<compile_context>
chip_gen: v6e
topology: v6e:2x2x1
jax: 0.10.0
libtpu: 0.0.40
codegen_flags: <defaults>
</compile_context>

<pallas_src>
import math

import jax
import jax.numpy as jnp
from jax.experimental import pallas as pl
from jax.experimental.pallas import tpu as pltpu

# ---------------- small but module-consistent configuration ----------------
N = 2              # batch
S = 30             # sequence length (forced by nn.Linear(d_model * 30, ...))
J = 16             # joints
C_IN = 3           # input channels (only the first 2 are used)
D_MODEL = 2 * J    # 32
NHEAD = 4
HEAD_DIM = D_MODEL // NHEAD
NUM_LAYERS = 2
DIM_FF = 2048      # nn.TransformerEncoderLayer default dim_feedforward
NUM_CLASSES = 16
EPS = 1e-5         # nn.LayerNorm default


def _layer_norm(x, w, b):
    mu = jnp.mean(x, axis=-1, keepdims=True)
    xc = x - mu
    var = jnp.mean(xc * xc, axis=-1, keepdims=True)
    return xc * jax.lax.rsqrt(var + EPS) * w + b


def encoder_kernel(x_ref,                       # (N*S, D) f32, rows ordered (n, s)
                   wqkv_ref, bqkv_ref,          # (L, D, 3D) bf16, (L, 1, 3D) f32
                   woh_ref, bo_ref,             # (L, N*NHEAD, HD, D) bf16, (L, 1, D) f32
                   ln1w_ref, ln1b_ref,          # (L, 1, D) f32
                   ln2w_ref, ln2b_ref,          # (L, 1, D) f32
                   w1_ref, b1_ref,              # (L, D, FF) bf16, (L, 1, FF) f32
                   w2_ref, b2_ref,              # (L, FF, D) bf16, (L, 1, D) f32
                   feat_ref):                   # out: (N*S, D) f32
    """2-layer transformer encoder, batch folded into the token axis, VMEM-resident."""
    h = x_ref[...]                              # (60, 32) f32 residual stream
    for l in range(NUM_LAYERS):                 # static unrolled layer loop
        # --- multi-head self-attention (post-LN layer, dropout = identity) ---
        # QKV projection on the full 60-row slab (scale already folded into Wq/bq).
        qkv = jnp.dot(h.astype(jnp.bfloat16), wqkv_ref[l],
                      preferred_element_type=jnp.float32) + bqkv_ref[l]     # (60, 3D) f32

        # Build head-batched (N*NHEAD, S, HD) Q/K/V stacks (leading-dim batch).
        q_parts, k_parts, v_parts = [], [], []
        for n in range(N):
            blk = qkv[n * S:(n + 1) * S, :]                                 # (S, 3D)
            for hh in range(NHEAD):
                q_parts.append(blk[:, hh * HEAD_DIM:(hh + 1) * HEAD_DIM])
                k_parts.append(blk[:, D_MODEL + hh * HEAD_DIM:
                                   D_MODEL + (hh + 1) * HEAD_DIM])
                v_parts.append(blk[:, 2 * D_MODEL + hh * HEAD_DIM:
                                   2 * D_MODEL + (hh + 1) * HEAD_DIM])
        q3 = jnp.stack(q_parts, axis=0).astype(jnp.bfloat16)                # (8, S, HD)
        k3 = jnp.stack(k_parts, axis=0).astype(jnp.bfloat16)
        v3 = jnp.stack(v_parts, axis=0).astype(jnp.bfloat16)

        # Batched scores / softmax / P@V over all (n, head) pairs at once.
        s3 = jnp.einsum('bqd,bkd->bqk', q3, k3,
                        preferred_element_type=jnp.float32)                 # (8, S, S)
        s3 = s3 - jnp.max(s3, axis=-1, keepdims=True)
        p3 = jnp.exp(s3)
        p3 = p3 * pl.reciprocal(jnp.sum(p3, axis=-1, keepdims=True), approx=True)
        o3 = jnp.einsum('bqk,bkd->bqd', p3.astype(jnp.bfloat16), v3,
                        preferred_element_type=jnp.float32)                 # (8, S, HD)

        # Per-head out-projection (weights pre-split per head on the host),
        # summed over heads == concat(heads) @ W_out.
        proj = jnp.einsum('bqd,bdk->bqk', o3.astype(jnp.bfloat16), woh_ref[l],
                          preferred_element_type=jnp.float32)               # (8, S, D)
        attn = jnp.concatenate(
            [jnp.sum(proj[n * NHEAD:(n + 1) * NHEAD], axis=0) for n in range(N)],
            axis=0) + bo_ref[l]                                             # (60, D)
        h = _layer_norm(h + attn, ln1w_ref[l], ln1b_ref[l])

        # --- feed-forward block on the folded 60-row slab ---
        ff = jnp.dot(h.astype(jnp.bfloat16), w1_ref[l],
                     preferred_element_type=jnp.float32) + b1_ref[l]        # (60, FF)
        ff = jnp.maximum(ff, 0.0).astype(jnp.bfloat16)
        ff = jnp.dot(ff, w2_ref[l],
                     preferred_element_type=jnp.float32) + b2_ref[l]        # (60, D)
        h = _layer_norm(h + ff, ln2w_ref[l], ln2b_ref[l])
    feat_ref[...] = h


def classifier_kernel(x_ref, w_ref, b_ref, out_ref):
    # (N, S*D) @ (S*D, C) + (1, C); bf16 matmul, f32 accumulate.
    out_ref[...] = jnp.dot(x_ref[...].astype(jnp.bfloat16), w_ref[...],
                           preferred_element_type=jnp.float32) + b_ref[...]


def transformer_classifier_forward(x, kp):
    """Returns (logits (N, num_classes), feat (S, N, d_model)) like the PyTorch module."""
    n, s, j, _ = x.shape
    d = 2 * j
    # glue: channel slice + flatten joints into d_model + fold batch into tokens
    x2 = x[:, :, :, :2].reshape(n * s, d).astype(jnp.float32)

    vmem = pl.BlockSpec(memory_space=pltpu.MemorySpace.VMEM)

    feat_fold = pl.pallas_call(
        encoder_kernel,
        out_shape=jax.ShapeDtypeStruct((n * s, d), jnp.float32),
        in_specs=[vmem] * 13,
        out_specs=vmem,
    )(x2,
      kp["wqkv"], kp["bqkv"], kp["woh"], kp["bo"],
      kp["ln1w"], kp["ln1b"], kp["ln2w"], kp["ln2b"],
      kp["w1"], kp["b1"], kp["w2"], kp["b2"])

    # glue: (N*S, D) row-major (n-major) == (N, S*D) flatten used by the classifier
    flat = feat_fold.reshape(n, s * d)
    logits = pl.pallas_call(
        classifier_kernel,
        out_shape=jax.ShapeDtypeStruct((n, NUM_CLASSES), jnp.float32),
        in_specs=[vmem] * 3,
        out_specs=vmem,
    )(flat, kp["cls_w"], kp["cls_b"])

    feat = jnp.transpose(feat_fold.reshape(n, s, d), (1, 0, 2))  # (S, N, D) seq-first
    return logits, feat


def init_params(key):
    """Deterministic synthetic parameters in PyTorch-equivalent (pre-transposed) layout.

    PyTorch stores linear weights as (out, in) and computes x @ W.T; here the
    weights are created directly in (in, out) layout (i.e. already transposed).
    """
    keys = jax.random.split(key, 10)

    def nrm(k, shape, std=0.05):
        return (std * jax.random.normal(k, shape)).astype(jnp.float32)

    L, D, FF = NUM_LAYERS, D_MODEL, DIM_FF
    return dict(
        in_w=nrm(keys[0], (L, D, 3 * D)),          # MHA in_proj_weight^T
        in_b=nrm(keys[1], (L, 1, 3 * D)),          # MHA in_proj_bias
        out_w=nrm(keys[2], (L, D, D)),             # MHA out_proj.weight^T
        out_b=nrm(keys[3], (L, 1, D)),             # MHA out_proj.bias
        ln1_w=jnp.ones((L, 1, D), jnp.float32),
        ln1_b=jnp.zeros((L, 1, D), jnp.float32),
        ln2_w=jnp.ones((L, 1, D), jnp.float32),
        ln2_b=jnp.zeros((L, 1, D), jnp.float32),
        f1_w=nrm(keys[4], (L, D, FF)),             # linear1.weight^T
        f1_b=nrm(keys[5], (L, 1, FF)),
        f2_w=nrm(keys[6], (L, FF, D)),             # linear2.weight^T
        f2_b=nrm(keys[7], (L, 1, D)),
        cls_w=nrm(keys[8], (S * D, NUM_CLASSES)),  # self.linear.weight^T
        cls_b=nrm(keys[9], (1, NUM_CLASSES)),
    )


def prepare_params(p):
    """One-time host-side conversion into kernel layouts:
      * fold the 1/sqrt(head_dim) attention scale into the Q projection (W and b),
      * split the attention out-projection per head and replicate it across the
        folded (batch, head) leading axis,
      * cast matmul weights to bfloat16 (biases / LN params stay f32)."""
    L, D = NUM_LAYERS, D_MODEL
    scale = 1.0 / math.sqrt(HEAD_DIM)
    qkv_scale = jnp.concatenate(
        [jnp.full((D,), scale, jnp.float32), jnp.ones((2 * D,), jnp.float32)])
    woh = p["out_w"].reshape(L, NHEAD, HEAD_DIM, D)                 # per-head W_out
    woh = jnp.broadcast_to(woh[:, None], (L, N, NHEAD, HEAD_DIM, D))
    woh = woh.reshape(L, N * NHEAD, HEAD_DIM, D)
    return dict(
        wqkv=(p["in_w"] * qkv_scale).astype(jnp.bfloat16),
        bqkv=p["in_b"] * qkv_scale,
        woh=woh.astype(jnp.bfloat16),
        bo=p["out_b"],
        ln1w=p["ln1_w"], ln1b=p["ln1_b"],
        ln2w=p["ln2_w"], ln2b=p["ln2_b"],
        w1=p["f1_w"].astype(jnp.bfloat16), b1=p["f1_b"],
        w2=p["f2_w"].astype(jnp.bfloat16), b2=p["f2_b"],
        cls_w=p["cls_w"].astype(jnp.bfloat16), cls_b=p["cls_b"],
    )


if __name__ == "__main__":
    key = jax.random.PRNGKey(0)
    pkey, xkey = jax.random.split(key)
    params = init_params(pkey)
    kparams = prepare_params(params)
    x = jax.random.normal(xkey, (N, S, J, C_IN), dtype=jnp.float32)

    fwd = jax.jit(transformer_classifier_forward)
    logits, feat = fwd(x, kparams)
    jax.block_until_ready((logits, feat))

    assert logits.shape == (N, NUM_CLASSES), logits.shape
    assert feat.shape == (S, N, D_MODEL), feat.shape
    assert bool(jnp.isfinite(logits).all()) and bool(jnp.isfinite(feat).all())
    # TODO(synk): dropout layers are treated as identity (eval-mode semantics).
    print("KERNEL_OK")
</pallas_src>

<mosaic_0001>
module attributes {stable_mosaic.version = 11 : i64} {
  func.func @classifier_kernel(%arg0: memref<2x960xf32, #tpu.memory_space<vmem>>, %arg1: memref<960x16xbf16, #tpu.memory_space<vmem>>, %arg2: memref<1x16xf32, #tpu.memory_space<vmem>>, %arg3: memref<2x16xf32, #tpu.memory_space<vmem>>) attributes {dimension_semantics = [], scalar_prefetch = 0 : i64, scratch_operands = 0 : i64, tpu.core_type = #tpu.core_type<tc>} {
    %c0 = arith.constant 0 : index
    %c0_0 = arith.constant 0 : index
    %0 = vector.load %arg0[%c0, %c0_0] : memref<2x960xf32, #tpu.memory_space<vmem>>, vector<2x960xf32>
    %1 = arith.truncf %0 : vector<2x960xf32> to vector<2x960xbf16>
    %c0_1 = arith.constant 0 : index
    %c0_2 = arith.constant 0 : index
    %2 = vector.load %arg1[%c0_1, %c0_2] : memref<960x16xbf16, #tpu.memory_space<vmem>>, vector<960x16xbf16>
    %cst = arith.constant dense<0.000000e+00> : vector<2x16xf32>
    %3 = tpu.matmul %1, %2, %cst {dimension_numbers = #tpu.dot_dimension_numbers<[1], [0], [0], [1], [0, 0, 1, 1], [], []>} : vector<2x960xbf16>, vector<960x16xbf16>, vector<2x16xf32> -> vector<2x16xf32>
    %c0_3 = arith.constant 0 : index
    %c0_4 = arith.constant 0 : index
    %4 = vector.load %arg2[%c0_3, %c0_4] : memref<1x16xf32, #tpu.memory_space<vmem>>, vector<1x16xf32>
    %5 = vector.broadcast %4 : vector<1x16xf32> to vector<2x16xf32>
    %6 = arith.addf %3, %5 : vector<2x16xf32>
    %c0_5 = arith.constant 0 : index
    %c0_6 = arith.constant 0 : index
    %7 = vector.load %arg3[%c0_5, %c0_6] : memref<2x16xf32, #tpu.memory_space<vmem>>, vector<2x16xf32>
    tpu.vector_store %arg3[%c0_5, %c0_6], %6 {strides = array<i32>} : memref<2x16xf32, #tpu.memory_space<vmem>>, vector<2x16xf32>,
    return
  }
}

module attributes {stable_mosaic.version = 11 : i64} {
  func.func @encoder_kernel(%arg0: memref<60x32xf32, #tpu.memory_space<vmem>>, %arg1: memref<2x32x96xbf16, #tpu.memory_space<vmem>>, %arg2: memref<2x1x96xf32, #tpu.memory_space<vmem>>, %arg3: memref<2x8x8x32xbf16, #tpu.memory_space<vmem>>, %arg4: memref<2x1x32xf32, #tpu.memory_space<vmem>>, %arg5: memref<2x1x32xf32, #tpu.memory_space<vmem>>, %arg6: memref<2x1x32xf32, #tpu.memory_space<vmem>>, %arg7: memref<2x1x32xf32, #tpu.memory_space<vmem>>, %arg8: memref<2x1x32xf32, #tpu.memory_space<vmem>>, %arg9: memref<2x32x2048xbf16, #tpu.memory_space<vmem>>, %arg10: memref<2x1x2048xf32, #tpu.memory_space<vmem>>, %arg11: memref<2x2048x32xbf16, #tpu.memory_space<vmem>>, %arg12: memref<2x1x32xf32, #tpu.memory_space<vmem>>, %arg13: memref<60x32xf32, #tpu.memory_space<vmem>>) attributes {dimension_semantics = [], scalar_prefetch = 0 : i64, scratch_operands = 0 : i64, tpu.core_type = #tpu.core_type<tc>} {
    %c0 = arith.constant 0 : index
    %c0_0 = arith.constant 0 : index
    %0 = vector.load %arg0[%c0, %c0_0] : memref<60x32xf32, #tpu.memory_space<vmem>>, vector<60x32xf32>
    %1 = arith.truncf %0 : vector<60x32xf32> to vector<60x32xbf16>
    %c0_1 = arith.constant 0 : index
    %c0_2 = arith.constant 0 : index
    %c0_3 = arith.constant 0 : index
    %2 = vector.load %arg1[%c0_1, %c0_2, %c0_3] : memref<2x32x96xbf16, #tpu.memory_space<vmem>>, vector<1x32x96xbf16>
    %3 = vector.shape_cast %2 : vector<1x32x96xbf16> to vector<32x96xbf16>
    %cst = arith.constant dense<0.000000e+00> : vector<60x96xf32>
    %4 = tpu.matmul %1, %3, %cst {dimension_numbers = #tpu.dot_dimension_numbers<[1], [0], [0], [1], [0, 0, 1, 1], [], []>} : vector<60x32xbf16>, vector<32x96xbf16>, vector<60x96xf32> -> vector<60x96xf32>
    %c0_4 = arith.constant 0 : index
    %c0_5 = arith.constant 0 : index
    %c0_6 = arith.constant 0 : index
    %5 = vector.load %arg2[%c0_4, %c0_5, %c0_6] : memref<2x1x96xf32, #tpu.memory_space<vmem>>, vector<1x1x96xf32>
    %6 = vector.shape_cast %5 : vector<1x1x96xf32> to vector<1x96xf32>
    %7 = vector.broadcast %6 : vector<1x96xf32> to vector<60x96xf32>
    %8 = arith.addf %4, %7 : vector<60x96xf32>
    %9 = vector.extract_strided_slice %8 {offsets = [0, 0], sizes = [30, 96], strides = [1, 1]} : vector<60x96xf32> to vector<30x96xf32>
    %10 = vector.extract_strided_slice %9 {offsets = [0, 0], sizes = [30, 8], strides = [1, 1]} : vector<30x96xf32> to vector<30x8xf32>
    %11 = vector.extract_strided_slice %9 {offsets = [0, 32], sizes = [30, 8], strides = [1, 1]} : vector<30x96xf32> to vector<30x8xf32>
    %12 = vector.extract_strided_slice %9 {offsets = [0, 64], sizes = [30, 8], strides = [1, 1]} : vector<30x96xf32> to vector<30x8xf32>
    %13 = vector.extract_strided_slice %9 {offsets = [0, 8], sizes = [30, 8], strides = [1, 1]} : vector<30x96xf32> to vector<30x8xf32>
    %14 = vector.extract_strided_slice %9 {offsets = [0, 40], sizes = [30, 8], strides = [1, 1]} : vector<30x96xf32> to vector<30x8xf32>
    %15 = vector.extract_strided_slice %9 {offsets = [0, 72], sizes = [30, 8], strides = [1, 1]} : vector<30x96xf32> to vector<30x8xf32>
    %16 = vector.extract_strided_slice %9 {offsets = [0, 16], sizes = [30, 8], strides = [1, 1]} : vector<30x96xf32> to vector<30x8xf32>
    %17 = vector.extract_strided_slice %9 {offsets = [0, 48], sizes = [30, 8], strides = [1, 1]} : vector<30x96xf32> to vector<30x8xf32>
    %18 = vector.extract_strided_slice %9 {offsets = [0, 80], sizes = [30, 8], strides = [1, 1]} : vector<30x96xf32> to vector<30x8xf32>
    %19 = vector.extract_strided_slice %9 {offsets = [0, 24], sizes = [30, 8], strides = [1, 1]} : vector<30x96xf32> to vector<30x8xf32>
    %20 = vector.extract_strided_slice %9 {offsets = [0, 56], sizes = [30, 8], strides = [1, 1]} : vector<30x96xf32> to vector<30x8xf32>
    %21 = vector.extract_strided_slice %9 {offsets = [0, 88], sizes = [30, 8], strides = [1, 1]} : vector<30x96xf32> to vector<30x8xf32>
    %22 = vector.extract_strided_slice %8 {offsets = [30, 0], sizes = [30, 96], strides = [1, 1]} : vector<60x96xf32> to vector<30x96xf32>
    %23 = vector.extract_strided_slice %22 {offsets = [0, 0], sizes = [30, 8], strides = [1, 1]} : vector<30x96xf32> to vector<30x8xf32>
    %24 = vector.extract_strided_slice %22 {offsets = [0, 32], sizes = [30, 8], strides = [1, 1]} : vector<30x96xf32> to vector<30x8xf32>
    %25 = vector.extract_strided_slice %22 {offsets = [0, 64], sizes = [30, 8], strides = [1, 1]} : vector<30x96xf32> to vector<30x8xf32>
    %26 = vector.extract_strided_slice %22 {offsets = [0, 8], sizes = [30, 8], strides = [1, 1]} : vector<30x96xf32> to vector<30x8xf32>
    %27 = vector.extract_strided_slice %22 {offsets = [0, 40], sizes = [30, 8], strides = [1, 1]} : vector<30x96xf32> to vector<30x8xf32>
    %28 = vector.extract_strided_slice %22 {offsets = [0, 72], sizes = [30, 8], strides = [1, 1]} : vector<30x96xf32> to vector<30x8xf32>
    %29 = vector.extract_strided_slice %22 {offsets = [0, 16], sizes = [30, 8], strides = [1, 1]} : vector<30x96xf32> to vector<30x8xf32>
    %30 = vector.extract_strided_slice %22 {offsets = [0, 48], sizes = [30, 8], strides = [1, 1]} : vector<30x96xf32> to vector<30x8xf32>
    %31 = vector.extract_strided_slice %22 {offsets = [0, 80], sizes = [30, 8], strides = [1, 1]} : vector<30x96xf32> to vector<30x8xf32>
    %32 = vector.extract_strided_slice %22 {offsets = [0, 24], sizes = [30, 8], strides = [1, 1]} : vector<30x96xf32> to vector<30x8xf32>
    %33 = vector.extract_strided_slice %22 {offsets = [0, 56], sizes = [30, 8], strides = [1, 1]} : vector<30x96xf32> to vector<30x8xf32>
    %34 = vector.extract_strided_slice %22 {offsets = [0, 88], sizes = [30, 8], strides = [1, 1]} : vector<30x96xf32> to vector<30x8xf32>
    %35 = vector.shape_cast %10 : vector<30x8xf32> to vector<1x30x8xf32>
    %36 = vector.shape_cast %13 : vector<30x8xf32> to vector<1x30x8xf32>
    %37 = vector.shape_cast %16 : vector<30x8xf32> to vector<1x30x8xf32>
    %38 = vector.shape_cast %19 : vector<30x8xf32> to vector<1x30x8xf32>
    %39 = vector.shape_cast %23 : vector<30x8xf32> to vector<1x30x8xf32>
    %40 = vector.shape_cast %26 : vector<30x8xf32> to vector<1x30x8xf32>
    %41 = vector.shape_cast %29 : vector<30x8xf32> to vector<1x30x8xf32>
    %42 = vector.shape_cast %32 : vector<30x8xf32> to vector<1x30x8xf32>
    %43 = tpu.concatenate %35, %36, %37, %38, %39, %40, %41, %42 in 0 : vector<1x30x8xf32>, vector<1x30x8xf32>, vector<1x30x8xf32>, vector<1x30x8xf32>, vector<1x30x8xf32>, vector<1x30x8xf32>, vector<1x30x8xf32>, vector<1x30x8xf32> -> vector<8x30x8xf32>
    %44 = arith.truncf %43 : vector<8x30x8xf32> to vector<8x30x8xbf16>
    %45 = vector.shape_cast %11 : vector<30x8xf32> to vector<1x30x8xf32>
    %46 = vector.shape_cast %14 : vector<30x8xf32> to vector<1x30x8xf32>
    %47 = vector.shape_cast %17 : vector<30x8xf32> to vector<1x30x8xf32>
    %48 = vector.shape_cast %20 : vector<30x8xf32> to vector<1x30x8xf32>
    %49 = vector.shape_cast %24 : vector<30x8xf32> to vector<1x30x8xf32>
    %50 = vector.shape_cast %27 : vector<30x8xf32> to vector<1x30x8xf32>
    %51 = vector.shape_cast %30 : vector<30x8xf32> to vector<1x30x8xf32>
    %52 = vector.shape_cast %33 : vector<30x8xf32> to vector<1x30x8xf32>
    %53 = tpu.concatenate %45, %46, %47, %48, %49, %50, %51, %52 in 0 : vector<1x30x8xf32>, vector<1x30x8xf32>, vector<1x30x8xf32>, vector<1x30x8xf32>, vector<1x30x8xf32>, vector<1x30x8xf32>, vector<1x30x8xf32>, vector<1x30x8xf32> -> vector<8x30x8xf32>
    %54 = arith.truncf %53 : vector<8x30x8xf32> to vector<8x30x8xbf16>
    %55 = vector.shape_cast %12 : vector<30x8xf32> to vector<1x30x8xf32>
    %56 = vector.shape_cast %15 : vector<30x8xf32> to vector<1x30x8xf32>
    %57 = vector.shape_cast %18 : vector<30x8xf32> to vector<1x30x8xf32>
    %58 = vector.shape_cast %21 : vector<30x8xf32> to vector<1x30x8xf32>
    %59 = vector.shape_cast %25 : vector<30x8xf32> to vector<1x30x8xf32>
    %60 = vector.shape_cast %28 : vector<30x8xf32> to vector<1x30x8xf32>
    %61 = vector.shape_cast %31 : vector<30x8xf32> to vector<1x30x8xf32>
    %62 = vector.shape_cast %34 : vector<30x8xf32> to vector<1x30x8xf32>
    %63 = tpu.concatenate %55, %56, %57, %58, %59, %60, %61, %62 in 0 : vector<1x30x8xf32>, vector<1x30x8xf32>, vector<1x30x8xf32>, vector<1x30x8xf32>, vector<1x30x8xf32>, vector<1x30x8xf32>, vector<1x30x8xf32>, vector<1x30x8xf32> -> vector<8x30x8xf32>
    %64 = arith.truncf %63 : vector<8x30x8xf32> to vector<8x30x8xbf16>
    "tpu.trace_start"() <{level = 10 : i32, message = "bqd,bkd->bqk"}> : () -> ()
    %cst_7 = arith.constant dense<0.000000e+00> : vector<8x30x30xf32>
    %65 = tpu.matmul %44, %54, %cst_7 {dimension_numbers = #tpu.dot_dimension_numbers<[2], [2], [1], [1], [0, 0, 0, 1, 1, 1], [0], [0]>} : vector<8x30x8xbf16>, vector<8x30x8xbf16>, vector<8x30x30xf32> -> vector<8x30x30xf32>
    "tpu.trace_stop"() : () -> ()
    %cst_8 = arith.constant dense<0xFF800000> : vector<8x30xf32>
    %66 = vector.multi_reduction <maximumf>, %65, %cst_8 [2] : vector<8x30x30xf32> to vector<8x30xf32>
    %67 = vector.shape_cast %66 : vector<8x30xf32> to vector<8x30x1xf32>
    %68 = vector.broadcast %67 : vector<8x30x1xf32> to vector<8x30x30xf32>
    %69 = arith.subf %65, %68 : vector<8x30x30xf32>
    %70 = math.exp %69 : vector<8x30x30xf32>
    %cst_9 = arith.constant dense<0.000000e+00> : vector<8x30xf32>
    %71 = vector.multi_reduction <add>, %70, %cst_9 [2] : vector<8x30x30xf32> to vector<8x30xf32>
    %72 = vector.shape_cast %71 : vector<8x30xf32> to vector<8x30x1xf32>
    %73 = tpu.reciprocal %72 {approx = true} : vector<8x30x1xf32> -> vector<8x30x1xf32>
    %74 = vector.broadcast %73 : vector<8x30x1xf32> to vector<8x30x30xf32>
    %75 = arith.mulf %70, %74 : vector<8x30x30xf32>
    %76 = arith.truncf %75 : vector<8x30x30xf32> to vector<8x30x30xbf16>
    "tpu.trace_start"() <{level = 10 : i32, message = "bqk,bkd->bqd"}> : () -> ()
    %cst_10 = arith.constant dense<0.000000e+00> : vector<8x30x8xf32>
    %77 = tpu.matmul %76, %64, %cst_10 {dimension_numbers = #tpu.dot_dimension_numbers<[2], [1], [1], [2], [0, 0, 0, 1, 1, 2], [0], [0]>} : vector<8x30x30xbf16>, vector<8x30x8xbf16>, vector<8x30x8xf32> -> vector<8x30x8xf32>
    "tpu.trace_stop"() : () -> ()
    %78 = arith.truncf %77 : vector<8x30x8xf32> to vector<8x30x8xbf16>
    %c0_11 = arith.constant 0 : index
    %c0_12 = arith.constant 0 : index
    %c0_13 = arith.constant 0 : index
    %c0_14 = arith.constant 0 : index
    %79 = vector.load %arg3[%c0_11, %c0_12, %c0_13, %c0_14] : memref<2x8x8x32xbf16, #tpu.memory_space<vmem>>, vector<1x8x8x32xbf16>
    %80 = vector.shape_cast %79 : vector<1x8x8x32xbf16> to vector<8x8x32xbf16>
    "tpu.trace_start"() <{level = 10 : i32, message = "bqd,bdk->bqk"}> : () -> ()
    %cst_15 = arith.constant dense<0.000000e+00> : vector<8x30x32xf32>
    %81 = tpu.matmul %78, %80, %cst_15 {dimension_numbers = #tpu.dot_dimension_numbers<[2], [1], [1], [2], [0, 0, 0, 1, 1, 2], [0], [0]>} : vector<8x30x8xbf16>, vector<8x8x32xbf16>, vector<8x30x32xf32> -> vector<8x30x32xf32>
    "tpu.trace_stop"() : () -> ()
    %82 = vector.extract_strided_slice %81 {offsets = [0, 0, 0], sizes = [4, 30, 32], strides = [1, 1, 1]} : vector<8x30x32xf32> to vector<4x30x32xf32>
    %cst_16 = arith.constant dense<0.000000e+00> : vector<30x32xf32>
    %83 = vector.multi_reduction <add>, %82, %cst_16 [0] : vector<4x30x32xf32> to vector<30x32xf32>
    %84 = vector.extract_strided_slice %81 {offsets = [4, 0, 0], sizes = [4, 30, 32], strides = [1, 1, 1]} : vector<8x30x32xf32> to vector<4x30x32xf32>
    %cst_17 = arith.constant dense<0.000000e+00> : vector<30x32xf32>
    %85 = vector.multi_reduction <add>, %84, %cst_17 [0] : vector<4x30x32xf32> to vector<30x32xf32>
    %86 = tpu.concatenate %83, %85 in 0 : vector<30x32xf32>, vector<30x32xf32> -> vector<60x32xf32>
    %c0_18 = arith.constant 0 : index
    %c0_19 = arith.constant 0 : index
    %c0_20 = arith.constant 0 : index
    %87 = vector.load %arg4[%c0_18, %c0_19, %c0_20] : memref<2x1x32xf32, #tpu.memory_space<vmem>>, vector<1x1x32xf32>
    %88 = vector.shape_cast %87 : vector<1x1x32xf32> to vector<1x32xf32>
    %89 = vector.broadcast %88 : vector<1x32xf32> to vector<60x32xf32>
    %90 = arith.addf %86, %89 : vector<60x32xf32>
    %91 = arith.addf %0, %90 : vector<60x32xf32>
    %c0_21 = arith.constant 0 : index
    %c0_22 = arith.constant 0 : index
    %c0_23 = arith.constant 0 : index
    %92 = vector.load %arg5[%c0_21, %c0_22, %c0_23] : memref<2x1x32xf32, #tpu.memory_space<vmem>>, vector<1x1x32xf32>
    %93 = vector.shape_cast %92 : vector<1x1x32xf32> to vector<1x32xf32>
    %c0_24 = arith.constant 0 : index
    %c0_25 = arith.constant 0 : index
    %c0_26 = arith.constant 0 : index
    %94 = vector.load %arg6[%c0_24, %c0_25, %c0_26] : memref<2x1x32xf32, #tpu.memory_space<vmem>>, vector<1x1x32xf32>
    %95 = vector.shape_cast %94 : vector<1x1x32xf32> to vector<1x32xf32>
    %cst_27 = arith.constant dense<0.000000e+00> : vector<60xf32>
    %96 = vector.multi_reduction <add>, %91, %cst_27 [1] : vector<60x32xf32> to vector<60xf32>
    %97 = vector.shape_cast %96 : vector<60xf32> to vector<60x1xf32>
    %cst_28 = arith.constant 3.200000e+01 : f32
    %98 = vector.broadcast %cst_28 : f32 to vector<60x1xf32>
    %99 = arith.divf %97, %98 : vector<60x1xf32>
    %100 = vector.broadcast %99 : vector<60x1xf32> to vector<60x32xf32>
    %101 = arith.subf %91, %100 : vector<60x32xf32>
    %102 = arith.mulf %101, %101 : vector<60x32xf32>
    %cst_29 = arith.constant dense<0.000000e+00> : vector<60xf32>
    %103 = vector.multi_reduction <add>, %102, %cst_29 [1] : vector<60x32xf32> to vector<60xf32>
    %104 = vector.shape_cast %103 : vector<60xf32> to vector<60x1xf32>
    %cst_30 = arith.constant 3.200000e+01 : f32
    %105 = vector.broadcast %cst_30 : f32 to vector<60x1xf32>
    %106 = arith.divf %104, %105 : vector<60x1xf32>
    %cst_31 = arith.constant 9.99999974E-6 : f32
    %107 = vector.broadcast %cst_31 : f32 to vector<60x1xf32>
    %108 = arith.addf %106, %107 : vector<60x1xf32>
    %109 = math.rsqrt %108 : vector<60x1xf32>
    %110 = vector.broadcast %109 : vector<60x1xf32> to vector<60x32xf32>
    %111 = arith.mulf %101, %110 : vector<60x32xf32>
    %112 = vector.broadcast %93 : vector<1x32xf32> to vector<60x32xf32>
    %113 = arith.mulf %111, %112 : vector<60x32xf32>
    %114 = vector.broadcast %95 : vector<1x32xf32> to vector<60x32xf32>
    %115 = arith.addf %113, %114 : vector<60x32xf32>
    %116 = arith.truncf %115 : vector<60x32xf32> to vector<60x32xbf16>
    %c0_32 = arith.constant 0 : index
    %c0_33 = arith.constant 0 : index
    %c0_34 = arith.constant 0 : index
    %117 = vector.load %arg9[%c0_32, %c0_33, %c0_34] : memref<2x32x2048xbf16, #tpu.memory_space<vmem>>, vector<1x32x2048xbf16>
    %118 = vector.shape_cast %117 : vector<1x32x2048xbf16> to vector<32x2048xbf16>
    %cst_35 = arith.constant dense<0.000000e+00> : vector<60x2048xf32>
    %119 = tpu.matmul %116, %118, %cst_35 {dimension_numbers = #tpu.dot_dimension_numbers<[1], [0], [0], [1], [0, 0, 1, 1], [], []>} : vector<60x32xbf16>, vector<32x2048xbf16>, vector<60x2048xf32> -> vector<60x2048xf32>
    %c0_36 = arith.constant 0 : index
    %c0_37 = arith.constant 0 : index
    %c0_38 = arith.constant 0 : index
    %120 = vector.load %arg10[%c0_36, %c0_37, %c0_38] : memref<2x1x2048xf32, #tpu.memory_space<vmem>>, vector<1x1x2048xf32>
    %121 = vector.shape_cast %120 : vector<1x1x2048xf32> to vector<1x2048xf32>
    %122 = vector.broadcast %121 : vector<1x2048xf32> to vector<60x2048xf32>
    %123 = arith.addf %119, %122 : vector<60x2048xf32>
    %cst_39 = arith.constant 0.000000e+00 : f32
    %124 = vector.broadcast %cst_39 : f32 to vector<60x2048xf32>
    %125 = arith.maximumf %123, %124 : vector<60x2048xf32>
    %126 = arith.truncf %125 : vector<60x2048xf32> to vector<60x2048xbf16>
    %c0_40 = arith.constant 0 : index
    %c0_41 = arith.constant 0 : index
    %c0_42 = arith.constant 0 : index
    %127 = vector.load %arg11[%c0_40, %c0_41, %c0_42] : memref<2x2048x32xbf16, #tpu.memory_space<vmem>>, vector<1x2048x32xbf16>
    %128 = vector.shape_cast %127 : vector<1x2048x32xbf16> to vector<2048x32xbf16>
    %cst_43 = arith.constant dense<0.000000e+00> : vector<60x32xf32>
    %129 = tpu.matmul %126, %128, %cst_43 {dimension_numbers = #tpu.dot_dimension_numbers<[1], [0], [0], [1], [0, 0, 1, 1], [], []>} : vector<60x2048xbf16>, vector<2048x32xbf16>, vector<60x32xf32> -> vector<60x32xf32>
    %c0_44 = arith.constant 0 : index
    %c0_45 = arith.constant 0 : index
    %c0_46 = arith.constant 0 : index
    %130 = vector.load %arg12[%c0_44, %c0_45, %c0_46] : memref<2x1x32xf32, #tpu.memory_space<vmem>>, vector<1x1x32xf32>
    %131 = vector.shape_cast %130 : vector<1x1x32xf32> to vector<1x32xf32>
    %132 = vector.broadcast %131 : vector<1x32xf32> to vector<60x32xf32>
    %133 = arith.addf %129, %132 : vector<60x32xf32>
    %134 = arith.addf %115, %133 : vector<60x32xf32>
    %c0_47 = arith.constant 0 : index
    %c0_48 = arith.constant 0 : index
    %c0_49 = arith.constant 0 : index
    %135 = vector.load %arg7[%c0_47, %c0_48, %c0_49] : memref<2x1x32xf32, #tpu.memory_space<vmem>>, vector<1x1x32xf32>
    %136 = vector.shape_cast %135 : vector<1x1x32xf32> to vector<1x32xf32>
    %c0_50 = arith.constant 0 : index
    %c0_51 = arith.constant 0 : index
    %c0_52 = arith.constant 0 : index
    %137 = vector.load %arg8[%c0_50, %c0_51, %c0_52] : memref<2x1x32xf32, #tpu.memory_space<vmem>>, vector<1x1x32xf32>
    %138 = vector.shape_cast %137 : vector<1x1x32xf32> to vector<1x32xf32>
    %cst_53 = arith.constant dense<0.000000e+00> : vector<60xf32>
    %139 = vector.multi_reduction <add>, %134, %cst_53 [1] : vector<60x32xf32> to vector<60xf32>
    %140 = vector.shape_cast %139 : vector<60xf32> to vector<60x1xf32>
    %cst_54 = arith.constant 3.200000e+01 : f32
    %141 = vector.broadcast %cst_54 : f32 to vector<60x1xf32>
    %142 = arith.divf %140, %141 : vector<60x1xf32>
    %143 = vector.broadcast %142 : vector<60x1xf32> to vector<60x32xf32>
    %144 = arith.subf %134, %143 : vector<60x32xf32>
    %145 = arith.mulf %144, %144 : vector<60x32xf32>
    %cst_55 = arith.constant dense<0.000000e+00> : vector<60xf32>
    %146 = vector.multi_reduction <add>, %145, %cst_55 [1] : vector<60x32xf32> to vector<60xf32>
    %147 = vector.shape_cast %146 : vector<60xf32> to vector<60x1xf32>
    %cst_56 = arith.constant 3.200000e+01 : f32
    %148 = vector.broadcast %cst_56 : f32 to vector<60x1xf32>
    %149 = arith.divf %147, %148 : vector<60x1xf32>
    %cst_57 = arith.constant 9.99999974E-6 : f32
    %150 = vector.broadcast %cst_57 : f32 to vector<60x1xf32>
    %151 = arith.addf %149, %150 : vector<60x1xf32>
    %152 = math.rsqrt %151 : vector<60x1xf32>
    %153 = vector.broadcast %152 : vector<60x1xf32> to vector<60x32xf32>
    %154 = arith.mulf %144, %153 : vector<60x32xf32>
    %155 = vector.broadcast %136 : vector<1x32xf32> to vector<60x32xf32>
    %156 = arith.mulf %154, %155 : vector<60x32xf32>
    %157 = vector.broadcast %138 : vector<1x32xf32> to vector<60x32xf32>
    %158 = arith.addf %156, %157 : vector<60x32xf32>
    %159 = arith.truncf %158 : vector<60x32xf32> to vector<60x32xbf16>
    %c1 = arith.constant 1 : index
    %c0_58 = arith.constant 0 : index
    %c0_59 = arith.constant 0 : index
    %160 = vector.load %arg1[%c1, %c0_58, %c0_59] : memref<2x32x96xbf16, #tpu.memory_space<vmem>>, vector<1x32x96xbf16>
    %161 = vector.shape_cast %160 : vector<1x32x96xbf16> to vector<32x96xbf16>
    %cst_60 = arith.constant dense<0.000000e+00> : vector<60x96xf32>
    %162 = tpu.matmul %159, %161, %cst_60 {dimension_numbers = #tpu.dot_dimension_numbers<[1], [0], [0], [1], [0, 0, 1, 1], [], []>} : vector<60x32xbf16>, vector<32x96xbf16>, vector<60x96xf32> -> vector<60x96xf32>
    %c1_61 = arith.constant 1 : index
    %c0_62 = arith.constant 0 : index
    %c0_63 = arith.constant 0 : index
    %163 = vector.load %arg2[%c1_61, %c0_62, %c0_63] : memref<2x1x96xf32, #tpu.memory_space<vmem>>, vector<1x1x96xf32>
    %164 = vector.shape_cast %163 : vector<1x1x96xf32> to vector<1x96xf32>
    %165 = vector.broadcast %164 : vector<1x96xf32> to vector<60x96xf32>
    %166 = arith.addf %162, %165 : vector<60x96xf32>
    %167 = vector.extract_strided_slice %166 {offsets = [0, 0], sizes = [30, 96], strides = [1, 1]} : vector<60x96xf32> to vector<30x96xf32>
    %168 = vector.extract_strided_slice %167 {offsets = [0, 0], sizes = [30, 8], strides = [1, 1]} : vector<30x96xf32> to vector<30x8xf32>
    %169 = vector.extract_strided_slice %167 {offsets = [0, 32], sizes = [30, 8], strides = [1, 1]} : vector<30x96xf32> to vector<30x8xf32>
    %170 = vector.extract_strided_slice %167 {offsets = [0, 64], sizes = [30, 8], strides = [1, 1]} : vector<30x96xf32> to vector<30x8xf32>
    %171 = vector.extract_strided_slice %167 {offsets = [0, 8], sizes = [30, 8], strides = [1, 1]} : vector<30x96xf32> to vector<30x8xf32>
    %172 = vector.extract_strided_slice %167 {offsets = [0, 40], sizes = [30, 8], strides = [1, 1]} : vector<30x96xf32> to vector<30x8xf32>
    %173 = vector.extract_strided_slice %167 {offsets = [0, 72], sizes = [30, 8], strides = [1, 1]} : vector<30x96xf32> to vector<30x8xf32>
    %174 = vector.extract_strided_slice %167 {offsets = [0, 16], sizes = [30, 8], strides = [1, 1]} : vector<30x96xf32> to vector<30x8xf32>
    %175 = vector.extract_strided_slice %167 {offsets = [0, 48], sizes = [30, 8], strides = [1, 1]} : vector<30x96xf32> to vector<30x8xf32>
    %176 = vector.extract_strided_slice %167 {offsets = [0, 80], sizes = [30, 8], strides = [1, 1]} : vector<30x96xf32> to vector<30x8xf32>
    %177 = vector.extract_strided_slice %167 {offsets = [0, 24], sizes = [30, 8], strides = [1, 1]} : vector<30x96xf32> to vector<30x8xf32>
    %178 = vector.extract_strided_slice %167 {offsets = [0, 56], sizes = [30, 8], strides = [1, 1]} : vector<30x96xf32> to vector<30x8xf32>
    %179 = vector.extract_strided_slice %167 {offsets = [0, 88], sizes = [30, 8], strides = [1, 1]} : vector<30x96xf32> to vector<30x8xf32>
    %180 = vector.extract_strided_slice %166 {offsets = [30, 0], sizes = [30, 96], strides = [1, 1]} : vector<60x96xf32> to vector<30x96xf32>
    %181 = vector.extract_strided_slice %180 {offsets = [0, 0], sizes = [30, 8], strides = [1, 1]} : vector<30x96xf32> to vector<30x8xf32>
    %182 = vector.extract_strided_slice %180 {offsets = [0, 32], sizes = [30, 8], strides = [1, 1]} : vector<30x96xf32> to vector<30x8xf32>
    %183 = vector.extract_strided_slice %180 {offsets = [0, 64], sizes = [30, 8], strides = [1, 1]} : vector<30x96xf32> to vector<30x8xf32>
    %184 = vector.extract_strided_slice %180 {offsets = [0, 8], sizes = [30, 8], strides = [1, 1]} : vector<30x96xf32> to vector<30x8xf32>
    %185 = vector.extract_strided_slice %180 {offsets = [0, 40], sizes = [30, 8], strides = [1, 1]} : vector<30x96xf32> to vector<30x8xf32>
    %186 = vector.extract_strided_slice %180 {offsets = [0, 72], sizes = [30, 8], strides = [1, 1]} : vector<30x96xf32> to vector<30x8xf32>
    %187 = vector.extract_strided_slice %180 {offsets = [0, 16], sizes = [30, 8], strides = [1, 1]} : vector<30x96xf32> to vector<30x8xf32>
    %188 = vector.extract_strided_slice %180 {offsets = [0, 48], sizes = [30, 8], strides = [1, 1]} : vector<30x96xf32> to vector<30x8xf32>
    %189 = vector.extract_strided_slice %180 {offsets = [0, 80], sizes = [30, 8], strides = [1, 1]} : vector<30x96xf32> to vector<30x8xf32>
    %190 = vector.extract_strided_slice %180 {offsets = [0, 24], sizes = [30, 8], strides = [1, 1]} : vector<30x96xf32> to vector<30x8xf32>
    %191 = vector.extract_strided_slice %180 {offsets = [0, 56], sizes = [30, 8], strides = [1, 1]} : vector<30x96xf32> to vector<30x8xf32>
    %192 = vector.extract_strided_slice %180 {offsets = [0, 88], sizes = [30, 8], strides = [1, 1]} : vector<30x96xf32> to vector<30x8xf32>
    %193 = vector.shape_cast %168 : vector<30x8xf32> to vector<1x30x8xf32>
    %194 = vector.shape_cast %171 : vector<30x8xf32> to vector<1x30x8xf32>
    %195 = vector.shape_cast %174 : vector<30x8xf32> to vector<1x30x8xf32>
    %196 = vector.shape_cast %177 : vector<30x8xf32> to vector<1x30x8xf32>
    %197 = vector.shape_cast %181 : vector<30x8xf32> to vector<1x30x8xf32>
    %198 = vector.shape_cast %184 : vector<30x8xf32> to vector<1x30x8xf32>
    %199 = vector.shape_cast %187 : vector<30x8xf32> to vector<1x30x8xf32>
    %200 = vector.shape_cast %190 : vector<30x8xf32> to vector<1x30x8xf32>
    %201 = tpu.concatenate %193, %194, %195, %196, %197, %198, %199, %200 in 0 : vector<1x30x8xf32>, vector<1x30x8xf32>, vector<1x30x8xf32>, vector<1x30x8xf32>, vector<1x30x8xf32>, vector<1x30x8xf32>, vector<1x30x8xf32>, vector<1x30x8xf32> -> vector<8x30x8xf32>
    %202 = arith.truncf %201 : vector<8x30x8xf32> to vector<8x30x8xbf16>
    %203 = vector.shape_cast %169 : vector<30x8xf32> to vector<1x30x8xf32>
    %204 = vector.shape_cast %172 : vector<30x8xf32> to vector<1x30x8xf32>
    %205 = vector.shape_cast %175 : vector<30x8xf32> to vector<1x30x8xf32>
    %206 = vector.shape_cast %178 : vector<30x8xf32> to vector<1x30x8xf32>
    %207 = vector.shape_cast %182 : vector<30x8xf32> to vector<1x30x8xf32>
    %208 = vector.shape_cast %185 : vector<30x8xf32> to vector<1x30x8xf32>
    %209 = vector.shape_cast %188 : vector<30x8xf32> to vector<1x30x8xf32>
    %210 = vector.shape_cast %191 : vector<30x8xf32> to vector<1x30x8xf32>
    %211 = tpu.concatenate %203, %204, %205, %206, %207, %208, %209, %210 in 0 : vector<1x30x8xf32>, vector<1x30x8xf32>, vector<1x30x8xf32>, vector<1x30x8xf32>, vector<1x30x8xf32>, vector<1x30x8xf32>, vector<1x30x8xf32>, vector<1x30x8xf32> -> vector<8x30x8xf32>
    %212 = arith.truncf %211 : vector<8x30x8xf32> to vector<8x30x8xbf16>
    %213 = vector.shape_cast %170 : vector<30x8xf32> to vector<1x30x8xf32>
    %214 = vector.shape_cast %173 : vector<30x8xf32> to vector<1x30x8xf32>
    %215 = vector.shape_cast %176 : vector<30x8xf32> to vector<1x30x8xf32>
    %216 = vector.shape_cast %179 : vector<30x8xf32> to vector<1x30x8xf32>
    %217 = vector.shape_cast %183 : vector<30x8xf32> to vector<1x30x8xf32>
    %218 = vector.shape_cast %186 : vector<30x8xf32> to vector<1x30x8xf32>
    %219 = vector.shape_cast %189 : vector<30x8xf32> to vector<1x30x8xf32>
    %220 = vector.shape_cast %192 : vector<30x8xf32> to vector<1x30x8xf32>
    %221 = tpu.concatenate %213, %214, %215, %216, %217, %218, %219, %220 in 0 : vector<1x30x8xf32>, vector<1x30x8xf32>, vector<1x30x8xf32>, vector<1x30x8xf32>, vector<1x30x8xf32>, vector<1x30x8xf32>, vector<1x30x8xf32>, vector<1x30x8xf32> -> vector<8x30x8xf32>
    %222 = arith.truncf %221 : vector<8x30x8xf32> to vector<8x30x8xbf16>
    "tpu.trace_start"() <{level = 10 : i32, message = "bqd,bkd->bqk"}> : () -> ()
    %cst_64 = arith.constant dense<0.000000e+00> : vector<8x30x30xf32>
    %223 = tpu.matmul %202, %212, %cst_64 {dimension_numbers = #tpu.dot_dimension_numbers<[2], [2], [1], [1], [0, 0, 0, 1, 1, 1], [0], [0]>} : vector<8x30x8xbf16>, vector<8x30x8xbf16>, vector<8x30x30xf32> -> vector<8x30x30xf32>
    "tpu.trace_stop"() : () -> ()
    %cst_65 = arith.constant dense<0xFF800000> : vector<8x30xf32>
    %224 = vector.multi_reduction <maximumf>, %223, %cst_65 [2] : vector<8x30x30xf32> to vector<8x30xf32>
    %225 = vector.shape_cast %224 : vector<8x30xf32> to vector<8x30x1xf32>
    %226 = vector.broadcast %225 : vector<8x30x1xf32> to vector<8x30x30xf32>
    %227 = arith.subf %223, %226 : vector<8x30x30xf32>
    %228 = math.exp %227 : vector<8x30x30xf32>
    %cst_66 = arith.constant dense<0.000000e+00> : vector<8x30xf32>
    %229 = vector.multi_reduction <add>, %228, %cst_66 [2] : vector<8x30x30xf32> to vector<8x30xf32>
    %230 = vector.shape_cast %229 : vector<8x30xf32> to vector<8x30x1xf32>
    %231 = tpu.reciprocal %230 {approx = true} : vector<8x30x1xf32> -> vector<8x30x1xf32>
    %232 = vector.broadcast %231 : vector<8x30x1xf32> to vector<8x30x30xf32>
    %233 = arith.mulf %228, %232 : vector<8x30x30xf32>
    %234 = arith.truncf %233 : vector<8x30x30xf32> to vector<8x30x30xbf16>
    "tpu.trace_start"() <{level = 10 : i32, message = "bqk,bkd->bqd"}> : () -> ()
    %cst_67 = arith.constant dense<0.000000e+00> : vector<8x30x8xf32>
    %235 = tpu.matmul %234, %222, %cst_67 {dimension_numbers = #tpu.dot_dimension_numbers<[2], [1], [1], [2], [0, 0, 0, 1, 1, 2], [0], [0]>} : vector<8x30x30xbf16>, vector<8x30x8xbf16>, vector<8x30x8xf32> -> vector<8x30x8xf32>
    "tpu.trace_stop"() : () -> ()
    %236 = arith.truncf %235 : vector<8x30x8xf32> to vector<8x30x8xbf16>
    %c1_68 = arith.constant 1 : index
    %c0_69 = arith.constant 0 : index
    %c0_70 = arith.constant 0 : index
    %c0_71 = arith.constant 0 : index
    %237 = vector.load %arg3[%c1_68, %c0_69, %c0_70, %c0_71] : memref<2x8x8x32xbf16, #tpu.memory_space<vmem>>, vector<1x8x8x32xbf16>
    %238 = vector.shape_cast %237 : vector<1x8x8x32xbf16> to vector<8x8x32xbf16>
    "tpu.trace_start"() <{level = 10 : i32, message = "bqd,bdk->bqk"}> : () -> ()
    %cst_72 = arith.constant dense<0.000000e+00> : vector<8x30x32xf32>
    %239 = tpu.matmul %236, %238, %cst_72 {dimension_numbers = #tpu.dot_dimension_numbers<[2], [1], [1], [2], [0, 0, 0, 1, 1, 2], [0], [0]>} : vector<8x30x8xbf16>, vector<8x8x32xbf16>, vector<8x30x32xf32> -> vector<8x30x32xf32>
    "tpu.trace_stop"() : () -> ()
    %240 = vector.extract_strided_slice %239 {offsets = [0, 0, 0], sizes = [4, 30, 32], strides = [1, 1, 1]} : vector<8x30x32xf32> to vector<4x30x32xf32>
    %cst_73 = arith.constant dense<0.000000e+00> : vector<30x32xf32>
    %241 = vector.multi_reduction <add>, %240, %cst_73 [0] : vector<4x30x32xf32> to vector<30x32xf32>
    %242 = vector.extract_strided_slice %239 {offsets = [4, 0, 0], sizes = [4, 30, 32], strides = [1, 1, 1]} : vector<8x30x32xf32> to vector<4x30x32xf32>
    %cst_74 = arith.constant dense<0.000000e+00> : vector<30x32xf32>
    %243 = vector.multi_reduction <add>, %242, %cst_74 [0] : vector<4x30x32xf32> to vector<30x32xf32>
    %244 = tpu.concatenate %241, %243 in 0 : vector<30x32xf32>, vector<30x32xf32> -> vector<60x32xf32>
    %c1_75 = arith.constant 1 : index
    %c0_76 = arith.constant 0 : index
    %c0_77 = arith.constant 0 : index
    %245 = vector.load %arg4[%c1_75, %c0_76, %c0_77] : memref<2x1x32xf32, #tpu.memory_space<vmem>>, vector<1x1x32xf32>
    %246 = vector.shape_cast %245 : vector<1x1x32xf32> to vector<1x32xf32>
    %247 = vector.broadcast %246 : vector<1x32xf32> to vector<60x32xf32>
    %248 = arith.addf %244, %247 : vector<60x32xf32>
    %249 = arith.addf %158, %248 : vector<60x32xf32>
    %c1_78 = arith.constant 1 : index
    %c0_79 = arith.constant 0 : index
    %c0_80 = arith.constant 0 : index
    %250 = vector.load %arg5[%c1_78, %c0_79, %c0_80] : memref<2x1x32xf32, #tpu.memory_space<vmem>>, vector<1x1x32xf32>
    %251 = vector.shape_cast %250 : vector<1x1x32xf32> to vector<1x32xf32>
    %c1_81 = arith.constant 1 : index
    %c0_82 = arith.constant 0 : index
    %c0_83 = arith.constant 0 : index
    %252 = vector.load %arg6[%c1_81, %c0_82, %c0_83] : memref<2x1x32xf32, #tpu.memory_space<vmem>>, vector<1x1x32xf32>
    %253 = vector.shape_cast %252 : vector<1x1x32xf32> to vector<1x32xf32>
    %cst_84 = arith.constant dense<0.000000e+00> : vector<60xf32>
    %254 = vector.multi_reduction <add>, %249, %cst_84 [1] : vector<60x32xf32> to vector<60xf32>
    %255 = vector.shape_cast %254 : vector<60xf32> to vector<60x1xf32>
    %cst_85 = arith.constant 3.200000e+01 : f32
    %256 = vector.broadcast %cst_85 : f32 to vector<60x1xf32>
    %257 = arith.divf %255, %256 : vector<60x1xf32>
    %258 = vector.broadcast %257 : vector<60x1xf32> to vector<60x32xf32>
    %259 = arith.subf %249, %258 : vector<60x32xf32>
    %260 = arith.mulf %259, %259 : vector<60x32xf32>
    %cst_86 = arith.constant dense<0.000000e+00> : vector<60xf32>
    %261 = vector.multi_reduction <add>, %260, %cst_86 [1] : vector<60x32xf32> to vector<60xf32>
    %262 = vector.shape_cast %261 : vector<60xf32> to vector<60x1xf32>
    %cst_87 = arith.constant 3.200000e+01 : f32
    %263 = vector.broadcast %cst_87 : f32 to vector<60x1xf32>
    %264 = arith.divf %262, %263 : vector<60x1xf32>
    %cst_88 = arith.constant 9.99999974E-6 : f32
    %265 = vector.broadcast %cst_88 : f32 to vector<60x1xf32>
    %266 = arith.addf %264, %265 : vector<60x1xf32>
    %267 = math.rsqrt %266 : vector<60x1xf32>
    %268 = vector.broadcast %267 : vector<60x1xf32> to vector<60x32xf32>
    %269 = arith.mulf %259, %268 : vector<60x32xf32>
    %270 = vector.broadcast %251 : vector<1x32xf32> to vector<60x32xf32>
    %271 = arith.mulf %269, %270 : vector<60x32xf32>
    %272 = vector.broadcast %253 : vector<1x32xf32> to vector<60x32xf32>
    %273 = arith.addf %271, %272 : vector<60x32xf32>
    %274 = arith.truncf %273 : vector<60x32xf32> to vector<60x32xbf16>
    %c1_89 = arith.constant 1 : index
    %c0_90 = arith.constant 0 : index
    %c0_91 = arith.constant 0 : index
    %275 = vector.load %arg9[%c1_89, %c0_90, %c0_91] : memref<2x32x2048xbf16, #tpu.memory_space<vmem>>, vector<1x32x2048xbf16>
    %276 = vector.shape_cast %275 : vector<1x32x2048xbf16> to vector<32x2048xbf16>
    %cst_92 = arith.constant dense<0.000000e+00> : vector<60x2048xf32>
    %277 = tpu.matmul %274, %276, %cst_92 {dimension_numbers = #tpu.dot_dimension_numbers<[1], [0], [0], [1], [0, 0, 1, 1], [], []>} : vector<60x32xbf16>, vector<32x2048xbf16>, vector<60x2048xf32> -> vector<60x2048xf32>
    %c1_93 = arith.constant 1 : index
    %c0_94 = arith.constant 0 : index
    %c0_95 = arith.constant 0 : index
    %278 = vector.load %arg10[%c1_93, %c0_94, %c0_95] : memref<2x1x2048xf32, #tpu.memory_space<vmem>>, vector<1x1x2048xf32>
    %279 = vector.shape_cast %278 : vector<1x1x2048xf32> to vector<1x2048xf32>
    %280 = vector.broadcast %279 : vector<1x2048xf32> to vector<60x2048xf32>
    %281 = arith.addf %277, %280 : vector<60x2048xf32>
    %cst_96 = arith.constant 0.000000e+00 : f32
    %282 = vector.broadcast %cst_96 : f32 to vector<60x2048xf32>
    %283 = arith.maximumf %281, %282 : vector<60x2048xf32>
    %284 = arith.truncf %283 : vector<60x2048xf32> to vector<60x2048xbf16>
    %c1_97 = arith.constant 1 : index
    %c0_98 = arith.constant 0 : index
    %c0_99 = arith.constant 0 : index
    %285 = vector.load %arg11[%c1_97, %c0_98, %c0_99] : memref<2x2048x32xbf16, #tpu.memory_space<vmem>>, vector<1x2048x32xbf16>
    %286 = vector.shape_cast %285 : vector<1x2048x32xbf16> to vector<2048x32xbf16>
    %cst_100 = arith.constant dense<0.000000e+00> : vector<60x32xf32>
    %287 = tpu.matmul %284, %286, %cst_100 {dimension_numbers = #tpu.dot_dimension_numbers<[1], [0], [0], [1], [0, 0, 1, 1], [], []>} : vector<60x2048xbf16>, vector<2048x32xbf16>, vector<60x32xf32> -> vector<60x32xf32>
    %c1_101 = arith.constant 1 : index
    %c0_102 = arith.constant 0 : index
    %c0_103 = arith.constant 0 : index
    %288 = vector.load %arg12[%c1_101, %c0_102, %c0_103] : memref<2x1x32xf32, #tpu.memory_space<vmem>>, vector<1x1x32xf32>
    %289 = vector.shape_cast %288 : vector<1x1x32xf32> to vector<1x32xf32>
    %290 = vector.broadcast %289 : vector<1x32xf32> to vector<60x32xf32>
    %291 = arith.addf %287, %290 : vector<60x32xf32>
    %292 = arith.addf %273, %291 : vector<60x32xf32>
    %c1_104 = arith.constant 1 : index
    %c0_105 = arith.constant 0 : index
    %c0_106 = arith.constant 0 : index
    %293 = vector.load %arg7[%c1_104, %c0_105, %c0_106] : memref<2x1x32xf32, #tpu.memory_space<vmem>>, vector<1x1x32xf32>
    %294 = vector.shape_cast %293 : vector<1x1x32xf32> to vector<1x32xf32>
    %c1_107 = arith.constant 1 : index
    %c0_108 = arith.constant 0 : index
    %c0_109 = arith.constant 0 : index
    %295 = vector.load %arg8[%c1_107, %c0_108, %c0_109] : memref<2x1x32xf32, #tpu.memory_space<vmem>>, vector<1x1x32xf32>
    %296 = vector.shape_cast %295 : vector<1x1x32xf32> to vector<1x32xf32>
    %cst_110 = arith.constant dense<0.000000e+00> : vector<60xf32>
    %297 = vector.multi_reduction <add>, %292, %cst_110 [1] : vector<60x32xf32> to vector<60xf32>
    %298 = vector.shape_cast %297 : vector<60xf32> to vector<60x1xf32>
    %cst_111 = arith.constant 3.200000e+01 : f32
    %299 = vector.broadcast %cst_111 : f32 to vector<60x1xf32>
    %300 = arith.divf %298, %299 : vector<60x1xf32>
    %301 = vector.broadcast %300 : vector<60x1xf32> to vector<60x32xf32>
    %302 = arith.subf %292, %301 : vector<60x32xf32>
    %303 = arith.mulf %302, %302 : vector<60x32xf32>
    %cst_112 = arith.constant dense<0.000000e+00> : vector<60xf32>
    %304 = vector.multi_reduction <add>, %303, %cst_112 [1] : vector<60x32xf32> to vector<60xf32>
    %305 = vector.shape_cast %304 : vector<60xf32> to vector<60x1xf32>
    %cst_113 = arith.constant 3.200000e+01 : f32
    %306 = vector.broadcast %cst_113 : f32 to vector<60x1xf32>
    %307 = arith.divf %305, %306 : vector<60x1xf32>
    %cst_114 = arith.constant 9.99999974E-6 : f32
    %308 = vector.broadcast %cst_114 : f32 to vector<60x1xf32>
    %309 = arith.addf %307, %308 : vector<60x1xf32>
    %310 = math.rsqrt %309 : vector<60x1xf32>
    %311 = vector.broadcast %310 : vector<60x1xf32> to vector<60x32xf32>
    %312 = arith.mulf %302, %311 : vector<60x32xf32>
    %313 = vector.broadcast %294 : vector<1x32xf32> to vector<60x32xf32>
    %314 = arith.mulf %312, %313 : vector<60x32xf32>
    %315 = vector.broadcast %296 : vector<1x32xf32> to vector<60x32xf32>
    %316 = arith.addf %314, %315 : vector<60x32xf32>
    %c0_115 = arith.constant 0 : index
    %c0_116 = arith.constant 0 : index
    %317 = vector.load %arg13[%c0_115, %c0_116] : memref<60x32xf32, #tpu.memory_space<vmem>>, vector<60x32xf32>
    tpu.vector_store %arg13[%c0_115, %c0_116], %316 {strides = array<i32>} : memref<60x32xf32, #tpu.memory_space<vmem>>, vector<60x32xf32>,
    return
  }
}

</mosaic_0001>

<llo_original>
// kernel: transformer_classifier_forward.3
$region0: #{transformer_classifier_forward.3}
  #allocation0 [shape = 'u32[]', space=smem, size = 0x4, offset = 0x4, fixed_abs, tag = 'smem constant byte address 0x4 - core index']
  #allocation1 [shape = 'u32[144,128]{1,0:T(1,128)}', space=vmem, size = 0x12000, scoped, tag = 'internal scratch']
  %s0 = inlined_call_operand.vmem [shape: f32[2,960], index: 0, kind: input, shape index: {}]
  %s1 = inlined_call_operand.vmem [shape: bf16[960,16], index: 1, kind: input, shape index: {}]
  %s2 = inlined_call_operand.vmem [shape: f32[1,16], index: 2, kind: input, shape index: {}]
  %s3 = inlined_call_operand.hbm [shape: f32[2,16], index: 3, kind: output, shape index: {}]
  %s4 = sld [smem:[#allocation0]]
  $region22: #{transformer_classifier_forward.3} parent=0
    _
  %s6 = ssub.s32 1, %s4
  %s7 = scalar_select 0, %s6, %s4
  $region1: #{transformer_classifier_forward.3} parent=0
    #allocation2 [shape = 'u8[1024]{0}', space=vmem, size = 0x400, scoped, tag = 'output window, operand 0, single buffered']
    #allocation3 [shape = 's32[1]{0}', space=sflag, size = 0x4, scoped, tag = 'scoped memory for transformer_classifier_forward.3']
    %8 = vsyncpa [#allocation3], 0
    // Predicated region
    $region2: #{transformer_classifier_forward.3} parent=1 // pred_check
      _
    $region3: #{transformer_classifier_forward.3} parent=1 // pred_check_branch
      %10 = sbr.rel (0) target = $region5
    $region4: #{transformer_classifier_forward.3} parent=1 // pred_region
      _
    $region5: #{transformer_classifier_forward.3} parent=1 // pred_fallthru
      _
    // Predicated region
    $region6: #{transformer_classifier_forward.3} parent=1 // pred_check
      _
    $region7: #{transformer_classifier_forward.3} parent=1 // pred_check_branch
      %12 = sbr.rel (0) target = $region9
    $region8: #{transformer_classifier_forward.3} parent=1 // pred_region
      _
    $region9: #{transformer_classifier_forward.3} parent=1 // pred_fallthru
      _
    // Predicated region
    $region10: #{transformer_classifier_forward.3} parent=1 // pred_check
      _
    $region11: #{transformer_classifier_forward.3} parent=1 // pred_check_branch
      %14 = sbr.rel (0) target = $region13
    $region12: #{transformer_classifier_forward.3} parent=1 // pred_region
      _
    $region13: #{transformer_classifier_forward.3} parent=1 // pred_fallthru
      _
    %v16 = vld [vmem:[%s0] sm:$0xff]
    %v17 = vld [vmem:[%s0 + $0x8] sm:$0xff]
    %v20 = vcombine.high %v16, %v16
    %v22 = vunpack.c.l.s4 1983009808
    %v23 = vunpack.c.0.s8 %v22
    %v24 = vlaneseq
    %v25 = vshrl.u32 %v24, 7
    %v26 = vsub.s32 %v23, %v25
    %v27 = vrot.slane %v16, %v26
    %v29 = vunpack.c.l.s4 1983009808
    %v30 = vunpack.c.0.s8 %v29
    %v31 = vlaneseq
    %v32 = vshrl.u32 %v31, 7
    %v33 = vsub.s32 %v30, %v32
    %v34 = vrot.slane %v20, %v33
    %v35 = vcombine.high %v27, %v27
    %v36 = vcombine.high %v34, %v34
    %v37 = vcombine.high %v17, %v17
    %v39 = vunpack.c.l.s4 1983009808
    %v40 = vunpack.c.0.s8 %v39
    %v41 = vlaneseq
    %v42 = vshrl.u32 %v41, 7
    %v43 = vsub.s32 %v40, %v42
    %v44 = vrot.slane %v17, %v43
    %v46 = vunpack.c.l.s4 1983009808
    %v47 = vunpack.c.0.s8 %v46
    %v48 = vlaneseq
    %v49 = vshrl.u32 %v48, 7
    %v50 = vsub.s32 %v47, %v49
    %v51 = vrot.slane %v37, %v50
    %v52 = vcombine.high %v44, %v44
    %v53 = vcombine.high %v51, %v51
    %v62 = vpack.c.bf16 %v27, %v27
    %v63 = vpack.c.bf16 %v35, %v35
    %v64 = vpack.c.bf16 %v34, %v34
    %v65 = vpack.c.bf16 %v36, %v36
    %v66 = vpack.c.bf16 %v44, %v44
    %v67 = vpack.c.bf16 %v52, %v52
    %v68 = vpack.c.bf16 %v51, %v51
    %v69 = vpack.c.bf16 %v53, %v53
    %v70 = vld [vmem:[%s1] sm:$0xf]
    %v71 = vld [vmem:[%s1 + $0x4] sm:$0xf]
    %v72 = vld [vmem:[%s1 + $0x8] sm:$0xf]
    %v73 = vld [vmem:[%s1 + $0xc] sm:$0xf]
    %v74 = vld [vmem:[%s1 + $0x10] sm:$0xf]
    %v75 = vld [vmem:[%s1 + $0x14] sm:$0xf]
    %v76 = vld [vmem:[%s1 + $0x18] sm:$0xf]
    %v77 = vld [vmem:[%s1 + $0x1c] sm:$0xf]
    %v78 = vld [vmem:[%s1 + $0x20] sm:$0xf]
    %v79 = vld [vmem:[%s1 + $0x24] sm:$0xf]
    %v80 = vld [vmem:[%s1 + $0x28] sm:$0xf]
    %v81 = vld [vmem:[%s1 + $0x2c] sm:$0xf]
    %v82 = vld [vmem:[%s1 + $0x30] sm:$0xf]
    %v83 = vld [vmem:[%s1 + $0x34] sm:$0xf]
    %v84 = vld [vmem:[%s1 + $0x38] sm:$0xf]
    %v85 = vld [vmem:[%s1 + $0x3c] sm:$0xf]
    %v86 = vld [vmem:[%s1 + $0x40] sm:$0xf]
    %v87 = vld [vmem:[%s1 + $0x44] sm:$0xf]
    %v88 = vld [vmem:[%s1 + $0x48] sm:$0xf]
    %v89 = vld [vmem:[%s1 + $0x4c] sm:$0xf]
    %v90 = vld [vmem:[%s1 + $0x50] sm:$0xf]
    %v91 = vld [vmem:[%s1 + $0x54] sm:$0xf]
    %v92 = vld [vmem:[%s1 + $0x58] sm:$0xf]
    %v93 = vld [vmem:[%s1 + $0x5c] sm:$0xf]
    %v94 = vld [vmem:[%s1 + $0x60] sm:$0xf]
    %v95 = vld [vmem:[%s1 + $0x64] sm:$0xf]
    %v96 = vld [vmem:[%s1 + $0x68] sm:$0xf]
    %v97 = vld [vmem:[%s1 + $0x6c] sm:$0xf]
    %v98 = vld [vmem:[%s1 + $0x70] sm:$0xf]
    %v99 = vld [vmem:[%s1 + $0x74] sm:$0xf]
    %v100 = vld [vmem:[%s1 + $0x78] sm:$0xf]
    %v101 = vld [vmem:[%s1 + $0x7c] sm:$0xf]
    %v102 = vld [vmem:[%s1 + $0x80] sm:$0xf]
    %v103 = vld [vmem:[%s1 + $0x84] sm:$0xf]
    %v104 = vld [vmem:[%s1 + $0x88] sm:$0xf]
    %v105 = vld [vmem:[%s1 + $0x8c] sm:$0xf]
    %v106 = vld [vmem:[%s1 + $0x90] sm:$0xf]
    %v107 = vld [vmem:[%s1 + $0x94] sm:$0xf]
    %v108 = vld [vmem:[%s1 + $0x98] sm:$0xf]
    %v109 = vld [vmem:[%s1 + $0x9c] sm:$0xf]
    %v110 = vld [vmem:[%s1 + $0xa0] sm:$0xf]
    %v111 = vld [vmem:[%s1 + $0xa4] sm:$0xf]
    %v112 = vld [vmem:[%s1 + $0xa8] sm:$0xf]
    %v113 = vld [vmem:[%s1 + $0xac] sm:$0xf]
    %v114 = vld [vmem:[%s1 + $0xb0] sm:$0xf]
    %v115 = vld [vmem:[%s1 + $0xb4] sm:$0xf]
    %v116 = vld [vmem:[%s1 + $0xb8] sm:$0xf]
    %v117 = vld [vmem:[%s1 + $0xbc] sm:$0xf]
    %v118 = vld [vmem:[%s1 + $0xc0] sm:$0xf]
    %v119 = vld [vmem:[%s1 + $0xc4] sm:$0xf]
    %v120 = vld [vmem:[%s1 + $0xc8] sm:$0xf]
    %v121 = vld [vmem:[%s1 + $0xcc] sm:$0xf]
    %v122 = vld [vmem:[%s1 + $0xd0] sm:$0xf]
    %v123 = vld [vmem:[%s1 + $0xd4] sm:$0xf]
    %v124 = vld [vmem:[%s1 + $0xd8] sm:$0xf]
    %v125 = vld [vmem:[%s1 + $0xdc] sm:$0xf]
    %v126 = vld [vmem:[%s1 + $0xe0] sm:$0xf]
    %v127 = vld [vmem:[%s1 + $0xe4] sm:$0xf]
    %v128 = vld [vmem:[%s1 + $0xe8] sm:$0xf]
    %v129 = vld [vmem:[%s1 + $0xec] sm:$0xf]
    %v130 = vld [vmem:[%s1 + $0xf0] sm:$0xf]
    %v131 = vld [vmem:[%s1 + $0xf4] sm:$0xf]
    %v132 = vld [vmem:[%s1 + $0xf8] sm:$0xf]
    %v133 = vld [vmem:[%s1 + $0xfc] sm:$0xf]
    %v134 = vld [vmem:[%s1 + $0x100] sm:$0xf]
    %v135 = vld [vmem:[%s1 + $0x104] sm:$0xf]
    %v136 = vld [vmem:[%s1 + $0x108] sm:$0xf]
    %v137 = vld [vmem:[%s1 + $0x10c] sm:$0xf]
    %v138 = vld [vmem:[%s1 + $0x110] sm:$0xf]
    %v139 = vld [vmem:[%s1 + $0x114] sm:$0xf]
    %v140 = vld [vmem:[%s1 + $0x118] sm:$0xf]
    %v141 = vld [vmem:[%s1 + $0x11c] sm:$0xf]
    %v142 = vld [vmem:[%s1 + $0x120] sm:$0xf]
    %v143 = vld [vmem:[%s1 + $0x124] sm:$0xf]
    %v144 = vld [vmem:[%s1 + $0x128] sm:$0xf]
    %v145 = vld [vmem:[%s1 + $0x12c] sm:$0xf]
    %v146 = vld [vmem:[%s1 + $0x130] sm:$0xf]
    %v147 = vld [vmem:[%s1 + $0x134] sm:$0xf]
    %v148 = vld [vmem:[%s1 + $0x138] sm:$0xf]
    %v149 = vld [vmem:[%s1 + $0x13c] sm:$0xf]
    %v150 = vld [vmem:[%s1 + $0x140] sm:$0xf]
    %v151 = vld [vmem:[%s1 + $0x144] sm:$0xf]
    %v152 = vld [vmem:[%s1 + $0x148] sm:$0xf]
    %v153 = vld [vmem:[%s1 + $0x14c] sm:$0xf]
    %v154 = vld [vmem:[%s1 + $0x150] sm:$0xf]
    %v155 = vld [vmem:[%s1 + $0x154] sm:$0xf]
    %v156 = vld [vmem:[%s1 + $0x158] sm:$0xf]
    %v157 = vld [vmem:[%s1 + $0x15c] sm:$0xf]
    %v158 = vld [vmem:[%s1 + $0x160] sm:$0xf]
    %v159 = vld [vmem:[%s1 + $0x164] sm:$0xf]
    %v160 = vld [vmem:[%s1 + $0x168] sm:$0xf]
    %v161 = vld [vmem:[%s1 + $0x16c] sm:$0xf]
    %v162 = vld [vmem:[%s1 + $0x170] sm:$0xf]
    %v163 = vld [vmem:[%s1 + $0x174] sm:$0xf]
    %v164 = vld [vmem:[%s1 + $0x178] sm:$0xf]
    %v165 = vld [vmem:[%s1 + $0x17c] sm:$0xf]
    %v166 = vld [vmem:[%s1 + $0x180] sm:$0xf]
    %v167 = vld [vmem:[%s1 + $0x184] sm:$0xf]
    %v168 = vld [vmem:[%s1 + $0x188] sm:$0xf]
    %v169 = vld [vmem:[%s1 + $0x18c] sm:$0xf]
    %v170 = vld [vmem:[%s1 + $0x190] sm:$0xf]
    %v171 = vld [vmem:[%s1 + $0x194] sm:$0xf]
    %v172 = vld [vmem:[%s1 + $0x198] sm:$0xf]
    %v173 = vld [vmem:[%s1 + $0x19c] sm:$0xf]
    %v174 = vld [vmem:[%s1 + $0x1a0] sm:$0xf]
    %v175 = vld [vmem:[%s1 + $0x1a4] sm:$0xf]
    %v176 = vld [vmem:[%s1 + $0x1a8] sm:$0xf]
    %v177 = vld [vmem:[%s1 + $0x1ac] sm:$0xf]
    %v178 = vld [vmem:[%s1 + $0x1b0] sm:$0xf]
    %v179 = vld [vmem:[%s1 + $0x1b4] sm:$0xf]
    %v180 = vld [vmem:[%s1 + $0x1b8] sm:$0xf]
    %v181 = vld [vmem:[%s1 + $0x1bc] sm:$0xf]
    %v182 = vld [vmem:[%s1 + $0x1c0] sm:$0xf]
    %v183 = vld [vmem:[%s1 + $0x1c4] sm:$0xf]
    %v184 = vld [vmem:[%s1 + $0x1c8] sm:$0xf]
    %v185 = vld [vmem:[%s1 + $0x1cc] sm:$0xf]
    %v186 = vld [vmem:[%s1 + $0x1d0] sm:$0xf]
    %v187 = vld [vmem:[%s1 + $0x1d4] sm:$0xf]
    %v188 = vld [vmem:[%s1 + $0x1d8] sm:$0xf]
    %v189 = vld [vmem:[%s1 + $0x1dc] sm:$0xf]
    %v190 = vld [vmem:[%s2] sm:$0x1]
    %v192 = vlaneseq
    %v193 = vshrl.u32 %v192, 7
    %v194 = vsub.s32 0, %v193
    %v195 = vrot.slane %v190, %v194
    %v317 = vunpack.c.l.b16 %v70
    %v318 = vunpack.c.l.b16 %v71
    %v319 = vunpack.c.l.b16 %v72
    %v320 = vunpack.c.l.b16 %v73
    %v321 = vunpack.c.l.b16 %v74
    %v322 = vunpack.c.l.b16 %v75
    %v323 = vunpack.c.l.b16 %v76
    %v324 = vunpack.c.l.b16 %v77
    %v325 = vunpack.c.l.b16 %v78
    %v326 = vunpack.c.l.b16 %v79
    %v327 = vunpack.c.l.b16 %v80
    %v328 = vunpack.c.l.b16 %v81
    %v329 = vunpack.c.l.b16 %v82
    %v330 = vunpack.c.l.b16 %v83
    %v331 = vunpack.c.l.b16 %v84
    %v332 = vunpack.c.l.b16 %v85
    %v333 = vunpack.c.l.b16 %v86
    %v334 = vunpack.c.l.b16 %v87
    %v335 = vunpack.c.l.b16 %v88
    %v336 = vunpack.c.l.b16 %v89
    %v337 = vunpack.c.l.b16 %v90
    %v338 = vunpack.c.l.b16 %v91
    %v339 = vunpack.c.l.b16 %v92
    %v340 = vunpack.c.l.b16 %v93
    %v341 = vunpack.c.l.b16 %v94
    %v342 = vunpack.c.l.b16 %v95
    %v343 = vunpack.c.l.b16 %v96
    %v344 = vunpack.c.l.b16 %v97
    %v345 = vunpack.c.l.b16 %v98
    %v346 = vunpack.c.l.b16 %v99
    %v347 = vunpack.c.l.b16 %v100
    %v348 = vunpack.c.l.b16 %v101
    %v349 = vunpack.c.l.b16 %v102
    %v350 = vunpack.c.l.b16 %v103
    %v351 = vunpack.c.l.b16 %v104
    %v352 = vunpack.c.l.b16 %v105
    %v353 = vunpack.c.l.b16 %v106
    %v354 = vunpack.c.l.b16 %v107
    %v355 = vunpack.c.l.b16 %v108
    %v356 = vunpack.c.l.b16 %v109
    %v357 = vunpack.c.l.b16 %v110
    %v358 = vunpack.c.l.b16 %v111
    %v359 = vunpack.c.l.b16 %v112
    %v360 = vunpack.c.l.b16 %v113
    %v361 = vunpack.c.l.b16 %v114
    %v362 = vunpack.c.l.b16 %v115
    %v363 = vunpack.c.l.b16 %v116
    %v364 = vunpack.c.l.b16 %v117
    %v365 = vunpack.c.l.b16 %v118
    %v366 = vunpack.c.l.b16 %v119
    %v367 = vunpack.c.l.b16 %v120
    %v368 = vunpack.c.l.b16 %v121
    %v369 = vunpack.c.l.b16 %v122
    %v370 = vunpack.c.l.b16 %v123
    %v371 = vunpack.c.l.b16 %v124
    %v372 = vunpack.c.l.b16 %v125
    %v373 = vunpack.c.l.b16 %v126
    %v374 = vunpack.c.l.b16 %v127
    %v375 = vunpack.c.l.b16 %v128
    %v376 = vunpack.c.l.b16 %v129
    %v377 = vunpack.c.l.b16 %v130
    %v378 = vunpack.c.l.b16 %v131
    %v379 = vunpack.c.l.b16 %v132
    %v380 = vunpack.c.l.b16 %v133
    %v381 = vunpack.c.l.b16 %v134
    %v382 = vunpack.c.l.b16 %v135
    %v383 = vunpack.c.l.b16 %v136
    %v384 = vunpack.c.l.b16 %v137
    %v385 = vunpack.c.l.b16 %v138
    %v386 = vunpack.c.l.b16 %v139
    %v387 = vunpack.c.l.b16 %v140
    %v388 = vunpack.c.l.b16 %v141
    %v389 = vunpack.c.l.b16 %v142
    %v390 = vunpack.c.l.b16 %v143
    %v391 = vunpack.c.l.b16 %v144
    %v392 = vunpack.c.l.b16 %v145
    %v393 = vunpack.c.l.b16 %v146
    %v394 = vunpack.c.l.b16 %v147
    %v395 = vunpack.c.l.b16 %v148
    %v396 = vunpack.c.l.b16 %v149
    %v397 = vunpack.c.l.b16 %v150
    %v398 = vunpack.c.l.b16 %v151
    %v399 = vunpack.c.l.b16 %v152
    %v400 = vunpack.c.l.b16 %v153
    %v401 = vunpack.c.l.b16 %v154
    %v402 = vunpack.c.l.b16 %v155
    %v403 = vunpack.c.l.b16 %v156
    %v404 = vunpack.c.l.b16 %v157
    %v405 = vunpack.c.l.b16 %v158
    %v406 = vunpack.c.l.b16 %v159
    %v407 = vunpack.c.l.b16 %v160
    %v408 = vunpack.c.l.b16 %v161
    %v409 = vunpack.c.l.b16 %v162
    %v410 = vunpack.c.l.b16 %v163
    %v411 = vunpack.c.l.b16 %v164
    %v412 = vunpack.c.l.b16 %v165
    %v413 = vunpack.c.l.b16 %v166
    %v414 = vunpack.c.l.b16 %v167
    %v415 = vunpack.c.l.b16 %v168
    %v416 = vunpack.c.l.b16 %v169
    %v417 = vunpack.c.l.b16 %v170
    %v418 = vunpack.c.l.b16 %v171
    %v419 = vunpack.c.l.b16 %v172
    %v420 = vunpack.c.l.b16 %v173
    %v421 = vunpack.c.l.b16 %v174
    %v422 = vunpack.c.l.b16 %v175
    %v423 = vunpack.c.l.b16 %v176
    %v424 = vunpack.c.l.b16 %v177
    %v425 = vunpack.c.l.b16 %v178
    %v426 = vunpack.c.l.b16 %v179
    %v427 = vunpack.c.l.b16 %v180
    %v428 = vunpack.c.l.b16 %v181
    %v429 = vunpack.c.l.b16 %v182
    %v430 = vunpack.c.l.b16 %v183
    %v431 = vunpack.c.l.b16 %v184
    %v432 = vunpack.c.l.b16 %v185
    %v433 = vunpack.c.l.b16 %v186
    %v434 = vunpack.c.l.b16 %v187
    %v435 = vunpack.c.l.b16 %v188
    %v436 = vunpack.c.l.b16 %v189
    %v437 = vpack.c.b16 %v318, %v317
    %v438 = vpack.c.b16 %v320, %v319
    %v439 = vpack.c.b16 %v322, %v321
    %v440 = vpack.c.b16 %v324, %v323
    %v441 = vpack.c.b16 %v326, %v325
    %v442 = vpack.c.b16 %v328, %v327
    %v443 = vpack.c.b16 %v330, %v329
    %v444 = vpack.c.b16 %v332, %v331
    %v445 = vpack.c.b16 %v334, %v333
    %v446 = vpack.c.b16 %v336, %v335
    %v447 = vpack.c.b16 %v338, %v337
    %v448 = vpack.c.b16 %v340, %v339
    %v449 = vpack.c.b16 %v342, %v341
    %v450 = vpack.c.b16 %v344, %v343
    %v451 = vpack.c.b16 %v346, %v345
    %v452 = vpack.c.b16 %v348, %v347
    %v453 = vpack.c.b16 %v350, %v349
    %v454 = vpack.c.b16 %v352, %v351
    %v455 = vpack.c.b16 %v354, %v353
    %v456 = vpack.c.b16 %v356, %v355
    %v457 = vpack.c.b16 %v358, %v357
    %v458 = vpack.c.b16 %v360, %v359
    %v459 = vpack.c.b16 %v362, %v361
    %v460 = vpack.c.b16 %v364, %v363
    %v461 = vpack.c.b16 %v366, %v365
    %v462 = vpack.c.b16 %v368, %v367
    %v463 = vpack.c.b16 %v370, %v369
    %v464 = vpack.c.b16 %v372, %v371
    %v465 = vpack.c.b16 %v374, %v373
    %v466 = vpack.c.b16 %v376, %v375
    %v467 = vpack.c.b16 %v378, %v377
    %v468 = vpack.c.b16 %v380, %v379
    %v469 = vpack.c.b16 %v382, %v381
    %v470 = vpack.c.b16 %v384, %v383
    %v471 = vpack.c.b16 %v386, %v385
    %v472 = vpack.c.b16 %v388, %v387
    %v473 = vpack.c.b16 %v390, %v389
    %v474 = vpack.c.b16 %v392, %v391
    %v475 = vpack.c.b16 %v394, %v393
    %v476 = vpack.c.b16 %v396, %v395
    %v477 = vpack.c.b16 %v398, %v397
    %v478 = vpack.c.b16 %v400, %v399
    %v479 = vpack.c.b16 %v402, %v401
    %v480 = vpack.c.b16 %v404, %v403
    %v481 = vpack.c.b16 %v406, %v405
    %v482 = vpack.c.b16 %v408, %v407
    %v483 = vpack.c.b16 %v410, %v409
    %v484 = vpack.c.b16 %v412, %v411
    %v485 = vpack.c.b16 %v414, %v413
    %v486 = vpack.c.b16 %v416, %v415
    %v487 = vpack.c.b16 %v418, %v417
    %v488 = vpack.c.b16 %v420, %v419
    %v489 = vpack.c.b16 %v422, %v421
    %v490 = vpack.c.b16 %v424, %v423
    %v491 = vpack.c.b16 %v426, %v425
    %v492 = vpack.c.b16 %v428, %v427
    %v493 = vpack.c.b16 %v430, %v429
    %v494 = vpack.c.b16 %v432, %v431
    %v495 = vpack.c.b16 %v434, %v433
    %v496 = vpack.c.b16 %v436, %v435
    %vm557 = vcmask 523264
    %v559 = vsel %vm557, %v69, 0
    %561 = vmatprep.subr.bf16.mxu0 0
    %562 = vmatpush1.bf16.msra.mxu0 %v444
    %563 = vmatprep.subr.bf16.mxu0 0
    %564 = vmatpush1.bf16.msra.mxu0 %v443
    %565 = vmatprep.subr.bf16.mxu0 0
    %566 = vmatpush1.bf16.msra.mxu0 %v442
    %567 = vmatprep.subr.bf16.mxu0 0
    %568 = vmatpush1.bf16.msra.mxu0 %v441
    %569 = vmatprep.subr.bf16.mxu0 0
    %570 = vmatpush1.bf16.msra.mxu0 %v440
    %571 = vmatprep.subr.bf16.mxu0 0
    %572 = vmatpush1.bf16.msra.mxu0 %v439
    %573 = vmatprep.subr.bf16.mxu0 0
    %574 = vmatpush1.bf16.msra.mxu0 %v438
    %575 = vmatprep.subr.bf16.mxu0 0
    %576 = vmatpush1.bf16.msra.mxu0 %v437
    %577 = vmatprep.subr.bf16.mxu0 0
    %578 = vmatpush2.bf16.msra.mxu0 %v452
    %579 = vmatprep.subr.bf16.mxu0 0
    %580 = vmatpush2.bf16.msra.mxu0 %v451
    %581 = vmatprep.subr.bf16.mxu0 0
    %582 = vmatpush2.bf16.msra.mxu0 %v450
    %583 = vmatprep.subr.bf16.mxu0 0
    %584 = vmatpush2.bf16.msra.mxu0 %v449
    %585 = vmatprep.subr.bf16.mxu0 0
    %586 = vmatpush2.bf16.msra.mxu0 %v448
    %587 = vmatprep.subr.bf16.mxu0 0
    %588 = vmatpush2.bf16.msra.mxu0 %v447
    %589 = vmatprep.subr.bf16.mxu0 0
    %590 = vmatpush2.bf16.msra.mxu0 %v446
    %591 = vmatprep.subr.bf16.mxu0 0
    %592 = vmatpush2.bf16.msra.mxu0 %v445
    %593 = vmatprep.mubr.bf16.mxu0 %v63
    %594 = vmatmul.mubr.bf16.gmra.mxu0 %v62
    %v595 = vpop.f32.mrf.mxu0
    %v596 = vadd.f32 %v195, %v595
    %v597 = vpop.f32.mrf.mxu0
    %v598 = vpop.f32.mrf.mxu0
    %v599 = vpop.f32.mrf.mxu0
    %600 = vdwg.mxu0
    %601 = vmatprep.subr.bf16.mxu0 0
    %602 = vmatpush1.bf16.msra.mxu0 %v460
    %603 = vmatprep.subr.bf16.mxu0 0
    %604 = vmatpush1.bf16.msra.mxu0 %v459
    %605 = vmatprep.subr.bf16.mxu0 0
    %606 = vmatpush1.bf16.msra.mxu0 %v458
    %607 = vmatprep.subr.bf16.mxu0 0
    %608 = vmatpush1.bf16.msra.mxu0 %v457
    %609 = vmatprep.subr.bf16.mxu0 0
    %610 = vmatpush1.bf16.msra.mxu0 %v456
    %611 = vmatprep.subr.bf16.mxu0 0
    %612 = vmatpush1.bf16.msra.mxu0 %v455
    %613 = vmatprep.subr.bf16.mxu0 0
    %614 = vmatpush1.bf16.msra.mxu0 %v454
    %615 = vmatprep.subr.bf16.mxu0 0
    %616 = vmatpush1.bf16.msra.mxu0 %v453
    %617 = vmatprep.subr.bf16.mxu0 0
    %618 = vmatpush2.bf16.msra.mxu0 %v468
    %619 = vmatprep.subr.bf16.mxu0 0
    %620 = vmatpush2.bf16.msra.mxu0 %v467
    %621 = vmatprep.subr.bf16.mxu0 0
    %622 = vmatpush2.bf16.msra.mxu0 %v466
    %623 = vmatprep.subr.bf16.mxu0 0
    %624 = vmatpush2.bf16.msra.mxu0 %v465
    %625 = vmatprep.subr.bf16.mxu0 0
    %626 = vmatpush2.bf16.msra.mxu0 %v464
    %627 = vmatprep.subr.bf16.mxu0 0
    %628 = vmatpush2.bf16.msra.mxu0 %v463
    %629 = vmatprep.subr.bf16.mxu0 0
    %630 = vmatpush2.bf16.msra.mxu0 %v462
    %631 = vmatprep.subr.bf16.mxu0 0
    %632 = vmatpush2.bf16.msra.mxu0 %v461
    %633 = vmatprep.mubr.bf16.mxu0 %v65
    %634 = vmatmul.mubr.bf16.gmra.mxu0 %v64
    %v635 = vpop.f32.mrf.mxu0
    %v636 = vadd.f32 %v596, %v635
    %v637 = vpop.f32.mrf.mxu0
    %v638 = vpop.f32.mrf.mxu0
    %v639 = vpop.f32.mrf.mxu0
    %640 = vdwg.mxu0
    %641 = vmatprep.subr.bf16.mxu0 0
    %642 = vmatpush1.bf16.msra.mxu0 %v476
    %643 = vmatprep.subr.bf16.mxu0 0
    %644 = vmatpush1.bf16.msra.mxu0 %v475
    %645 = vmatprep.subr.bf16.mxu0 0
    %646 = vmatpush1.bf16.msra.mxu0 %v474
    %647 = vmatprep.subr.bf16.mxu0 0
    %648 = vmatpush1.bf16.msra.mxu0 %v473
    %649 = vmatprep.subr.bf16.mxu0 0
    %650 = vmatpush1.bf16.msra.mxu0 %v472
    %651 = vmatprep.subr.bf16.mxu0 0
    %652 = vmatpush1.bf16.msra.mxu0 %v471
    %653 = vmatprep.subr.bf16.mxu0 0
    %654 = vmatpush1.bf16.msra.mxu0 %v470
    %655 = vmatprep.subr.bf16.mxu0 0
    %656 = vmatpush1.bf16.msra.mxu0 %v469
    %657 = vmatprep.subr.bf16.mxu0 0
    %658 = vmatpush2.bf16.msra.mxu0 %v484
    %659 = vmatprep.subr.bf16.mxu0 0
    %660 = vmatpush2.bf16.msra.mxu0 %v483
    %661 = vmatprep.subr.bf16.mxu0 0
    %662 = vmatpush2.bf16.msra.mxu0 %v482
    %663 = vmatprep.subr.bf16.mxu0 0
    %664 = vmatpush2.bf16.msra.mxu0 %v481
    %665 = vmatprep.subr.bf16.mxu0 0
    %666 = vmatpush2.bf16.msra.mxu0 %v480
    %667 = vmatprep.subr.bf16.mxu0 0
    %668 = vmatpush2.bf16.msra.mxu0 %v479
    %669 = vmatprep.subr.bf16.mxu0 0
    %670 = vmatpush2.bf16.msra.mxu0 %v478
    %671 = vmatprep.subr.bf16.mxu0 0
    %672 = vmatpush2.bf16.msra.mxu0 %v477
    %673 = vmatprep.mubr.bf16.mxu0 %v67
    %674 = vmatmul.mubr.bf16.gmra.mxu0 %v66
    %v675 = vpop.f32.mrf.mxu0
    %v676 = vadd.f32 %v636, %v675
    %v677 = vpop.f32.mrf.mxu0
    %v678 = vpop.f32.mrf.mxu0
    %v679 = vpop.f32.mrf.mxu0
    %680 = vdwg.mxu0
    %681 = vmatprep.subr.bf16.mxu0 0
    %682 = vmatpush1.bf16.msra.mxu0 %v492
    %683 = vmatprep.subr.bf16.mxu0 0
    %684 = vmatpush1.bf16.msra.mxu0 %v491
    %685 = vmatprep.subr.bf16.mxu0 0
    %686 = vmatpush1.bf16.msra.mxu0 %v490
    %687 = vmatprep.subr.bf16.mxu0 0
    %688 = vmatpush1.bf16.msra.mxu0 %v489
    %689 = vmatprep.subr.bf16.mxu0 0
    %690 = vmatpush1.bf16.msra.mxu0 %v488
    %691 = vmatprep.subr.bf16.mxu0 0
    %692 = vmatpush1.bf16.msra.mxu0 %v487
    %693 = vmatprep.subr.bf16.mxu0 0
    %694 = vmatpush1.bf16.msra.mxu0 %v486
    %695 = vmatprep.subr.bf16.mxu0 0
    %696 = vmatpush1.bf16.msra.mxu0 %v485
    %697 = vmatprep.subr.bf16.mxu0 0
    %698 = vmatpush2.bf16.msra.mxu0 0
    %699 = vmatprep.subr.bf16.mxu0 0
    %700 = vmatpush2.bf16.msra.mxu0 0
    %701 = vmatprep.subr.bf16.mxu0 0
    %702 = vmatpush2.bf16.msra.mxu0 0
    %703 = vmatprep.subr.bf16.mxu0 0
    %704 = vmatpush2.bf16.msra.mxu0 0
    %705 = vmatprep.subr.bf16.mxu0 0
    %706 = vmatpush2.bf16.msra.mxu0 %v496
    %707 = vmatprep.subr.bf16.mxu0 0
    %708 = vmatpush2.bf16.msra.mxu0 %v495
    %709 = vmatprep.subr.bf16.mxu0 0
    %710 = vmatpush2.bf16.msra.mxu0 %v494
    %711 = vmatprep.subr.bf16.mxu0 0
    %712 = vmatpush2.bf16.msra.mxu0 %v493
    %713 = vmatprep.mubr.bf16.mxu0 %v559
    %714 = vmatmul.mubr.bf16.gmra.mxu0 %v68
    %v715 = vpop.f32.mrf.mxu0
    %v716 = vadd.f32 %v676, %v715
    %v717 = vpop.f32.mrf.mxu0
    %v718 = vpop.f32.mrf.mxu0
    %v719 = vpop.f32.mrf.mxu0
    %720 = vdwg.mxu0
    %vm721 = vcmask 123904
    %722 = vst.msk [vmem:[#allocation2] sm:$0x3] %vm721, %v716
    // Predicated region
    $region14: #{transformer_classifier_forward.3} parent=1 // pred_check
      _
    $region15: #{transformer_classifier_forward.3} parent=1 // pred_check_branch
      %724 = sbr.rel (0) target = $region17
    $region16: #{transformer_classifier_forward.3} parent=1 // pred_region
      %s726 = ssub.s32 32, 32
      %727 = vsyncadd [#allocation3], %s726
      %s729 = sshll.u32 [#allocation2], 4
      %s730 = int_to_ptr.vmem [resolvable:$true] %s729
      %732 = dma.vmem_to_hbm [thread:$0]  %s730, 32, %s3, [#allocation3]
    $region17: #{transformer_classifier_forward.3} parent=1 // pred_fallthru
      _
    // Predicated region
    $region18: #{transformer_classifier_forward.3} parent=1 // pred_check
      _
    $region19: #{transformer_classifier_forward.3} parent=1 // pred_check_branch
      %734 = sbr.rel (0) target = $region21
    $region20: #{transformer_classifier_forward.3} parent=1 // pred_region
      %735 = dma.done [#allocation3], 32
    $region21: #{transformer_classifier_forward.3} parent=1 // pred_fallthru
      _
    %736 = vsyncpa [#allocation3], 1

// kernel: transformer_classifier_forward.2
$region0: #{transformer_classifier_forward.2}
  #allocation0 [shape = 'u32[]', space=smem, size = 0x4, offset = 0x4, fixed_abs, tag = 'smem constant byte address 0x4 - core index']
  #allocation1 [shape = 'u32[144,128]{1,0:T(1,128)}', space=vmem, size = 0x12000, scoped, tag = 'internal scratch']
  %s0 = inlined_call_operand.vmem [shape: f32[60,32], index: 0, kind: input, shape index: {}]
  %s1 = inlined_call_operand.vmem [shape: bf16[2,32,96], index: 1, kind: input, shape index: {}]
  %s2 = inlined_call_operand.vmem [shape: f32[2,1,96], index: 2, kind: input, shape index: {}]
  %s3 = inlined_call_operand.vmem [shape: bf16[2,8,8,32], index: 3, kind: input, shape index: {}]
  %s4 = inlined_call_operand.vmem [shape: f32[2,1,32], index: 4, kind: input, shape index: {}]
  %s5 = inlined_call_operand.vmem [shape: f32[2,1,32], index: 5, kind: input, shape index: {}]
  %s6 = inlined_call_operand.vmem [shape: f32[2,1,32], index: 6, kind: input, shape index: {}]
  %s7 = inlined_call_operand.vmem [shape: f32[2,1,32], index: 7, kind: input, shape index: {}]
  %s8 = inlined_call_operand.vmem [shape: f32[2,1,32], index: 8, kind: input, shape index: {}]
  %s9 = inlined_call_operand.vmem [shape: bf16[2,32,2048], index: 9, kind: input, shape index: {}]
  %s10 = inlined_call_operand.vmem [shape: f32[2,1,2048], index: 10, kind: input, shape index: {}]
  %s11 = inlined_call_operand.vmem [shape: bf16[2,2048,32], index: 11, kind: input, shape index: {}]
  %s12 = inlined_call_operand.vmem [shape: f32[2,1,32], index: 12, kind: input, shape index: {}]
  %s13 = inlined_call_operand.vmem [shape: f32[60,32], index: 13, kind: output, shape index: {}]
  %s14 = sld [smem:[#allocation0]]
  $region62: #{transformer_classifier_forward.2} parent=0
    _
  %s16 = ssub.s32 1, %s14
  %s17 = scalar_select 0, %s16, %s14
  // Predicated region
  $region2: #{transformer_classifier_forward.2} parent=0 // pred_check
    _
  $region3: #{transformer_classifier_forward.2} parent=0 // pred_check_branch
    %19 = sbr.rel (0) target = $region5
  $region4: #{transformer_classifier_forward.2} parent=0 // pred_region
    _
  $region5: #{transformer_classifier_forward.2} parent=0 // pred_fallthru
    _
  // Predicated region
  $region6: #{transformer_classifier_forward.2} parent=0 // pred_check
    _
  $region7: #{transformer_classifier_forward.2} parent=0 // pred_check_branch
    %21 = sbr.rel (0) target = $region9
  $region8: #{transformer_classifier_forward.2} parent=0 // pred_region
    _
  $region9: #{transformer_classifier_forward.2} parent=0 // pred_fallthru
    _
  // Predicated region
  $region10: #{transformer_classifier_forward.2} parent=0 // pred_check
    _
  $region11: #{transformer_classifier_forward.2} parent=0 // pred_check_branch
    %23 = sbr.rel (0) target = $region13
  $region12: #{transformer_classifier_forward.2} parent=0 // pred_region
    _
  $region13: #{transformer_classifier_forward.2} parent=0 // pred_fallthru
    _
  // Predicated region
  $region14: #{transformer_classifier_forward.2} parent=0 // pred_check
    _
  $region15: #{transformer_classifier_forward.2} parent=0 // pred_check_branch
    %25 = sbr.rel (0) target = $region17
  $region16: #{transformer_classifier_forward.2} parent=0 // pred_region
    _
  $region17: #{transformer_classifier_forward.2} parent=0 // pred_fallthru
    _
  // Predicated region
  $region18: #{transformer_classifier_forward.2} parent=0 // pred_check
    _
  $region19: #{transformer_classifier_forward.2} parent=0 // pred_check_branch
    %27 = sbr.rel (0) target = $region21
  $region20: #{transformer_classifier_forward.2} parent=0 // pred_region
    _
  $region21: #{transformer_classifier_forward.2} parent=0 // pred_fallthru
    _
  // Predicated region
  $region22: #{transformer_classifier_forward.2} parent=0 // pred_check
    _
  $region23: #{transformer_classifier_forward.2} parent=0 // pred_check_branch
    %29 = sbr.rel (0) target = $region25
  $region24: #{transformer_classifier_forward.2} parent=0 // pred_region
    _
  $region25: #{transformer_classifier_forward.2} parent=0 // pred_fallthru
    _
  // Predicated region
  $region26: #{transformer_classifier_forward.2} parent=0 // pred_check
    _
  $region27: #{transformer_classifier_forward.2} parent=0 // pred_check_branch
    %31 = sbr.rel (0) target = $region29
  $region28: #{transformer_classifier_forward.2} parent=0 // pred_region
    _
  $region29: #{transformer_classifier_forward.2} parent=0 // pred_fallthru
    _
  // Predicated region
  $region30: #{transformer_classifier_forward.2} parent=0 // pred_check
    _
  $region31: #{transformer_classifier_forward.2} parent=0 // pred_check_branch
    %33 = sbr.rel (0) target = $region33
  $region32: #{transformer_classifier_forward.2} parent=0 // pred_region
    _
  $region33: #{transformer_classifier_forward.2} parent=0 // pred_fallthru
    _
  // Predicated region
  $region34: #{transformer_classifier_forward.2} parent=0 // pred_check
    _
  $region35: #{transformer_classifier_forward.2} parent=0 // pred_check_branch
    %35 = sbr.rel (0) target = $region37
  $region36: #{transformer_classifier_forward.2} parent=0 // pred_region
    _
  $region37: #{transformer_classifier_forward.2} parent=0 // pred_fallthru
    _
  // Predicated region
  $region38: #{transformer_classifier_forward.2} parent=0 // pred_check
    _
  $region39: #{transformer_classifier_forward.2} parent=0 // pred_check_branch
    %37 = sbr.rel (0) target = $region41
  $region40: #{transformer_classifier_forward.2} parent=0 // pred_region
    _
  $region41: #{transformer_classifier_forward.2} parent=0 // pred_fallthru
    _
  // Predicated region
  $region42: #{transformer_classifier_forward.2} parent=0 // pred_check
    _
  $region43: #{transformer_classifier_forward.2} parent=0 // pred_check_branch
    %39 = sbr.rel (0) target = $region45
  $region44: #{transformer_classifier_forward.2} parent=0 // pred_region
    _
  $region45: #{transformer_classifier_forward.2} parent=0 // pred_fallthru
    _
  // Predicated region
  $region46: #{transformer_classifier_forward.2} parent=0 // pred_check
    _
  $region47: #{transformer_classifier_forward.2} parent=0 // pred_check_branch
    %41 = sbr.rel (0) target = $region49
  $region48: #{transformer_classifier_forward.2} parent=0 // pred_region
    _
  $region49: #{transformer_classifier_forward.2} parent=0 // pred_fallthru
    _
  // Predicated region
  $region50: #{transformer_classifier_forward.2} parent=0 // pred_check
    _
  $region51: #{transformer_classifier_forward.2} parent=0 // pred_check_branch
    %43 = sbr.rel (0) target = $region53
  $region52: #{transformer_classifier_forward.2} parent=0 // pred_region
    _
  $region53: #{transformer_classifier_forward.2} parent=0 // pred_fallthru
    _
  %v45 = vld [vmem:[%s0] sm:$0xff]
  %v46 = vld [vmem:[%s0 + $0x8] sm:$0xff]
  %v47 = vld [vmem:[%s0 + $0x10] sm:$0xff]
  %v48 = vld [vmem:[%s0 + $0x18] sm:$0xff]
  %v49 = vld [vmem:[%s0 + $0x20] sm:$0xff]
  %v50 = vld [vmem:[%s0 + $0x28] sm:$0xff]
  %v51 = vld [vmem:[%s0 + $0x30] sm:$0xff]
  %v52 = vld [vmem:[%s0 + $0x38] sm:$0xf]
  %v53 = vpack.c.bf16 %v46, %v45
  %v54 = vpack.c.bf16 %v48, %v47
  %v55 = vpack.c.bf16 %v50, %v49
  %v56 = vpack.c.bf16 %v52, %v51
  %v57 = vld [vmem:[%s1] sm:$0xf]
  %v58 = vld [vmem:[%s1 + $0x4] sm:$0xf]
  %v59 = vld [vmem:[%s1 + $0x8] sm:$0xf]
  %v60 = vld [vmem:[%s1 + $0xc] sm:$0xf]
  %v61 = vld [vmem:[%s2] sm:$0x1]
  %v63 = vlaneseq
  %v64 = vshrl.u32 %v63, 7
  %v65 = vsub.s32 0, %v64
  %v66 = vrot.slane %v61, %v65
  %v72 = vunpack.c.l.b16 %v57
  %v73 = vunpack.c.l.b16 %v58
  %v74 = vunpack.c.l.b16 %v59
  %v75 = vunpack.c.l.b16 %v60
  %v76 = vpack.c.b16 %v73, %v72
  %v77 = vpack.c.b16 %v75, %v74
  %vm80 = vcmask 261120
  %v82 = vsel %vm80, %v53, 0
  %v85 = vsel %vm80, %v54, 0
  %v88 = vsel %vm80, %v55, 0
  %v91 = vsel %vm80, %v56, 0
  %93 = vmatprep.subr.bf16.mxu0 0
  %94 = vmatpush1.bf16.msra.mxu0 0
  %95 = vmatprep.subr.bf16.mxu0 0
  %96 = vmatpush1.bf16.msra.mxu0 0
  %97 = vmatprep.subr.bf16.mxu0 0
  %98 = vmatpush1.bf16.msra.mxu0 0
  %99 = vmatprep.subr.bf16.mxu0 0
  %100 = vmatpush1.bf16.msra.mxu0 0
  %101 = vmatprep.subr.bf16.mxu0 0
  %102 = vmatpush1.bf16.msra.mxu0 0
  %103 = vmatprep.subr.bf16.mxu0 0
  %104 = vmatpush1.bf16.msra.mxu0 0
  %105 = vmatprep.subr.bf16.mxu0 0
  %106 = vmatpush1.bf16.msra.mxu0 %v77
  %107 = vmatprep.subr.bf16.mxu0 0
  %108 = vmatpush1.bf16.msra.mxu0 %v76
  %109 = vmatprep.subr.bf16.mxu0 0
  %110 = vmatpush2.bf16.msra.mxu0 0
  %111 = vmatprep.subr.bf16.mxu0 0
  %112 = vmatpush2.bf16.msra.mxu0 0
  %113 = vmatprep.subr.bf16.mxu0 0
  %114 = vmatpush2.bf16.msra.mxu0 0
  %115 = vmatprep.subr.bf16.mxu0 0
  %116 = vmatpush2.bf16.msra.mxu0 0
  %117 = vmatprep.subr.bf16.mxu0 0
  %118 = vmatpush2.bf16.msra.mxu0 0
  %119 = vmatprep.subr.bf16.mxu0 0
  %120 = vmatpush2.bf16.msra.mxu0 0
  %121 = vmatprep.subr.bf16.mxu0 0
  %122 = vmatpush2.bf16.msra.mxu0 0
  %123 = vmatprep.subr.bf16.mxu0 0
  %124 = vmatpush2.bf16.msra.mxu0 0
  %125 = vmatprep.mubr.bf16.mxu0 0
  %126 = vmatmul.mubr.bf16.gmra.mxu0 %v82
  %v127 = vpop.f32.mrf.mxu0
  %v128 = vadd.f32 %v66, %v127
  %v129 = vpop.f32.mrf.mxu0
  %v130 = vpop.f32.mrf.mxu0
  %v131 = vadd.f32 %v66, %v130
  %v132 = vpop.f32.mrf.mxu0
  %133 = vmatprep.mubr.bf16.mxu0 0
  %134 = vmatmul.mubr.bf16.gmra.mxu0 %v85
  %v135 = vpop.f32.mrf.mxu0
  %v136 = vadd.f32 %v66, %v135
  %v137 = vpop.f32.mrf.mxu0
  %v138 = vpop.f32.mrf.mxu0
  %v139 = vadd.f32 %v66, %v138
  %v140 = vpop.f32.mrf.mxu0
  %141 = vmatprep.mubr.bf16.mxu0 0
  %142 = vmatmul.mubr.bf16.gmra.mxu0 %v88
  %v143 = vpop.f32.mrf.mxu0
  %v144 = vadd.f32 %v66, %v143
  %v145 = vpop.f32.mrf.mxu0
  %v146 = vpop.f32.mrf.mxu0
  %v147 = vadd.f32 %v66, %v146
  %v148 = vpop.f32.mrf.mxu0
  %149 = vmatprep.mubr.bf16.mxu0 0
  %150 = vmatmul.mubr.bf16.gmra.mxu0 %v91
  %v151 = vpop.f32.mrf.mxu0
  %v152 = vadd.f32 %v66, %v151
  %v153 = vpop.f32.mrf.mxu0
  %v154 = vpop.f32.mrf.mxu0
  %v155 = vadd.f32 %v66, %v154
  %v156 = vpop.f32.mrf.mxu0
  %157 = vdwg.mxu0
  %162 = vrot.lane.b32.xlu0 %v128, 120
  %v163 = vpop.permute.xlu0 %162
  %164 = vrot.lane.b32.xlu0 %v131, 120
  %v165 = vpop.permute.xlu0 %164
  %166 = vrot.lane.b32.xlu0 %v136, 120
  %v167 = vpop.permute.xlu0 %166
  %168 = vrot.lane.b32.xlu0 %v139, 120
  %v169 = vpop.permute.xlu0 %168
  %174 = vrot.lane.b32.xlu0 %v128, 112
  %v175 = vpop.permute.xlu0 %174
  %176 = vrot.lane.b32.xlu0 %v131, 112
  %v177 = vpop.permute.xlu0 %176
  %178 = vrot.lane.b32.xlu0 %v136, 112
  %v179 = vpop.permute.xlu0 %178
  %180 = vrot.lane.b32.xlu0 %v139, 112
  %v181 = vpop.permute.xlu0 %180
  %186 = vrot.lane.b32.xlu0 %v128, 104
  %v187 = vpop.permute.xlu0 %186
  %188 = vrot.lane.b32.xlu0 %v131, 104
  %v189 = vpop.permute.xlu0 %188
  %190 = vrot.lane.b32.xlu0 %v136, 104
  %v191 = vpop.permute.xlu0 %190
  %192 = vrot.lane.b32.xlu0 %v139, 104
  %v193 = vpop.permute.xlu0 %192
  %vm202 = vcmask 1041408
  %v203 = vrot.slane %v139, 6
  %v204 = vrot.slane %v144, 6
  %v205 = vsel %vm202, %v203, %v204
  %v206 = vrot.slane %v147, 6
  %v207 = vsel %vm202, %v204, %v206
  %v208 = vrot.slane %v152, 6
  %v209 = vsel %vm202, %v206, %v208
  %v210 = vrot.slane %v155, 6
  %v211 = vsel %vm202, %v208, %v210
  %216 = vrot.lane.b32.xlu0 %v205, 120
  %v217 = vpop.permute.xlu0 %216
  %218 = vrot.lane.b32.xlu0 %v207, 120
  %v219 = vpop.permute.xlu0 %218
  %220 = vrot.lane.b32.xlu0 %v209, 120
  %v221 = vpop.permute.xlu0 %220
  %222 = vrot.lane.b32.xlu0 %v211, 120
  %v223 = vpop.permute.xlu0 %222
  %228 = vrot.lane.b32.xlu0 %v205, 112
  %v229 = vpop.permute.xlu0 %228
  %230 = vrot.lane.b32.xlu0 %v207, 112
  %v231 = vpop.permute.xlu0 %230
  %232 = vrot.lane.b32.xlu0 %v209, 112
  %v233 = vpop.permute.xlu0 %232
  %234 = vrot.lane.b32.xlu0 %v211, 112
  %v235 = vpop.permute.xlu0 %234
  %240 = vrot.lane.b32.xlu0 %v205, 104
  %v241 = vpop.permute.xlu0 %240
  %242 = vrot.lane.b32.xlu0 %v207, 104
  %v243 = vpop.permute.xlu0 %242
  %244 = vrot.lane.b32.xlu0 %v209, 104
  %v245 = vpop.permute.xlu0 %244
  %246 = vrot.lane.b32.xlu0 %v211, 104
  %v247 = vpop.permute.xlu0 %246
  %v252 = vpack.c.bf16 %v131, %v128
  %v253 = vpack.c.bf16 %v139, %v136
  %v254 = vpack.c.bf16 %v165, %v163
  %v255 = vpack.c.bf16 %v169, %v167
  %v256 = vpack.c.bf16 %v177, %v175
  %v257 = vpack.c.bf16 %v181, %v179
  %v258 = vpack.c.bf16 %v189, %v187
  %v259 = vpack.c.bf16 %v193, %v191
  %v260 = vpack.c.bf16 %v207, %v205
  %v261 = vpack.c.bf16 %v211, %v209
  %v262 = vpack.c.bf16 %v219, %v217
  %v263 = vpack.c.bf16 %v223, %v221
  %v264 = vpack.c.bf16 %v231, %v229
  %v265 = vpack.c.bf16 %v235, %v233
  %v266 = vpack.c.bf16 %v243, %v241
  %v267 = vpack.c.bf16 %v247, %v245
  %270 = vrot.lane.b32.xlu0 %v252, 96
  %v271 = vpop.permute.xlu0 %270
  %272 = vrot.lane.b32.xlu0 %v253, 96
  %v273 = vpop.permute.xlu0 %272
  %vm274 = vcmask 64512
  %v276 = vsel %vm274, %v252, 0
  %v279 = vsel %vm274, %v253, 0
  %v282 = vsel %vm274, %v271, 0
  %v285 = vsel %vm274, %v273, 0
  %287 = vmatprep.subr.bf16.mxu0 0
  %288 = vmatpush1.bf16.xpose.msra.mxu0 0
  %289 = vmatprep.subr.bf16.mxu0 0
  %290 = vmatpush1.bf16.xpose.msra.mxu0 0
  %291 = vmatprep.subr.bf16.mxu0 0
  %292 = vmatpush1.bf16.xpose.msra.mxu0 0
  %293 = vmatprep.subr.bf16.mxu0 0
  %294 = vmatpush1.bf16.xpose.msra.mxu0 0
  %295 = vmatprep.subr.bf16.mxu0 0
  %296 = vmatpush1.bf16.xpose.msra.mxu0 0
  %297 = vmatprep.subr.bf16.mxu0 0
  %298 = vmatpush1.bf16.xpose.msra.mxu0 0
  %299 = vmatprep.subr.bf16.mxu0 0
  %300 = vmatpush1.bf16.xpose.msra.mxu0 %v285
  %301 = vmatprep.subr.bf16.mxu0 0
  %302 = vmatpush1.bf16.xpose.msra.mxu0 %v282
  %303 = vmatprep.subr.bf16.mxu0 0
  %304 = vmatpush2.bf16.xpose.msra.mxu0 0
  %305 = vmatprep.subr.bf16.mxu0 0
  %306 = vmatpush2.bf16.xpose.msra.mxu0 0
  %307 = vmatprep.subr.bf16.mxu0 0
  %308 = vmatpush2.bf16.xpose.msra.mxu0 0
  %309 = vmatprep.subr.bf16.mxu0 0
  %310 = vmatpush2.bf16.xpose.msra.mxu0 0
  %311 = vmatprep.subr.bf16.mxu0 0
  %312 = vmatpush2.bf16.xpose.msra.mxu0 0
  %313 = vmatprep.subr.bf16.mxu0 0
  %314 = vmatpush2.bf16.xpose.msra.mxu0 0
  %315 = vmatprep.subr.bf16.mxu0 0
  %316 = vmatpush2.bf16.xpose.msra.mxu0 0
  %317 = vmatprep.subr.bf16.mxu0 0
  %318 = vmatpush2.bf16.xpose.msra.mxu0 0
  %319 = vmatprep.mubr.bf16.mxu0 0
  %320 = vmatmul.mubr.bf16.gmra.mxu0 %v276
  %v321 = vpop.f32.mrf.mxu0
  %v322 = vadd.f32 0.0, %v321
  %v323 = vpop.f32.mrf.mxu0
  %v324 = vpop.f32.mrf.mxu0
  %v325 = vadd.f32 0.0, %v324
  %v326 = vpop.f32.mrf.mxu0
  %327 = vmatprep.mubr.bf16.mxu0 0
  %328 = vmatmul.mubr.bf16.gmra.mxu0 %v279
  %v329 = vpop.f32.mrf.mxu0
  %v330 = vadd.f32 0.0, %v329
  %v331 = vpop.f32.mrf.mxu0
  %v332 = vpop.f32.mrf.mxu0
  %v333 = vadd.f32 0.0, %v332
  %v334 = vpop.f32.mrf.mxu0
  %335 = vdwg.mxu0
  %338 = vrot.lane.b32.xlu0 %v254, 96
  %v339 = vpop.permute.xlu0 %338
  %340 = vrot.lane.b32.xlu0 %v255, 96
  %v341 = vpop.permute.xlu0 %340
  %v343 = vsel %vm274, %v254, 0
  %v346 = vsel %vm274, %v255, 0
  %v349 = vsel %vm274, %v339, 0
  %v352 = vsel %vm274, %v341, 0
  %354 = vmatprep.subr.bf16.mxu0 0
  %355 = vmatpush1.bf16.xpose.msra.mxu0 0
  %356 = vmatprep.subr.bf16.mxu0 0
  %357 = vmatpush1.bf16.xpose.msra.mxu0 0
  %358 = vmatprep.subr.bf16.mxu0 0
  %359 = vmatpush1.bf16.xpose.msra.mxu0 0
  %360 = vmatprep.subr.bf16.mxu0 0
  %361 = vmatpush1.bf16.xpose.msra.mxu0 0
  %362 = vmatprep.subr.bf16.mxu0 0
  %363 = vmatpush1.bf16.xpose.msra.mxu0 0
  %364 = vmatprep.subr.bf16.mxu0 0
  %365 = vmatpush1.bf16.xpose.msra.mxu0 0
  %366 = vmatprep.subr.bf16.mxu0 0
  %367 = vmatpush1.bf16.xpose.msra.mxu0 %v352
  %368 = vmatprep.subr.bf16.mxu0 0
  %369 = vmatpush1.bf16.xpose.msra.mxu0 %v349
  %370 = vmatprep.subr.bf16.mxu0 0
  %371 = vmatpush2.bf16.xpose.msra.mxu0 0
  %372 = vmatprep.subr.bf16.mxu0 0
  %373 = vmatpush2.bf16.xpose.msra.mxu0 0
  %374 = vmatprep.subr.bf16.mxu0 0
  %375 = vmatpush2.bf16.xpose.msra.mxu0 0
  %376 = vmatprep.subr.bf16.mxu0 0
  %377 = vmatpush2.bf16.xpose.msra.mxu0 0
  %378 = vmatprep.subr.bf16.mxu0 0
  %379 = vmatpush2.bf16.xpose.msra.mxu0 0
  %380 = vmatprep.subr.bf16.mxu0 0
  %381 = vmatpush2.bf16.xpose.msra.mxu0 0
  %382 = vmatprep.subr.bf16.mxu0 0
  %383 = vmatpush2.bf16.xpose.msra.mxu0 0
  %384 = vmatprep.subr.bf16.mxu0 0
  %385 = vmatpush2.bf16.xpose.msra.mxu0 0
  %386 = vmatprep.mubr.bf16.mxu0 0
  %387 = vmatmul.mubr.bf16.gmra.mxu0 %v343
  %v388 = vpop.f32.mrf.mxu0
  %v389 = vadd.f32 0.0, %v388
  %v390 = vpop.f32.mrf.mxu0
  %v391 = vpop.f32.mrf.mxu0
  %v392 = vadd.f32 0.0, %v391
  %v393 = vpop.f32.mrf.mxu0
  %394 = vmatprep.mubr.bf16.mxu0 0
  %395 = vmatmul.mubr.bf16.gmra.mxu0 %v346
  %v396 = vpop.f32.mrf.mxu0
  %v397 = vadd.f32 0.0, %v396
  %v398 = vpop.f32.mrf.mxu0
  %v399 = vpop.f32.mrf.mxu0
  %v400 = vadd.f32 0.0, %v399
  %v401 = vpop.f32.mrf.mxu0
  %402 = vdwg.mxu0
  %405 = vrot.lane.b32.xlu0 %v256, 96
  %v406 = vpop.permute.xlu0 %405
  %407 = vrot.lane.b32.xlu0 %v257, 96
  %v408 = vpop.permute.xlu0 %407
  %v410 = vsel %vm274, %v256, 0
  %v413 = vsel %vm274, %v257, 0
  %v416 = vsel %vm274, %v406, 0
  %v419 = vsel %vm274, %v408, 0
  %421 = vmatprep.subr.bf16.mxu0 0
  %422 = vmatpush1.bf16.xpose.msra.mxu0 0
  %423 = vmatprep.subr.bf16.mxu0 0
  %424 = vmatpush1.bf16.xpose.msra.mxu0 0
  %425 = vmatprep.subr.bf16.mxu0 0
  %426 = vmatpush1.bf16.xpose.msra.mxu0 0
  %427 = vmatprep.subr.bf16.mxu0 0
  %428 = vmatpush1.bf16.xpose.msra.mxu0 0
  %429 = vmatprep.subr.bf16.mxu0 0
  %430 = vmatpush1.bf16.xpose.msra.mxu0 0
  %431 = vmatprep.subr.bf16.mxu0 0
  %432 = vmatpush1.bf16.xpose.msra.mxu0 0
  %433 = vmatprep.subr.bf16.mxu0 0
  %434 = vmatpush1.bf16.xpose.msra.mxu0 %v419
  %435 = vmatprep.subr.bf16.mxu0 0
  %436 = vmatpush1.bf16.xpose.msra.mxu0 %v416
  %437 = vmatprep.subr.bf16.mxu0 0
  %438 = vmatpush2.bf16.xpose.msra.mxu0 0
  %439 = vmatprep.subr.bf16.mxu0 0
  %440 = vmatpush2.bf16.xpose.msra.mxu0 0
  %441 = vmatprep.subr.bf16.mxu0 0
  %442 = vmatpush2.bf16.xpose.msra.mxu0 0
  %443 = vmatprep.subr.bf16.mxu0 0
  %444 = vmatpush2.bf16.xpose.msra.mxu0 0
  %445 = vmatprep.subr.bf16.mxu0 0
  %446 = vmatpush2.bf16.xpose.msra.mxu0 0
  %447 = vmatprep.subr.bf16.mxu0 0
  %448 = vmatpush2.bf16.xpose.msra.mxu0 0
  %449 = vmatprep.subr.bf16.mxu0 0
  %450 = vmatpush2.bf16.xpose.msra.mxu0 0
  %451 = vmatprep.subr.bf16.mxu0 0
  %452 = vmatpush2.bf16.xpose.msra.mxu0 0
  %453 = vmatprep.mubr.bf16.mxu0 0
  %454 = vmatmul.mubr.bf16.gmra.mxu0 %v410
  %v455 = vpop.f32.mrf.mxu0
  %v456 = vadd.f32 0.0, %v455
  %v457 = vpop.f32.mrf.mxu0
  %v458 = vpop.f32.mrf.mxu0
  %v459 = vadd.f32 0.0, %v458
  %v460 = vpop.f32.mrf.mxu0
  %461 = vmatprep.mubr.bf16.mxu0 0
  %462 = vmatmul.mubr.bf16.gmra.mxu0 %v413
  %v463 = vpop.f32.mrf.mxu0
  %v464 = vadd.f32 0.0, %v463
  %v465 = vpop.f32.mrf.mxu0
  %v466 = vpop.f32.mrf.mxu0
  %v467 = vadd.f32 0.0, %v466
  %v468 = vpop.f32.mrf.mxu0
  %469 = vdwg.mxu0
  %472 = vrot.lane.b32.xlu0 %v258, 96
  %v473 = vpop.permute.xlu0 %472
  %474 = vrot.lane.b32.xlu0 %v259, 96
  %v475 = vpop.permute.xlu0 %474
  %v477 = vsel %vm274, %v258, 0
  %v480 = vsel %vm274, %v259, 0
  %v483 = vsel %vm274, %v473, 0
  %v486 = vsel %vm274, %v475, 0
  %488 = vmatprep.subr.bf16.mxu0 0
  %489 = vmatpush1.bf16.xpose.msra.mxu0 0
  %490 = vmatprep.subr.bf16.mxu0 0
  %491 = vmatpush1.bf16.xpose.msra.mxu0 0
  %492 = vmatprep.subr.bf16.mxu0 0
  %493 = vmatpush1.bf16.xpose.msra.mxu0 0
  %494 = vmatprep.subr.bf16.mxu0 0
  %495 = vmatpush1.bf16.xpose.msra.mxu0 0
  %496 = vmatprep.subr.bf16.mxu0 0
  %497 = vmatpush1.bf16.xpose.msra.mxu0 0
  %498 = vmatprep.subr.bf16.mxu0 0
  %499 = vmatpush1.bf16.xpose.msra.mxu0 0
  %500 = vmatprep.subr.bf16.mxu0 0
  %501 = vmatpush1.bf16.xpose.msra.mxu0 %v486
  %502 = vmatprep.subr.bf16.mxu0 0
  %503 = vmatpush1.bf16.xpose.msra.mxu0 %v483
  %504 = vmatprep.subr.bf16.mxu0 0
  %505 = vmatpush2.bf16.xpose.msra.mxu0 0
  %506 = vmatprep.subr.bf16.mxu0 0
  %507 = vmatpush2.bf16.xpose.msra.mxu0 0
  %508 = vmatprep.subr.bf16.mxu0 0
  %509 = vmatpush2.bf16.xpose.msra.mxu0 0
  %510 = vmatprep.subr.bf16.mxu0 0
  %511 = vmatpush2.bf16.xpose.msra.mxu0 0
  %512 = vmatprep.subr.bf16.mxu0 0
  %513 = vmatpush2.bf16.xpose.msra.mxu0 0
  %514 = vmatprep.subr.bf16.mxu0 0
  %515 = vmatpush2.bf16.xpose.msra.mxu0 0
  %516 = vmatprep.subr.bf16.mxu0 0
  %517 = vmatpush2.bf16.xpose.msra.mxu0 0
  %518 = vmatprep.subr.bf16.mxu0 0
  %519 = vmatpush2.bf16.xpose.msra.mxu0 0
  %520 = vmatprep.mubr.bf16.mxu0 0
  %521 = vmatmul.mubr.bf16.gmra.mxu0 %v477
  %v522 = vpop.f32.mrf.mxu0
  %v523 = vadd.f32 0.0, %v522
  %v524 = vpop.f32.mrf.mxu0
  %v525 = vpop.f32.mrf.mxu0
  %v526 = vadd.f32 0.0, %v525
  %v527 = vpop.f32.mrf.mxu0
  %528 = vmatprep.mubr.bf16.mxu0 0
  %529 = vmatmul.mubr.bf16.gmra.mxu0 %v480
  %v530 = vpop.f32.mrf.mxu0
  %v531 = vadd.f32 0.0, %v530
  %v532 = vpop.f32.mrf.mxu0
  %v533 = vpop.f32.mrf.mxu0
  %v534 = vadd.f32 0.0, %v533
  %v535 = vpop.f32.mrf.mxu0
  %536 = vdwg.mxu0
  %539 = vrot.lane.b32.xlu0 %v260, 96
  %v540 = vpop.permute.xlu0 %539
  %541 = vrot.lane.b32.xlu0 %v261, 96
  %v542 = vpop.permute.xlu0 %541
  %v544 = vsel %vm274, %v260, 0
  %v547 = vsel %vm274, %v261, 0
  %v550 = vsel %vm274, %v540, 0
  %v553 = vsel %vm274, %v542, 0
  %555 = vmatprep.subr.bf16.mxu0 0
  %556 = vmatpush1.bf16.xpose.msra.mxu0 0
  %557 = vmatprep.subr.bf16.mxu0 0
  %558 = vmatpush1.bf16.xpose.msra.mxu0 0
  %559 = vmatprep.subr.bf16.mxu0 0
  %560 = vmatpush1.bf16.xpose.msra.mxu0 0
  %561 = vmatprep.subr.bf16.mxu0 0
  %562 = vmatpush1.bf16.xpose.msra.mxu0 0
  %563 = vmatprep.subr.bf16.mxu0 0
  %564 = vmatpush1.bf16.xpose.msra.mxu0 0
  %565 = vmatprep.subr.bf16.mxu0 0
  %566 = vmatpush1.bf16.xpose.msra.mxu0 0
  %567 = vmatprep.subr.bf16.mxu0 0
  %568 = vmatpush1.bf16.xpose.msra.mxu0 %v553
  %569 = vmatprep.subr.bf16.mxu0 0
  %570 = vmatpush1.bf16.xpose.msra.mxu0 %v550
  %571 = vmatprep.subr.bf16.mxu0 0
  %572 = vmatpush2.bf16.xpose.msra.mxu0 0
  %573 = vmatprep.subr.bf16.mxu0 0
  %574 = vmatpush2.bf16.xpose.msra.mxu0 0
  %575 = vmatprep.subr.bf16.mxu0 0
  %576 = vmatpush2.bf16.xpose.msra.mxu0 0
  %577 = vmatprep.subr.bf16.mxu0 0
  %578 = vmatpush2.bf16.xpose.msra.mxu0 0
  %579 = vmatprep.subr.bf16.mxu0 0
  %580 = vmatpush2.bf16.xpose.msra.mxu0 0
  %581 = vmatprep.subr.bf16.mxu0 0
  %582 = vmatpush2.bf16.xpose.msra.mxu0 0
  %583 = vmatprep.subr.bf16.mxu0 0
  %584 = vmatpush2.bf16.xpose.msra.mxu0 0
  %585 = vmatprep.subr.bf16.mxu0 0
  %586 = vmatpush2.bf16.xpose.msra.mxu0 0
  %587 = vmatprep.mubr.bf16.mxu0 0
  %588 = vmatmul.mubr.bf16.gmra.mxu0 %v544
  %v589 = vpop.f32.mrf.mxu0
  %v590 = vadd.f32 0.0, %v589
  %v591 = vpop.f32.mrf.mxu0
  %v592 = vpop.f32.mrf.mxu0
  %v593 = vadd.f32 0.0, %v592
  %v594 = vpop.f32.mrf.mxu0
  %595 = vmatprep.mubr.bf16.mxu0 0
  %596 = vmatmul.mubr.bf16.gmra.mxu0 %v547
  %v597 = vpop.f32.mrf.mxu0
  %v598 = vadd.f32 0.0, %v597
  %v599 = vpop.f32.mrf.mxu0
  %v600 = vpop.f32.mrf.mxu0
  %v601 = vadd.f32 0.0, %v600
  %v602 = vpop.f32.mrf.mxu0
  %603 = vdwg.mxu0
  %606 = vrot.lane.b32.xlu0 %v262, 96
  %v607 = vpop.permute.xlu0 %606
  %608 = vrot.lane.b32.xlu0 %v263, 96
  %v609 = vpop.permute.xlu0 %608
  %v611 = vsel %vm274, %v262, 0
  %v614 = vsel %vm274, %v263, 0
  %v617 = vsel %vm274, %v607, 0
  %v620 = vsel %vm274, %v609, 0
  %622 = vmatprep.subr.bf16.mxu0 0
  %623 = vmatpush1.bf16.xpose.msra.mxu0 0
  %624 = vmatprep.subr.bf16.mxu0 0
  %625 = vmatpush1.bf16.xpose.msra.mxu0 0
  %626 = vmatprep.subr.bf16.mxu0 0
  %627 = vmatpush1.bf16.xpose.msra.mxu0 0
  %628 = vmatprep.subr.bf16.mxu0 0
  %629 = vmatpush1.bf16.xpose.msra.mxu0 0
  %630 = vmatprep.subr.bf16.mxu0 0
  %631 = vmatpush1.bf16.xpose.msra.mxu0 0
  %632 = vmatprep.subr.bf16.mxu0 0
  %633 = vmatpush1.bf16.xpose.msra.mxu0 0
  %634 = vmatprep.subr.bf16.mxu0 0
  %635 = vmatpush1.bf16.xpose.msra.mxu0 %v620
  %636 = vmatprep.subr.bf16.mxu0 0
  %637 = vmatpush1.bf16.xpose.msra.mxu0 %v617
  %638 = vmatprep.subr.bf16.mxu0 0
  %639 = vmatpush2.bf16.xpose.msra.mxu0 0
  %640 = vmatprep.subr.bf16.mxu0 0
  %641 = vmatpush2.bf16.xpose.msra.mxu0 0
  %642 = vmatprep.subr.bf16.mxu0 0
  %643 = vmatpush2.bf16.xpose.msra.mxu0 0
  %644 = vmatprep.subr.bf16.mxu0 0
  %645 = vmatpush2.bf16.xpose.msra.mxu0 0
  %646 = vmatprep.subr.bf16.mxu0 0
  %647 = vmatpush2.bf16.xpose.msra.mxu0 0
  %648 = vmatprep.subr.bf16.mxu0 0
  %649 = vmatpush2.bf16.xpose.msra.mxu0 0
  %650 = vmatprep.subr.bf16.mxu0 0
  %651 = vmatpush2.bf16.xpose.msra.mxu0 0
  %652 = vmatprep.subr.bf16.mxu0 0
  %653 = vmatpush2.bf16.xpose.msra.mxu0 0
  %654 = vmatprep.mubr.bf16.mxu0 0
  %655 = vmatmul.mubr.bf16.gmra.mxu0 %v611
  %v656 = vpop.f32.mrf.mxu0
  %v657 = vadd.f32 0.0, %v656
  %v658 = vpop.f32.mrf.mxu0
  %v659 = vpop.f32.mrf.mxu0
  %v660 = vadd.f32 0.0, %v659
  %v661 = vpop.f32.mrf.mxu0
  %662 = vmatprep.mubr.bf16.mxu0 0
  %663 = vmatmul.mubr.bf16.gmra.mxu0 %v614
  %v664 = vpop.f32.mrf.mxu0
  %v665 = vadd.f32 0.0, %v664
  %v666 = vpop.f32.mrf.mxu0
  %v667 = vpop.f32.mrf.mxu0
  %v668 = vadd.f32 0.0, %v667
  %v669 = vpop.f32.mrf.mxu0
  %670 = vdwg.mxu0
  %673 = vrot.lane.b32.xlu0 %v264, 96
  %v674 = vpop.permute.xlu0 %673
  %675 = vrot.lane.b32.xlu0 %v265, 96
  %v676 = vpop.permute.xlu0 %675
  %v678 = vsel %vm274, %v264, 0
  %v681 = vsel %vm274, %v265, 0
  %v684 = vsel %vm274, %v674, 0
  %v687 = vsel %vm274, %v676, 0
  %689 = vmatprep.subr.bf16.mxu0 0
  %690 = vmatpush1.bf16.xpose.msra.mxu0 0
  %691 = vmatprep.subr.bf16.mxu0 0
  %692 = vmatpush1.bf16.xpose.msra.mxu0 0
  %693 = vmatprep.subr.bf16.mxu0 0
  %694 = vmatpush1.bf16.xpose.msra.mxu0 0
  %695 = vmatprep.subr.bf16.mxu0 0
  %696 = vmatpush1.bf16.xpose.msra.mxu0 0
  %697 = vmatprep.subr.bf16.mxu0 0
  %698 = vmatpush1.bf16.xpose.msra.mxu0 0
  %699 = vmatprep.subr.bf16.mxu0 0
  %700 = vmatpush1.bf16.xpose.msra.mxu0 0
  %701 = vmatprep.subr.bf16.mxu0 0
  %702 = vmatpush1.bf16.xpose.msra.mxu0 %v687
  %703 = vmatprep.subr.bf16.mxu0 0
  %704 = vmatpush1.bf16.xpose.msra.mxu0 %v684
  %705 = vmatprep.subr.bf16.mxu0 0
  %706 = vmatpush2.bf16.xpose.msra.mxu0 0
  %707 = vmatprep.subr.bf16.mxu0 0
  %708 = vmatpush2.bf16.xpose.msra.mxu0 0
  %709 = vmatprep.subr.bf16.mxu0 0
  %710 = vmatpush2.bf16.xpose.msra.mxu0 0
  %711 = vmatprep.subr.bf16.mxu0 0
  %712 = vmatpush2.bf16.xpose.msra.mxu0 0
  %713 = vmatprep.subr.bf16.mxu0 0
  %714 = vmatpush2.bf16.xpose.msra.mxu0 0
  %715 = vmatprep.subr.bf16.mxu0 0
  %716 = vmatpush2.bf16.xpose.msra.mxu0 0
  %717 = vmatprep.subr.bf16.mxu0 0
  %718 = vmatpush2.bf16.xpose.msra.mxu0 0
  %719 = vmatprep.subr.bf16.mxu0 0
  %720 = vmatpush2.bf16.xpose.msra.mxu0 0
  %721 = vmatprep.mubr.bf16.mxu0 0
  %722 = vmatmul.mubr.bf16.gmra.mxu0 %v678
  %v723 = vpop.f32.mrf.mxu0
  %v724 = vadd.f32 0.0, %v723
  %v725 = vpop.f32.mrf.mxu0
  %v726 = vpop.f32.mrf.mxu0
  %v727 = vadd.f32 0.0, %v726
  %v728 = vpop.f32.mrf.mxu0
  %729 = vmatprep.mubr.bf16.mxu0 0
  %730 = vmatmul.mubr.bf16.gmra.mxu0 %v681
  %v731 = vpop.f32.mrf.mxu0
  %v732 = vadd.f32 0.0, %v731
  %v733 = vpop.f32.mrf.mxu0
  %v734 = vpop.f32.mrf.mxu0
  %v735 = vadd.f32 0.0, %v734
  %v736 = vpop.f32.mrf.mxu0
  %737 = vdwg.mxu0
  %740 = vrot.lane.b32.xlu0 %v266, 96
  %v741 = vpop.permute.xlu0 %740
  %742 = vrot.lane.b32.xlu0 %v267, 96
  %v743 = vpop.permute.xlu0 %742
  %v745 = vsel %vm274, %v266, 0
  %v748 = vsel %vm274, %v267, 0
  %v751 = vsel %vm274, %v741, 0
  %v754 = vsel %vm274, %v743, 0
  %756 = vmatprep.subr.bf16.mxu0 0
  %757 = vmatpush1.bf16.xpose.msra.mxu0 0
  %758 = vmatprep.subr.bf16.mxu0 0
  %759 = vmatpush1.bf16.xpose.msra.mxu0 0
  %760 = vmatprep.subr.bf16.mxu0 0
  %761 = vmatpush1.bf16.xpose.msra.mxu0 0
  %762 = vmatprep.subr.bf16.mxu0 0
  %763 = vmatpush1.bf16.xpose.msra.mxu0 0
  %764 = vmatprep.subr.bf16.mxu0 0
  %765 = vmatpush1.bf16.xpose.msra.mxu0 0
  %766 = vmatprep.subr.bf16.mxu0 0
  %767 = vmatpush1.bf16.xpose.msra.mxu0 0
  %768 = vmatprep.subr.bf16.mxu0 0
  %769 = vmatpush1.bf16.xpose.msra.mxu0 %v754
  %770 = vmatprep.subr.bf16.mxu0 0
  %771 = vmatpush1.bf16.xpose.msra.mxu0 %v751
  %772 = vmatprep.subr.bf16.mxu0 0
  %773 = vmatpush2.bf16.xpose.msra.mxu0 0
  %774 = vmatprep.subr.bf16.mxu0 0
  %775 = vmatpush2.bf16.xpose.msra.mxu0 0
  %776 = vmatprep.subr.bf16.mxu0 0
  %777 = vmatpush2.bf16.xpose.msra.mxu0 0
  %778 = vmatprep.subr.bf16.mxu0 0
  %779 = vmatpush2.bf16.xpose.msra.mxu0 0
  %780 = vmatprep.subr.bf16.mxu0 0
  %781 = vmatpush2.bf16.xpose.msra.mxu0 0
  %782 = vmatprep.subr.bf16.mxu0 0
  %783 = vmatpush2.bf16.xpose.msra.mxu0 0
  %784 = vmatprep.subr.bf16.mxu0 0
  %785 = vmatpush2.bf16.xpose.msra.mxu0 0
  %786 = vmatprep.subr.bf16.mxu0 0
  %787 = vmatpush2.bf16.xpose.msra.mxu0 0
  %788 = vmatprep.mubr.bf16.mxu0 0
  %789 = vmatmul.mubr.bf16.gmra.mxu0 %v745
  %v790 = vpop.f32.mrf.mxu0
  %v791 = vadd.f32 0.0, %v790
  %v792 = vpop.f32.mrf.mxu0
  %v793 = vpop.f32.mrf.mxu0
  %v794 = vadd.f32 0.0, %v793
  %v795 = vpop.f32.mrf.mxu0
  %796 = vmatprep.mubr.bf16.mxu0 0
  %797 = vmatmul.mubr.bf16.gmra.mxu0 %v748
  %v798 = vpop.f32.mrf.mxu0
  %v799 = vadd.f32 0.0, %v798
  %v800 = vpop.f32.mrf.mxu0
  %v801 = vpop.f32.mrf.mxu0
  %v802 = vadd.f32 0.0, %v801
  %v803 = vpop.f32.mrf.mxu0
  %804 = vdwg.mxu0
  %vm805 = vcmask 244736
  %v806 = vsel %vm805, %v322, -inf
  %807 = vmax.xlane.f32.xlu0 %v806
  %v808 = vpop.xlane.xlu0 %807
  %v809 = vsel %vm805, %v325, -inf
  %810 = vmax.xlane.f32.xlu0 %v809
  %v811 = vpop.xlane.xlu0 %810
  %v812 = vsel %vm805, %v330, -inf
  %813 = vmax.xlane.f32.xlu0 %v812
  %v814 = vpop.xlane.xlu0 %813
  %vm815 = vcmask 242688
  %v816 = vsel %vm815, %v333, -inf
  %817 = vmax.xlane.f32.xlu0 %v816
  %v818 = vpop.xlane.xlu0 %817
  %v819 = vsel %vm805, %v389, -inf
  %820 = vmax.xlane.f32.xlu0 %v819
  %v821 = vpop.xlane.xlu0 %820
  %v822 = vsel %vm805, %v392, -inf
  %823 = vmax.xlane.f32.xlu0 %v822
  %v824 = vpop.xlane.xlu0 %823
  %v825 = vsel %vm805, %v397, -inf
  %826 = vmax.xlane.f32.xlu0 %v825
  %v827 = vpop.xlane.xlu0 %826
  %v828 = vsel %vm815, %v400, -inf
  %829 = vmax.xlane.f32.xlu0 %v828
  %v830 = vpop.xlane.xlu0 %829
  %v831 = vsel %vm805, %v456, -inf
  %832 = vmax.xlane.f32.xlu0 %v831
  %v833 = vpop.xlane.xlu0 %832
  %v834 = vsel %vm805, %v459, -inf
  %835 = vmax.xlane.f32.xlu0 %v834
  %v836 = vpop.xlane.xlu0 %835
  %v837 = vsel %vm805, %v464, -inf
  %838 = vmax.xlane.f32.xlu0 %v837
  %v839 = vpop.xlane.xlu0 %838
  %v840 = vsel %vm815, %v467, -inf
  %841 = vmax.xlane.f32.xlu0 %v840
  %v842 = vpop.xlane.xlu0 %841
  %v843 = vsel %vm805, %v523, -inf
  %844 = vmax.xlane.f32.xlu0 %v843
  %v845 = vpop.xlane.xlu0 %844
  %v846 = vsel %vm805, %v526, -inf
  %847 = vmax.xlane.f32.xlu0 %v846
  %v848 = vpop.xlane.xlu0 %847
  %v849 = vsel %vm805, %v531, -inf
  %850 = vmax.xlane.f32.xlu0 %v849
  %v851 = vpop.xlane.xlu0 %850
  %v852 = vsel %vm815, %v534, -inf
  %853 = vmax.xlane.f32.xlu0 %v852
  %v854 = vpop.xlane.xlu0 %853
  %v855 = vsel %vm805, %v590, -inf
  %856 = vmax.xlane.f32.xlu0 %v855
  %v857 = vpop.xlane.xlu0 %856
  %v858 = vsel %vm805, %v593, -inf
  %859 = vmax.xlane.f32.xlu0 %v858
  %v860 = vpop.xlane.xlu0 %859
  %v861 = vsel %vm805, %v598, -inf
  %862 = vmax.xlane.f32.xlu0 %v861
  %v863 = vpop.xlane.xlu0 %862
  %v864 = vsel %vm815, %v601, -inf
  %865 = vmax.xlane.f32.xlu0 %v864
  %v866 = vpop.xlane.xlu0 %865
  %v867 = vsel %vm805, %v657, -inf
  %868 = vmax.xlane.f32.xlu0 %v867
  %v869 = vpop.xlane.xlu0 %868
  %v870 = vsel %vm805, %v660, -inf
  %871 = vmax.xlane.f32.xlu0 %v870
  %v872 = vpop.xlane.xlu0 %871
  %v873 = vsel %vm805, %v665, -inf
  %874 = vmax.xlane.f32.xlu0 %v873
  %v875 = vpop.xlane.xlu0 %874
  %v876 = vsel %vm815, %v668, -inf
  %877 = vmax.xlane.f32.xlu0 %v876
  %v878 = vpop.xlane.xlu0 %877
  %v879 = vsel %vm805, %v724, -inf
  %880 = vmax.xlane.f32.xlu0 %v879
  %v881 = vpop.xlane.xlu0 %880
  %v882 = vsel %vm805, %v727, -inf
  %883 = vmax.xlane.f32.xlu0 %v882
  %v884 = vpop.xlane.xlu0 %883
  %v885 = vsel %vm805, %v732, -inf
  %886 = vmax.xlane.f32.xlu0 %v885
  %v887 = vpop.xlane.xlu0 %886
  %v888 = vsel %vm815, %v735, -inf
  %889 = vmax.xlane.f32.xlu0 %v888
  %v890 = vpop.xlane.xlu0 %889
  %v891 = vsel %vm805, %v791, -inf
  %892 = vmax.xlane.f32.xlu0 %v891
  %v893 = vpop.xlane.xlu0 %892
  %v894 = vsel %vm805, %v794, -inf
  %895 = vmax.xlane.f32.xlu0 %v894
  %v896 = vpop.xlane.xlu0 %895
  %v897 = vsel %vm805, %v799, -inf
  %898 = vmax.xlane.f32.xlu0 %v897
  %v899 = vpop.xlane.xlu0 %898
  %v900 = vsel %vm815, %v802, -inf
  %901 = vmax.xlane.f32.xlu0 %v900
  %v902 = vpop.xlane.xlu0 %901
  %v903 = vsub.f32 %v322, %v808
  %v904 = vsub.f32 %v325, %v811
  %v905 = vsub.f32 %v330, %v814
  %v906 = vsub.f32 %v333, %v818
  %v907 = vsub.f32 %v389, %v821
  %v908 = vsub.f32 %v392, %v824
  %v909 = vsub.f32 %v397, %v827
  %v910 = vsub.f32 %v400, %v830
  %v911 = vsub.f32 %v456, %v833
  %v912 = vsub.f32 %v459, %v836
  %v913 = vsub.f32 %v464, %v839
  %v914 = vsub.f32 %v467, %v842
  %v915 = vsub.f32 %v523, %v845
  %v916 = vsub.f32 %v526, %v848
  %v917 = vsub.f32 %v531, %v851
  %v918 = vsub.f32 %v534, %v854
  %v919 = vsub.f32 %v590, %v857
  %v920 = vsub.f32 %v593, %v860
  %v921 = vsub.f32 %v598, %v863
  %v922 = vsub.f32 %v601, %v866
  %v923 = vsub.f32 %v657, %v869
  %v924 = vsub.f32 %v660, %v872
  %v925 = vsub.f32 %v665, %v875
  %v926 = vsub.f32 %v668, %v878
  %v927 = vsub.f32 %v724, %v881
  %v928 = vsub.f32 %v727, %v884
  %v929 = vsub.f32 %v732, %v887
  %v930 = vsub.f32 %v735, %v890
  %v931 = vsub.f32 %v791, %v893
  %v932 = vsub.f32 %v794, %v896
  %v933 = vsub.f32 %v799, %v899
  %v934 = vsub.f32 %v802, %v902
  %v935 = vmul.f32 %v903, 1.442695
  %v936 = vpow.pop %v935
  %v937 = vmul.f32 %v904, 1.442695
  %v938 = vpow.pop %v937
  %v939 = vmul.f32 %v905, 1.442695
  %v940 = vpow.pop %v939
  %v941 = vmul.f32 %v906, 1.442695
  %v942 = vpow.pop %v941
  %v943 = vmul.f32 %v907, 1.442695
  %v944 = vpow.pop %v943
  %v945 = vmul.f32 %v908, 1.442695
  %v946 = vpow.pop %v945
  %v947 = vmul.f32 %v909, 1.442695
  %v948 = vpow.pop %v947
  %v949 = vmul.f32 %v910, 1.442695
  %v950 = vpow.pop %v949
  %v951 = vmul.f32 %v911, 1.442695
  %v952 = vpow.pop %v951
  %v953 = vmul.f32 %v912, 1.442695
  %v954 = vpow.pop %v953
  %v955 = vmul.f32 %v913, 1.442695
  %v956 = vpow.pop %v955
  %v957 = vmul.f32 %v914, 1.442695
  %v958 = vpow.pop %v957
  %v959 = vmul.f32 %v915, 1.442695
  %v960 = vpow.pop %v959
  %v961 = vmul.f32 %v916, 1.442695
  %v962 = vpow.pop %v961
  %v963 = vmul.f32 %v917, 1.442695
  %v964 = vpow.pop %v963
  %v965 = vmul.f32 %v918, 1.442695
  %v966 = vpow.pop %v965
  %v967 = vmul.f32 %v919, 1.442695
  %v968 = vpow.pop %v967
  %v969 = vmul.f32 %v920, 1.442695
  %v970 = vpow.pop %v969
  %v971 = vmul.f32 %v921, 1.442695
  %v972 = vpow.pop %v971
  %v973 = vmul.f32 %v922, 1.442695
  %v974 = vpow.pop %v973
  %v975 = vmul.f32 %v923, 1.442695
  %v976 = vpow.pop %v975
  %v977 = vmul.f32 %v924, 1.442695
  %v978 = vpow.pop %v977
  %v979 = vmul.f32 %v925, 1.442695
  %v980 = vpow.pop %v979
  %v981 = vmul.f32 %v926, 1.442695
  %v982 = vpow.pop %v981
  %v983 = vmul.f32 %v927, 1.442695
  %v984 = vpow.pop %v983
  %v985 = vmul.f32 %v928, 1.442695
  %v986 = vpow.pop %v985
  %v987 = vmul.f32 %v929, 1.442695
  %v988 = vpow.pop %v987
  %v989 = vmul.f32 %v930, 1.442695
  %v990 = vpow.pop %v989
  %v991 = vmul.f32 %v931, 1.442695
  %v992 = vpow.pop %v991
  %v993 = vmul.f32 %v932, 1.442695
  %v994 = vpow.pop %v993
  %v995 = vmul.f32 %v933, 1.442695
  %v996 = vpow.pop %v995
  %v997 = vmul.f32 %v934, 1.442695
  %v998 = vpow.pop %v997
  %v999 = vsel %vm805, %v936, 0.0
  %1000 = vadd.xlane.f32.xlu0 %v999
  %v1001 = vpop.xlane.xlu0 %1000
  %v1002 = vsel %vm805, %v938, 0.0
  %1003 = vadd.xlane.f32.xlu0 %v1002
  %v1004 = vpop.xlane.xlu0 %1003
  %v1005 = vsel %vm805, %v940, 0.0
  %1006 = vadd.xlane.f32.xlu0 %v1005
  %v1007 = vpop.xlane.xlu0 %1006
  %v1008 = vsel %vm815, %v942, 0.0
  %1009 = vadd.xlane.f32.xlu0 %v1008
  %v1010 = vpop.xlane.xlu0 %1009
  %v1011 = vsel %vm805, %v944, 0.0
  %1012 = vadd.xlane.f32.xlu0 %v1011
  %v1013 = vpop.xlane.xlu0 %1012
  %v1014 = vsel %vm805, %v946, 0.0
  %1015 = vadd.xlane.f32.xlu0 %v1014
  %v1016 = vpop.xlane.xlu0 %1015
  %v1017 = vsel %vm805, %v948, 0.0
  %1018 = vadd.xlane.f32.xlu0 %v1017
  %v1019 = vpop.xlane.xlu0 %1018
  %v1020 = vsel %vm815, %v950, 0.0
  %1021 = vadd.xlane.f32.xlu0 %v1020
  %v1022 = vpop.xlane.xlu0 %1021
  %v1023 = vsel %vm805, %v952, 0.0
  %1024 = vadd.xlane.f32.xlu0 %v1023
  %v1025 = vpop.xlane.xlu0 %1024
  %v1026 = vsel %vm805, %v954, 0.0
  %1027 = vadd.xlane.f32.xlu0 %v1026
  %v1028 = vpop.xlane.xlu0 %1027
  %v1029 = vsel %vm805, %v956, 0.0
  %1030 = vadd.xlane.f32.xlu0 %v1029
  %v1031 = vpop.xlane.xlu0 %1030
  %v1032 = vsel %vm815, %v958, 0.0
  %1033 = vadd.xlane.f32.xlu0 %v1032
  %v1034 = vpop.xlane.xlu0 %1033
  %v1035 = vsel %vm805, %v960, 0.0
  %1036 = vadd.xlane.f32.xlu0 %v1035
  %v1037 = vpop.xlane.xlu0 %1036
  %v1038 = vsel %vm805, %v962, 0.0
  %1039 = vadd.xlane.f32.xlu0 %v1038
  %v1040 = vpop.xlane.xlu0 %1039
  %v1041 = vsel %vm805, %v964, 0.0
  %1042 = vadd.xlane.f32.xlu0 %v1041
  %v1043 = vpop.xlane.xlu0 %1042
  %v1044 = vsel %vm815, %v966, 0.0
  %1045 = vadd.xlane.f32.xlu0 %v1044
  %v1046 = vpop.xlane.xlu0 %1045
  %v1047 = vsel %vm805, %v968, 0.0
  %1048 = vadd.xlane.f32.xlu0 %v1047
  %v1049 = vpop.xlane.xlu0 %1048
  %v1050 = vsel %vm805, %v970, 0.0
  %1051 = vadd.xlane.f32.xlu0 %v1050
  %v1052 = vpop.xlane.xlu0 %1051
  %v1053 = vsel %vm805, %v972, 0.0
  %1054 = vadd.xlane.f32.xlu0 %v1053
  %v1055 = vpop.xlane.xlu0 %1054
  %v1056 = vsel %vm815, %v974, 0.0
  %1057 = vadd.xlane.f32.xlu0 %v1056
  %v1058 = vpop.xlane.xlu0 %1057
  %v1059 = vsel %vm805, %v976, 0.0
  %1060 = vadd.xlane.f32.xlu0 %v1059
  %v1061 = vpop.xlane.xlu0 %1060
  %v1062 = vsel %vm805, %v978, 0.0
  %1063 = vadd.xlane.f32.xlu0 %v1062
  %v1064 = vpop.xlane.xlu0 %1063
  %v1065 = vsel %vm805, %v980, 0.0
  %1066 = vadd.xlane.f32.xlu0 %v1065
  %v1067 = vpop.xlane.xlu0 %1066
  %v1068 = vsel %vm815, %v982, 0.0
  %1069 = vadd.xlane.f32.xlu0 %v1068
  %v1070 = vpop.xlane.xlu0 %1069
  %v1071 = vsel %vm805, %v984, 0.0
  %1072 = vadd.xlane.f32.xlu0 %v1071
  %v1073 = vpop.xlane.xlu0 %1072
  %v1074 = vsel %vm805, %v986, 0.0
  %1075 = vadd.xlane.f32.xlu0 %v1074
  %v1076 = vpop.xlane.xlu0 %1075
  %v1077 = vsel %vm805, %v988, 0.0
  %1078 = vadd.xlane.f32.xlu0 %v1077
  %v1079 = vpop.xlane.xlu0 %1078
  %v1080 = vsel %vm815, %v990, 0.0
  %1081 = vadd.xlane.f32.xlu0 %v1080
  %v1082 = vpop.xlane.xlu0 %1081
  %v1083 = vsel %vm805, %v992, 0.0
  %1084 = vadd.xlane.f32.xlu0 %v1083
  %v1085 = vpop.xlane.xlu0 %1084
  %v1086 = vsel %vm805, %v994, 0.0
  %1087 = vadd.xlane.f32.xlu0 %v1086
  %v1088 = vpop.xlane.xlu0 %1087
  %v1089 = vsel %vm805, %v996, 0.0
  %1090 = vadd.xlane.f32.xlu0 %v1089
  %v1091 = vpop.xlane.xlu0 %1090
  %v1092 = vsel %vm815, %v998, 0.0
  %1093 = vadd.xlane.f32.xlu0 %v1092
  %v1094 = vpop.xlane.xlu0 %1093
  %v1095 = vrcp.pop %v1001
  %v1096 = vrcp.pop %v1004
  %v1097 = vrcp.pop %v1007
  %v1098 = vrcp.pop %v1010
  %v1099 = vrcp.pop %v1013
  %v1100 = vrcp.pop %v1016
  %v1101 = vrcp.pop %v1019
  %v1102 = vrcp.pop %v1022
  %v1103 = vrcp.pop %v1025
  %v1104 = vrcp.pop %v1028
  %v1105 = vrcp.pop %v1031
  %v1106 = vrcp.pop %v1034
  %v1107 = vrcp.pop %v1037
  %v1108 = vrcp.pop %v1040
  %v1109 = vrcp.pop %v1043
  %v1110 = vrcp.pop %v1046
  %v1111 = vrcp.pop %v1049
  %v1112 = vrcp.pop %v1052
  %v1113 = vrcp.pop %v1055
  %v1114 = vrcp.pop %v1058
  %v1115 = vrcp.pop %v1061
  %v1116 = vrcp.pop %v1064
  %v1117 = vrcp.pop %v1067
  %v1118 = vrcp.pop %v1070
  %v1119 = vrcp.pop %v1073
  %v1120 = vrcp.pop %v1076
  %v1121 = vrcp.pop %v1079
  %v1122 = vrcp.pop %v1082
  %v1123 = vrcp.pop %v1085
  %v1124 = vrcp.pop %v1088
  %v1125 = vrcp.pop %v1091
  %v1126 = vrcp.pop %v1094
  %v1127 = vmul.f32 %v936, %v1095
  %v1128 = vmul.f32 %v938, %v1096
  %v1129 = vmul.f32 %v940, %v1097
  %v1130 = vmul.f32 %v942, %v1098
  %v1131 = vmul.f32 %v944, %v1099
  %v1132 = vmul.f32 %v946, %v1100
  %v1133 = vmul.f32 %v948, %v1101
  %v1134 = vmul.f32 %v950, %v1102
  %v1135 = vmul.f32 %v952, %v1103
  %v1136 = vmul.f32 %v954, %v1104
  %v1137 = vmul.f32 %v956, %v1105
  %v1138 = vmul.f32 %v958, %v1106
  %v1139 = vmul.f32 %v960, %v1107
  %v1140 = vmul.f32 %v962, %v1108
  %v1141 = vmul.f32 %v964, %v1109
  %v1142 = vmul.f32 %v966, %v1110
  %v1143 = vmul.f32 %v968, %v1111
  %v1144 = vmul.f32 %v970, %v1112
  %v1145 = vmul.f32 %v972, %v1113
  %v1146 = vmul.f32 %v974, %v1114
  %v1147 = vmul.f32 %v976, %v1115
  %v1148 = vmul.f32 %v978, %v1116
  %v1149 = vmul.f32 %v980, %v1117
  %v1150 = vmul.f32 %v982, %v1118
  %v1151 = vmul.f32 %v984, %v1119
  %v1152 = vmul.f32 %v986, %v1120
  %v1153 = vmul.f32 %v988, %v1121
  %v1154 = vmul.f32 %v990, %v1122
  %v1155 = vmul.f32 %v992, %v1123
  %v1156 = vmul.f32 %v994, %v1124
  %v1157 = vmul.f32 %v996, %v1125
  %v1158 = vmul.f32 %v998, %v1126
  %v1159 = vpack.c.bf16 %v1128, %v1127
  %v1160 = vpack.c.bf16 %v1130, %v1129
  %v1161 = vpack.c.bf16 %v1132, %v1131
  %v1162 = vpack.c.bf16 %v1134, %v1133
  %v1163 = vpack.c.bf16 %v1136, %v1135
  %v1164 = vpack.c.bf16 %v1138, %v1137
  %v1165 = vpack.c.bf16 %v1140, %v1139
  %v1166 = vpack.c.bf16 %v1142, %v1141
  %v1167 = vpack.c.bf16 %v1144, %v1143
  %v1168 = vpack.c.bf16 %v1146, %v1145
  %v1169 = vpack.c.bf16 %v1148, %v1147
  %v1170 = vpack.c.bf16 %v1150, %v1149
  %v1171 = vpack.c.bf16 %v1152, %v1151
  %v1172 = vpack.c.bf16 %v1154, %v1153
  %v1173 = vpack.c.bf16 %v1156, %v1155
  %v1174 = vpack.c.bf16 %v1158, %v1157
  %1175 = vrot.lane.b32.xlu0 %v252, 64
  %v1176 = vpop.permute.xlu0 %1175
  %1177 = vrot.lane.b32.xlu0 %v253, 64
  %v1178 = vpop.permute.xlu0 %1177
  %v1181 = vsel %vm805, %v1159, 0
  %v1184 = vsel %vm805, %v1160, 0
  %vm1186 = vcmask 1046528
  %v1188 = vsel %vm1186, %v1178, 0
  %1190 = vmatprep.subr.bf16.mxu0 0
  %1191 = vmatpush1.bf16.msra.mxu0 0
  %1192 = vmatprep.subr.bf16.mxu0 0
  %1193 = vmatpush1.bf16.msra.mxu0 0
  %1194 = vmatprep.subr.bf16.mxu0 0
  %1195 = vmatpush1.bf16.msra.mxu0 0
  %1196 = vmatprep.subr.bf16.mxu0 0
  %1197 = vmatpush1.bf16.msra.mxu0 0
  %1198 = vmatprep.subr.bf16.mxu0 0
  %1199 = vmatpush1.bf16.msra.mxu0 0
  %1200 = vmatprep.subr.bf16.mxu0 0
  %1201 = vmatpush1.bf16.msra.mxu0 0
  %1202 = vmatprep.subr.bf16.mxu0 0
  %1203 = vmatpush1.bf16.msra.mxu0 %v1188
  %1204 = vmatprep.subr.bf16.mxu0 0
  %1205 = vmatpush1.bf16.msra.mxu0 %v1176
  %1206 = vmatprep.subr.bf16.mxu0 0
  %1207 = vmatpush2.bf16.msra.mxu0 0
  %1208 = vmatprep.subr.bf16.mxu0 0
  %1209 = vmatpush2.bf16.msra.mxu0 0
  %1210 = vmatprep.subr.bf16.mxu0 0
  %1211 = vmatpush2.bf16.msra.mxu0 0
  %1212 = vmatprep.subr.bf16.mxu0 0
  %1213 = vmatpush2.bf16.msra.mxu0 0
  %1214 = vmatprep.subr.bf16.mxu0 0
  %1215 = vmatpush2.bf16.msra.mxu0 0
  %1216 = vmatprep.subr.bf16.mxu0 0
  %1217 = vmatpush2.bf16.msra.mxu0 0
  %1218 = vmatprep.subr.bf16.mxu0 0
  %1219 = vmatpush2.bf16.msra.mxu0 0
  %1220 = vmatprep.subr.bf16.mxu0 0
  %1221 = vmatpush2.bf16.msra.mxu0 0
  %1222 = vmatprep.mubr.bf16.mxu0 0
  %1223 = vmatmul.mubr.bf16.gmra.mxu0 %v1181
  %v1224 = vpop.f32.mrf.mxu0
  %v1225 = vadd.f32 0.0, %v1224
  %v1226 = vpop.f32.mrf.mxu0
  %v1227 = vpop.f32.mrf.mxu0
  %v1228 = vadd.f32 0.0, %v1227
  %v1229 = vpop.f32.mrf.mxu0
  %1230 = vmatprep.mubr.bf16.mxu0 0
  %1231 = vmatmul.mubr.bf16.gmra.mxu0 %v1184
  %v1232 = vpop.f32.mrf.mxu0
  %v1233 = vadd.f32 0.0, %v1232
  %v1234 = vpop.f32.mrf.mxu0
  %v1235 = vpop.f32.mrf.mxu0
  %v1236 = vadd.f32 0.0, %v1235
  %v1237 = vpop.f32.mrf.mxu0
  %1238 = vdwg.mxu0
  %1239 = vrot.lane.b32.xlu0 %v254, 64
  %v1240 = vpop.permute.xlu0 %1239
  %1241 = vrot.lane.b32.xlu0 %v255, 64
  %v1242 = vpop.permute.xlu0 %1241
  %v1245 = vsel %vm805, %v1161, 0
  %v1248 = vsel %vm805, %v1162, 0
  %v1251 = vsel %vm1186, %v1242, 0
  %1253 = vmatprep.subr.bf16.mxu0 0
  %1254 = vmatpush1.bf16.msra.mxu0 0
  %1255 = vmatprep.subr.bf16.mxu0 0
  %1256 = vmatpush1.bf16.msra.mxu0 0
  %1257 = vmatprep.subr.bf16.mxu0 0
  %1258 = vmatpush1.bf16.msra.mxu0 0
  %1259 = vmatprep.subr.bf16.mxu0 0
  %1260 = vmatpush1.bf16.msra.mxu0 0
  %1261 = vmatprep.subr.bf16.mxu0 0
  %1262 = vmatpush1.bf16.msra.mxu0 0
  %1263 = vmatprep.subr.bf16.mxu0 0
  %1264 = vmatpush1.bf16.msra.mxu0 0
  %1265 = vmatprep.subr.bf16.mxu0 0
  %1266 = vmatpush1.bf16.msra.mxu0 %v1251
  %1267 = vmatprep.subr.bf16.mxu0 0
  %1268 = vmatpush1.bf16.msra.mxu0 %v1240
  %1269 = vmatprep.subr.bf16.mxu0 0
  %1270 = vmatpush2.bf16.msra.mxu0 0
  %1271 = vmatprep.subr.bf16.mxu0 0
  %1272 = vmatpush2.bf16.msra.mxu0 0
  %1273 = vmatprep.subr.bf16.mxu0 0
  %1274 = vmatpush2.bf16.msra.mxu0 0
  %1275 = vmatprep.subr.bf16.mxu0 0
  %1276 = vmatpush2.bf16.msra.mxu0 0
  %1277 = vmatprep.subr.bf16.mxu0 0
  %1278 = vmatpush2.bf16.msra.mxu0 0
  %1279 = vmatprep.subr.bf16.mxu0 0
  %1280 = vmatpush2.bf16.msra.mxu0 0
  %1281 = vmatprep.subr.bf16.mxu0 0
  %1282 = vmatpush2.bf16.msra.mxu0 0
  %1283 = vmatprep.subr.bf16.mxu0 0
  %1284 = vmatpush2.bf16.msra.mxu0 0
  %1285 = vmatprep.mubr.bf16.mxu0 0
  %1286 = vmatmul.mubr.bf16.gmra.mxu0 %v1245
  %v1287 = vpop.f32.mrf.mxu0
  %v1288 = vadd.f32 0.0, %v1287
  %v1289 = vpop.f32.mrf.mxu0
  %v1290 = vpop.f32.mrf.mxu0
  %v1291 = vadd.f32 0.0, %v1290
  %v1292 = vpop.f32.mrf.mxu0
  %1293 = vmatprep.mubr.bf16.mxu0 0
  %1294 = vmatmul.mubr.bf16.gmra.mxu0 %v1248
  %v1295 = vpop.f32.mrf.mxu0
  %v1296 = vadd.f32 0.0, %v1295
  %v1297 = vpop.f32.mrf.mxu0
  %v1298 = vpop.f32.mrf.mxu0
  %v1299 = vadd.f32 0.0, %v1298
  %v1300 = vpop.f32.mrf.mxu0
  %1301 = vdwg.mxu0
  %1302 = vrot.lane.b32.xlu0 %v256, 64
  %v1303 = vpop.permute.xlu0 %1302
  %1304 = vrot.lane.b32.xlu0 %v257, 64
  %v1305 = vpop.permute.xlu0 %1304
  %v1308 = vsel %vm805, %v1163, 0
  %v1311 = vsel %vm805, %v1164, 0
  %v1314 = vsel %vm1186, %v1305, 0
  %1316 = vmatprep.subr.bf16.mxu0 0
  %1317 = vmatpush1.bf16.msra.mxu0 0
  %1318 = vmatprep.subr.bf16.mxu0 0
  %1319 = vmatpush1.bf16.msra.mxu0 0
  %1320 = vmatprep.subr.bf16.mxu0 0
  %1321 = vmatpush1.bf16.msra.mxu0 0
  %1322 = vmatprep.subr.bf16.mxu0 0
  %1323 = vmatpush1.bf16.msra.mxu0 0
  %1324 = vmatprep.subr.bf16.mxu0 0
  %1325 = vmatpush1.bf16.msra.mxu0 0
  %1326 = vmatprep.subr.bf16.mxu0 0
  %1327 = vmatpush1.bf16.msra.mxu0 0
  %1328 = vmatprep.subr.bf16.mxu0 0
  %1329 = vmatpush1.bf16.msra.mxu0 %v1314
  %1330 = vmatprep.subr.bf16.mxu0 0
  %1331 = vmatpush1.bf16.msra.mxu0 %v1303
  %1332 = vmatprep.subr.bf16.mxu0 0
  %1333 = vmatpush2.bf16.msra.mxu0 0
  %1334 = vmatprep.subr.bf16.mxu0 0
  %1335 = vmatpush2.bf16.msra.mxu0 0
  %1336 = vmatprep.subr.bf16.mxu0 0
  %1337 = vmatpush2.bf16.msra.mxu0 0
  %1338 = vmatprep.subr.bf16.mxu0 0
  %1339 = vmatpush2.bf16.msra.mxu0 0
  %1340 = vmatprep.subr.bf16.mxu0 0
  %1341 = vmatpush2.bf16.msra.mxu0 0
  %1342 = vmatprep.subr.bf16.mxu0 0
  %1343 = vmatpush2.bf16.msra.mxu0 0
  %1344 = vmatprep.subr.bf16.mxu0 0
  %1345 = vmatpush2.bf16.msra.mxu0 0
  %1346 = vmatprep.subr.bf16.mxu0 0
  %1347 = vmatpush2.bf16.msra.mxu0 0
  %1348 = vmatprep.mubr.bf16.mxu0 0
  %1349 = vmatmul.mubr.bf16.gmra.mxu0 %v1308
  %v1350 = vpop.f32.mrf.mxu0
  %v1351 = vadd.f32 0.0, %v1350
  %v1352 = vpop.f32.mrf.mxu0
  %v1353 = vpop.f32.mrf.mxu0
  %v1354 = vadd.f32 0.0, %v1353
  %v1355 = vpop.f32.mrf.mxu0
  %1356 = vmatprep.mubr.bf16.mxu0 0
  %1357 = vmatmul.mubr.bf16.gmra.mxu0 %v1311
  %v1358 = vpop.f32.mrf.mxu0
  %v1359 = vadd.f32 0.0, %v1358
  %v1360 = vpop.f32.mrf.mxu0
  %v1361 = vpop.f32.mrf.mxu0
  %v1362 = vadd.f32 0.0, %v1361
  %v1363 = vpop.f32.mrf.mxu0
  %1364 = vdwg.mxu0
  %1365 = vrot.lane.b32.xlu0 %v258, 64
  %v1366 = vpop.permute.xlu0 %1365
  %1367 = vrot.lane.b32.xlu0 %v259, 64
  %v1368 = vpop.permute.xlu0 %1367
  %v1371 = vsel %vm805, %v1165, 0
  %v1374 = vsel %vm805, %v1166, 0
  %v1377 = vsel %vm1186, %v1368, 0
  %1379 = vmatprep.subr.bf16.mxu0 0
  %1380 = vmatpush1.bf16.msra.mxu0 0
  %1381 = vmatprep.subr.bf16.mxu0 0
  %1382 = vmatpush1.bf16.msra.mxu0 0
  %1383 = vmatprep.subr.bf16.mxu0 0
  %1384 = vmatpush1.bf16.msra.mxu0 0
  %1385 = vmatprep.subr.bf16.mxu0 0
  %1386 = vmatpush1.bf16.msra.mxu0 0
  %1387 = vmatprep.subr.bf16.mxu0 0
  %1388 = vmatpush1.bf16.msra.mxu0 0
  %1389 = vmatprep.subr.bf16.mxu0 0
  %1390 = vmatpush1.bf16.msra.mxu0 0
  %1391 = vmatprep.subr.bf16.mxu0 0
  %1392 = vmatpush1.bf16.msra.mxu0 %v1377
  %1393 = vmatprep.subr.bf16.mxu0 0
  %1394 = vmatpush1.bf16.msra.mxu0 %v1366
  %1395 = vmatprep.subr.bf16.mxu0 0
  %1396 = vmatpush2.bf16.msra.mxu0 0
  %1397 = vmatprep.subr.bf16.mxu0 0
  %1398 = vmatpush2.bf16.msra.mxu0 0
  %1399 = vmatprep.subr.bf16.mxu0 0
  %1400 = vmatpush2.bf16.msra.mxu0 0
  %1401 = vmatprep.subr.bf16.mxu0 0
  %1402 = vmatpush2.bf16.msra.mxu0 0
  %1403 = vmatprep.subr.bf16.mxu0 0
  %1404 = vmatpush2.bf16.msra.mxu0 0
  %1405 = vmatprep.subr.bf16.mxu0 0
  %1406 = vmatpush2.bf16.msra.mxu0 0
  %1407 = vmatprep.subr.bf16.mxu0 0
  %1408 = vmatpush2.bf16.msra.mxu0 0
  %1409 = vmatprep.subr.bf16.mxu0 0
  %1410 = vmatpush2.bf16.msra.mxu0 0
  %1411 = vmatprep.mubr.bf16.mxu0 0
  %1412 = vmatmul.mubr.bf16.gmra.mxu0 %v1371
  %v1413 = vpop.f32.mrf.mxu0
  %v1414 = vadd.f32 0.0, %v1413
  %v1415 = vpop.f32.mrf.mxu0
  %v1416 = vpop.f32.mrf.mxu0
  %v1417 = vadd.f32 0.0, %v1416
  %v1418 = vpop.f32.mrf.mxu0
  %1419 = vmatprep.mubr.bf16.mxu0 0
  %1420 = vmatmul.mubr.bf16.gmra.mxu0 %v1374
  %v1421 = vpop.f32.mrf.mxu0
  %v1422 = vadd.f32 0.0, %v1421
  %v1423 = vpop.f32.mrf.mxu0
  %v1424 = vpop.f32.mrf.mxu0
  %v1425 = vadd.f32 0.0, %v1424
  %v1426 = vpop.f32.mrf.mxu0
  %1427 = vdwg.mxu0
  %1428 = vrot.lane.b32.xlu0 %v260, 64
  %v1429 = vpop.permute.xlu0 %1428
  %1430 = vrot.lane.b32.xlu0 %v261, 64
  %v1431 = vpop.permute.xlu0 %1430
  %v1434 = vsel %vm805, %v1167, 0
  %v1437 = vsel %vm805, %v1168, 0
  %v1440 = vsel %vm1186, %v1431, 0
  %1442 = vmatprep.subr.bf16.mxu0 0
  %1443 = vmatpush1.bf16.msra.mxu0 0
  %1444 = vmatprep.subr.bf16.mxu0 0
  %1445 = vmatpush1.bf16.msra.mxu0 0
  %1446 = vmatprep.subr.bf16.mxu0 0
  %1447 = vmatpush1.bf16.msra.mxu0 0
  %1448 = vmatprep.subr.bf16.mxu0 0
  %1449 = vmatpush1.bf16.msra.mxu0 0
  %1450 = vmatprep.subr.bf16.mxu0 0
  %1451 = vmatpush1.bf16.msra.mxu0 0
  %1452 = vmatprep.subr.bf16.mxu0 0
  %1453 = vmatpush1.bf16.msra.mxu0 0
  %1454 = vmatprep.subr.bf16.mxu0 0
  %1455 = vmatpush1.bf16.msra.mxu0 %v1440
  %1456 = vmatprep.subr.bf16.mxu0 0
  %1457 = vmatpush1.bf16.msra.mxu0 %v1429
  %1458 = vmatprep.subr.bf16.mxu0 0
  %1459 = vmatpush2.bf16.msra.mxu0 0
  %1460 = vmatprep.subr.bf16.mxu0 0
  %1461 = vmatpush2.bf16.msra.mxu0 0
  %1462 = vmatprep.subr.bf16.mxu0 0
  %1463 = vmatpush2.bf16.msra.mxu0 0
  %1464 = vmatprep.subr.bf16.mxu0 0
  %1465 = vmatpush2.bf16.msra.mxu0 0
  %1466 = vmatprep.subr.bf16.mxu0 0
  %1467 = vmatpush2.bf16.msra.mxu0 0
  %1468 = vmatprep.subr.bf16.mxu0 0
  %1469 = vmatpush2.bf16.msra.mxu0 0
  %1470 = vmatprep.subr.bf16.mxu0 0
  %1471 = vmatpush2.bf16.msra.mxu0 0
  %1472 = vmatprep.subr.bf16.mxu0 0
  %1473 = vmatpush2.bf16.msra.mxu0 0
  %1474 = vmatprep.mubr.bf16.mxu0 0
  %1475 = vmatmul.mubr.bf16.gmra.mxu0 %v1434
  %v1476 = vpop.f32.mrf.mxu0
  %v1477 = vadd.f32 0.0, %v1476
  %v1478 = vpop.f32.mrf.mxu0
  %v1479 = vpop.f32.mrf.mxu0
  %v1480 = vadd.f32 0.0, %v1479
  %v1481 = vpop.f32.mrf.mxu0
  %1482 = vmatprep.mubr.bf16.mxu0 0
  %1483 = vmatmul.mubr.bf16.gmra.mxu0 %v1437
  %v1484 = vpop.f32.mrf.mxu0
  %v1485 = vadd.f32 0.0, %v1484
  %v1486 = vpop.f32.mrf.mxu0
  %v1487 = vpop.f32.mrf.mxu0
  %v1488 = vadd.f32 0.0, %v1487
  %v1489 = vpop.f32.mrf.mxu0
  %1490 = vdwg.mxu0
  %1491 = vrot.lane.b32.xlu0 %v262, 64
  %v1492 = vpop.permute.xlu0 %1491
  %1493 = vrot.lane.b32.xlu0 %v263, 64
  %v1494 = vpop.permute.xlu0 %1493
  %v1497 = vsel %vm805, %v1169, 0
  %v1500 = vsel %vm805, %v1170, 0
  %v1503 = vsel %vm1186, %v1494, 0
  %1505 = vmatprep.subr.bf16.mxu0 0
  %1506 = vmatpush1.bf16.msra.mxu0 0
  %1507 = vmatprep.subr.bf16.mxu0 0
  %1508 = vmatpush1.bf16.msra.mxu0 0
  %1509 = vmatprep.subr.bf16.mxu0 0
  %1510 = vmatpush1.bf16.msra.mxu0 0
  %1511 = vmatprep.subr.bf16.mxu0 0
  %1512 = vmatpush1.bf16.msra.mxu0 0
  %1513 = vmatprep.subr.bf16.mxu0 0
  %1514 = vmatpush1.bf16.msra.mxu0 0
  %1515 = vmatprep.subr.bf16.mxu0 0
  %1516 = vmatpush1.bf16.msra.mxu0 0
  %1517 = vmatprep.subr.bf16.mxu0 0
  %1518 = vmatpush1.bf16.msra.mxu0 %v1503
  %1519 = vmatprep.subr.bf16.mxu0 0
  %1520 = vmatpush1.bf16.msra.mxu0 %v1492
  %1521 = vmatprep.subr.bf16.mxu0 0
  %1522 = vmatpush2.bf16.msra.mxu0 0
  %1523 = vmatprep.subr.bf16.mxu0 0
  %1524 = vmatpush2.bf16.msra.mxu0 0
  %1525 = vmatprep.subr.bf16.mxu0 0
  %1526 = vmatpush2.bf16.msra.mxu0 0
  %1527 = vmatprep.subr.bf16.mxu0 0
  %1528 = vmatpush2.bf16.msra.mxu0 0
  %1529 = vmatprep.subr.bf16.mxu0 0
  %1530 = vmatpush2.bf16.msra.mxu0 0
  %1531 = vmatprep.subr.bf16.mxu0 0
  %1532 = vmatpush2.bf16.msra.mxu0 0
  %1533 = vmatprep.subr.bf16.mxu0 0
  %1534 = vmatpush2.bf16.msra.mxu0 0
  %1535 = vmatprep.subr.bf16.mxu0 0
  %1536 = vmatpush2.bf16.msra.mxu0 0
  %1537 = vmatprep.mubr.bf16.mxu0 0
  %1538 = vmatmul.mubr.bf16.gmra.mxu0 %v1497
  %v1539 = vpop.f32.mrf.mxu0
  %v1540 = vadd.f32 0.0, %v1539
  %v1541 = vpop.f32.mrf.mxu0
  %v1542 = vpop.f32.mrf.mxu0
  %v1543 = vadd.f32 0.0, %v1542
  %v1544 = vpop.f32.mrf.mxu0
  %1545 = vmatprep.mubr.bf16.mxu0 0
  %1546 = vmatmul.mubr.bf16.gmra.mxu0 %v1500
  %v1547 = vpop.f32.mrf.mxu0
  %v1548 = vadd.f32 0.0, %v1547
  %v1549 = vpop.f32.mrf.mxu0
  %v1550 = vpop.f32.mrf.mxu0
  %v1551 = vadd.f32 0.0, %v1550
  %v1552 = vpop.f32.mrf.mxu0
  %1553 = vdwg.mxu0
  %1554 = vrot.lane.b32.xlu0 %v264, 64
  %v1555 = vpop.permute.xlu0 %1554
  %1556 = vrot.lane.b32.xlu0 %v265, 64
  %v1557 = vpop.permute.xlu0 %1556
  %v1560 = vsel %vm805, %v1171, 0
  %v1563 = vsel %vm805, %v1172, 0
  %v1566 = vsel %vm1186, %v1557, 0
  %1568 = vmatprep.subr.bf16.mxu0 0
  %1569 = vmatpush1.bf16.msra.mxu0 0
  %1570 = vmatprep.subr.bf16.mxu0 0
  %1571 = vmatpush1.bf16.msra.mxu0 0
  %1572 = vmatprep.subr.bf16.mxu0 0
  %1573 = vmatpush1.bf16.msra.mxu0 0
  %1574 = vmatprep.subr.bf16.mxu0 0
  %1575 = vmatpush1.bf16.msra.mxu0 0
  %1576 = vmatprep.subr.bf16.mxu0 0
  %1577 = vmatpush1.bf16.msra.mxu0 0
  %1578 = vmatprep.subr.bf16.mxu0 0
  %1579 = vmatpush1.bf16.msra.mxu0 0
  %1580 = vmatprep.subr.bf16.mxu0 0
  %1581 = vmatpush1.bf16.msra.mxu0 %v1566
  %1582 = vmatprep.subr.bf16.mxu0 0
  %1583 = vmatpush1.bf16.msra.mxu0 %v1555
  %1584 = vmatprep.subr.bf16.mxu0 0
  %1585 = vmatpush2.bf16.msra.mxu0 0
  %1586 = vmatprep.subr.bf16.mxu0 0
  %1587 = vmatpush2.bf16.msra.mxu0 0
  %1588 = vmatprep.subr.bf16.mxu0 0
  %1589 = vmatpush2.bf16.msra.mxu0 0
  %1590 = vmatprep.subr.bf16.mxu0 0
  %1591 = vmatpush2.bf16.msra.mxu0 0
  %1592 = vmatprep.subr.bf16.mxu0 0
  %1593 = vmatpush2.bf16.msra.mxu0 0
  %1594 = vmatprep.subr.bf16.mxu0 0
  %1595 = vmatpush2.bf16.msra.mxu0 0
  %1596 = vmatprep.subr.bf16.mxu0 0
  %1597 = vmatpush2.bf16.msra.mxu0 0
  %1598 = vmatprep.subr.bf16.mxu0 0
  %1599 = vmatpush2.bf16.msra.mxu0 0
  %1600 = vmatprep.mubr.bf16.mxu0 0
  %1601 = vmatmul.mubr.bf16.gmra.mxu0 %v1560
  %v1602 = vpop.f32.mrf.mxu0
  %v1603 = vadd.f32 0.0, %v1602
  %v1604 = vpop.f32.mrf.mxu0
  %v1605 = vpop.f32.mrf.mxu0
  %v1606 = vadd.f32 0.0, %v1605
  %v1607 = vpop.f32.mrf.mxu0
  %1608 = vmatprep.mubr.bf16.mxu0 0
  %1609 = vmatmul.mubr.bf16.gmra.mxu0 %v1563
  %v1610 = vpop.f32.mrf.mxu0
  %v1611 = vadd.f32 0.0, %v1610
  %v1612 = vpop.f32.mrf.mxu0
  %v1613 = vpop.f32.mrf.mxu0
  %v1614 = vadd.f32 0.0, %v1613
  %v1615 = vpop.f32.mrf.mxu0
  %1616 = vdwg.mxu0
  %1617 = vrot.lane.b32.xlu0 %v266, 64
  %v1618 = vpop.permute.xlu0 %1617
  %1619 = vrot.lane.b32.xlu0 %v267, 64
  %v1620 = vpop.permute.xlu0 %1619
  %v1623 = vsel %vm805, %v1173, 0
  %v1626 = vsel %vm805, %v1174, 0
  %v1629 = vsel %vm1186, %v1620, 0
  %1631 = vmatprep.subr.bf16.mxu0 0
  %1632 = vmatpush1.bf16.msra.mxu0 0
  %1633 = vmatprep.subr.bf16.mxu0 0
  %1634 = vmatpush1.bf16.msra.mxu0 0
  %1635 = vmatprep.subr.bf16.mxu0 0
  %1636 = vmatpush1.bf16.msra.mxu0 0
  %1637 = vmatprep.subr.bf16.mxu0 0
  %1638 = vmatpush1.bf16.msra.mxu0 0
  %1639 = vmatprep.subr.bf16.mxu0 0
  %1640 = vmatpush1.bf16.msra.mxu0 0
  %1641 = vmatprep.subr.bf16.mxu0 0
  %1642 = vmatpush1.bf16.msra.mxu0 0
  %1643 = vmatprep.subr.bf16.mxu0 0
  %1644 = vmatpush1.bf16.msra.mxu0 %v1629
  %1645 = vmatprep.subr.bf16.mxu0 0
  %1646 = vmatpush1.bf16.msra.mxu0 %v1618
  %1647 = vmatprep.subr.bf16.mxu0 0
  %1648 = vmatpush2.bf16.msra.mxu0 0
  %1649 = vmatprep.subr.bf16.mxu0 0
  %1650 = vmatpush2.bf16.msra.mxu0 0
  %1651 = vmatprep.subr.bf16.mxu0 0
  %1652 = vmatpush2.bf16.msra.mxu0 0
  %1653 = vmatprep.subr.bf16.mxu0 0
  %1654 = vmatpush2.bf16.msra.mxu0 0
  %1655 = vmatprep.subr.bf16.mxu0 0
  %1656 = vmatpush2.bf16.msra.mxu0 0
  %1657 = vmatprep.subr.bf16.mxu0 0
  %1658 = vmatpush2.bf16.msra.mxu0 0
  %1659 = vmatprep.subr.bf16.mxu0 0
  %1660 = vmatpush2.bf16.msra.mxu0 0
  %1661 = vmatprep.subr.bf16.mxu0 0
  %1662 = vmatpush2.bf16.msra.mxu0 0
  %1663 = vmatprep.mubr.bf16.mxu0 0
  %1664 = vmatmul.mubr.bf16.gmra.mxu0 %v1623
  %v1665 = vpop.f32.mrf.mxu0
  %v1666 = vadd.f32 0.0, %v1665
  %v1667 = vpop.f32.mrf.mxu0
  %v1668 = vpop.f32.mrf.mxu0
  %v1669 = vadd.f32 0.0, %v1668
  %v1670 = vpop.f32.mrf.mxu0
  %1671 = vmatprep.mubr.bf16.mxu0 0
  %1672 = vmatmul.mubr.bf16.gmra.mxu0 %v1626
  %v1673 = vpop.f32.mrf.mxu0
  %v1674 = vadd.f32 0.0, %v1673
  %v1675 = vpop.f32.mrf.mxu0
  %v1676 = vpop.f32.mrf.mxu0
  %v1677 = vadd.f32 0.0, %v1676
  %v1678 = vpop.f32.mrf.mxu0
  %1679 = vdwg.mxu0
  %v1680 = vpack.c.bf16 %v1228, %v1225
  %v1681 = vpack.c.bf16 %v1236, %v1233
  %v1682 = vpack.c.bf16 %v1291, %v1288
  %v1683 = vpack.c.bf16 %v1299, %v1296
  %v1684 = vpack.c.bf16 %v1354, %v1351
  %v1685 = vpack.c.bf16 %v1362, %v1359
  %v1686 = vpack.c.bf16 %v1417, %v1414
  %v1687 = vpack.c.bf16 %v1425, %v1422
  %v1688 = vpack.c.bf16 %v1480, %v1477
  %v1689 = vpack.c.bf16 %v1488, %v1485
  %v1690 = vpack.c.bf16 %v1543, %v1540
  %v1691 = vpack.c.bf16 %v1551, %v1548
  %v1692 = vpack.c.bf16 %v1606, %v1603
  %v1693 = vpack.c.bf16 %v1614, %v1611
  %v1694 = vpack.c.bf16 %v1669, %v1666
  %v1695 = vpack.c.bf16 %v1677, %v1674
  %v1696 = vld [vmem:[%s3] sm:$0xf]
  %v1697 = vld [vmem:[%s3 + $0x4] sm:$0xf]
  %v1698 = vld [vmem:[%s3 + $0x8] sm:$0xf]
  %v1699 = vld [vmem:[%s3 + $0xc] sm:$0xf]
  %v1700 = vld [vmem:[%s3 + $0x10] sm:$0xf]
  %v1701 = vld [vmem:[%s3 + $0x14] sm:$0xf]
  %v1702 = vld [vmem:[%s3 + $0x18] sm:$0xf]
  %v1703 = vld [vmem:[%s3 + $0x1c] sm:$0xf]
  %v1705 = vsel %vm274, %v1680, 0
  %v1708 = vsel %vm274, %v1681, 0
  %vm1710 = vcmask 1043456
  %v1712 = vsel %vm1710, %v1696, 0
  %1714 = vmatprep.subr.bf16.mxu0 0
  %1715 = vmatpush1.bf16.msra.mxu0 0
  %1716 = vmatprep.subr.bf16.mxu0 0
  %1717 = vmatpush1.bf16.msra.mxu0 0
  %1718 = vmatprep.subr.bf16.mxu0 0
  %1719 = vmatpush1.bf16.msra.mxu0 0
  %1720 = vmatprep.subr.bf16.mxu0 0
  %1721 = vmatpush1.bf16.msra.mxu0 0
  %1722 = vmatprep.subr.bf16.mxu0 0
  %1723 = vmatpush1.bf16.msra.mxu0 0
  %1724 = vmatprep.subr.bf16.mxu0 0
  %1725 = vmatpush1.bf16.msra.mxu0 0
  %1726 = vmatprep.subr.bf16.mxu0 0
  %1727 = vmatpush1.bf16.msra.mxu0 0
  %1728 = vmatprep.subr.bf16.mxu0 0
  %1729 = vmatpush1.bf16.msra.mxu0 %v1712
  %1730 = vmatprep.subr.bf16.mxu0 0
  %1731 = vmatpush2.bf16.msra.mxu0 0
  %1732 = vmatprep.subr.bf16.mxu0 0
  %1733 = vmatpush2.bf16.msra.mxu0 0
  %1734 = vmatprep.subr.bf16.mxu0 0
  %1735 = vmatpush2.bf16.msra.mxu0 0
  %1736 = vmatprep.subr.bf16.mxu0 0
  %1737 = vmatpush2.bf16.msra.mxu0 0
  %1738 = vmatprep.subr.bf16.mxu0 0
  %1739 = vmatpush2.bf16.msra.mxu0 0
  %1740 = vmatprep.subr.bf16.mxu0 0
  %1741 = vmatpush2.bf16.msra.mxu0 0
  %1742 = vmatprep.subr.bf16.mxu0 0
  %1743 = vmatpush2.bf16.msra.mxu0 0
  %1744 = vmatprep.subr.bf16.mxu0 0
  %1745 = vmatpush2.bf16.msra.mxu0 0
  %1746 = vmatprep.mubr.bf16.mxu0 0
  %1747 = vmatmul.mubr.bf16.gmra.mxu0 %v1705
  %v1748 = vpop.f32.mrf.mxu0
  %v1749 = vadd.f32 0.0, %v1748
  %v1750 = vpop.f32.mrf.mxu0
  %v1751 = vpop.f32.mrf.mxu0
  %v1752 = vadd.f32 0.0, %v1751
  %v1753 = vpop.f32.mrf.mxu0
  %1754 = vmatprep.mubr.bf16.mxu0 0
  %1755 = vmatmul.mubr.bf16.gmra.mxu0 %v1708
  %v1756 = vpop.f32.mrf.mxu0
  %v1757 = vadd.f32 0.0, %v1756
  %v1758 = vpop.f32.mrf.mxu0
  %v1759 = vpop.f32.mrf.mxu0
  %v1760 = vadd.f32 0.0, %v1759
  %v1761 = vpop.f32.mrf.mxu0
  %1762 = vdwg.mxu0
  %v1764 = vsel %vm274, %v1682, 0
  %v1767 = vsel %vm274, %v1683, 0
  %v1770 = vsel %vm1710, %v1697, 0
  %1772 = vmatprep.subr.bf16.mxu0 0
  %1773 = vmatpush1.bf16.msra.mxu0 0
  %1774 = vmatprep.subr.bf16.mxu0 0
  %1775 = vmatpush1.bf16.msra.mxu0 0
  %1776 = vmatprep.subr.bf16.mxu0 0
  %1777 = vmatpush1.bf16.msra.mxu0 0
  %1778 = vmatprep.subr.bf16.mxu0 0
  %1779 = vmatpush1.bf16.msra.mxu0 0
  %1780 = vmatprep.subr.bf16.mxu0 0
  %1781 = vmatpush1.bf16.msra.mxu0 0
  %1782 = vmatprep.subr.bf16.mxu0 0
  %1783 = vmatpush1.bf16.msra.mxu0 0
  %1784 = vmatprep.subr.bf16.mxu0 0
  %1785 = vmatpush1.bf16.msra.mxu0 0
  %1786 = vmatprep.subr.bf16.mxu0 0
  %1787 = vmatpush1.bf16.msra.mxu0 %v1770
  %1788 = vmatprep.subr.bf16.mxu0 0
  %1789 = vmatpush2.bf16.msra.mxu0 0
  %1790 = vmatprep.subr.bf16.mxu0 0
  %1791 = vmatpush2.bf16.msra.mxu0 0
  %1792 = vmatprep.subr.bf16.mxu0 0
  %1793 = vmatpush2.bf16.msra.mxu0 0
  %1794 = vmatprep.subr.bf16.mxu0 0
  %1795 = vmatpush2.bf16.msra.mxu0 0
  %1796 = vmatprep.subr.bf16.mxu0 0
  %1797 = vmatpush2.bf16.msra.mxu0 0
  %1798 = vmatprep.subr.bf16.mxu0 0
  %1799 = vmatpush2.bf16.msra.mxu0 0
  %1800 = vmatprep.subr.bf16.mxu0 0
  %1801 = vmatpush2.bf16.msra.mxu0 0
  %1802 = vmatprep.subr.bf16.mxu0 0
  %1803 = vmatpush2.bf16.msra.mxu0 0
  %1804 = vmatprep.mubr.bf16.mxu0 0
  %1805 = vmatmul.mubr.bf16.gmra.mxu0 %v1764
  %v1806 = vpop.f32.mrf.mxu0
  %v1807 = vadd.f32 0.0, %v1806
  %v1808 = vpop.f32.mrf.mxu0
  %v1809 = vpop.f32.mrf.mxu0
  %v1810 = vadd.f32 0.0, %v1809
  %v1811 = vpop.f32.mrf.mxu0
  %1812 = vmatprep.mubr.bf16.mxu0 0
  %1813 = vmatmul.mubr.bf16.gmra.mxu0 %v1767
  %v1814 = vpop.f32.mrf.mxu0
  %v1815 = vadd.f32 0.0, %v1814
  %v1816 = vpop.f32.mrf.mxu0
  %v1817 = vpop.f32.mrf.mxu0
  %v1818 = vadd.f32 0.0, %v1817
  %v1819 = vpop.f32.mrf.mxu0
  %1820 = vdwg.mxu0
  %v1822 = vsel %vm274, %v1684, 0
  %v1825 = vsel %vm274, %v1685, 0
  %v1828 = vsel %vm1710, %v1698, 0
  %1830 = vmatprep.subr.bf16.mxu0 0
  %1831 = vmatpush1.bf16.msra.mxu0 0
  %1832 = vmatprep.subr.bf16.mxu0 0
  %1833 = vmatpush1.bf16.msra.mxu0 0
  %1834 = vmatprep.subr.bf16.mxu0 0
  %1835 = vmatpush1.bf16.msra.mxu0 0
  %1836 = vmatprep.subr.bf16.mxu0 0
  %1837 = vmatpush1.bf16.msra.mxu0 0
  %1838 = vmatprep.subr.bf16.mxu0 0
  %1839 = vmatpush1.bf16.msra.mxu0 0
  %1840 = vmatprep.subr.bf16.mxu0 0
  %1841 = vmatpush1.bf16.msra.mxu0 0
  %1842 = vmatprep.subr.bf16.mxu0 0
  %1843 = vmatpush1.bf16.msra.mxu0 0
  %1844 = vmatprep.subr.bf16.mxu0 0
  %1845 = vmatpush1.bf16.msra.mxu0 %v1828
  %1846 = vmatprep.subr.bf16.mxu0 0
  %1847 = vmatpush2.bf16.msra.mxu0 0
  %1848 = vmatprep.subr.bf16.mxu0 0
  %1849 = vmatpush2.bf16.msra.mxu0 0
  %1850 = vmatprep.subr.bf16.mxu0 0
  %1851 = vmatpush2.bf16.msra.mxu0 0
  %1852 = vmatprep.subr.bf16.mxu0 0
  %1853 = vmatpush2.bf16.msra.mxu0 0
  %1854 = vmatprep.subr.bf16.mxu0 0
  %1855 = vmatpush2.bf16.msra.mxu0 0
  %1856 = vmatprep.subr.bf16.mxu0 0
  %1857 = vmatpush2.bf16.msra.mxu0 0
  %1858 = vmatprep.subr.bf16.mxu0 0
  %1859 = vmatpush2.bf16.msra.mxu0 0
  %1860 = vmatprep.subr.bf16.mxu0 0
  %1861 = vmatpush2.bf16.msra.mxu0 0
  %1862 = vmatprep.mubr.bf16.mxu0 0
  %1863 = vmatmul.mubr.bf16.gmra.mxu0 %v1822
  %v1864 = vpop.f32.mrf.mxu0
  %v1865 = vadd.f32 0.0, %v1864
  %v1866 = vpop.f32.mrf.mxu0
  %v1867 = vpop.f32.mrf.mxu0
  %v1868 = vadd.f32 0.0, %v1867
  %v1869 = vpop.f32.mrf.mxu0
  %1870 = vmatprep.mubr.bf16.mxu0 0
  %1871 = vmatmul.mubr.bf16.gmra.mxu0 %v1825
  %v1872 = vpop.f32.mrf.mxu0
  %v1873 = vadd.f32 0.0, %v1872
  %v1874 = vpop.f32.mrf.mxu0
  %v1875 = vpop.f32.mrf.mxu0
  %v1876 = vadd.f32 0.0, %v1875
  %v1877 = vpop.f32.mrf.mxu0
  %1878 = vdwg.mxu0
  %v1880 = vsel %vm274, %v1686, 0
  %v1883 = vsel %vm274, %v1687, 0
  %v1886 = vsel %vm1710, %v1699, 0
  %1888 = vmatprep.subr.bf16.mxu0 0
  %1889 = vmatpush1.bf16.msra.mxu0 0
  %1890 = vmatprep.subr.bf16.mxu0 0
  %1891 = vmatpush1.bf16.msra.mxu0 0
  %1892 = vmatprep.subr.bf16.mxu0 0
  %1893 = vmatpush1.bf16.msra.mxu0 0
  %1894 = vmatprep.subr.bf16.mxu0 0
  %1895 = vmatpush1.bf16.msra.mxu0 0
  %1896 = vmatprep.subr.bf16.mxu0 0
  %1897 = vmatpush1.bf16.msra.mxu0 0
  %1898 = vmatprep.subr.bf16.mxu0 0
  %1899 = vmatpush1.bf16.msra.mxu0 0
  %1900 = vmatprep.subr.bf16.mxu0 0
  %1901 = vmatpush1.bf16.msra.mxu0 0
  %1902 = vmatprep.subr.bf16.mxu0 0
  %1903 = vmatpush1.bf16.msra.mxu0 %v1886
  %1904 = vmatprep.subr.bf16.mxu0 0
  %1905 = vmatpush2.bf16.msra.mxu0 0
  %1906 = vmatprep.subr.bf16.mxu0 0
  %1907 = vmatpush2.bf16.msra.mxu0 0
  %1908 = vmatprep.subr.bf16.mxu0 0
  %1909 = vmatpush2.bf16.msra.mxu0 0
  %1910 = vmatprep.subr.bf16.mxu0 0
  %1911 = vmatpush2.bf16.msra.mxu0 0
  %1912 = vmatprep.subr.bf16.mxu0 0
  %1913 = vmatpush2.bf16.msra.mxu0 0
  %1914 = vmatprep.subr.bf16.mxu0 0
  %1915 = vmatpush2.bf16.msra.mxu0 0
  %1916 = vmatprep.subr.bf16.mxu0 0
  %1917 = vmatpush2.bf16.msra.mxu0 0
  %1918 = vmatprep.subr.bf16.mxu0 0
  %1919 = vmatpush2.bf16.msra.mxu0 0
  %1920 = vmatprep.mubr.bf16.mxu0 0
  %1921 = vmatmul.mubr.bf16.gmra.mxu0 %v1880
  %v1922 = vpop.f32.mrf.mxu0
  %v1923 = vadd.f32 0.0, %v1922
  %v1924 = vpop.f32.mrf.mxu0
  %v1925 = vpop.f32.mrf.mxu0
  %v1926 = vadd.f32 0.0, %v1925
  %v1927 = vpop.f32.mrf.mxu0
  %1928 = vmatprep.mubr.bf16.mxu0 0
  %1929 = vmatmul.mubr.bf16.gmra.mxu0 %v1883
  %v1930 = vpop.f32.mrf.mxu0
  %v1931 = vadd.f32 0.0, %v1930
  %v1932 = vpop.f32.mrf.mxu0
  %v1933 = vpop.f32.mrf.mxu0
  %v1934 = vadd.f32 0.0, %v1933
  %v1935 = vpop.f32.mrf.mxu0
  %1936 = vdwg.mxu0
  %v1938 = vsel %vm274, %v1688, 0
  %v1941 = vsel %vm274, %v1689, 0
  %v1944 = vsel %vm1710, %v1700, 0
  %1946 = vmatprep.subr.bf16.mxu0 0
  %1947 = vmatpush1.bf16.msra.mxu0 0
  %1948 = vmatprep.subr.bf16.mxu0 0
  %1949 = vmatpush1.bf16.msra.mxu0 0
  %1950 = vmatprep.subr.bf16.mxu0 0
  %1951 = vmatpush1.bf16.msra.mxu0 0
  %1952 = vmatprep.subr.bf16.mxu0 0
  %1953 = vmatpush1.bf16.msra.mxu0 0
  %1954 = vmatprep.subr.bf16.mxu0 0
  %1955 = vmatpush1.bf16.msra.mxu0 0
  %1956 = vmatprep.subr.bf16.mxu0 0
  %1957 = vmatpush1.bf16.msra.mxu0 0
  %1958 = vmatprep.subr.bf16.mxu0 0
  %1959 = vmatpush1.bf16.msra.mxu0 0
  %1960 = vmatprep.subr.bf16.mxu0 0
  %1961 = vmatpush1.bf16.msra.mxu0 %v1944
  %1962 = vmatprep.subr.bf16.mxu0 0
  %1963 = vmatpush2.bf16.msra.mxu0 0
  %1964 = vmatprep.subr.bf16.mxu0 0
  %1965 = vmatpush2.bf16.msra.mxu0 0
  %1966 = vmatprep.subr.bf16.mxu0 0
  %1967 = vmatpush2.bf16.msra.mxu0 0
  %1968 = vmatprep.subr.bf16.mxu0 0
  %1969 = vmatpush2.bf16.msra.mxu0 0
  %1970 = vmatprep.subr.bf16.mxu0 0
  %1971 = vmatpush2.bf16.msra.mxu0 0
  %1972 = vmatprep.subr.bf16.mxu0 0
  %1973 = vmatpush2.bf16.msra.mxu0 0
  %1974 = vmatprep.subr.bf16.mxu0 0
  %1975 = vmatpush2.bf16.msra.mxu0 0
  %1976 = vmatprep.subr.bf16.mxu0 0
  %1977 = vmatpush2.bf16.msra.mxu0 0
  %1978 = vmatprep.mubr.bf16.mxu0 0
  %1979 = vmatmul.mubr.bf16.gmra.mxu0 %v1938
  %v1980 = vpop.f32.mrf.mxu0
  %v1981 = vadd.f32 0.0, %v1980
  %v1982 = vpop.f32.mrf.mxu0
  %v1983 = vpop.f32.mrf.mxu0
  %v1984 = vadd.f32 0.0, %v1983
  %v1985 = vpop.f32.mrf.mxu0
  %1986 = vmatprep.mubr.bf16.mxu0 0
  %1987 = vmatmul.mubr.bf16.gmra.mxu0 %v1941
  %v1988 = vpop.f32.mrf.mxu0
  %v1989 = vadd.f32 0.0, %v1988
  %v1990 = vpop.f32.mrf.mxu0
  %v1991 = vpop.f32.mrf.mxu0
  %v1992 = vadd.f32 0.0, %v1991
  %v1993 = vpop.f32.mrf.mxu0
  %1994 = vdwg.mxu0
  %v1996 = vsel %vm274, %v1690, 0
  %v1999 = vsel %vm274, %v1691, 0
  %v2002 = vsel %vm1710, %v1701, 0
  %2004 = vmatprep.subr.bf16.mxu0 0
  %2005 = vmatpush1.bf16.msra.mxu0 0
  %2006 = vmatprep.subr.bf16.mxu0 0
  %2007 = vmatpush1.bf16.msra.mxu0 0
  %2008 = vmatprep.subr.bf16.mxu0 0
  %2009 = vmatpush1.bf16.msra.mxu0 0
  %2010 = vmatprep.subr.bf16.mxu0 0
  %2011 = vmatpush1.bf16.msra.mxu0 0
  %2012 = vmatprep.subr.bf16.mxu0 0
  %2013 = vmatpush1.bf16.msra.mxu0 0
  %2014 = vmatprep.subr.bf16.mxu0 0
  %2015 = vmatpush1.bf16.msra.mxu0 0
  %2016 = vmatprep.subr.bf16.mxu0 0
  %2017 = vmatpush1.bf16.msra.mxu0 0
  %2018 = vmatprep.subr.bf16.mxu0 0
  %2019 = vmatpush1.bf16.msra.mxu0 %v2002
  %2020 = vmatprep.subr.bf16.mxu0 0
  %2021 = vmatpush2.bf16.msra.mxu0 0
  %2022 = vmatprep.subr.bf16.mxu0 0
  %2023 = vmatpush2.bf16.msra.mxu0 0
  %2024 = vmatprep.subr.bf16.mxu0 0
  %2025 = vmatpush2.bf16.msra.mxu0 0
  %2026 = vmatprep.subr.bf16.mxu0 0
  %2027 = vmatpush2.bf16.msra.mxu0 0
  %2028 = vmatprep.subr.bf16.mxu0 0
  %2029 = vmatpush2.bf16.msra.mxu0 0
  %2030 = vmatprep.subr.bf16.mxu0 0
  %2031 = vmatpush2.bf16.msra.mxu0 0
  %2032 = vmatprep.subr.bf16.mxu0 0
  %2033 = vmatpush2.bf16.msra.mxu0 0
  %2034 = vmatprep.subr.bf16.mxu0 0
  %2035 = vmatpush2.bf16.msra.mxu0 0
  %2036 = vmatprep.mubr.bf16.mxu0 0
  %2037 = vmatmul.mubr.bf16.gmra.mxu0 %v1996
  %v2038 = vpop.f32.mrf.mxu0
  %v2039 = vadd.f32 0.0, %v2038
  %v2040 = vpop.f32.mrf.mxu0
  %v2041 = vpop.f32.mrf.mxu0
  %v2042 = vadd.f32 0.0, %v2041
  %v2043 = vpop.f32.mrf.mxu0
  %2044 = vmatprep.mubr.bf16.mxu0 0
  %2045 = vmatmul.mubr.bf16.gmra.mxu0 %v1999
  %v2046 = vpop.f32.mrf.mxu0
  %v2047 = vadd.f32 0.0, %v2046
  %v2048 = vpop.f32.mrf.mxu0
  %v2049 = vpop.f32.mrf.mxu0
  %v2050 = vadd.f32 0.0, %v2049
  %v2051 = vpop.f32.mrf.mxu0
  %2052 = vdwg.mxu0
  %v2054 = vsel %vm274, %v1692, 0
  %v2057 = vsel %vm274, %v1693, 0
  %v2060 = vsel %vm1710, %v1702, 0
  %2062 = vmatprep.subr.bf16.mxu0 0
  %2063 = vmatpush1.bf16.msra.mxu0 0
  %2064 = vmatprep.subr.bf16.mxu0 0
  %2065 = vmatpush1.bf16.msra.mxu0 0
  %2066 = vmatprep.subr.bf16.mxu0 0
  %2067 = vmatpush1.bf16.msra.mxu0 0
  %2068 = vmatprep.subr.bf16.mxu0 0
  %2069 = vmatpush1.bf16.msra.mxu0 0
  %2070 = vmatprep.subr.bf16.mxu0 0
  %2071 = vmatpush1.bf16.msra.mxu0 0
  %2072 = vmatprep.subr.bf16.mxu0 0
  %2073 = vmatpush1.bf16.msra.mxu0 0
  %2074 = vmatprep.subr.bf16.mxu0 0
  %2075 = vmatpush1.bf16.msra.mxu0 0
  %2076 = vmatprep.subr.bf16.mxu0 0
  %2077 = vmatpush1.bf16.msra.mxu0 %v2060
  %2078 = vmatprep.subr.bf16.mxu0 0
  %2079 = vmatpush2.bf16.msra.mxu0 0
  %2080 = vmatprep.subr.bf16.mxu0 0
  %2081 = vmatpush2.bf16.msra.mxu0 0
  %2082 = vmatprep.subr.bf16.mxu0 0
  %2083 = vmatpush2.bf16.msra.mxu0 0
  %2084 = vmatprep.subr.bf16.mxu0 0
  %2085 = vmatpush2.bf16.msra.mxu0 0
  %2086 = vmatprep.subr.bf16.mxu0 0
  %2087 = vmatpush2.bf16.msra.mxu0 0
  %2088 = vmatprep.subr.bf16.mxu0 0
  %2089 = vmatpush2.bf16.msra.mxu0 0
  %2090 = vmatprep.subr.bf16.mxu0 0
  %2091 = vmatpush2.bf16.msra.mxu0 0
  %2092 = vmatprep.subr.bf16.mxu0 0
  %2093 = vmatpush2.bf16.msra.mxu0 0
  %2094 = vmatprep.mubr.bf16.mxu0 0
  %2095 = vmatmul.mubr.bf16.gmra.mxu0 %v2054
  %v2096 = vpop.f32.mrf.mxu0
  %v2097 = vadd.f32 0.0, %v2096
  %v2098 = vpop.f32.mrf.mxu0
  %v2099 = vpop.f32.mrf.mxu0
  %v2100 = vadd.f32 0.0, %v2099
  %v2101 = vpop.f32.mrf.mxu0
  %2102 = vmatprep.mubr.bf16.mxu0 0
  %2103 = vmatmul.mubr.bf16.gmra.mxu0 %v2057
  %v2104 = vpop.f32.mrf.mxu0
  %v2105 = vadd.f32 0.0, %v2104
  %v2106 = vpop.f32.mrf.mxu0
  %v2107 = vpop.f32.mrf.mxu0
  %v2108 = vadd.f32 0.0, %v2107
  %v2109 = vpop.f32.mrf.mxu0
  %2110 = vdwg.mxu0
  %v2112 = vsel %vm274, %v1694, 0
  %v2115 = vsel %vm274, %v1695, 0
  %v2118 = vsel %vm1710, %v1703, 0
  %2120 = vmatprep.subr.bf16.mxu0 0
  %2121 = vmatpush1.bf16.msra.mxu0 0
  %2122 = vmatprep.subr.bf16.mxu0 0
  %2123 = vmatpush1.bf16.msra.mxu0 0
  %2124 = vmatprep.subr.bf16.mxu0 0
  %2125 = vmatpush1.bf16.msra.mxu0 0
  %2126 = vmatprep.subr.bf16.mxu0 0
  %2127 = vmatpush1.bf16.msra.mxu0 0
  %2128 = vmatprep.subr.bf16.mxu0 0
  %2129 = vmatpush1.bf16.msra.mxu0 0
  %2130 = vmatprep.subr.bf16.mxu0 0
  %2131 = vmatpush1.bf16.msra.mxu0 0
  %2132 = vmatprep.subr.bf16.mxu0 0
  %2133 = vmatpush1.bf16.msra.mxu0 0
  %2134 = vmatprep.subr.bf16.mxu0 0
  %2135 = vmatpush1.bf16.msra.mxu0 %v2118
  %2136 = vmatprep.subr.bf16.mxu0 0
  %2137 = vmatpush2.bf16.msra.mxu0 0
  %2138 = vmatprep.subr.bf16.mxu0 0
  %2139 = vmatpush2.bf16.msra.mxu0 0
  %2140 = vmatprep.subr.bf16.mxu0 0
  %2141 = vmatpush2.bf16.msra.mxu0 0
  %2142 = vmatprep.subr.bf16.mxu0 0
  %2143 = vmatpush2.bf16.msra.mxu0 0
  %2144 = vmatprep.subr.bf16.mxu0 0
  %2145 = vmatpush2.bf16.msra.mxu0 0
  %2146 = vmatprep.subr.bf16.mxu0 0
  %2147 = vmatpush2.bf16.msra.mxu0 0
  %2148 = vmatprep.subr.bf16.mxu0 0
  %2149 = vmatpush2.bf16.msra.mxu0 0
  %2150 = vmatprep.subr.bf16.mxu0 0
  %2151 = vmatpush2.bf16.msra.mxu0 0
  %2152 = vmatprep.mubr.bf16.mxu0 0
  %2153 = vmatmul.mubr.bf16.gmra.mxu0 %v2112
  %v2154 = vpop.f32.mrf.mxu0
  %v2155 = vadd.f32 0.0, %v2154
  %v2156 = vpop.f32.mrf.mxu0
  %v2157 = vpop.f32.mrf.mxu0
  %v2158 = vadd.f32 0.0, %v2157
  %v2159 = vpop.f32.mrf.mxu0
  %2160 = vmatprep.mubr.bf16.mxu0 0
  %2161 = vmatmul.mubr.bf16.gmra.mxu0 %v2115
  %v2162 = vpop.f32.mrf.mxu0
  %v2163 = vadd.f32 0.0, %v2162
  %v2164 = vpop.f32.mrf.mxu0
  %v2165 = vpop.f32.mrf.mxu0
  %v2166 = vadd.f32 0.0, %v2165
  %v2167 = vpop.f32.mrf.mxu0
  %2168 = vdwg.mxu0
  %v2169 = vsel %vm80, %v1749, 0.0
  %v2170 = vsel %vm80, %v1807, 0.0
  %v2171 = vadd.f32 %v2169, %v2170
  %v2172 = vsel %vm80, %v1865, 0.0
  %v2173 = vadd.f32 %v2171, %v2172
  %v2174 = vsel %vm80, %v1923, 0.0
  %v2175 = vadd.f32 %v2173, %v2174
  %v2176 = vsel %vm80, %v1752, 0.0
  %v2177 = vsel %vm80, %v1810, 0.0
  %v2178 = vadd.f32 %v2176, %v2177
  %v2179 = vsel %vm80, %v1868, 0.0
  %v2180 = vadd.f32 %v2178, %v2179
  %v2181 = vsel %vm80, %v1926, 0.0
  %v2182 = vadd.f32 %v2180, %v2181
  %v2183 = vsel %vm80, %v1757, 0.0
  %v2184 = vsel %vm80, %v1815, 0.0
  %v2185 = vadd.f32 %v2183, %v2184
  %v2186 = vsel %vm80, %v1873, 0.0
  %v2187 = vadd.f32 %v2185, %v2186
  %v2188 = vsel %vm80, %v1931, 0.0
  %v2189 = vadd.f32 %v2187, %v2188
  %vm2190 = vcmask 259072
  %v2191 = vsel %vm2190, %v1760, 0.0
  %v2192 = vsel %vm2190, %v1818, 0.0
  %v2193 = vadd.f32 %v2191, %v2192
  %v2194 = vsel %vm2190, %v1876, 0.0
  %v2195 = vadd.f32 %v2193, %v2194
  %v2196 = vsel %vm2190, %v1934, 0.0
  %v2197 = vadd.f32 %v2195, %v2196
  %v2198 = vsel %vm80, %v1981, 0.0
  %v2199 = vsel %vm80, %v2039, 0.0
  %v2200 = vadd.f32 %v2198, %v2199
  %v2201 = vsel %vm80, %v2097, 0.0
  %v2202 = vadd.f32 %v2200, %v2201
  %v2203 = vsel %vm80, %v2155, 0.0
  %v2204 = vadd.f32 %v2202, %v2203
  %v2205 = vsel %vm80, %v1984, 0.0
  %v2206 = vsel %vm80, %v2042, 0.0
  %v2207 = vadd.f32 %v2205, %v2206
  %v2208 = vsel %vm80, %v2100, 0.0
  %v2209 = vadd.f32 %v2207, %v2208
  %v2210 = vsel %vm80, %v2158, 0.0
  %v2211 = vadd.f32 %v2209, %v2210
  %v2212 = vsel %vm80, %v1989, 0.0
  %v2213 = vsel %vm80, %v2047, 0.0
  %v2214 = vadd.f32 %v2212, %v2213
  %v2215 = vsel %vm80, %v2105, 0.0
  %v2216 = vadd.f32 %v2214, %v2215
  %v2217 = vsel %vm80, %v2163, 0.0
  %v2218 = vadd.f32 %v2216, %v2217
  %v2219 = vsel %vm2190, %v1992, 0.0
  %v2220 = vsel %vm2190, %v2050, 0.0
  %v2221 = vadd.f32 %v2219, %v2220
  %v2222 = vsel %vm2190, %v2108, 0.0
  %v2223 = vadd.f32 %v2221, %v2222
  %v2224 = vsel %vm2190, %v2166, 0.0
  %v2225 = vadd.f32 %v2223, %v2224
  %vm2230 = vcmask 1045504
  %v2231 = vrot.slane %v2204, 2
  %v2232 = vrot.slane %v2211, 2
  %v2233 = vsel %vm2230, %v2231, %v2232
  %v2234 = vrot.slane %v2218, 2
  %v2235 = vsel %vm2230, %v2232, %v2234
  %v2236 = vrot.slane %v2225, 2
  %v2237 = vsel %vm2230, %v2234, %v2236
  %v2243 = vsel %vm2230, %v2197, %v2231
  %v2244 = vld [vmem:[%s4] sm:$0x1]
  %v2246 = vlaneseq
  %v2247 = vshrl.u32 %v2246, 7
  %v2248 = vsub.s32 0, %v2247
  %v2249 = vrot.slane %v2244, %v2248
  %v2251 = vadd.f32 %v2175, %v2249
  %v2252 = vadd.f32 %v2182, %v2249
  %v2253 = vadd.f32 %v2189, %v2249
  %v2254 = vadd.f32 %v2243, %v2249
  %v2255 = vadd.f32 %v2233, %v2249
  %v2256 = vadd.f32 %v2235, %v2249
  %v2257 = vadd.f32 %v2237, %v2249
  %v2258 = vadd.f32 %v2236, %v2249
  %v2259 = vadd.f32 %v45, %v2251
  %v2260 = vadd.f32 %v46, %v2252
  %v2261 = vadd.f32 %v47, %v2253
  %v2262 = vadd.f32 %v48, %v2254
  %v2263 = vadd.f32 %v49, %v2255
  %v2264 = vadd.f32 %v50, %v2256
  %v2265 = vadd.f32 %v51, %v2257
  %v2266 = vadd.f32 %v52, %v2258
  %v2267 = vld [vmem:[%s5] sm:$0x1]
  %v2268 = vld [vmem:[%s6] sm:$0x1]
  %v2269 = vsel %vm80, %v2259, 0.0
  %2270 = vadd.xlane.f32.xlu0 %v2269
  %v2271 = vpop.xlane.xlu0 %2270
  %v2272 = vsel %vm80, %v2260, 0.0
  %2273 = vadd.xlane.f32.xlu0 %v2272
  %v2274 = vpop.xlane.xlu0 %2273
  %v2275 = vsel %vm80, %v2261, 0.0
  %2276 = vadd.xlane.f32.xlu0 %v2275
  %v2277 = vpop.xlane.xlu0 %2276
  %v2278 = vsel %vm80, %v2262, 0.0
  %2279 = vadd.xlane.f32.xlu0 %v2278
  %v2280 = vpop.xlane.xlu0 %2279
  %v2281 = vsel %vm80, %v2263, 0.0
  %2282 = vadd.xlane.f32.xlu0 %v2281
  %v2283 = vpop.xlane.xlu0 %2282
  %v2284 = vsel %vm80, %v2264, 0.0
  %2285 = vadd.xlane.f32.xlu0 %v2284
  %v2286 = vpop.xlane.xlu0 %2285
  %v2287 = vsel %vm80, %v2265, 0.0
  %2288 = vadd.xlane.f32.xlu0 %v2287
  %v2289 = vpop.xlane.xlu0 %2288
  %vm2290 = vcmask 257024
  %v2291 = vsel %vm2290, %v2266, 0.0
  %2292 = vadd.xlane.f32.xlu0 %v2291
  %v2293 = vpop.xlane.xlu0 %2292
  %v2294 = vrcp.pop 32.0
  %v2295 = vmul.f32 %v2271, %v2294
  %v2296 = vmul.f32 %v2274, %v2294
  %v2297 = vmul.f32 %v2277, %v2294
  %v2298 = vmul.f32 %v2280, %v2294
  %v2299 = vmul.f32 %v2283, %v2294
  %v2300 = vmul.f32 %v2286, %v2294
  %v2301 = vmul.f32 %v2289, %v2294
  %v2302 = vmul.f32 %v2293, %v2294
  %v2303 = vsub.f32 %v2259, %v2295
  %v2304 = vsub.f32 %v2260, %v2296
  %v2305 = vsub.f32 %v2261, %v2297
  %v2306 = vsub.f32 %v2262, %v2298
  %v2307 = vsub.f32 %v2263, %v2299
  %v2308 = vsub.f32 %v2264, %v2300
  %v2309 = vsub.f32 %v2265, %v2301
  %v2310 = vsub.f32 %v2266, %v2302
  %v2311 = vmul.f32 %v2303, %v2303
  %v2312 = vmul.f32 %v2304, %v2304
  %v2313 = vmul.f32 %v2305, %v2305
  %v2314 = vmul.f32 %v2306, %v2306
  %v2315 = vmul.f32 %v2307, %v2307
  %v2316 = vmul.f32 %v2308, %v2308
  %v2317 = vmul.f32 %v2309, %v2309
  %v2318 = vmul.f32 %v2310, %v2310
  %v2319 = vsel %vm80, %v2311, 0.0
  %2320 = vadd.xlane.f32.xlu0 %v2319
  %v2321 = vpop.xlane.xlu0 %2320
  %v2322 = vsel %vm80, %v2312, 0.0
  %2323 = vadd.xlane.f32.xlu0 %v2322
  %v2324 = vpop.xlane.xlu0 %2323
  %v2325 = vsel %vm80, %v2313, 0.0
  %2326 = vadd.xlane.f32.xlu0 %v2325
  %v2327 = vpop.xlane.xlu0 %2326
  %v2328 = vsel %vm80, %v2314, 0.0
  %2329 = vadd.xlane.f32.xlu0 %v2328
  %v2330 = vpop.xlane.xlu0 %2329
  %v2331 = vsel %vm80, %v2315, 0.0
  %2332 = vadd.xlane.f32.xlu0 %v2331
  %v2333 = vpop.xlane.xlu0 %2332
  %v2334 = vsel %vm80, %v2316, 0.0
  %2335 = vadd.xlane.f32.xlu0 %v2334
  %v2336 = vpop.xlane.xlu0 %2335
  %v2337 = vsel %vm80, %v2317, 0.0
  %2338 = vadd.xlane.f32.xlu0 %v2337
  %v2339 = vpop.xlane.xlu0 %2338
  %v2340 = vsel %vm2290, %v2318, 0.0
  %2341 = vadd.xlane.f32.xlu0 %v2340
  %v2342 = vpop.xlane.xlu0 %2341
  %v2343 = vmul.f32 %v2321, %v2294
  %v2344 = vmul.f32 %v2324, %v2294
  %v2345 = vmul.f32 %v2327, %v2294
  %v2346 = vmul.f32 %v2330, %v2294
  %v2347 = vmul.f32 %v2333, %v2294
  %v2348 = vmul.f32 %v2336, %v2294
  %v2349 = vmul.f32 %v2339, %v2294
  %v2350 = vmul.f32 %v2342, %v2294
  %v2351 = vadd.f32 %v2343, 1e-05
  %v2352 = vadd.f32 %v2344, 1e-05
  %v2353 = vadd.f32 %v2345, 1e-05
  %v2354 = vadd.f32 %v2346, 1e-05
  %v2355 = vadd.f32 %v2347, 1e-05
  %v2356 = vadd.f32 %v2348, 1e-05
  %v2357 = vadd.f32 %v2349, 1e-05
  %v2358 = vadd.f32 %v2350, 1e-05
  %v2359 = vrsqrt.pop %v2351
  %v2360 = vrsqrt.pop %v2352
  %v2361 = vrsqrt.pop %v2353
  %v2362 = vrsqrt.pop %v2354
  %v2363 = vrsqrt.pop %v2355
  %v2364 = vrsqrt.pop %v2356
  %v2365 = vrsqrt.pop %v2357
  %v2366 = vrsqrt.pop %v2358
  %v2367 = vmul.f32 %v2303, %v2359
  %v2368 = vmul.f32 %v2304, %v2360
  %v2369 = vmul.f32 %v2305, %v2361
  %v2370 = vmul.f32 %v2306, %v2362
  %v2371 = vmul.f32 %v2307, %v2363
  %v2372 = vmul.f32 %v2308, %v2364
  %v2373 = vmul.f32 %v2309, %v2365
  %v2374 = vmul.f32 %v2310, %v2366
  %v2376 = vlaneseq
  %v2377 = vshrl.u32 %v2376, 7
  %v2378 = vsub.s32 0, %v2377
  %v2379 = vrot.slane %v2267, %v2378
  %v2381 = vmul.f32 %v2367, %v2379
  %v2382 = vmul.f32 %v2368, %v2379
  %v2383 = vmul.f32 %v2369, %v2379
  %v2384 = vmul.f32 %v2370, %v2379
  %v2385 = vmul.f32 %v2371, %v2379
  %v2386 = vmul.f32 %v2372, %v2379
  %v2387 = vmul.f32 %v2373, %v2379
  %v2388 = vmul.f32 %v2374, %v2379
  %v2390 = vlaneseq
  %v2391 = vshrl.u32 %v2390, 7
  %v2392 = vsub.s32 0, %v2391
  %v2393 = vrot.slane %v2268, %v2392
  %v2395 = vadd.f32 %v2381, %v2393
  %v2396 = vadd.f32 %v2382, %v2393
  %v2397 = vadd.f32 %v2383, %v2393
  %v2398 = vadd.f32 %v2384, %v2393
  %v2399 = vadd.f32 %v2385, %v2393
  %v2400 = vadd.f32 %v2386, %v2393
  %v2401 = vadd.f32 %v2387, %v2393
  %v2402 = vadd.f32 %v2388, %v2393
  %v2403 = vpack.c.bf16 %v2396, %v2395
  %v2404 = vpack.c.bf16 %v2398, %v2397
  %v2405 = vpack.c.bf16 %v2400, %v2399
  %v2406 = vpack.c.bf16 %v2402, %v2401
  %v2407 = vld [vmem:[%s9] sm:$0xff]
  %v2408 = vld [vmem:[%s9 + $0x8] sm:$0xff]
  %v2409 = vld [vmem:[%s9 + $0x10] sm:$0xff]
  %v2410 = vld [vmem:[%s9 + $0x18] sm:$0xff]
  %v2411 = vld [vmem:[%s9 + $0x20] sm:$0xff]
  %v2412 = vld [vmem:[%s9 + $0x28] sm:$0xff]
  %v2413 = vld [vmem:[%s9 + $0x30] sm:$0xff]
  %v2414 = vld [vmem:[%s9 + $0x38] sm:$0xff]
  %v2415 = vld [vmem:[%s9 + $0x40] sm:$0xff]
  %v2416 = vld [vmem:[%s9 + $0x48] sm:$0xff]
  %v2417 = vld [vmem:[%s9 + $0x50] sm:$0xff]
  %v2418 = vld [vmem:[%s9 + $0x58] sm:$0xff]
  %v2419 = vld [vmem:[%s9 + $0x60] sm:$0xff]
  %v2420 = vld [vmem:[%s9 + $0x68] sm:$0xff]
  %v2421 = vld [vmem:[%s9 + $0x70] sm:$0xff]
  %v2422 = vld [vmem:[%s9 + $0x78] sm:$0xff]
  %v2423 = vld [vmem:[%s9 + $0x80] sm:$0xff]
  %v2424 = vld [vmem:[%s9 + $0x88] sm:$0xff]
  %v2425 = vld [vmem:[%s9 + $0x90] sm:$0xff]
  %v2426 = vld [vmem:[%s9 + $0x98] sm:$0xff]
  %v2427 = vld [vmem:[%s9 + $0xa0] sm:$0xff]
  %v2428 = vld [vmem:[%s9 + $0xa8] sm:$0xff]
  %v2429 = vld [vmem:[%s9 + $0xb0] sm:$0xff]
  %v2430 = vld [vmem:[%s9 + $0xb8] sm:$0xff]
  %v2431 = vld [vmem:[%s9 + $0xc0] sm:$0xff]
  %v2432 = vld [vmem:[%s9 + $0xc8] sm:$0xff]
  %v2433 = vld [vmem:[%s9 + $0xd0] sm:$0xff]
  %v2434 = vld [vmem:[%s9 + $0xd8] sm:$0xff]
  %v2435 = vld [vmem:[%s9 + $0xe0] sm:$0xff]
  %v2436 = vld [vmem:[%s9 + $0xe8] sm:$0xff]
  %v2437 = vld [vmem:[%s9 + $0xf0] sm:$0xff]
  %v2438 = vld [vmem:[%s9 + $0xf8] sm:$0xff]
  %v2439 = vld [vmem:[%s10] sm:$0xff]
  %v2440 = vld [vmem:[%s10 + $0x8] sm:$0xff]
  %v2443 = vlaneseq
  %v2444 = vshrl.u32 %v2443, 7
  %v2445 = vsub.s32 0, %v2444
  %v2446 = vrot.slane %v2439, %v2445
  %v2447 = vlaneseq
  %v2448 = vshrl.u32 %v2447, 7
  %v2449 = vsub.s32 1, %v2448
  %v2450 = vrot.slane %v2439, %v2449
  %v2451 = vlaneseq
  %v2452 = vshrl.u32 %v2451, 7
  %v2453 = vsub.s32 2, %v2452
  %v2454 = vrot.slane %v2439, %v2453
  %v2455 = vlaneseq
  %v2456 = vshrl.u32 %v2455, 7
  %v2457 = vsub.s32 3, %v2456
  %v2458 = vrot.slane %v2439, %v2457
  %v2459 = vlaneseq
  %v2460 = vshrl.u32 %v2459, 7
  %v2461 = vsub.s32 4, %v2460
  %v2462 = vrot.slane %v2439, %v2461
  %v2463 = vlaneseq
  %v2464 = vshrl.u32 %v2463, 7
  %v2465 = vsub.s32 5, %v2464
  %v2466 = vrot.slane %v2439, %v2465
  %v2467 = vlaneseq
  %v2468 = vshrl.u32 %v2467, 7
  %v2469 = vsub.s32 6, %v2468
  %v2470 = vrot.slane %v2439, %v2469
  %v2471 = vlaneseq
  %v2472 = vshrl.u32 %v2471, 7
  %v2473 = vsub.s32 7, %v2472
  %v2474 = vrot.slane %v2439, %v2473
  %v2475 = vlaneseq
  %v2476 = vshrl.u32 %v2475, 7
  %v2477 = vsub.s32 0, %v2476
  %v2478 = vrot.slane %v2440, %v2477
  %v2479 = vlaneseq
  %v2480 = vshrl.u32 %v2479, 7
  %v2481 = vsub.s32 1, %v2480
  %v2482 = vrot.slane %v2440, %v2481
  %v2483 = vlaneseq
  %v2484 = vshrl.u32 %v2483, 7
  %v2485 = vsub.s32 2, %v2484
  %v2486 = vrot.slane %v2440, %v2485
  %v2487 = vlaneseq
  %v2488 = vshrl.u32 %v2487, 7
  %v2489 = vsub.s32 3, %v2488
  %v2490 = vrot.slane %v2440, %v2489
  %v2491 = vlaneseq
  %v2492 = vshrl.u32 %v2491, 7
  %v2493 = vsub.s32 4, %v2492
  %v2494 = vrot.slane %v2440, %v2493
  %v2495 = vlaneseq
  %v2496 = vshrl.u32 %v2495, 7
  %v2497 = vsub.s32 5, %v2496
  %v2498 = vrot.slane %v2440, %v2497
  %v2499 = vlaneseq
  %v2500 = vshrl.u32 %v2499, 7
  %v2501 = vsub.s32 6, %v2500
  %v2502 = vrot.slane %v2440, %v2501
  %v2503 = vlaneseq
  %v2504 = vshrl.u32 %v2503, 7
  %v2505 = vsub.s32 7, %v2504
  %v2506 = vrot.slane %v2440, %v2505
  %v2555 = vunpack.c.l.b16 %v2407
  %v2556 = vunpack.c.h.b16 %v2407
  %v2557 = vunpack.c.l.b16 %v2408
  %v2558 = vunpack.c.h.b16 %v2408
  %v2559 = vunpack.c.l.b16 %v2409
  %v2560 = vunpack.c.h.b16 %v2409
  %v2561 = vunpack.c.l.b16 %v2410
  %v2562 = vunpack.c.h.b16 %v2410
  %v2563 = vunpack.c.l.b16 %v2411
  %v2564 = vunpack.c.h.b16 %v2411
  %v2565 = vunpack.c.l.b16 %v2412
  %v2566 = vunpack.c.h.b16 %v2412
  %v2567 = vunpack.c.l.b16 %v2413
  %v2568 = vunpack.c.h.b16 %v2413
  %v2569 = vunpack.c.l.b16 %v2414
  %v2570 = vunpack.c.h.b16 %v2414
  %v2571 = vunpack.c.l.b16 %v2415
  %v2572 = vunpack.c.h.b16 %v2415
  %v2573 = vunpack.c.l.b16 %v2416
  %v2574 = vunpack.c.h.b16 %v2416
  %v2575 = vunpack.c.l.b16 %v2417
  %v2576 = vunpack.c.h.b16 %v2417
  %v2577 = vunpack.c.l.b16 %v2418
  %v2578 = vunpack.c.h.b16 %v2418
  %v2579 = vunpack.c.l.b16 %v2419
  %v2580 = vunpack.c.h.b16 %v2419
  %v2581 = vunpack.c.l.b16 %v2420
  %v2582 = vunpack.c.h.b16 %v2420
  %v2583 = vunpack.c.l.b16 %v2421
  %v2584 = vunpack.c.h.b16 %v2421
  %v2585 = vunpack.c.l.b16 %v2422
  %v2586 = vunpack.c.h.b16 %v2422
  %v2587 = vunpack.c.l.b16 %v2423
  %v2588 = vunpack.c.h.b16 %v2423
  %v2589 = vunpack.c.l.b16 %v2424
  %v2590 = vunpack.c.h.b16 %v2424
  %v2591 = vunpack.c.l.b16 %v2425
  %v2592 = vunpack.c.h.b16 %v2425
  %v2593 = vunpack.c.l.b16 %v2426
  %v2594 = vunpack.c.h.b16 %v2426
  %v2595 = vunpack.c.l.b16 %v2427
  %v2596 = vunpack.c.h.b16 %v2427
  %v2597 = vunpack.c.l.b16 %v2428
  %v2598 = vunpack.c.h.b16 %v2428
  %v2599 = vunpack.c.l.b16 %v2429
  %v2600 = vunpack.c.h.b16 %v2429
  %v2601 = vunpack.c.l.b16 %v2430
  %v2602 = vunpack.c.h.b16 %v2430
  %v2603 = vunpack.c.l.b16 %v2431
  %v2604 = vunpack.c.h.b16 %v2431
  %v2605 = vunpack.c.l.b16 %v2432
  %v2606 = vunpack.c.h.b16 %v2432
  %v2607 = vunpack.c.l.b16 %v2433
  %v2608 = vunpack.c.h.b16 %v2433
  %v2609 = vunpack.c.l.b16 %v2434
  %v2610 = vunpack.c.h.b16 %v2434
  %v2611 = vunpack.c.l.b16 %v2435
  %v2612 = vunpack.c.h.b16 %v2435
  %v2613 = vunpack.c.l.b16 %v2436
  %v2614 = vunpack.c.h.b16 %v2436
  %v2615 = vunpack.c.l.b16 %v2437
  %v2616 = vunpack.c.h.b16 %v2437
  %v2617 = vunpack.c.l.b16 %v2438
  %v2618 = vunpack.c.h.b16 %v2438
  %v2619 = vpack.c.b16 %v2571, %v2555
  %v2620 = vpack.c.b16 %v2572, %v2556
  %v2621 = vpack.c.b16 %v2573, %v2557
  %v2622 = vpack.c.b16 %v2574, %v2558
  %v2623 = vpack.c.b16 %v2575, %v2559
  %v2624 = vpack.c.b16 %v2576, %v2560
  %v2625 = vpack.c.b16 %v2577, %v2561
  %v2626 = vpack.c.b16 %v2578, %v2562
  %v2627 = vpack.c.b16 %v2579, %v2563
  %v2628 = vpack.c.b16 %v2580, %v2564
  %v2629 = vpack.c.b16 %v2581, %v2565
  %v2630 = vpack.c.b16 %v2582, %v2566
  %v2631 = vpack.c.b16 %v2583, %v2567
  %v2632 = vpack.c.b16 %v2584, %v2568
  %v2633 = vpack.c.b16 %v2585, %v2569
  %v2634 = vpack.c.b16 %v2586, %v2570
  %v2635 = vpack.c.b16 %v2603, %v2587
  %v2636 = vpack.c.b16 %v2604, %v2588
  %v2637 = vpack.c.b16 %v2605, %v2589
  %v2638 = vpack.c.b16 %v2606, %v2590
  %v2639 = vpack.c.b16 %v2607, %v2591
  %v2640 = vpack.c.b16 %v2608, %v2592
  %v2641 = vpack.c.b16 %v2609, %v2593
  %v2642 = vpack.c.b16 %v2610, %v2594
  %v2643 = vpack.c.b16 %v2611, %v2595
  %v2644 = vpack.c.b16 %v2612, %v2596
  %v2645 = vpack.c.b16 %v2613, %v2597
  %v2646 = vpack.c.b16 %v2614, %v2598
  %v2647 = vpack.c.b16 %v2615, %v2599
  %v2648 = vpack.c.b16 %v2616, %v2600
  %v2649 = vpack.c.b16 %v2617, %v2601
  %v2650 = vpack.c.b16 %v2618, %v2602
  %v2684 = vsel %vm80, %v2403, 0
  %v2687 = vsel %vm80, %v2404, 0
  %v2690 = vsel %vm80, %v2405, 0
  %v2693 = vsel %vm80, %v2406, 0
  %2695 = vmatprep.subr.bf16.mxu0 0
  %2696 = vmatpush1.bf16.msra.mxu0 0
  %2697 = vmatprep.subr.bf16.mxu0 0
  %2698 = vmatpush1.bf16.msra.mxu0 0
  %2699 = vmatprep.subr.bf16.mxu0 0
  %2700 = vmatpush1.bf16.msra.mxu0 0
  %2701 = vmatprep.subr.bf16.mxu0 0
  %2702 = vmatpush1.bf16.msra.mxu0 0
  %2703 = vmatprep.subr.bf16.mxu0 0
  %2704 = vmatpush1.bf16.msra.mxu0 0
  %2705 = vmatprep.subr.bf16.mxu0 0
  %2706 = vmatpush1.bf16.msra.mxu0 0
  %2707 = vmatprep.subr.bf16.mxu0 %v2636
  %2708 = vmatpush1.bf16.msra.mxu0 %v2635
  %2709 = vmatprep.subr.bf16.mxu0 %v2620
  %2710 = vmatpush1.bf16.msra.mxu0 %v2619
  %2711 = vmatprep.subr.bf16.mxu0 0
  %2712 = vmatpush2.bf16.msra.mxu0 0
  %2713 = vmatprep.subr.bf16.mxu0 0
  %2714 = vmatpush2.bf16.msra.mxu0 0
  %2715 = vmatprep.subr.bf16.mxu0 0
  %2716 = vmatpush2.bf16.msra.mxu0 0
  %2717 = vmatprep.subr.bf16.mxu0 0
  %2718 = vmatpush2.bf16.msra.mxu0 0
  %2719 = vmatprep.subr.bf16.mxu0 0
  %2720 = vmatpush2.bf16.msra.mxu0 0
  %2721 = vmatprep.subr.bf16.mxu0 0
  %2722 = vmatpush2.bf16.msra.mxu0 0
  %2723 = vmatprep.subr.bf16.mxu0 0
  %2724 = vmatpush2.bf16.msra.mxu0 0
  %2725 = vmatprep.subr.bf16.mxu0 0
  %2726 = vmatpush2.bf16.msra.mxu0 0
  %2727 = vmatprep.mubr.bf16.mxu0 0
  %2728 = vmatmul.mubr.bf16.gmra.mxu0 %v2684
  %v2729 = vpop.f32.mrf.mxu0
  %v2730 = vadd.f32 %v2446, %v2729
  %v2731 = vpop.f32.mrf.mxu0
  %v2732 = vadd.f32 %v2450, %v2731
  %v2733 = vpop.f32.mrf.mxu0
  %v2734 = vadd.f32 %v2446, %v2733
  %v2735 = vpop.f32.mrf.mxu0
  %v2736 = vadd.f32 %v2450, %v2735
  %2737 = vmatprep.mubr.bf16.mxu0 0
  %2738 = vmatmul.mubr.bf16.gmra.mxu0 %v2687
  %v2739 = vpop.f32.mrf.mxu0
  %v2740 = vadd.f32 %v2446, %v2739
  %v2741 = vpop.f32.mrf.mxu0
  %v2742 = vadd.f32 %v2450, %v2741
  %v2743 = vpop.f32.mrf.mxu0
  %v2744 = vadd.f32 %v2446, %v2743
  %v2745 = vpop.f32.mrf.mxu0
  %v2746 = vadd.f32 %v2450, %v2745
  %2747 = vmatprep.mubr.bf16.mxu0 0
  %2748 = vmatmul.mubr.bf16.gmra.mxu0 %v2690
  %v2749 = vpop.f32.mrf.mxu0
  %v2750 = vadd.f32 %v2446, %v2749
  %v2751 = vpop.f32.mrf.mxu0
  %v2752 = vadd.f32 %v2450, %v2751
  %v2753 = vpop.f32.mrf.mxu0
  %v2754 = vadd.f32 %v2446, %v2753
  %v2755 = vpop.f32.mrf.mxu0
  %v2756 = vadd.f32 %v2450, %v2755
  %2757 = vmatprep.mubr.bf16.mxu0 0
  %2758 = vmatmul.mubr.bf16.gmra.mxu0 %v2693
  %v2759 = vpop.f32.mrf.mxu0
  %v2760 = vadd.f32 %v2446, %v2759
  %v2761 = vpop.f32.mrf.mxu0
  %v2762 = vadd.f32 %v2450, %v2761
  %v2763 = vpop.f32.mrf.mxu0
  %v2764 = vadd.f32 %v2446, %v2763
  %v2765 = vpop.f32.mrf.mxu0
  %v2766 = vadd.f32 %v2450, %v2765
  %2767 = vdwg.mxu0
  %2768 = vmatprep.subr.bf16.mxu0 0
  %2769 = vmatpush1.bf16.msra.mxu0 0
  %2770 = vmatprep.subr.bf16.mxu0 0
  %2771 = vmatpush1.bf16.msra.mxu0 0
  %2772 = vmatprep.subr.bf16.mxu0 0
  %2773 = vmatpush1.bf16.msra.mxu0 0
  %2774 = vmatprep.subr.bf16.mxu0 0
  %2775 = vmatpush1.bf16.msra.mxu0 0
  %2776 = vmatprep.subr.bf16.mxu0 0
  %2777 = vmatpush1.bf16.msra.mxu0 0
  %2778 = vmatprep.subr.bf16.mxu0 0
  %2779 = vmatpush1.bf16.msra.mxu0 0
  %2780 = vmatprep.subr.bf16.mxu0 %v2638
  %2781 = vmatpush1.bf16.msra.mxu0 %v2637
  %2782 = vmatprep.subr.bf16.mxu0 %v2622
  %2783 = vmatpush1.bf16.msra.mxu0 %v2621
  %2784 = vmatprep.subr.bf16.mxu0 0
  %2785 = vmatpush2.bf16.msra.mxu0 0
  %2786 = vmatprep.subr.bf16.mxu0 0
  %2787 = vmatpush2.bf16.msra.mxu0 0
  %2788 = vmatprep.subr.bf16.mxu0 0
  %2789 = vmatpush2.bf16.msra.mxu0 0
  %2790 = vmatprep.subr.bf16.mxu0 0
  %2791 = vmatpush2.bf16.msra.mxu0 0
  %2792 = vmatprep.subr.bf16.mxu0 0
  %2793 = vmatpush2.bf16.msra.mxu0 0
  %2794 = vmatprep.subr.bf16.mxu0 0
  %2795 = vmatpush2.bf16.msra.mxu0 0
  %2796 = vmatprep.subr.bf16.mxu0 0
  %2797 = vmatpush2.bf16.msra.mxu0 0
  %2798 = vmatprep.subr.bf16.mxu0 0
  %2799 = vmatpush2.bf16.msra.mxu0 0
  %2800 = vmatprep.mubr.bf16.mxu0 0
  %2801 = vmatmul.mubr.bf16.gmra.mxu0 %v2684
  %v2802 = vpop.f32.mrf.mxu0
  %v2803 = vadd.f32 %v2454, %v2802
  %v2804 = vpop.f32.mrf.mxu0
  %v2805 = vadd.f32 %v2458, %v2804
  %v2806 = vpop.f32.mrf.mxu0
  %v2807 = vadd.f32 %v2454, %v2806
  %v2808 = vpop.f32.mrf.mxu0
  %v2809 = vadd.f32 %v2458, %v2808
  %2810 = vmatprep.mubr.bf16.mxu0 0
  %2811 = vmatmul.mubr.bf16.gmra.mxu0 %v2687
  %v2812 = vpop.f32.mrf.mxu0
  %v2813 = vadd.f32 %v2454, %v2812
  %v2814 = vpop.f32.mrf.mxu0
  %v2815 = vadd.f32 %v2458, %v2814
  %v2816 = vpop.f32.mrf.mxu0
  %v2817 = vadd.f32 %v2454, %v2816
  %v2818 = vpop.f32.mrf.mxu0
  %v2819 = vadd.f32 %v2458, %v2818
  %2820 = vmatprep.mubr.bf16.mxu0 0
  %2821 = vmatmul.mubr.bf16.gmra.mxu0 %v2690
  %v2822 = vpop.f32.mrf.mxu0
  %v2823 = vadd.f32 %v2454, %v2822
  %v2824 = vpop.f32.mrf.mxu0
  %v2825 = vadd.f32 %v2458, %v2824
  %v2826 = vpop.f32.mrf.mxu0
  %v2827 = vadd.f32 %v2454, %v2826
  %v2828 = vpop.f32.mrf.mxu0
  %v2829 = vadd.f32 %v2458, %v2828
  %2830 = vmatprep.mubr.bf16.mxu0 0
  %2831 = vmatmul.mubr.bf16.gmra.mxu0 %v2693
  %v2832 = vpop.f32.mrf.mxu0
  %v2833 = vadd.f32 %v2454, %v2832
  %v2834 = vpop.f32.mrf.mxu0
  %v2835 = vadd.f32 %v2458, %v2834
  %v2836 = vpop.f32.mrf.mxu0
  %v2837 = vadd.f32 %v2454, %v2836
  %v2838 = vpop.f32.mrf.mxu0
  %v2839 = vadd.f32 %v2458, %v2838
  %2840 = vdwg.mxu0
  %2841 = vmatprep.subr.bf16.mxu0 0
  %2842 = vmatpush1.bf16.msra.mxu0 0
  %2843 = vmatprep.subr.bf16.mxu0 0
  %2844 = vmatpush1.bf16.msra.mxu0 0
  %2845 = vmatprep.subr.bf16.mxu0 0
  %2846 = vmatpush1.bf16.msra.mxu0 0
  %2847 = vmatprep.subr.bf16.mxu0 0
  %2848 = vmatpush1.bf16.msra.mxu0 0
  %2849 = vmatprep.subr.bf16.mxu0 0
  %2850 = vmatpush1.bf16.msra.mxu0 0
  %2851 = vmatprep.subr.bf16.mxu0 0
  %2852 = vmatpush1.bf16.msra.mxu0 0
  %2853 = vmatprep.subr.bf16.mxu0 %v2640
  %2854 = vmatpush1.bf16.msra.mxu0 %v2639
  %2855 = vmatprep.subr.bf16.mxu0 %v2624
  %2856 = vmatpush1.bf16.msra.mxu0 %v2623
  %2857 = vmatprep.subr.bf16.mxu0 0
  %2858 = vmatpush2.bf16.msra.mxu0 0
  %2859 = vmatprep.subr.bf16.mxu0 0
  %2860 = vmatpush2.bf16.msra.mxu0 0
  %2861 = vmatprep.subr.bf16.mxu0 0
  %2862 = vmatpush2.bf16.msra.mxu0 0
  %2863 = vmatprep.subr.bf16.mxu0 0
  %2864 = vmatpush2.bf16.msra.mxu0 0
  %2865 = vmatprep.subr.bf16.mxu0 0
  %2866 = vmatpush2.bf16.msra.mxu0 0
  %2867 = vmatprep.subr.bf16.mxu0 0
  %2868 = vmatpush2.bf16.msra.mxu0 0
  %2869 = vmatprep.subr.bf16.mxu0 0
  %2870 = vmatpush2.bf16.msra.mxu0 0
  %2871 = vmatprep.subr.bf16.mxu0 0
  %2872 = vmatpush2.bf16.msra.mxu0 0
  %2873 = vmatprep.mubr.bf16.mxu0 0
  %2874 = vmatmul.mubr.bf16.gmra.mxu0 %v2684
  %v2875 = vpop.f32.mrf.mxu0
  %v2876 = vadd.f32 %v2462, %v2875
  %v2877 = vpop.f32.mrf.mxu0
  %v2878 = vadd.f32 %v2466, %v2877
  %v2879 = vpop.f32.mrf.mxu0
  %v2880 = vadd.f32 %v2462, %v2879
  %v2881 = vpop.f32.mrf.mxu0
  %v2882 = vadd.f32 %v2466, %v2881
  %2883 = vmatprep.mubr.bf16.mxu0 0
  %2884 = vmatmul.mubr.bf16.gmra.mxu0 %v2687
  %v2885 = vpop.f32.mrf.mxu0
  %v2886 = vadd.f32 %v2462, %v2885
  %v2887 = vpop.f32.mrf.mxu0
  %v2888 = vadd.f32 %v2466, %v2887
  %v2889 = vpop.f32.mrf.mxu0
  %v2890 = vadd.f32 %v2462, %v2889
  %v2891 = vpop.f32.mrf.mxu0
  %v2892 = vadd.f32 %v2466, %v2891
  %2893 = vmatprep.mubr.bf16.mxu0 0
  %2894 = vmatmul.mubr.bf16.gmra.mxu0 %v2690
  %v2895 = vpop.f32.mrf.mxu0
  %v2896 = vadd.f32 %v2462, %v2895
  %v2897 = vpop.f32.mrf.mxu0
  %v2898 = vadd.f32 %v2466, %v2897
  %v2899 = vpop.f32.mrf.mxu0
  %v2900 = vadd.f32 %v2462, %v2899
  %v2901 = vpop.f32.mrf.mxu0
  %v2902 = vadd.f32 %v2466, %v2901
  %2903 = vmatprep.mubr.bf16.mxu0 0
  %2904 = vmatmul.mubr.bf16.gmra.mxu0 %v2693
  %v2905 = vpop.f32.mrf.mxu0
  %v2906 = vadd.f32 %v2462, %v2905
  %v2907 = vpop.f32.mrf.mxu0
  %v2908 = vadd.f32 %v2466, %v2907
  %v2909 = vpop.f32.mrf.mxu0
  %v2910 = vadd.f32 %v2462, %v2909
  %v2911 = vpop.f32.mrf.mxu0
  %v2912 = vadd.f32 %v2466, %v2911
  %2913 = vdwg.mxu0
  %2914 = vmatprep.subr.bf16.mxu0 0
  %2915 = vmatpush1.bf16.msra.mxu0 0
  %2916 = vmatprep.subr.bf16.mxu0 0
  %2917 = vmatpush1.bf16.msra.mxu0 0
  %2918 = vmatprep.subr.bf16.mxu0 0
  %2919 = vmatpush1.bf16.msra.mxu0 0
  %2920 = vmatprep.subr.bf16.mxu0 0
  %2921 = vmatpush1.bf16.msra.mxu0 0
  %2922 = vmatprep.subr.bf16.mxu0 0
  %2923 = vmatpush1.bf16.msra.mxu0 0
  %2924 = vmatprep.subr.bf16.mxu0 0
  %2925 = vmatpush1.bf16.msra.mxu0 0
  %2926 = vmatprep.subr.bf16.mxu0 %v2642
  %2927 = vmatpush1.bf16.msra.mxu0 %v2641
  %2928 = vmatprep.subr.bf16.mxu0 %v2626
  %2929 = vmatpush1.bf16.msra.mxu0 %v2625
  %2930 = vmatprep.subr.bf16.mxu0 0
  %2931 = vmatpush2.bf16.msra.mxu0 0
  %2932 = vmatprep.subr.bf16.mxu0 0
  %2933 = vmatpush2.bf16.msra.mxu0 0
  %2934 = vmatprep.subr.bf16.mxu0 0
  %2935 = vmatpush2.bf16.msra.mxu0 0
  %2936 = vmatprep.subr.bf16.mxu0 0
  %2937 = vmatpush2.bf16.msra.mxu0 0
  %2938 = vmatprep.subr.bf16.mxu0 0
  %2939 = vmatpush2.bf16.msra.mxu0 0
  %2940 = vmatprep.subr.bf16.mxu0 0
  %2941 = vmatpush2.bf16.msra.mxu0 0
  %2942 = vmatprep.subr.bf16.mxu0 0
  %2943 = vmatpush2.bf16.msra.mxu0 0
  %2944 = vmatprep.subr.bf16.mxu0 0
  %2945 = vmatpush2.bf16.msra.mxu0 0
  %2946 = vmatprep.mubr.bf16.mxu0 0
  %2947 = vmatmul.mubr.bf16.gmra.mxu0 %v2684
  %v2948 = vpop.f32.mrf.mxu0
  %v2949 = vadd.f32 %v2470, %v2948
  %v2950 = vpop.f32.mrf.mxu0
  %v2951 = vadd.f32 %v2474, %v2950
  %v2952 = vpop.f32.mrf.mxu0
  %v2953 = vadd.f32 %v2470, %v2952
  %v2954 = vpop.f32.mrf.mxu0
  %v2955 = vadd.f32 %v2474, %v2954
  %2956 = vmatprep.mubr.bf16.mxu0 0
  %2957 = vmatmul.mubr.bf16.gmra.mxu0 %v2687
  %v2958 = vpop.f32.mrf.mxu0
  %v2959 = vadd.f32 %v2470, %v2958
  %v2960 = vpop.f32.mrf.mxu0
  %v2961 = vadd.f32 %v2474, %v2960
  %v2962 = vpop.f32.mrf.mxu0
  %v2963 = vadd.f32 %v2470, %v2962
  %v2964 = vpop.f32.mrf.mxu0
  %v2965 = vadd.f32 %v2474, %v2964
  %2966 = vmatprep.mubr.bf16.mxu0 0
  %2967 = vmatmul.mubr.bf16.gmra.mxu0 %v2690
  %v2968 = vpop.f32.mrf.mxu0
  %v2969 = vadd.f32 %v2470, %v2968
  %v2970 = vpop.f32.mrf.mxu0
  %v2971 = vadd.f32 %v2474, %v2970
  %v2972 = vpop.f32.mrf.mxu0
  %v2973 = vadd.f32 %v2470, %v2972
  %v2974 = vpop.f32.mrf.mxu0
  %v2975 = vadd.f32 %v2474, %v2974
  %2976 = vmatprep.mubr.bf16.mxu0 0
  %2977 = vmatmul.mubr.bf16.gmra.mxu0 %v2693
  %v2978 = vpop.f32.mrf.mxu0
  %v2979 = vadd.f32 %v2470, %v2978
  %v2980 = vpop.f32.mrf.mxu0
  %v2981 = vadd.f32 %v2474, %v2980
  %v2982 = vpop.f32.mrf.mxu0
  %v2983 = vadd.f32 %v2470, %v2982
  %v2984 = vpop.f32.mrf.mxu0
  %v2985 = vadd.f32 %v2474, %v2984
  %2986 = vdwg.mxu0
  %2987 = vmatprep.subr.bf16.mxu0 0
  %2988 = vmatpush1.bf16.msra.mxu0 0
  %2989 = vmatprep.subr.bf16.mxu0 0
  %2990 = vmatpush1.bf16.msra.mxu0 0
  %2991 = vmatprep.subr.bf16.mxu0 0
  %2992 = vmatpush1.bf16.msra.mxu0 0
  %2993 = vmatprep.subr.bf16.mxu0 0
  %2994 = vmatpush1.bf16.msra.mxu0 0
  %2995 = vmatprep.subr.bf16.mxu0 0
  %2996 = vmatpush1.bf16.msra.mxu0 0
  %2997 = vmatprep.subr.bf16.mxu0 0
  %2998 = vmatpush1.bf16.msra.mxu0 0
  %2999 = vmatprep.subr.bf16.mxu0 %v2644
  %3000 = vmatpush1.bf16.msra.mxu0 %v2643
  %3001 = vmatprep.subr.bf16.mxu0 %v2628
  %3002 = vmatpush1.bf16.msra.mxu0 %v2627
  %3003 = vmatprep.subr.bf16.mxu0 0
  %3004 = vmatpush2.bf16.msra.mxu0 0
  %3005 = vmatprep.subr.bf16.mxu0 0
  %3006 = vmatpush2.bf16.msra.mxu0 0
  %3007 = vmatprep.subr.bf16.mxu0 0
  %3008 = vmatpush2.bf16.msra.mxu0 0
  %3009 = vmatprep.subr.bf16.mxu0 0
  %3010 = vmatpush2.bf16.msra.mxu0 0
  %3011 = vmatprep.subr.bf16.mxu0 0
  %3012 = vmatpush2.bf16.msra.mxu0 0
  %3013 = vmatprep.subr.bf16.mxu0 0
  %3014 = vmatpush2.bf16.msra.mxu0 0
  %3015 = vmatprep.subr.bf16.mxu0 0
  %3016 = vmatpush2.bf16.msra.mxu0 0
  %3017 = vmatprep.subr.bf16.mxu0 0
  %3018 = vmatpush2.bf16.msra.mxu0 0
  %3019 = vmatprep.mubr.bf16.mxu0 0
  %3020 = vmatmul.mubr.bf16.gmra.mxu0 %v2684
  %v3021 = vpop.f32.mrf.mxu0
  %v3022 = vadd.f32 %v2478, %v3021
  %v3023 = vpop.f32.mrf.mxu0
  %v3024 = vadd.f32 %v2482, %v3023
  %v3025 = vpop.f32.mrf.mxu0
  %v3026 = vadd.f32 %v2478, %v3025
  %v3027 = vpop.f32.mrf.mxu0
  %v3028 = vadd.f32 %v2482, %v3027
  %3029 = vmatprep.mubr.bf16.mxu0 0
  %3030 = vmatmul.mubr.bf16.gmra.mxu0 %v2687
  %v3031 = vpop.f32.mrf.mxu0
  %v3032 = vadd.f32 %v2478, %v3031
  %v3033 = vpop.f32.mrf.mxu0
  %v3034 = vadd.f32 %v2482, %v3033
  %v3035 = vpop.f32.mrf.mxu0
  %v3036 = vadd.f32 %v2478, %v3035
  %v3037 = vpop.f32.mrf.mxu0
  %v3038 = vadd.f32 %v2482, %v3037
  %3039 = vmatprep.mubr.bf16.mxu0 0
  %3040 = vmatmul.mubr.bf16.gmra.mxu0 %v2690
  %v3041 = vpop.f32.mrf.mxu0
  %v3042 = vadd.f32 %v2478, %v3041
  %v3043 = vpop.f32.mrf.mxu0
  %v3044 = vadd.f32 %v2482, %v3043
  %v3045 = vpop.f32.mrf.mxu0
  %v3046 = vadd.f32 %v2478, %v3045
  %v3047 = vpop.f32.mrf.mxu0
  %v3048 = vadd.f32 %v2482, %v3047
  %3049 = vmatprep.mubr.bf16.mxu0 0
  %3050 = vmatmul.mubr.bf16.gmra.mxu0 %v2693
  %v3051 = vpop.f32.mrf.mxu0
  %v3052 = vadd.f32 %v2478, %v3051
  %v3053 = vpop.f32.mrf.mxu0
  %v3054 = vadd.f32 %v2482, %v3053
  %v3055 = vpop.f32.mrf.mxu0
  %v3056 = vadd.f32 %v2478, %v3055
  %v3057 = vpop.f32.mrf.mxu0
  %v3058 = vadd.f32 %v2482, %v3057
  %3059 = vdwg.mxu0
  %3060 = vmatprep.subr.bf16.mxu0 0
  %3061 = vmatpush1.bf16.msra.mxu0 0
  %3062 = vmatprep.subr.bf16.mxu0 0
  %3063 = vmatpush1.bf16.msra.mxu0 0
  %3064 = vmatprep.subr.bf16.mxu0 0
  %3065 = vmatpush1.bf16.msra.mxu0 0
  %3066 = vmatprep.subr.bf16.mxu0 0
  %3067 = vmatpush1.bf16.msra.mxu0 0
  %3068 = vmatprep.subr.bf16.mxu0 0
  %3069 = vmatpush1.bf16.msra.mxu0 0
  %3070 = vmatprep.subr.bf16.mxu0 0
  %3071 = vmatpush1.bf16.msra.mxu0 0
  %3072 = vmatprep.subr.bf16.mxu0 %v2646
  %3073 = vmatpush1.bf16.msra.mxu0 %v2645
  %3074 = vmatprep.subr.bf16.mxu0 %v2630
  %3075 = vmatpush1.bf16.msra.mxu0 %v2629
  %3076 = vmatprep.subr.bf16.mxu0 0
  %3077 = vmatpush2.bf16.msra.mxu0 0
  %3078 = vmatprep.subr.bf16.mxu0 0
  %3079 = vmatpush2.bf16.msra.mxu0 0
  %3080 = vmatprep.subr.bf16.mxu0 0
  %3081 = vmatpush2.bf16.msra.mxu0 0
  %3082 = vmatprep.subr.bf16.mxu0 0
  %3083 = vmatpush2.bf16.msra.mxu0 0
  %3084 = vmatprep.subr.bf16.mxu0 0
  %3085 = vmatpush2.bf16.msra.mxu0 0
  %3086 = vmatprep.subr.bf16.mxu0 0
  %3087 = vmatpush2.bf16.msra.mxu0 0
  %3088 = vmatprep.subr.bf16.mxu0 0
  %3089 = vmatpush2.bf16.msra.mxu0 0
  %3090 = vmatprep.subr.bf16.mxu0 0
  %3091 = vmatpush2.bf16.msra.mxu0 0
  %3092 = vmatprep.mubr.bf16.mxu0 0
  %3093 = vmatmul.mubr.bf16.gmra.mxu0 %v2684
  %v3094 = vpop.f32.mrf.mxu0
  %v3095 = vadd.f32 %v2486, %v3094
  %v3096 = vpop.f32.mrf.mxu0
  %v3097 = vadd.f32 %v2490, %v3096
  %v3098 = vpop.f32.mrf.mxu0
  %v3099 = vadd.f32 %v2486, %v3098
  %v3100 = vpop.f32.mrf.mxu0
  %v3101 = vadd.f32 %v2490, %v3100
  %3102 = vmatprep.mubr.bf16.mxu0 0
  %3103 = vmatmul.mubr.bf16.gmra.mxu0 %v2687
  %v3104 = vpop.f32.mrf.mxu0
  %v3105 = vadd.f32 %v2486, %v3104
  %v3106 = vpop.f32.mrf.mxu0
  %v3107 = vadd.f32 %v2490, %v3106
  %v3108 = vpop.f32.mrf.mxu0
  %v3109 = vadd.f32 %v2486, %v3108
  %v3110 = vpop.f32.mrf.mxu0
  %v3111 = vadd.f32 %v2490, %v3110
  %3112 = vmatprep.mubr.bf16.mxu0 0
  %3113 = vmatmul.mubr.bf16.gmra.mxu0 %v2690
  %v3114 = vpop.f32.mrf.mxu0
  %v3115 = vadd.f32 %v2486, %v3114
  %v3116 = vpop.f32.mrf.mxu0
  %v3117 = vadd.f32 %v2490, %v3116
  %v3118 = vpop.f32.mrf.mxu0
  %v3119 = vadd.f32 %v2486, %v3118
  %v3120 = vpop.f32.mrf.mxu0
  %v3121 = vadd.f32 %v2490, %v3120
  %3122 = vmatprep.mubr.bf16.mxu0 0
  %3123 = vmatmul.mubr.bf16.gmra.mxu0 %v2693
  %v3124 = vpop.f32.mrf.mxu0
  %v3125 = vadd.f32 %v2486, %v3124
  %v3126 = vpop.f32.mrf.mxu0
  %v3127 = vadd.f32 %v2490, %v3126
  %v3128 = vpop.f32.mrf.mxu0
  %v3129 = vadd.f32 %v2486, %v3128
  %v3130 = vpop.f32.mrf.mxu0
  %v3131 = vadd.f32 %v2490, %v3130
  %3132 = vdwg.mxu0
  %3133 = vmatprep.subr.bf16.mxu0 0
  %3134 = vmatpush1.bf16.msra.mxu0 0
  %3135 = vmatprep.subr.bf16.mxu0 0
  %3136 = vmatpush1.bf16.msra.mxu0 0
  %3137 = vmatprep.subr.bf16.mxu0 0
  %3138 = vmatpush1.bf16.msra.mxu0 0
  %3139 = vmatprep.subr.bf16.mxu0 0
  %3140 = vmatpush1.bf16.msra.mxu0 0
  %3141 = vmatprep.subr.bf16.mxu0 0
  %3142 = vmatpush1.bf16.msra.mxu0 0
  %3143 = vmatprep.subr.bf16.mxu0 0
  %3144 = vmatpush1.bf16.msra.mxu0 0
  %3145 = vmatprep.subr.bf16.mxu0 %v2648
  %3146 = vmatpush1.bf16.msra.mxu0 %v2647
  %3147 = vmatprep.subr.bf16.mxu0 %v2632
  %3148 = vmatpush1.bf16.msra.mxu0 %v2631
  %3149 = vmatprep.subr.bf16.mxu0 0
  %3150 = vmatpush2.bf16.msra.mxu0 0
  %3151 = vmatprep.subr.bf16.mxu0 0
  %3152 = vmatpush2.bf16.msra.mxu0 0
  %3153 = vmatprep.subr.bf16.mxu0 0
  %3154 = vmatpush2.bf16.msra.mxu0 0
  %3155 = vmatprep.subr.bf16.mxu0 0
  %3156 = vmatpush2.bf16.msra.mxu0 0
  %3157 = vmatprep.subr.bf16.mxu0 0
  %3158 = vmatpush2.bf16.msra.mxu0 0
  %3159 = vmatprep.subr.bf16.mxu0 0
  %3160 = vmatpush2.bf16.msra.mxu0 0
  %3161 = vmatprep.subr.bf16.mxu0 0
  %3162 = vmatpush2.bf16.msra.mxu0 0
  %3163 = vmatprep.subr.bf16.mxu0 0
  %3164 = vmatpush2.bf16.msra.mxu0 0
  %3165 = vmatprep.mubr.bf16.mxu0 0
  %3166 = vmatmul.mubr.bf16.gmra.mxu0 %v2684
  %v3167 = vpop.f32.mrf.mxu0
  %v3168 = vadd.f32 %v2494, %v3167
  %v3169 = vpop.f32.mrf.mxu0
  %v3170 = vadd.f32 %v2498, %v3169
  %v3171 = vpop.f32.mrf.mxu0
  %v3172 = vadd.f32 %v2494, %v3171
  %v3173 = vpop.f32.mrf.mxu0
  %v3174 = vadd.f32 %v2498, %v3173
  %3175 = vmatprep.mubr.bf16.mxu0 0
  %3176 = vmatmul.mubr.bf16.gmra.mxu0 %v2687
  %v3177 = vpop.f32.mrf.mxu0
  %v3178 = vadd.f32 %v2494, %v3177
  %v3179 = vpop.f32.mrf.mxu0
  %v3180 = vadd.f32 %v2498, %v3179
  %v3181 = vpop.f32.mrf.mxu0
  %v3182 = vadd.f32 %v2494, %v3181
  %v3183 = vpop.f32.mrf.mxu0
  %v3184 = vadd.f32 %v2498, %v3183
  %3185 = vmatprep.mubr.bf16.mxu0 0
  %3186 = vmatmul.mubr.bf16.gmra.mxu0 %v2690
  %v3187 = vpop.f32.mrf.mxu0
  %v3188 = vadd.f32 %v2494, %v3187
  %v3189 = vpop.f32.mrf.mxu0
  %v3190 = vadd.f32 %v2498, %v3189
  %v3191 = vpop.f32.mrf.mxu0
  %v3192 = vadd.f32 %v2494, %v3191
  %v3193 = vpop.f32.mrf.mxu0
  %v3194 = vadd.f32 %v2498, %v3193
  %3195 = vmatprep.mubr.bf16.mxu0 0
  %3196 = vmatmul.mubr.bf16.gmra.mxu0 %v2693
  %v3197 = vpop.f32.mrf.mxu0
  %v3198 = vadd.f32 %v2494, %v3197
  %v3199 = vpop.f32.mrf.mxu0
  %v3200 = vadd.f32 %v2498, %v3199
  %v3201 = vpop.f32.mrf.mxu0
  %v3202 = vadd.f32 %v2494, %v3201
  %v3203 = vpop.f32.mrf.mxu0
  %v3204 = vadd.f32 %v2498, %v3203
  %3205 = vdwg.mxu0
  %3206 = vmatprep.subr.bf16.mxu0 0
  %3207 = vmatpush1.bf16.msra.mxu0 0
  %3208 = vmatprep.subr.bf16.mxu0 0
  %3209 = vmatpush1.bf16.msra.mxu0 0
  %3210 = vmatprep.subr.bf16.mxu0 0
  %3211 = vmatpush1.bf16.msra.mxu0 0
  %3212 = vmatprep.subr.bf16.mxu0 0
  %3213 = vmatpush1.bf16.msra.mxu0 0
  %3214 = vmatprep.subr.bf16.mxu0 0
  %3215 = vmatpush1.bf16.msra.mxu0 0
  %3216 = vmatprep.subr.bf16.mxu0 0
  %3217 = vmatpush1.bf16.msra.mxu0 0
  %3218 = vmatprep.subr.bf16.mxu0 %v2650
  %3219 = vmatpush1.bf16.msra.mxu0 %v2649
  %3220 = vmatprep.subr.bf16.mxu0 %v2634
  %3221 = vmatpush1.bf16.msra.mxu0 %v2633
  %3222 = vmatprep.subr.bf16.mxu0 0
  %3223 = vmatpush2.bf16.msra.mxu0 0
  %3224 = vmatprep.subr.bf16.mxu0 0
  %3225 = vmatpush2.bf16.msra.mxu0 0
  %3226 = vmatprep.subr.bf16.mxu0 0
  %3227 = vmatpush2.bf16.msra.mxu0 0
  %3228 = vmatprep.subr.bf16.mxu0 0
  %3229 = vmatpush2.bf16.msra.mxu0 0
  %3230 = vmatprep.subr.bf16.mxu0 0
  %3231 = vmatpush2.bf16.msra.mxu0 0
  %3232 = vmatprep.subr.bf16.mxu0 0
  %3233 = vmatpush2.bf16.msra.mxu0 0
  %3234 = vmatprep.subr.bf16.mxu0 0
  %3235 = vmatpush2.bf16.msra.mxu0 0
  %3236 = vmatprep.subr.bf16.mxu0 0
  %3237 = vmatpush2.bf16.msra.mxu0 0
  %3238 = vmatprep.mubr.bf16.mxu0 0
  %3239 = vmatmul.mubr.bf16.gmra.mxu0 %v2684
  %v3240 = vpop.f32.mrf.mxu0
  %v3241 = vadd.f32 %v2502, %v3240
  %v3242 = vpop.f32.mrf.mxu0
  %v3243 = vadd.f32 %v2506, %v3242
  %v3244 = vpop.f32.mrf.mxu0
  %v3245 = vadd.f32 %v2502, %v3244
  %v3246 = vpop.f32.mrf.mxu0
  %v3247 = vadd.f32 %v2506, %v3246
  %3248 = vmatprep.mubr.bf16.mxu0 0
  %3249 = vmatmul.mubr.bf16.gmra.mxu0 %v2687
  %v3250 = vpop.f32.mrf.mxu0
  %v3251 = vadd.f32 %v2502, %v3250
  %v3252 = vpop.f32.mrf.mxu0
  %v3253 = vadd.f32 %v2506, %v3252
  %v3254 = vpop.f32.mrf.mxu0
  %v3255 = vadd.f32 %v2502, %v3254
  %v3256 = vpop.f32.mrf.mxu0
  %v3257 = vadd.f32 %v2506, %v3256
  %3258 = vmatprep.mubr.bf16.mxu0 0
  %3259 = vmatmul.mubr.bf16.gmra.mxu0 %v2690
  %v3260 = vpop.f32.mrf.mxu0
  %v3261 = vadd.f32 %v2502, %v3260
  %v3262 = vpop.f32.mrf.mxu0
  %v3263 = vadd.f32 %v2506, %v3262
  %v3264 = vpop.f32.mrf.mxu0
  %v3265 = vadd.f32 %v2502, %v3264
  %v3266 = vpop.f32.mrf.mxu0
  %v3267 = vadd.f32 %v2506, %v3266
  %3268 = vmatprep.mubr.bf16.mxu0 0
  %3269 = vmatmul.mubr.bf16.gmra.mxu0 %v2693
  %v3270 = vpop.f32.mrf.mxu0
  %v3271 = vadd.f32 %v2502, %v3270
  %v3272 = vpop.f32.mrf.mxu0
  %v3273 = vadd.f32 %v2506, %v3272
  %v3274 = vpop.f32.mrf.mxu0
  %v3275 = vadd.f32 %v2502, %v3274
  %v3276 = vpop.f32.mrf.mxu0
  %v3277 = vadd.f32 %v2506, %v3276
  %3278 = vdwg.mxu0
  %v3279 = vmax.f32 %v2730, 0.0
  %v3280 = vmax.f32 %v2732, 0.0
  %v3281 = vmax.f32 %v2803, 0.0
  %v3282 = vmax.f32 %v2805, 0.0
  %v3283 = vmax.f32 %v2876, 0.0
  %v3284 = vmax.f32 %v2878, 0.0
  %v3285 = vmax.f32 %v2949, 0.0
  %v3286 = vmax.f32 %v2951, 0.0
  %v3287 = vmax.f32 %v3022, 0.0
  %v3288 = vmax.f32 %v3024, 0.0
  %v3289 = vmax.f32 %v3095, 0.0
  %v3290 = vmax.f32 %v3097, 0.0
  %v3291 = vmax.f32 %v3168, 0.0
  %v3292 = vmax.f32 %v3170, 0.0
  %v3293 = vmax.f32 %v3241, 0.0
  %v3294 = vmax.f32 %v3243, 0.0
  %v3295 = vmax.f32 %v2734, 0.0
  %v3296 = vmax.f32 %v2736, 0.0
  %v3297 = vmax.f32 %v2807, 0.0
  %v3298 = vmax.f32 %v2809, 0.0
  %v3299 = vmax.f32 %v2880, 0.0
  %v3300 = vmax.f32 %v2882, 0.0
  %v3301 = vmax.f32 %v2953, 0.0
  %v3302 = vmax.f32 %v2955, 0.0
  %v3303 = vmax.f32 %v3026, 0.0
  %v3304 = vmax.f32 %v3028, 0.0
  %v3305 = vmax.f32 %v3099, 0.0
  %v3306 = vmax.f32 %v3101, 0.0
  %v3307 = vmax.f32 %v3172, 0.0
  %v3308 = vmax.f32 %v3174, 0.0
  %v3309 = vmax.f32 %v3245, 0.0
  %v3310 = vmax.f32 %v3247, 0.0
  %v3311 = vmax.f32 %v2740, 0.0
  %v3312 = vmax.f32 %v2742, 0.0
  %v3313 = vmax.f32 %v2813, 0.0
  %v3314 = vmax.f32 %v2815, 0.0
  %v3315 = vmax.f32 %v2886, 0.0
  %v3316 = vmax.f32 %v2888, 0.0
  %v3317 = vmax.f32 %v2959, 0.0
  %v3318 = vmax.f32 %v2961, 0.0
  %v3319 = vmax.f32 %v3032, 0.0
  %v3320 = vmax.f32 %v3034, 0.0
  %v3321 = vmax.f32 %v3105, 0.0
  %v3322 = vmax.f32 %v3107, 0.0
  %v3323 = vmax.f32 %v3178, 0.0
  %v3324 = vmax.f32 %v3180, 0.0
  %v3325 = vmax.f32 %v3251, 0.0
  %v3326 = vmax.f32 %v3253, 0.0
  %v3327 = vmax.f32 %v2744, 0.0
  %v3328 = vmax.f32 %v2746, 0.0
  %v3329 = vmax.f32 %v2817, 0.0
  %v3330 = vmax.f32 %v2819, 0.0
  %v3331 = vmax.f32 %v2890, 0.0
  %v3332 = vmax.f32 %v2892, 0.0
  %v3333 = vmax.f32 %v2963, 0.0
  %v3334 = vmax.f32 %v2965, 0.0
  %v3335 = vmax.f32 %v3036, 0.0
  %v3336 = vmax.f32 %v3038, 0.0
  %v3337 = vmax.f32 %v3109, 0.0
  %v3338 = vmax.f32 %v3111, 0.0
  %v3339 = vmax.f32 %v3182, 0.0
  %v3340 = vmax.f32 %v3184, 0.0
  %v3341 = vmax.f32 %v3255, 0.0
  %v3342 = vmax.f32 %v3257, 0.0
  %v3343 = vmax.f32 %v2750, 0.0
  %v3344 = vmax.f32 %v2752, 0.0
  %v3345 = vmax.f32 %v2823, 0.0
  %v3346 = vmax.f32 %v2825, 0.0
  %v3347 = vmax.f32 %v2896, 0.0
  %v3348 = vmax.f32 %v2898, 0.0
  %v3349 = vmax.f32 %v2969, 0.0
  %v3350 = vmax.f32 %v2971, 0.0
  %v3351 = vmax.f32 %v3042, 0.0
  %v3352 = vmax.f32 %v3044, 0.0
  %v3353 = vmax.f32 %v3115, 0.0
  %v3354 = vmax.f32 %v3117, 0.0
  %v3355 = vmax.f32 %v3188, 0.0
  %v3356 = vmax.f32 %v3190, 0.0
  %v3357 = vmax.f32 %v3261, 0.0
  %v3358 = vmax.f32 %v3263, 0.0
  %v3359 = vmax.f32 %v2754, 0.0
  %v3360 = vmax.f32 %v2756, 0.0
  %v3361 = vmax.f32 %v2827, 0.0
  %v3362 = vmax.f32 %v2829, 0.0
  %v3363 = vmax.f32 %v2900, 0.0
  %v3364 = vmax.f32 %v2902, 0.0
  %v3365 = vmax.f32 %v2973, 0.0
  %v3366 = vmax.f32 %v2975, 0.0
  %v3367 = vmax.f32 %v3046, 0.0
  %v3368 = vmax.f32 %v3048, 0.0
  %v3369 = vmax.f32 %v3119, 0.0
  %v3370 = vmax.f32 %v3121, 0.0
  %v3371 = vmax.f32 %v3192, 0.0
  %v3372 = vmax.f32 %v3194, 0.0
  %v3373 = vmax.f32 %v3265, 0.0
  %v3374 = vmax.f32 %v3267, 0.0
  %v3375 = vmax.f32 %v2760, 0.0
  %v3376 = vmax.f32 %v2762, 0.0
  %v3377 = vmax.f32 %v2833, 0.0
  %v3378 = vmax.f32 %v2835, 0.0
  %v3379 = vmax.f32 %v2906, 0.0
  %v3380 = vmax.f32 %v2908, 0.0
  %v3381 = vmax.f32 %v2979, 0.0
  %v3382 = vmax.f32 %v2981, 0.0
  %v3383 = vmax.f32 %v3052, 0.0
  %v3384 = vmax.f32 %v3054, 0.0
  %v3385 = vmax.f32 %v3125, 0.0
  %v3386 = vmax.f32 %v3127, 0.0
  %v3387 = vmax.f32 %v3198, 0.0
  %v3388 = vmax.f32 %v3200, 0.0
  %v3389 = vmax.f32 %v3271, 0.0
  %v3390 = vmax.f32 %v3273, 0.0
  %v3391 = vmax.f32 %v2764, 0.0
  %v3392 = vmax.f32 %v2766, 0.0
  %v3393 = vmax.f32 %v2837, 0.0
  %v3394 = vmax.f32 %v2839, 0.0
  %v3395 = vmax.f32 %v2910, 0.0
  %v3396 = vmax.f32 %v2912, 0.0
  %v3397 = vmax.f32 %v2983, 0.0
  %v3398 = vmax.f32 %v2985, 0.0
  %v3399 = vmax.f32 %v3056, 0.0
  %v3400 = vmax.f32 %v3058, 0.0
  %v3401 = vmax.f32 %v3129, 0.0
  %v3402 = vmax.f32 %v3131, 0.0
  %v3403 = vmax.f32 %v3202, 0.0
  %v3404 = vmax.f32 %v3204, 0.0
  %v3405 = vmax.f32 %v3275, 0.0
  %v3406 = vmax.f32 %v3277, 0.0
  %v3407 = vpack.c.bf16 %v3295, %v3279
  %v3408 = vpack.c.bf16 %v3296, %v3280
  %v3409 = vpack.c.bf16 %v3297, %v3281
  %v3410 = vpack.c.bf16 %v3298, %v3282
  %v3411 = vpack.c.bf16 %v3299, %v3283
  %v3412 = vpack.c.bf16 %v3300, %v3284
  %v3413 = vpack.c.bf16 %v3301, %v3285
  %v3414 = vpack.c.bf16 %v3302, %v3286
  %v3415 = vpack.c.bf16 %v3303, %v3287
  %v3416 = vpack.c.bf16 %v3304, %v3288
  %v3417 = vpack.c.bf16 %v3305, %v3289
  %v3418 = vpack.c.bf16 %v3306, %v3290
  %v3419 = vpack.c.bf16 %v3307, %v3291
  %v3420 = vpack.c.bf16 %v3308, %v3292
  %v3421 = vpack.c.bf16 %v3309, %v3293
  %v3422 = vpack.c.bf16 %v3310, %v3294
  %v3423 = vpack.c.bf16 %v3327, %v3311
  %v3424 = vpack.c.bf16 %v3328, %v3312
  %v3425 = vpack.c.bf16 %v3329, %v3313
  %v3426 = vpack.c.bf16 %v3330, %v3314
  %v3427 = vpack.c.bf16 %v3331, %v3315
  %v3428 = vpack.c.bf16 %v3332, %v3316
  %v3429 = vpack.c.bf16 %v3333, %v3317
  %v3430 = vpack.c.bf16 %v3334, %v3318
  %v3431 = vpack.c.bf16 %v3335, %v3319
  %v3432 = vpack.c.bf16 %v3336, %v3320
  %v3433 = vpack.c.bf16 %v3337, %v3321
  %v3434 = vpack.c.bf16 %v3338, %v3322
  %v3435 = vpack.c.bf16 %v3339, %v3323
  %v3436 = vpack.c.bf16 %v3340, %v3324
  %v3437 = vpack.c.bf16 %v3341, %v3325
  %v3438 = vpack.c.bf16 %v3342, %v3326
  %v3439 = vpack.c.bf16 %v3359, %v3343
  %v3440 = vpack.c.bf16 %v3360, %v3344
  %v3441 = vpack.c.bf16 %v3361, %v3345
  %v3442 = vpack.c.bf16 %v3362, %v3346
  %v3443 = vpack.c.bf16 %v3363, %v3347
  %v3444 = vpack.c.bf16 %v3364, %v3348
  %v3445 = vpack.c.bf16 %v3365, %v3349
  %v3446 = vpack.c.bf16 %v3366, %v3350
  %v3447 = vpack.c.bf16 %v3367, %v3351
  %v3448 = vpack.c.bf16 %v3368, %v3352
  %v3449 = vpack.c.bf16 %v3369, %v3353
  %v3450 = vpack.c.bf16 %v3370, %v3354
  %v3451 = vpack.c.bf16 %v3371, %v3355
  %v3452 = vpack.c.bf16 %v3372, %v3356
  %v3453 = vpack.c.bf16 %v3373, %v3357
  %v3454 = vpack.c.bf16 %v3374, %v3358
  %v3455 = vpack.c.bf16 %v3391, %v3375
  %v3456 = vpack.c.bf16 %v3392, %v3376
  %v3457 = vpack.c.bf16 %v3393, %v3377
  %v3458 = vpack.c.bf16 %v3394, %v3378
  %v3459 = vpack.c.bf16 %v3395, %v3379
  %v3460 = vpack.c.bf16 %v3396, %v3380
  %v3461 = vpack.c.bf16 %v3397, %v3381
  %v3462 = vpack.c.bf16 %v3398, %v3382
  %v3463 = vpack.c.bf16 %v3399, %v3383
  %v3464 = vpack.c.bf16 %v3400, %v3384
  %v3465 = vpack.c.bf16 %v3401, %v3385
  %v3466 = vpack.c.bf16 %v3402, %v3386
  %v3467 = vpack.c.bf16 %v3403, %v3387
  %v3468 = vpack.c.bf16 %v3404, %v3388
  %v3469 = vpack.c.bf16 %v3405, %v3389
  %v3470 = vpack.c.bf16 %v3406, %v3390
  %v3471 = vld [vmem:[%s11] sm:$0xf]
  %v3472 = vld [vmem:[%s11 + $0x4] sm:$0xf]
  %v3473 = vld [vmem:[%s11 + $0x8] sm:$0xf]
  %v3474 = vld [vmem:[%s11 + $0xc] sm:$0xf]
  %v3475 = vld [vmem:[%s11 + $0x10] sm:$0xf]
  %v3476 = vld [vmem:[%s11 + $0x14] sm:$0xf]
  %v3477 = vld [vmem:[%s11 + $0x18] sm:$0xf]
  %v3478 = vld [vmem:[%s11 + $0x1c] sm:$0xf]
  %v3479 = vld [vmem:[%s11 + $0x20] sm:$0xf]
  %v3480 = vld [vmem:[%s11 + $0x24] sm:$0xf]
  %v3481 = vld [vmem:[%s11 + $0x28] sm:$0xf]
  %v3482 = vld [vmem:[%s11 + $0x2c] sm:$0xf]
  %v3483 = vld [vmem:[%s11 + $0x30] sm:$0xf]
  %v3484 = vld [vmem:[%s11 + $0x34] sm:$0xf]
  %v3485 = vld [vmem:[%s11 + $0x38] sm:$0xf]
  %v3486 = vld [vmem:[%s11 + $0x3c] sm:$0xf]
  %v3487 = vld [vmem:[%s11 + $0x40] sm:$0xf]
  %v3488 = vld [vmem:[%s11 + $0x44] sm:$0xf]
  %v3489 = vld [vmem:[%s11 + $0x48] sm:$0xf]
  %v3490 = vld [vmem:[%s11 + $0x4c] sm:$0xf]
  %v3491 = vld [vmem:[%s11 + $0x50] sm:$0xf]
  %v3492 = vld [vmem:[%s11 + $0x54] sm:$0xf]
  %v3493 = vld [vmem:[%s11 + $0x58] sm:$0xf]
  %v3494 = vld [vmem:[%s11 + $0x5c] sm:$0xf]
  %v3495 = vld [vmem:[%s11 + $0x60] sm:$0xf]
  %v3496 = vld [vmem:[%s11 + $0x64] sm:$0xf]
  %v3497 = vld [vmem:[%s11 + $0x68] sm:$0xf]
  %v3498 = vld [vmem:[%s11 + $0x6c] sm:$0xf]
  %v3499 = vld [vmem:[%s11 + $0x70] sm:$0xf]
  %v3500 = vld [vmem:[%s11 + $0x74] sm:$0xf]
  %v3501 = vld [vmem:[%s11 + $0x78] sm:$0xf]
  %v3502 = vld [vmem:[%s11 + $0x7c] sm:$0xf]
  %v3503 = vld [vmem:[%s11 + $0x80] sm:$0xf]
  %v3504 = vld [vmem:[%s11 + $0x84] sm:$0xf]
  %v3505 = vld [vmem:[%s11 + $0x88] sm:$0xf]
  %v3506 = vld [vmem:[%s11 + $0x8c] sm:$0xf]
  %v3507 = vld [vmem:[%s11 + $0x90] sm:$0xf]
  %v3508 = vld [vmem:[%s11 + $0x94] sm:$0xf]
  %v3509 = vld [vmem:[%s11 + $0x98] sm:$0xf]
  %v3510 = vld [vmem:[%s11 + $0x9c] sm:$0xf]
  %v3511 = vld [vmem:[%s11 + $0xa0] sm:$0xf]
  %v3512 = vld [vmem:[%s11 + $0xa4] sm:$0xf]
  %v3513 = vld [vmem:[%s11 + $0xa8] sm:$0xf]
  %v3514 = vld [vmem:[%s11 + $0xac] sm:$0xf]
  %v3515 = vld [vmem:[%s11 + $0xb0] sm:$0xf]
  %v3516 = vld [vmem:[%s11 + $0xb4] sm:$0xf]
  %v3517 = vld [vmem:[%s11 + $0xb8] sm:$0xf]
  %v3518 = vld [vmem:[%s11 + $0xbc] sm:$0xf]
  %v3519 = vld [vmem:[%s11 + $0xc0] sm:$0xf]
  %v3520 = vld [vmem:[%s11 + $0xc4] sm:$0xf]
  %v3521 = vld [vmem:[%s11 + $0xc8] sm:$0xf]
  %v3522 = vld [vmem:[%s11 + $0xcc] sm:$0xf]
  %v3523 = vld [vmem:[%s11 + $0xd0] sm:$0xf]
  %v3524 = vld [vmem:[%s11 + $0xd4] sm:$0xf]
  %v3525 = vld [vmem:[%s11 + $0xd8] sm:$0xf]
  %v3526 = vld [vmem:[%s11 + $0xdc] sm:$0xf]
  %v3527 = vld [vmem:[%s11 + $0xe0] sm:$0xf]
  %v3528 = vld [vmem:[%s11 + $0xe4] sm:$0xf]
  %v3529 = vld [vmem:[%s11 + $0xe8] sm:$0xf]
  %v3530 = vld [vmem:[%s11 + $0xec] sm:$0xf]
  %v3531 = vld [vmem:[%s11 + $0xf0] sm:$0xf]
  %v3532 = vld [vmem:[%s11 + $0xf4] sm:$0xf]
  %v3533 = vld [vmem:[%s11 + $0xf8] sm:$0xf]
  %v3534 = vld [vmem:[%s11 + $0xfc] sm:$0xf]
  %v3535 = vld [vmem:[%s11 + $0x100] sm:$0xf]
  %v3536 = vld [vmem:[%s11 + $0x104] sm:$0xf]
  %v3537 = vld [vmem:[%s11 + $0x108] sm:$0xf]
  %v3538 = vld [vmem:[%s11 + $0x10c] sm:$0xf]
  %v3539 = vld [vmem:[%s11 + $0x110] sm:$0xf]
  %v3540 = vld [vmem:[%s11 + $0x114] sm:$0xf]
  %v3541 = vld [vmem:[%s11 + $0x118] sm:$0xf]
  %v3542 = vld [vmem:[%s11 + $0x11c] sm:$0xf]
  %v3543 = vld [vmem:[%s11 + $0x120] sm:$0xf]
  %v3544 = vld [vmem:[%s11 + $0x124] sm:$0xf]
  %v3545 = vld [vmem:[%s11 + $0x128] sm:$0xf]
  %v3546 = vld [vmem:[%s11 + $0x12c] sm:$0xf]
  %v3547 = vld [vmem:[%s11 + $0x130] sm:$0xf]
  %v3548 = vld [vmem:[%s11 + $0x134] sm:$0xf]
  %v3549 = vld [vmem:[%s11 + $0x138] sm:$0xf]
  %v3550 = vld [vmem:[%s11 + $0x13c] sm:$0xf]
  %v3551 = vld [vmem:[%s11 + $0x140] sm:$0xf]
  %v3552 = vld [vmem:[%s11 + $0x144] sm:$0xf]
  %v3553 = vld [vmem:[%s11 + $0x148] sm:$0xf]
  %v3554 = vld [vmem:[%s11 + $0x14c] sm:$0xf]
  %v3555 = vld [vmem:[%s11 + $0x150] sm:$0xf]
  %v3556 = vld [vmem:[%s11 + $0x154] sm:$0xf]
  %v3557 = vld [vmem:[%s11 + $0x158] sm:$0xf]
  %v3558 = vld [vmem:[%s11 + $0x15c] sm:$0xf]
  %v3559 = vld [vmem:[%s11 + $0x160] sm:$0xf]
  %v3560 = vld [vmem:[%s11 + $0x164] sm:$0xf]
  %v3561 = vld [vmem:[%s11 + $0x168] sm:$0xf]
  %v3562 = vld [vmem:[%s11 + $0x16c] sm:$0xf]
  %v3563 = vld [vmem:[%s11 + $0x170] sm:$0xf]
  %v3564 = vld [vmem:[%s11 + $0x174] sm:$0xf]
  %v3565 = vld [vmem:[%s11 + $0x178] sm:$0xf]
  %v3566 = vld [vmem:[%s11 + $0x17c] sm:$0xf]
  %v3567 = vld [vmem:[%s11 + $0x180] sm:$0xf]
  %v3568 = vld [vmem:[%s11 + $0x184] sm:$0xf]
  %v3569 = vld [vmem:[%s11 + $0x188] sm:$0xf]
  %v3570 = vld [vmem:[%s11 + $0x18c] sm:$0xf]
  %v3571 = vld [vmem:[%s11 + $0x190] sm:$0xf]
  %v3572 = vld [vmem:[%s11 + $0x194] sm:$0xf]
  %v3573 = vld [vmem:[%s11 + $0x198] sm:$0xf]
  %v3574 = vld [vmem:[%s11 + $0x19c] sm:$0xf]
  %v3575 = vld [vmem:[%s11 + $0x1a0] sm:$0xf]
  %v3576 = vld [vmem:[%s11 + $0x1a4] sm:$0xf]
  %v3577 = vld [vmem:[%s11 + $0x1a8] sm:$0xf]
  %v3578 = vld [vmem:[%s11 + $0x1ac] sm:$0xf]
  %v3579 = vld [vmem:[%s11 + $0x1b0] sm:$0xf]
  %v3580 = vld [vmem:[%s11 + $0x1b4] sm:$0xf]
  %v3581 = vld [vmem:[%s11 + $0x1b8] sm:$0xf]
  %v3582 = vld [vmem:[%s11 + $0x1bc] sm:$0xf]
  %v3583 = vld [vmem:[%s11 + $0x1c0] sm:$0xf]
  %v3584 = vld [vmem:[%s11 + $0x1c4] sm:$0xf]
  %v3585 = vld [vmem:[%s11 + $0x1c8] sm:$0xf]
  %v3586 = vld [vmem:[%s11 + $0x1cc] sm:$0xf]
  %v3587 = vld [vmem:[%s11 + $0x1d0] sm:$0xf]
  %v3588 = vld [vmem:[%s11 + $0x1d4] sm:$0xf]
  %v3589 = vld [vmem:[%s11 + $0x1d8] sm:$0xf]
  %v3590 = vld [vmem:[%s11 + $0x1dc] sm:$0xf]
  %v3591 = vld [vmem:[%s11 + $0x1e0] sm:$0xf]
  %v3592 = vld [vmem:[%s11 + $0x1e4] sm:$0xf]
  %v3593 = vld [vmem:[%s11 + $0x1e8] sm:$0xf]
  %v3594 = vld [vmem:[%s11 + $0x1ec] sm:$0xf]
  %v3595 = vld [vmem:[%s11 + $0x1f0] sm:$0xf]
  %v3596 = vld [vmem:[%s11 + $0x1f4] sm:$0xf]
  %v3597 = vld [vmem:[%s11 + $0x1f8] sm:$0xf]
  %v3598 = vld [vmem:[%s11 + $0x1fc] sm:$0xf]
  %v3599 = vld [vmem:[%s11 + $0x200] sm:$0xf]
  %v3600 = vld [vmem:[%s11 + $0x204] sm:$0xf]
  %v3601 = vld [vmem:[%s11 + $0x208] sm:$0xf]
  %v3602 = vld [vmem:[%s11 + $0x20c] sm:$0xf]
  %v3603 = vld [vmem:[%s11 + $0x210] sm:$0xf]
  %v3604 = vld [vmem:[%s11 + $0x214] sm:$0xf]
  %v3605 = vld [vmem:[%s11 + $0x218] sm:$0xf]
  %v3606 = vld [vmem:[%s11 + $0x21c] sm:$0xf]
  %v3607 = vld [vmem:[%s11 + $0x220] sm:$0xf]
  %v3608 = vld [vmem:[%s11 + $0x224] sm:$0xf]
  %v3609 = vld [vmem:[%s11 + $0x228] sm:$0xf]
  %v3610 = vld [vmem:[%s11 + $0x22c] sm:$0xf]
  %v3611 = vld [vmem:[%s11 + $0x230] sm:$0xf]
  %v3612 = vld [vmem:[%s11 + $0x234] sm:$0xf]
  %v3613 = vld [vmem:[%s11 + $0x238] sm:$0xf]
  %v3614 = vld [vmem:[%s11 + $0x23c] sm:$0xf]
  %v3615 = vld [vmem:[%s11 + $0x240] sm:$0xf]
  %v3616 = vld [vmem:[%s11 + $0x244] sm:$0xf]
  %v3617 = vld [vmem:[%s11 + $0x248] sm:$0xf]
  %v3618 = vld [vmem:[%s11 + $0x24c] sm:$0xf]
  %v3619 = vld [vmem:[%s11 + $0x250] sm:$0xf]
  %v3620 = vld [vmem:[%s11 + $0x254] sm:$0xf]
  %v3621 = vld [vmem:[%s11 + $0x258] sm:$0xf]
  %v3622 = vld [vmem:[%s11 + $0x25c] sm:$0xf]
  %v3623 = vld [vmem:[%s11 + $0x260] sm:$0xf]
  %v3624 = vld [vmem:[%s11 + $0x264] sm:$0xf]
  %v3625 = vld [vmem:[%s11 + $0x268] sm:$0xf]
  %v3626 = vld [vmem:[%s11 + $0x26c] sm:$0xf]
  %v3627 = vld [vmem:[%s11 + $0x270] sm:$0xf]
  %v3628 = vld [vmem:[%s11 + $0x274] sm:$0xf]
  %v3629 = vld [vmem:[%s11 + $0x278] sm:$0xf]
  %v3630 = vld [vmem:[%s11 + $0x27c] sm:$0xf]
  %v3631 = vld [vmem:[%s11 + $0x280] sm:$0xf]
  %v3632 = vld [vmem:[%s11 + $0x284] sm:$0xf]
  %v3633 = vld [vmem:[%s11 + $0x288] sm:$0xf]
  %v3634 = vld [vmem:[%s11 + $0x28c] sm:$0xf]
  %v3635 = vld [vmem:[%s11 + $0x290] sm:$0xf]
  %v3636 = vld [vmem:[%s11 + $0x294] sm:$0xf]
  %v3637 = vld [vmem:[%s11 + $0x298] sm:$0xf]
  %v3638 = vld [vmem:[%s11 + $0x29c] sm:$0xf]
  %v3639 = vld [vmem:[%s11 + $0x2a0] sm:$0xf]
  %v3640 = vld [vmem:[%s11 + $0x2a4] sm:$0xf]
  %v3641 = vld [vmem:[%s11 + $0x2a8] sm:$0xf]
  %v3642 = vld [vmem:[%s11 + $0x2ac] sm:$0xf]
  %v3643 = vld [vmem:[%s11 + $0x2b0] sm:$0xf]
  %v3644 = vld [vmem:[%s11 + $0x2b4] sm:$0xf]
  %v3645 = vld [vmem:[%s11 + $0x2b8] sm:$0xf]
  %v3646 = vld [vmem:[%s11 + $0x2bc] sm:$0xf]
  %v3647 = vld [vmem:[%s11 + $0x2c0] sm:$0xf]
  %v3648 = vld [vmem:[%s11 + $0x2c4] sm:$0xf]
  %v3649 = vld [vmem:[%s11 + $0x2c8] sm:$0xf]
  %v3650 = vld [vmem:[%s11 + $0x2cc] sm:$0xf]
  %v3651 = vld [vmem:[%s11 + $0x2d0] sm:$0xf]
  %v3652 = vld [vmem:[%s11 + $0x2d4] sm:$0xf]
  %v3653 = vld [vmem:[%s11 + $0x2d8] sm:$0xf]
  %v3654 = vld [vmem:[%s11 + $0x2dc] sm:$0xf]
  %v3655 = vld [vmem:[%s11 + $0x2e0] sm:$0xf]
  %v3656 = vld [vmem:[%s11 + $0x2e4] sm:$0xf]
  %v3657 = vld [vmem:[%s11 + $0x2e8] sm:$0xf]
  %v3658 = vld [vmem:[%s11 + $0x2ec] sm:$0xf]
  %v3659 = vld [vmem:[%s11 + $0x2f0] sm:$0xf]
  %v3660 = vld [vmem:[%s11 + $0x2f4] sm:$0xf]
  %v3661 = vld [vmem:[%s11 + $0x2f8] sm:$0xf]
  %v3662 = vld [vmem:[%s11 + $0x2fc] sm:$0xf]
  %v3663 = vld [vmem:[%s11 + $0x300] sm:$0xf]
  %v3664 = vld [vmem:[%s11 + $0x304] sm:$0xf]
  %v3665 = vld [vmem:[%s11 + $0x308] sm:$0xf]
  %v3666 = vld [vmem:[%s11 + $0x30c] sm:$0xf]
  %v3667 = vld [vmem:[%s11 + $0x310] sm:$0xf]
  %v3668 = vld [vmem:[%s11 + $0x314] sm:$0xf]
  %v3669 = vld [vmem:[%s11 + $0x318] sm:$0xf]
  %v3670 = vld [vmem:[%s11 + $0x31c] sm:$0xf]
  %v3671 = vld [vmem:[%s11 + $0x320] sm:$0xf]
  %v3672 = vld [vmem:[%s11 + $0x324] sm:$0xf]
  %v3673 = vld [vmem:[%s11 + $0x328] sm:$0xf]
  %v3674 = vld [vmem:[%s11 + $0x32c] sm:$0xf]
  %v3675 = vld [vmem:[%s11 + $0x330] sm:$0xf]
  %v3676 = vld [vmem:[%s11 + $0x334] sm:$0xf]
  %v3677 = vld [vmem:[%s11 + $0x338] sm:$0xf]
  %v3678 = vld [vmem:[%s11 + $0x33c] sm:$0xf]
  %v3679 = vld [vmem:[%s11 + $0x340] sm:$0xf]
  %v3680 = vld [vmem:[%s11 + $0x344] sm:$0xf]
  %v3681 = vld [vmem:[%s11 + $0x348] sm:$0xf]
  %v3682 = vld [vmem:[%s11 + $0x34c] sm:$0xf]
  %v3683 = vld [vmem:[%s11 + $0x350] sm:$0xf]
  %v3684 = vld [vmem:[%s11 + $0x354] sm:$0xf]
  %v3685 = vld [vmem:[%s11 + $0x358] sm:$0xf]
  %v3686 = vld [vmem:[%s11 + $0x35c] sm:$0xf]
  %v3687 = vld [vmem:[%s11 + $0x360] sm:$0xf]
  %v3688 = vld [vmem:[%s11 + $0x364] sm:$0xf]
  %v3689 = vld [vmem:[%s11 + $0x368] sm:$0xf]
  %v3690 = vld [vmem:[%s11 + $0x36c] sm:$0xf]
  %v3691 = vld [vmem:[%s11 + $0x370] sm:$0xf]
  %v3692 = vld [vmem:[%s11 + $0x374] sm:$0xf]
  %v3693 = vld [vmem:[%s11 + $0x378] sm:$0xf]
  %v3694 = vld [vmem:[%s11 + $0x37c] sm:$0xf]
  %v3695 = vld [vmem:[%s11 + $0x380] sm:$0xf]
  %v3696 = vld [vmem:[%s11 + $0x384] sm:$0xf]
  %v3697 = vld [vmem:[%s11 + $0x388] sm:$0xf]
  %v3698 = vld [vmem:[%s11 + $0x38c] sm:$0xf]
  %v3699 = vld [vmem:[%s11 + $0x390] sm:$0xf]
  %v3700 = vld [vmem:[%s11 + $0x394] sm:$0xf]
  %v3701 = vld [vmem:[%s11 + $0x398] sm:$0xf]
  %v3702 = vld [vmem:[%s11 + $0x39c] sm:$0xf]
  %v3703 = vld [vmem:[%s11 + $0x3a0] sm:$0xf]
  %v3704 = vld [vmem:[%s11 + $0x3a4] sm:$0xf]
  %v3705 = vld [vmem:[%s11 + $0x3a8] sm:$0xf]
  %v3706 = vld [vmem:[%s11 + $0x3ac] sm:$0xf]
  %v3707 = vld [vmem:[%s11 + $0x3b0] sm:$0xf]
  %v3708 = vld [vmem:[%s11 + $0x3b4] sm:$0xf]
  %v3709 = vld [vmem:[%s11 + $0x3b8] sm:$0xf]
  %v3710 = vld [vmem:[%s11 + $0x3bc] sm:$0xf]
  %v3711 = vld [vmem:[%s11 + $0x3c0] sm:$0xf]
  %v3712 = vld [vmem:[%s11 + $0x3c4] sm:$0xf]
  %v3713 = vld [vmem:[%s11 + $0x3c8] sm:$0xf]
  %v3714 = vld [vmem:[%s11 + $0x3cc] sm:$0xf]
  %v3715 = vld [vmem:[%s11 + $0x3d0] sm:$0xf]
  %v3716 = vld [vmem:[%s11 + $0x3d4] sm:$0xf]
  %v3717 = vld [vmem:[%s11 + $0x3d8] sm:$0xf]
  %v3718 = vld [vmem:[%s11 + $0x3dc] sm:$0xf]
  %v3719 = vld [vmem:[%s11 + $0x3e0] sm:$0xf]
  %v3720 = vld [vmem:[%s11 + $0x3e4] sm:$0xf]
  %v3721 = vld [vmem:[%s11 + $0x3e8] sm:$0xf]
  %v3722 = vld [vmem:[%s11 + $0x3ec] sm:$0xf]
  %v3723 = vld [vmem:[%s11 + $0x3f0] sm:$0xf]
  %v3724 = vld [vmem:[%s11 + $0x3f4] sm:$0xf]
  %v3725 = vld [vmem:[%s11 + $0x3f8] sm:$0xf]
  %v3726 = vld [vmem:[%s11 + $0x3fc] sm:$0xf]
  %v3727 = vld [vmem:[%s12] sm:$0x1]
  %v3729 = vlaneseq
  %v3730 = vshrl.u32 %v3729, 7
  %v3731 = vsub.s32 0, %v3730
  %v3732 = vrot.slane %v3727, %v3731
  %v3990 = vunpack.c.l.b16 %v3471
  %v3991 = vunpack.c.l.b16 %v3472
  %v3992 = vunpack.c.l.b16 %v3473
  %v3993 = vunpack.c.l.b16 %v3474
  %v3994 = vunpack.c.l.b16 %v3475
  %v3995 = vunpack.c.l.b16 %v3476
  %v3996 = vunpack.c.l.b16 %v3477
  %v3997 = vunpack.c.l.b16 %v3478
  %v3998 = vunpack.c.l.b16 %v3479
  %v3999 = vunpack.c.l.b16 %v3480
  %v4000 = vunpack.c.l.b16 %v3481
  %v4001 = vunpack.c.l.b16 %v3482
  %v4002 = vunpack.c.l.b16 %v3483
  %v4003 = vunpack.c.l.b16 %v3484
  %v4004 = vunpack.c.l.b16 %v3485
  %v4005 = vunpack.c.l.b16 %v3486
  %v4006 = vunpack.c.l.b16 %v3487
  %v4007 = vunpack.c.l.b16 %v3488
  %v4008 = vunpack.c.l.b16 %v3489
  %v4009 = vunpack.c.l.b16 %v3490
  %v4010 = vunpack.c.l.b16 %v3491
  %v4011 = vunpack.c.l.b16 %v3492
  %v4012 = vunpack.c.l.b16 %v3493
  %v4013 = vunpack.c.l.b16 %v3494
  %v4014 = vunpack.c.l.b16 %v3495
  %v4015 = vunpack.c.l.b16 %v3496
  %v4016 = vunpack.c.l.b16 %v3497
  %v4017 = vunpack.c.l.b16 %v3498
  %v4018 = vunpack.c.l.b16 %v3499
  %v4019 = vunpack.c.l.b16 %v3500
  %v4020 = vunpack.c.l.b16 %v3501
  %v4021 = vunpack.c.l.b16 %v3502
  %v4022 = vunpack.c.l.b16 %v3503
  %v4023 = vunpack.c.l.b16 %v3504
  %v4024 = vunpack.c.l.b16 %v3505
  %v4025 = vunpack.c.l.b16 %v3506
  %v4026 = vunpack.c.l.b16 %v3507
  %v4027 = vunpack.c.l.b16 %v3508
  %v4028 = vunpack.c.l.b16 %v3509
  %v4029 = vunpack.c.l.b16 %v3510
  %v4030 = vunpack.c.l.b16 %v3511
  %v4031 = vunpack.c.l.b16 %v3512
  %v4032 = vunpack.c.l.b16 %v3513
  %v4033 = vunpack.c.l.b16 %v3514
  %v4034 = vunpack.c.l.b16 %v3515
  %v4035 = vunpack.c.l.b16 %v3516
  %v4036 = vunpack.c.l.b16 %v3517
  %v4037 = vunpack.c.l.b16 %v3518
  %v4038 = vunpack.c.l.b16 %v3519
  %v4039 = vunpack.c.l.b16 %v3520
  %v4040 = vunpack.c.l.b16 %v3521
  %v4041 = vunpack.c.l.b16 %v3522
  %v4042 = vunpack.c.l.b16 %v3523
  %v4043 = vunpack.c.l.b16 %v3524
  %v4044 = vunpack.c.l.b16 %v3525
  %v4045 = vunpack.c.l.b16 %v3526
  %v4046 = vunpack.c.l.b16 %v3527
  %v4047 = vunpack.c.l.b16 %v3528
  %v4048 = vunpack.c.l.b16 %v3529
  %v4049 = vunpack.c.l.b16 %v3530
  %v4050 = vunpack.c.l.b16 %v3531
  %v4051 = vunpack.c.l.b16 %v3532
  %v4052 = vunpack.c.l.b16 %v3533
  %v4053 = vunpack.c.l.b16 %v3534
  %v4054 = vunpack.c.l.b16 %v3535
  %v4055 = vunpack.c.l.b16 %v3536
  %v4056 = vunpack.c.l.b16 %v3537
  %v4057 = vunpack.c.l.b16 %v3538
  %v4058 = vunpack.c.l.b16 %v3539
  %v4059 = vunpack.c.l.b16 %v3540
  %v4060 = vunpack.c.l.b16 %v3541
  %v4061 = vunpack.c.l.b16 %v3542
  %v4062 = vunpack.c.l.b16 %v3543
  %v4063 = vunpack.c.l.b16 %v3544
  %v4064 = vunpack.c.l.b16 %v3545
  %v4065 = vunpack.c.l.b16 %v3546
  %v4066 = vunpack.c.l.b16 %v3547
  %v4067 = vunpack.c.l.b16 %v3548
  %v4068 = vunpack.c.l.b16 %v3549
  %v4069 = vunpack.c.l.b16 %v3550
  %v4070 = vunpack.c.l.b16 %v3551
  %v4071 = vunpack.c.l.b16 %v3552
  %v4072 = vunpack.c.l.b16 %v3553
  %v4073 = vunpack.c.l.b16 %v3554
  %v4074 = vunpack.c.l.b16 %v3555
  %v4075 = vunpack.c.l.b16 %v3556
  %v4076 = vunpack.c.l.b16 %v3557
  %v4077 = vunpack.c.l.b16 %v3558
  %v4078 = vunpack.c.l.b16 %v3559
  %v4079 = vunpack.c.l.b16 %v3560
  %v4080 = vunpack.c.l.b16 %v3561
  %v4081 = vunpack.c.l.b16 %v3562
  %v4082 = vunpack.c.l.b16 %v3563
  %v4083 = vunpack.c.l.b16 %v3564
  %v4084 = vunpack.c.l.b16 %v3565
  %v4085 = vunpack.c.l.b16 %v3566
  %v4086 = vunpack.c.l.b16 %v3567
  %v4087 = vunpack.c.l.b16 %v3568
  %v4088 = vunpack.c.l.b16 %v3569
  %v4089 = vunpack.c.l.b16 %v3570
  %v4090 = vunpack.c.l.b16 %v3571
  %v4091 = vunpack.c.l.b16 %v3572
  %v4092 = vunpack.c.l.b16 %v3573
  %v4093 = vunpack.c.l.b16 %v3574
  %v4094 = vunpack.c.l.b16 %v3575
  %v4095 = vunpack.c.l.b16 %v3576
  %v4096 = vunpack.c.l.b16 %v3577
  %v4097 = vunpack.c.l.b16 %v3578
  %v4098 = vunpack.c.l.b16 %v3579
  %v4099 = vunpack.c.l.b16 %v3580
  %v4100 = vunpack.c.l.b16 %v3581
  %v4101 = vunpack.c.l.b16 %v3582
  %v4102 = vunpack.c.l.b16 %v3583
  %v4103 = vunpack.c.l.b16 %v3584
  %v4104 = vunpack.c.l.b16 %v3585
  %v4105 = vunpack.c.l.b16 %v3586
  %v4106 = vunpack.c.l.b16 %v3587
  %v4107 = vunpack.c.l.b16 %v3588
  %v4108 = vunpack.c.l.b16 %v3589
  %v4109 = vunpack.c.l.b16 %v3590
  %v4110 = vunpack.c.l.b16 %v3591
  %v4111 = vunpack.c.l.b16 %v3592
  %v4112 = vunpack.c.l.b16 %v3593
  %v4113 = vunpack.c.l.b16 %v3594
  %v4114 = vunpack.c.l.b16 %v3595
  %v4115 = vunpack.c.l.b16 %v3596
  %v4116 = vunpack.c.l.b16 %v3597
  %v4117 = vunpack.c.l.b16 %v3598
  %v4118 = vunpack.c.l.b16 %v3599
  %v4119 = vunpack.c.l.b16 %v3600
  %v4120 = vunpack.c.l.b16 %v3601
  %v4121 = vunpack.c.l.b16 %v3602
  %v4122 = vunpack.c.l.b16 %v3603
  %v4123 = vunpack.c.l.b16 %v3604
  %v4124 = vunpack.c.l.b16 %v3605
  %v4125 = vunpack.c.l.b16 %v3606
  %v4126 = vunpack.c.l.b16 %v3607
  %v4127 = vunpack.c.l.b16 %v3608
  %v4128 = vunpack.c.l.b16 %v3609
  %v4129 = vunpack.c.l.b16 %v3610
  %v4130 = vunpack.c.l.b16 %v3611
  %v4131 = vunpack.c.l.b16 %v3612
  %v4132 = vunpack.c.l.b16 %v3613
  %v4133 = vunpack.c.l.b16 %v3614
  %v4134 = vunpack.c.l.b16 %v3615
  %v4135 = vunpack.c.l.b16 %v3616
  %v4136 = vunpack.c.l.b16 %v3617
  %v4137 = vunpack.c.l.b16 %v3618
  %v4138 = vunpack.c.l.b16 %v3619
  %v4139 = vunpack.c.l.b16 %v3620
  %v4140 = vunpack.c.l.b16 %v3621
  %v4141 = vunpack.c.l.b16 %v3622
  %v4142 = vunpack.c.l.b16 %v3623
  %v4143 = vunpack.c.l.b16 %v3624
  %v4144 = vunpack.c.l.b16 %v3625
  %v4145 = vunpack.c.l.b16 %v3626
  %v4146 = vunpack.c.l.b16 %v3627
  %v4147 = vunpack.c.l.b16 %v3628
  %v4148 = vunpack.c.l.b16 %v3629
  %v4149 = vunpack.c.l.b16 %v3630
  %v4150 = vunpack.c.l.b16 %v3631
  %v4151 = vunpack.c.l.b16 %v3632
  %v4152 = vunpack.c.l.b16 %v3633
  %v4153 = vunpack.c.l.b16 %v3634
  %v4154 = vunpack.c.l.b16 %v3635
  %v4155 = vunpack.c.l.b16 %v3636
  %v4156 = vunpack.c.l.b16 %v3637
  %v4157 = vunpack.c.l.b16 %v3638
  %v4158 = vunpack.c.l.b16 %v3639
  %v4159 = vunpack.c.l.b16 %v3640
  %v4160 = vunpack.c.l.b16 %v3641
  %v4161 = vunpack.c.l.b16 %v3642
  %v4162 = vunpack.c.l.b16 %v3643
  %v4163 = vunpack.c.l.b16 %v3644
  %v4164 = vunpack.c.l.b16 %v3645
  %v4165 = vunpack.c.l.b16 %v3646
  %v4166 = vunpack.c.l.b16 %v3647
  %v4167 = vunpack.c.l.b16 %v3648
  %v4168 = vunpack.c.l.b16 %v3649
  %v4169 = vunpack.c.l.b16 %v3650
  %v4170 = vunpack.c.l.b16 %v3651
  %v4171 = vunpack.c.l.b16 %v3652
  %v4172 = vunpack.c.l.b16 %v3653
  %v4173 = vunpack.c.l.b16 %v3654
  %v4174 = vunpack.c.l.b16 %v3655
  %v4175 = vunpack.c.l.b16 %v3656
  %v4176 = vunpack.c.l.b16 %v3657
  %v4177 = vunpack.c.l.b16 %v3658
  %v4178 = vunpack.c.l.b16 %v3659
  %v4179 = vunpack.c.l.b16 %v3660
  %v4180 = vunpack.c.l.b16 %v3661
  %v4181 = vunpack.c.l.b16 %v3662
  %v4182 = vunpack.c.l.b16 %v3663
  %v4183 = vunpack.c.l.b16 %v3664
  %v4184 = vunpack.c.l.b16 %v3665
  %v4185 = vunpack.c.l.b16 %v3666
  %v4186 = vunpack.c.l.b16 %v3667
  %v4187 = vunpack.c.l.b16 %v3668
  %v4188 = vunpack.c.l.b16 %v3669
  %v4189 = vunpack.c.l.b16 %v3670
  %v4190 = vunpack.c.l.b16 %v3671
  %v4191 = vunpack.c.l.b16 %v3672
  %v4192 = vunpack.c.l.b16 %v3673
  %v4193 = vunpack.c.l.b16 %v3674
  %v4194 = vunpack.c.l.b16 %v3675
  %v4195 = vunpack.c.l.b16 %v3676
  %v4196 = vunpack.c.l.b16 %v3677
  %v4197 = vunpack.c.l.b16 %v3678
  %v4198 = vunpack.c.l.b16 %v3679
  %v4199 = vunpack.c.l.b16 %v3680
  %v4200 = vunpack.c.l.b16 %v3681
  %v4201 = vunpack.c.l.b16 %v3682
  %v4202 = vunpack.c.l.b16 %v3683
  %v4203 = vunpack.c.l.b16 %v3684
  %v4204 = vunpack.c.l.b16 %v3685
  %v4205 = vunpack.c.l.b16 %v3686
  %v4206 = vunpack.c.l.b16 %v3687
  %v4207 = vunpack.c.l.b16 %v3688
  %v4208 = vunpack.c.l.b16 %v3689
  %v4209 = vunpack.c.l.b16 %v3690
  %v4210 = vunpack.c.l.b16 %v3691
  %v4211 = vunpack.c.l.b16 %v3692
  %v4212 = vunpack.c.l.b16 %v3693
  %v4213 = vunpack.c.l.b16 %v3694
  %v4214 = vunpack.c.l.b16 %v3695
  %v4215 = vunpack.c.l.b16 %v3696
  %v4216 = vunpack.c.l.b16 %v3697
  %v4217 = vunpack.c.l.b16 %v3698
  %v4218 = vunpack.c.l.b16 %v3699
  %v4219 = vunpack.c.l.b16 %v3700
  %v4220 = vunpack.c.l.b16 %v3701
  %v4221 = vunpack.c.l.b16 %v3702
  %v4222 = vunpack.c.l.b16 %v3703
  %v4223 = vunpack.c.l.b16 %v3704
  %v4224 = vunpack.c.l.b16 %v3705
  %v4225 = vunpack.c.l.b16 %v3706
  %v4226 = vunpack.c.l.b16 %v3707
  %v4227 = vunpack.c.l.b16 %v3708
  %v4228 = vunpack.c.l.b16 %v3709
  %v4229 = vunpack.c.l.b16 %v3710
  %v4230 = vunpack.c.l.b16 %v3711
  %v4231 = vunpack.c.l.b16 %v3712
  %v4232 = vunpack.c.l.b16 %v3713
  %v4233 = vunpack.c.l.b16 %v3714
  %v4234 = vunpack.c.l.b16 %v3715
  %v4235 = vunpack.c.l.b16 %v3716
  %v4236 = vunpack.c.l.b16 %v3717
  %v4237 = vunpack.c.l.b16 %v3718
  %v4238 = vunpack.c.l.b16 %v3719
  %v4239 = vunpack.c.l.b16 %v3720
  %v4240 = vunpack.c.l.b16 %v3721
  %v4241 = vunpack.c.l.b16 %v3722
  %v4242 = vunpack.c.l.b16 %v3723
  %v4243 = vunpack.c.l.b16 %v3724
  %v4244 = vunpack.c.l.b16 %v3725
  %v4245 = vunpack.c.l.b16 %v3726
  %v4246 = vpack.c.b16 %v3991, %v3990
  %v4247 = vpack.c.b16 %v3993, %v3992
  %v4248 = vpack.c.b16 %v3995, %v3994
  %v4249 = vpack.c.b16 %v3997, %v3996
  %v4250 = vpack.c.b16 %v3999, %v3998
  %v4251 = vpack.c.b16 %v4001, %v4000
  %v4252 = vpack.c.b16 %v4003, %v4002
  %v4253 = vpack.c.b16 %v4005, %v4004
  %v4254 = vpack.c.b16 %v4007, %v4006
  %v4255 = vpack.c.b16 %v4009, %v4008
  %v4256 = vpack.c.b16 %v4011, %v4010
  %v4257 = vpack.c.b16 %v4013, %v4012
  %v4258 = vpack.c.b16 %v4015, %v4014
  %v4259 = vpack.c.b16 %v4017, %v4016
  %v4260 = vpack.c.b16 %v4019, %v4018
  %v4261 = vpack.c.b16 %v4021, %v4020
  %v4262 = vpack.c.b16 %v4023, %v4022
  %v4263 = vpack.c.b16 %v4025, %v4024
  %v4264 = vpack.c.b16 %v4027, %v4026
  %v4265 = vpack.c.b16 %v4029, %v4028
  %v4266 = vpack.c.b16 %v4031, %v4030
  %v4267 = vpack.c.b16 %v4033, %v4032
  %v4268 = vpack.c.b16 %v4035, %v4034
  %v4269 = vpack.c.b16 %v4037, %v4036
  %v4270 = vpack.c.b16 %v4039, %v4038
  %v4271 = vpack.c.b16 %v4041, %v4040
  %v4272 = vpack.c.b16 %v4043, %v4042
  %v4273 = vpack.c.b16 %v4045, %v4044
  %v4274 = vpack.c.b16 %v4047, %v4046
  %v4275 = vpack.c.b16 %v4049, %v4048
  %v4276 = vpack.c.b16 %v4051, %v4050
  %v4277 = vpack.c.b16 %v4053, %v4052
  %v4278 = vpack.c.b16 %v4055, %v4054
  %v4279 = vpack.c.b16 %v4057, %v4056
  %v4280 = vpack.c.b16 %v4059, %v4058
  %v4281 = vpack.c.b16 %v4061, %v4060
  %v4282 = vpack.c.b16 %v4063, %v4062
  %v4283 = vpack.c.b16 %v4065, %v4064
  %v4284 = vpack.c.b16 %v4067, %v4066
  %v4285 = vpack.c.b16 %v4069, %v4068
  %v4286 = vpack.c.b16 %v4071, %v4070
  %v4287 = vpack.c.b16 %v4073, %v4072
  %v4288 = vpack.c.b16 %v4075, %v4074
  %v4289 = vpack.c.b16 %v4077, %v4076
  %v4290 = vpack.c.b16 %v4079, %v4078
  %v4291 = vpack.c.b16 %v4081, %v4080
  %v4292 = vpack.c.b16 %v4083, %v4082
  %v4293 = vpack.c.b16 %v4085, %v4084
  %v4294 = vpack.c.b16 %v4087, %v4086
  %v4295 = vpack.c.b16 %v4089, %v4088
  %v4296 = vpack.c.b16 %v4091, %v4090
  %v4297 = vpack.c.b16 %v4093, %v4092
  %v4298 = vpack.c.b16 %v4095, %v4094
  %v4299 = vpack.c.b16 %v4097, %v4096
  %v4300 = vpack.c.b16 %v4099, %v4098
  %v4301 = vpack.c.b16 %v4101, %v4100
  %v4302 = vpack.c.b16 %v4103, %v4102
  %v4303 = vpack.c.b16 %v4105, %v4104
  %v4304 = vpack.c.b16 %v4107, %v4106
  %v4305 = vpack.c.b16 %v4109, %v4108
  %v4306 = vpack.c.b16 %v4111, %v4110
  %v4307 = vpack.c.b16 %v4113, %v4112
  %v4308 = vpack.c.b16 %v4115, %v4114
  %v4309 = vpack.c.b16 %v4117, %v4116
  %v4310 = vpack.c.b16 %v4119, %v4118
  %v4311 = vpack.c.b16 %v4121, %v4120
  %v4312 = vpack.c.b16 %v4123, %v4122
  %v4313 = vpack.c.b16 %v4125, %v4124
  %v4314 = vpack.c.b16 %v4127, %v4126
  %v4315 = vpack.c.b16 %v4129, %v4128
  %v4316 = vpack.c.b16 %v4131, %v4130
  %v4317 = vpack.c.b16 %v4133, %v4132
  %v4318 = vpack.c.b16 %v4135, %v4134
  %v4319 = vpack.c.b16 %v4137, %v4136
  %v4320 = vpack.c.b16 %v4139, %v4138
  %v4321 = vpack.c.b16 %v4141, %v4140
  %v4322 = vpack.c.b16 %v4143, %v4142
  %v4323 = vpack.c.b16 %v4145, %v4144
  %v4324 = vpack.c.b16 %v4147, %v4146
  %v4325 = vpack.c.b16 %v4149, %v4148
  %v4326 = vpack.c.b16 %v4151, %v4150
  %v4327 = vpack.c.b16 %v4153, %v4152
  %v4328 = vpack.c.b16 %v4155, %v4154
  %v4329 = vpack.c.b16 %v4157, %v4156
  %v4330 = vpack.c.b16 %v4159, %v4158
  %v4331 = vpack.c.b16 %v4161, %v4160
  %v4332 = vpack.c.b16 %v4163, %v4162
  %v4333 = vpack.c.b16 %v4165, %v4164
  %v4334 = vpack.c.b16 %v4167, %v4166
  %v4335 = vpack.c.b16 %v4169, %v4168
  %v4336 = vpack.c.b16 %v4171, %v4170
  %v4337 = vpack.c.b16 %v4173, %v4172
  %v4338 = vpack.c.b16 %v4175, %v4174
  %v4339 = vpack.c.b16 %v4177, %v4176
  %v4340 = vpack.c.b16 %v4179, %v4178
  %v4341 = vpack.c.b16 %v4181, %v4180
  %v4342 = vpack.c.b16 %v4183, %v4182
  %v4343 = vpack.c.b16 %v4185, %v4184
  %v4344 = vpack.c.b16 %v4187, %v4186
  %v4345 = vpack.c.b16 %v4189, %v4188
  %v4346 = vpack.c.b16 %v4191, %v4190
  %v4347 = vpack.c.b16 %v4193, %v4192
  %v4348 = vpack.c.b16 %v4195, %v4194
  %v4349 = vpack.c.b16 %v4197, %v4196
  %v4350 = vpack.c.b16 %v4199, %v4198
  %v4351 = vpack.c.b16 %v4201, %v4200
  %v4352 = vpack.c.b16 %v4203, %v4202
  %v4353 = vpack.c.b16 %v4205, %v4204
  %v4354 = vpack.c.b16 %v4207, %v4206
  %v4355 = vpack.c.b16 %v4209, %v4208
  %v4356 = vpack.c.b16 %v4211, %v4210
  %v4357 = vpack.c.b16 %v4213, %v4212
  %v4358 = vpack.c.b16 %v4215, %v4214
  %v4359 = vpack.c.b16 %v4217, %v4216
  %v4360 = vpack.c.b16 %v4219, %v4218
  %v4361 = vpack.c.b16 %v4221, %v4220
  %v4362 = vpack.c.b16 %v4223, %v4222
  %v4363 = vpack.c.b16 %v4225, %v4224
  %v4364 = vpack.c.b16 %v4227, %v4226
  %v4365 = vpack.c.b16 %v4229, %v4228
  %v4366 = vpack.c.b16 %v4231, %v4230
  %v4367 = vpack.c.b16 %v4233, %v4232
  %v4368 = vpack.c.b16 %v4235, %v4234
  %v4369 = vpack.c.b16 %v4237, %v4236
  %v4370 = vpack.c.b16 %v4239, %v4238
  %v4371 = vpack.c.b16 %v4241, %v4240
  %v4372 = vpack.c.b16 %v4243, %v4242
  %v4373 = vpack.c.b16 %v4245, %v4244
  %4502 = vmatprep.subr.bf16.mxu0 0
  %4503 = vmatpush1.bf16.msra.mxu0 %v4253
  %4504 = vmatprep.subr.bf16.mxu0 0
  %4505 = vmatpush1.bf16.msra.mxu0 %v4252
  %4506 = vmatprep.subr.bf16.mxu0 0
  %4507 = vmatpush1.bf16.msra.mxu0 %v4251
  %4508 = vmatprep.subr.bf16.mxu0 0
  %4509 = vmatpush1.bf16.msra.mxu0 %v4250
  %4510 = vmatprep.subr.bf16.mxu0 0
  %4511 = vmatpush1.bf16.msra.mxu0 %v4249
  %4512 = vmatprep.subr.bf16.mxu0 0
  %4513 = vmatpush1.bf16.msra.mxu0 %v4248
  %4514 = vmatprep.subr.bf16.mxu0 0
  %4515 = vmatpush1.bf16.msra.mxu0 %v4247
  %4516 = vmatprep.subr.bf16.mxu0 0
  %4517 = vmatpush1.bf16.msra.mxu0 %v4246
  %4518 = vmatprep.subr.bf16.mxu0 0
  %4519 = vmatpush2.bf16.msra.mxu0 %v4261
  %4520 = vmatprep.subr.bf16.mxu0 0
  %4521 = vmatpush2.bf16.msra.mxu0 %v4260
  %4522 = vmatprep.subr.bf16.mxu0 0
  %4523 = vmatpush2.bf16.msra.mxu0 %v4259
  %4524 = vmatprep.subr.bf16.mxu0 0
  %4525 = vmatpush2.bf16.msra.mxu0 %v4258
  %4526 = vmatprep.subr.bf16.mxu0 0
  %4527 = vmatpush2.bf16.msra.mxu0 %v4257
  %4528 = vmatprep.subr.bf16.mxu0 0
  %4529 = vmatpush2.bf16.msra.mxu0 %v4256
  %4530 = vmatprep.subr.bf16.mxu0 0
  %4531 = vmatpush2.bf16.msra.mxu0 %v4255
  %4532 = vmatprep.subr.bf16.mxu0 0
  %4533 = vmatpush2.bf16.msra.mxu0 %v4254
  %4534 = vmatprep.mubr.bf16.mxu0 %v3408
  %4535 = vmatmul.mubr.bf16.gmra.mxu0 %v3407
  %v4536 = vpop.f32.mrf.mxu0
  %v4537 = vadd.f32 %v3732, %v4536
  %v4538 = vpop.f32.mrf.mxu0
  %v4539 = vpop.f32.mrf.mxu0
  %v4540 = vadd.f32 %v3732, %v4539
  %v4541 = vpop.f32.mrf.mxu0
  %4542 = vmatprep.mubr.bf16.mxu0 %v3424
  %4543 = vmatmul.mubr.bf16.gmra.mxu0 %v3423
  %v4544 = vpop.f32.mrf.mxu0
  %v4545 = vadd.f32 %v3732, %v4544
  %v4546 = vpop.f32.mrf.mxu0
  %v4547 = vpop.f32.mrf.mxu0
  %v4548 = vadd.f32 %v3732, %v4547
  %v4549 = vpop.f32.mrf.mxu0
  %4550 = vmatprep.mubr.bf16.mxu0 %v3440
  %4551 = vmatmul.mubr.bf16.gmra.mxu0 %v3439
  %v4552 = vpop.f32.mrf.mxu0
  %v4553 = vadd.f32 %v3732, %v4552
  %v4554 = vpop.f32.mrf.mxu0
  %v4555 = vpop.f32.mrf.mxu0
  %v4556 = vadd.f32 %v3732, %v4555
  %v4557 = vpop.f32.mrf.mxu0
  %4558 = vmatprep.mubr.bf16.mxu0 %v3456
  %4559 = vmatmul.mubr.bf16.gmra.mxu0 %v3455
  %v4560 = vpop.f32.mrf.mxu0
  %v4561 = vadd.f32 %v3732, %v4560
  %v4562 = vpop.f32.mrf.mxu0
  %v4563 = vpop.f32.mrf.mxu0
  %v4564 = vadd.f32 %v3732, %v4563
  %v4565 = vpop.f32.mrf.mxu0
  %4566 = vdwg.mxu0
  %4567 = vmatprep.subr.bf16.mxu0 0
  %4568 = vmatpush1.bf16.msra.mxu0 %v4269
  %4569 = vmatprep.subr.bf16.mxu0 0
  %4570 = vmatpush1.bf16.msra.mxu0 %v4268
  %4571 = vmatprep.subr.bf16.mxu0 0
  %4572 = vmatpush1.bf16.msra.mxu0 %v4267
  %4573 = vmatprep.subr.bf16.mxu0 0
  %4574 = vmatpush1.bf16.msra.mxu0 %v4266
  %4575 = vmatprep.subr.bf16.mxu0 0
  %4576 = vmatpush1.bf16.msra.mxu0 %v4265
  %4577 = vmatprep.subr.bf16.mxu0 0
  %4578 = vmatpush1.bf16.msra.mxu0 %v4264
  %4579 = vmatprep.subr.bf16.mxu0 0
  %4580 = vmatpush1.bf16.msra.mxu0 %v4263
  %4581 = vmatprep.subr.bf16.mxu0 0
  %4582 = vmatpush1.bf16.msra.mxu0 %v4262
  %4583 = vmatprep.subr.bf16.mxu0 0
  %4584 = vmatpush2.bf16.msra.mxu0 %v4277
  %4585 = vmatprep.subr.bf16.mxu0 0
  %4586 = vmatpush2.bf16.msra.mxu0 %v4276
  %4587 = vmatprep.subr.bf16.mxu0 0
  %4588 = vmatpush2.bf16.msra.mxu0 %v4275
  %4589 = vmatprep.subr.bf16.mxu0 0
  %4590 = vmatpush2.bf16.msra.mxu0 %v4274
  %4591 = vmatprep.subr.bf16.mxu0 0
  %4592 = vmatpush2.bf16.msra.mxu0 %v4273
  %4593 = vmatprep.subr.bf16.mxu0 0
  %4594 = vmatpush2.bf16.msra.mxu0 %v4272
  %4595 = vmatprep.subr.bf16.mxu0 0
  %4596 = vmatpush2.bf16.msra.mxu0 %v4271
  %4597 = vmatprep.subr.bf16.mxu0 0
  %4598 = vmatpush2.bf16.msra.mxu0 %v4270
  %4599 = vmatprep.mubr.bf16.mxu0 %v3410
  %4600 = vmatmul.mubr.bf16.gmra.mxu0 %v3409
  %v4601 = vpop.f32.mrf.mxu0
  %v4602 = vadd.f32 %v4537, %v4601
  %v4603 = vpop.f32.mrf.mxu0
  %v4604 = vpop.f32.mrf.mxu0
  %v4605 = vadd.f32 %v4540, %v4604
  %v4606 = vpop.f32.mrf.mxu0
  %4607 = vmatprep.mubr.bf16.mxu0 %v3426
  %4608 = vmatmul.mubr.bf16.gmra.mxu0 %v3425
  %v4609 = vpop.f32.mrf.mxu0
  %v4610 = vadd.f32 %v4545, %v4609
  %v4611 = vpop.f32.mrf.mxu0
  %v4612 = vpop.f32.mrf.mxu0
  %v4613 = vadd.f32 %v4548, %v4612
  %v4614 = vpop.f32.mrf.mxu0
  %4615 = vmatprep.mubr.bf16.mxu0 %v3442
  %4616 = vmatmul.mubr.bf16.gmra.mxu0 %v3441
  %v4617 = vpop.f32.mrf.mxu0
  %v4618 = vadd.f32 %v4553, %v4617
  %v4619 = vpop.f32.mrf.mxu0
  %v4620 = vpop.f32.mrf.mxu0
  %v4621 = vadd.f32 %v4556, %v4620
  %v4622 = vpop.f32.mrf.mxu0
  %4623 = vmatprep.mubr.bf16.mxu0 %v3458
  %4624 = vmatmul.mubr.bf16.gmra.mxu0 %v3457
  %v4625 = vpop.f32.mrf.mxu0
  %v4626 = vadd.f32 %v4561, %v4625
  %v4627 = vpop.f32.mrf.mxu0
  %v4628 = vpop.f32.mrf.mxu0
  %v4629 = vadd.f32 %v4564, %v4628
  %v4630 = vpop.f32.mrf.mxu0
  %4631 = vdwg.mxu0
  %4632 = vmatprep.subr.bf16.mxu0 0
  %4633 = vmatpush1.bf16.msra.mxu0 %v4285
  %4634 = vmatprep.subr.bf16.mxu0 0
  %4635 = vmatpush1.bf16.msra.mxu0 %v4284
  %4636 = vmatprep.subr.bf16.mxu0 0
  %4637 = vmatpush1.bf16.msra.mxu0 %v4283
  %4638 = vmatprep.subr.bf16.mxu0 0
  %4639 = vmatpush1.bf16.msra.mxu0 %v4282
  %4640 = vmatprep.subr.bf16.mxu0 0
  %4641 = vmatpush1.bf16.msra.mxu0 %v4281
  %4642 = vmatprep.subr.bf16.mxu0 0
  %4643 = vmatpush1.bf16.msra.mxu0 %v4280
  %4644 = vmatprep.subr.bf16.mxu0 0
  %4645 = vmatpush1.bf16.msra.mxu0 %v4279
  %4646 = vmatprep.subr.bf16.mxu0 0
  %4647 = vmatpush1.bf16.msra.mxu0 %v4278
  %4648 = vmatprep.subr.bf16.mxu0 0
  %4649 = vmatpush2.bf16.msra.mxu0 %v4293
  %4650 = vmatprep.subr.bf16.mxu0 0
  %4651 = vmatpush2.bf16.msra.mxu0 %v4292
  %4652 = vmatprep.subr.bf16.mxu0 0
  %4653 = vmatpush2.bf16.msra.mxu0 %v4291
  %4654 = vmatprep.subr.bf16.mxu0 0
  %4655 = vmatpush2.bf16.msra.mxu0 %v4290
  %4656 = vmatprep.subr.bf16.mxu0 0
  %4657 = vmatpush2.bf16.msra.mxu0 %v4289
  %4658 = vmatprep.subr.bf16.mxu0 0
  %4659 = vmatpush2.bf16.msra.mxu0 %v4288
  %4660 = vmatprep.subr.bf16.mxu0 0
  %4661 = vmatpush2.bf16.msra.mxu0 %v4287
  %4662 = vmatprep.subr.bf16.mxu0 0
  %4663 = vmatpush2.bf16.msra.mxu0 %v4286
  %4664 = vmatprep.mubr.bf16.mxu0 %v3412
  %4665 = vmatmul.mubr.bf16.gmra.mxu0 %v3411
  %v4666 = vpop.f32.mrf.mxu0
  %v4667 = vadd.f32 %v4602, %v4666
  %v4668 = vpop.f32.mrf.mxu0
  %v4669 = vpop.f32.mrf.mxu0
  %v4670 = vadd.f32 %v4605, %v4669
  %v4671 = vpop.f32.mrf.mxu0
  %4672 = vmatprep.mubr.bf16.mxu0 %v3428
  %4673 = vmatmul.mubr.bf16.gmra.mxu0 %v3427
  %v4674 = vpop.f32.mrf.mxu0
  %v4675 = vadd.f32 %v4610, %v4674
  %v4676 = vpop.f32.mrf.mxu0
  %v4677 = vpop.f32.mrf.mxu0
  %v4678 = vadd.f32 %v4613, %v4677
  %v4679 = vpop.f32.mrf.mxu0
  %4680 = vmatprep.mubr.bf16.mxu0 %v3444
  %4681 = vmatmul.mubr.bf16.gmra.mxu0 %v3443
  %v4682 = vpop.f32.mrf.mxu0
  %v4683 = vadd.f32 %v4618, %v4682
  %v4684 = vpop.f32.mrf.mxu0
  %v4685 = vpop.f32.mrf.mxu0
  %v4686 = vadd.f32 %v4621, %v4685
  %v4687 = vpop.f32.mrf.mxu0
  %4688 = vmatprep.mubr.bf16.mxu0 %v3460
  %4689 = vmatmul.mubr.bf16.gmra.mxu0 %v3459
  %v4690 = vpop.f32.mrf.mxu0
  %v4691 = vadd.f32 %v4626, %v4690
  %v4692 = vpop.f32.mrf.mxu0
  %v4693 = vpop.f32.mrf.mxu0
  %v4694 = vadd.f32 %v4629, %v4693
  %v4695 = vpop.f32.mrf.mxu0
  %4696 = vdwg.mxu0
  %4697 = vmatprep.subr.bf16.mxu0 0
  %4698 = vmatpush1.bf16.msra.mxu0 %v4301
  %4699 = vmatprep.subr.bf16.mxu0 0
  %4700 = vmatpush1.bf16.msra.mxu0 %v4300
  %4701 = vmatprep.subr.bf16.mxu0 0
  %4702 = vmatpush1.bf16.msra.mxu0 %v4299
  %4703 = vmatprep.subr.bf16.mxu0 0
  %4704 = vmatpush1.bf16.msra.mxu0 %v4298
  %4705 = vmatprep.subr.bf16.mxu0 0
  %4706 = vmatpush1.bf16.msra.mxu0 %v4297
  %4707 = vmatprep.subr.bf16.mxu0 0
  %4708 = vmatpush1.bf16.msra.mxu0 %v4296
  %4709 = vmatprep.subr.bf16.mxu0 0
  %4710 = vmatpush1.bf16.msra.mxu0 %v4295
  %4711 = vmatprep.subr.bf16.mxu0 0
  %4712 = vmatpush1.bf16.msra.mxu0 %v4294
  %4713 = vmatprep.subr.bf16.mxu0 0
  %4714 = vmatpush2.bf16.msra.mxu0 %v4309
  %4715 = vmatprep.subr.bf16.mxu0 0
  %4716 = vmatpush2.bf16.msra.mxu0 %v4308
  %4717 = vmatprep.subr.bf16.mxu0 0
  %4718 = vmatpush2.bf16.msra.mxu0 %v4307
  %4719 = vmatprep.subr.bf16.mxu0 0
  %4720 = vmatpush2.bf16.msra.mxu0 %v4306
  %4721 = vmatprep.subr.bf16.mxu0 0
  %4722 = vmatpush2.bf16.msra.mxu0 %v4305
  %4723 = vmatprep.subr.bf16.mxu0 0
  %4724 = vmatpush2.bf16.msra.mxu0 %v4304
  %4725 = vmatprep.subr.bf16.mxu0 0
  %4726 = vmatpush2.bf16.msra.mxu0 %v4303
  %4727 = vmatprep.subr.bf16.mxu0 0
  %4728 = vmatpush2.bf16.msra.mxu0 %v4302
  %4729 = vmatprep.mubr.bf16.mxu0 %v3414
  %4730 = vmatmul.mubr.bf16.gmra.mxu0 %v3413
  %v4731 = vpop.f32.mrf.mxu0
  %v4732 = vadd.f32 %v4667, %v4731
  %v4733 = vpop.f32.mrf.mxu0
  %v4734 = vpop.f32.mrf.mxu0
  %v4735 = vadd.f32 %v4670, %v4734
  %v4736 = vpop.f32.mrf.mxu0
  %4737 = vmatprep.mubr.bf16.mxu0 %v3430
  %4738 = vmatmul.mubr.bf16.gmra.mxu0 %v3429
  %v4739 = vpop.f32.mrf.mxu0
  %v4740 = vadd.f32 %v4675, %v4739
  %v4741 = vpop.f32.mrf.mxu0
  %v4742 = vpop.f32.mrf.mxu0
  %v4743 = vadd.f32 %v4678, %v4742
  %v4744 = vpop.f32.mrf.mxu0
  %4745 = vmatprep.mubr.bf16.mxu0 %v3446
  %4746 = vmatmul.mubr.bf16.gmra.mxu0 %v3445
  %v4747 = vpop.f32.mrf.mxu0
  %v4748 = vadd.f32 %v4683, %v4747
  %v4749 = vpop.f32.mrf.mxu0
  %v4750 = vpop.f32.mrf.mxu0
  %v4751 = vadd.f32 %v4686, %v4750
  %v4752 = vpop.f32.mrf.mxu0
  %4753 = vmatprep.mubr.bf16.mxu0 %v3462
  %4754 = vmatmul.mubr.bf16.gmra.mxu0 %v3461
  %v4755 = vpop.f32.mrf.mxu0
  %v4756 = vadd.f32 %v4691, %v4755
  %v4757 = vpop.f32.mrf.mxu0
  %v4758 = vpop.f32.mrf.mxu0
  %v4759 = vadd.f32 %v4694, %v4758
  %v4760 = vpop.f32.mrf.mxu0
  %4761 = vdwg.mxu0
  %4762 = vmatprep.subr.bf16.mxu0 0
  %4763 = vmatpush1.bf16.msra.mxu0 %v4317
  %4764 = vmatprep.subr.bf16.mxu0 0
  %4765 = vmatpush1.bf16.msra.mxu0 %v4316
  %4766 = vmatprep.subr.bf16.mxu0 0
  %4767 = vmatpush1.bf16.msra.mxu0 %v4315
  %4768 = vmatprep.subr.bf16.mxu0 0
  %4769 = vmatpush1.bf16.msra.mxu0 %v4314
  %4770 = vmatprep.subr.bf16.mxu0 0
  %4771 = vmatpush1.bf16.msra.mxu0 %v4313
  %4772 = vmatprep.subr.bf16.mxu0 0
  %4773 = vmatpush1.bf16.msra.mxu0 %v4312
  %4774 = vmatprep.subr.bf16.mxu0 0
  %4775 = vmatpush1.bf16.msra.mxu0 %v4311
  %4776 = vmatprep.subr.bf16.mxu0 0
  %4777 = vmatpush1.bf16.msra.mxu0 %v4310
  %4778 = vmatprep.subr.bf16.mxu0 0
  %4779 = vmatpush2.bf16.msra.mxu0 %v4325
  %4780 = vmatprep.subr.bf16.mxu0 0
  %4781 = vmatpush2.bf16.msra.mxu0 %v4324
  %4782 = vmatprep.subr.bf16.mxu0 0
  %4783 = vmatpush2.bf16.msra.mxu0 %v4323
  %4784 = vmatprep.subr.bf16.mxu0 0
  %4785 = vmatpush2.bf16.msra.mxu0 %v4322
  %4786 = vmatprep.subr.bf16.mxu0 0
  %4787 = vmatpush2.bf16.msra.mxu0 %v4321
  %4788 = vmatprep.subr.bf16.mxu0 0
  %4789 = vmatpush2.bf16.msra.mxu0 %v4320
  %4790 = vmatprep.subr.bf16.mxu0 0
  %4791 = vmatpush2.bf16.msra.mxu0 %v4319
  %4792 = vmatprep.subr.bf16.mxu0 0
  %4793 = vmatpush2.bf16.msra.mxu0 %v4318
  %4794 = vmatprep.mubr.bf16.mxu0 %v3416
  %4795 = vmatmul.mubr.bf16.gmra.mxu0 %v3415
  %v4796 = vpop.f32.mrf.mxu0
  %v4797 = vadd.f32 %v4732, %v4796
  %v4798 = vpop.f32.mrf.mxu0
  %v4799 = vpop.f32.mrf.mxu0
  %v4800 = vadd.f32 %v4735, %v4799
  %v4801 = vpop.f32.mrf.mxu0
  %4802 = vmatprep.mubr.bf16.mxu0 %v3432
  %4803 = vmatmul.mubr.bf16.gmra.mxu0 %v3431
  %v4804 = vpop.f32.mrf.mxu0
  %v4805 = vadd.f32 %v4740, %v4804
  %v4806 = vpop.f32.mrf.mxu0
  %v4807 = vpop.f32.mrf.mxu0
  %v4808 = vadd.f32 %v4743, %v4807
  %v4809 = vpop.f32.mrf.mxu0
  %4810 = vmatprep.mubr.bf16.mxu0 %v3448
  %4811 = vmatmul.mubr.bf16.gmra.mxu0 %v3447
  %v4812 = vpop.f32.mrf.mxu0
  %v4813 = vadd.f32 %v4748, %v4812
  %v4814 = vpop.f32.mrf.mxu0
  %v4815 = vpop.f32.mrf.mxu0
  %v4816 = vadd.f32 %v4751, %v4815
  %v4817 = vpop.f32.mrf.mxu0
  %4818 = vmatprep.mubr.bf16.mxu0 %v3464
  %4819 = vmatmul.mubr.bf16.gmra.mxu0 %v3463
  %v4820 = vpop.f32.mrf.mxu0
  %v4821 = vadd.f32 %v4756, %v4820
  %v4822 = vpop.f32.mrf.mxu0
  %v4823 = vpop.f32.mrf.mxu0
  %v4824 = vadd.f32 %v4759, %v4823
  %v4825 = vpop.f32.mrf.mxu0
  %4826 = vdwg.mxu0
  %4827 = vmatprep.subr.bf16.mxu0 0
  %4828 = vmatpush1.bf16.msra.mxu0 %v4333
  %4829 = vmatprep.subr.bf16.mxu0 0
  %4830 = vmatpush1.bf16.msra.mxu0 %v4332
  %4831 = vmatprep.subr.bf16.mxu0 0
  %4832 = vmatpush1.bf16.msra.mxu0 %v4331
  %4833 = vmatprep.subr.bf16.mxu0 0
  %4834 = vmatpush1.bf16.msra.mxu0 %v4330
  %4835 = vmatprep.subr.bf16.mxu0 0
  %4836 = vmatpush1.bf16.msra.mxu0 %v4329
  %4837 = vmatprep.subr.bf16.mxu0 0
  %4838 = vmatpush1.bf16.msra.mxu0 %v4328
  %4839 = vmatprep.subr.bf16.mxu0 0
  %4840 = vmatpush1.bf16.msra.mxu0 %v4327
  %4841 = vmatprep.subr.bf16.mxu0 0
  %4842 = vmatpush1.bf16.msra.mxu0 %v4326
  %4843 = vmatprep.subr.bf16.mxu0 0
  %4844 = vmatpush2.bf16.msra.mxu0 %v4341
  %4845 = vmatprep.subr.bf16.mxu0 0
  %4846 = vmatpush2.bf16.msra.mxu0 %v4340
  %4847 = vmatprep.subr.bf16.mxu0 0
  %4848 = vmatpush2.bf16.msra.mxu0 %v4339
  %4849 = vmatprep.subr.bf16.mxu0 0
  %4850 = vmatpush2.bf16.msra.mxu0 %v4338
  %4851 = vmatprep.subr.bf16.mxu0 0
  %4852 = vmatpush2.bf16.msra.mxu0 %v4337
  %4853 = vmatprep.subr.bf16.mxu0 0
  %4854 = vmatpush2.bf16.msra.mxu0 %v4336
  %4855 = vmatprep.subr.bf16.mxu0 0
  %4856 = vmatpush2.bf16.msra.mxu0 %v4335
  %4857 = vmatprep.subr.bf16.mxu0 0
  %4858 = vmatpush2.bf16.msra.mxu0 %v4334
  %4859 = vmatprep.mubr.bf16.mxu0 %v3418
  %4860 = vmatmul.mubr.bf16.gmra.mxu0 %v3417
  %v4861 = vpop.f32.mrf.mxu0
  %v4862 = vadd.f32 %v4797, %v4861
  %v4863 = vpop.f32.mrf.mxu0
  %v4864 = vpop.f32.mrf.mxu0
  %v4865 = vadd.f32 %v4800, %v4864
  %v4866 = vpop.f32.mrf.mxu0
  %4867 = vmatprep.mubr.bf16.mxu0 %v3434
  %4868 = vmatmul.mubr.bf16.gmra.mxu0 %v3433
  %v4869 = vpop.f32.mrf.mxu0
  %v4870 = vadd.f32 %v4805, %v4869
  %v4871 = vpop.f32.mrf.mxu0
  %v4872 = vpop.f32.mrf.mxu0
  %v4873 = vadd.f32 %v4808, %v4872
  %v4874 = vpop.f32.mrf.mxu0
  %4875 = vmatprep.mubr.bf16.mxu0 %v3450
  %4876 = vmatmul.mubr.bf16.gmra.mxu0 %v3449
  %v4877 = vpop.f32.mrf.mxu0
  %v4878 = vadd.f32 %v4813, %v4877
  %v4879 = vpop.f32.mrf.mxu0
  %v4880 = vpop.f32.mrf.mxu0
  %v4881 = vadd.f32 %v4816, %v4880
  %v4882 = vpop.f32.mrf.mxu0
  %4883 = vmatprep.mubr.bf16.mxu0 %v3466
  %4884 = vmatmul.mubr.bf16.gmra.mxu0 %v3465
  %v4885 = vpop.f32.mrf.mxu0
  %v4886 = vadd.f32 %v4821, %v4885
  %v4887 = vpop.f32.mrf.mxu0
  %v4888 = vpop.f32.mrf.mxu0
  %v4889 = vadd.f32 %v4824, %v4888
  %v4890 = vpop.f32.mrf.mxu0
  %4891 = vdwg.mxu0
  %4892 = vmatprep.subr.bf16.mxu0 0
  %4893 = vmatpush1.bf16.msra.mxu0 %v4349
  %4894 = vmatprep.subr.bf16.mxu0 0
  %4895 = vmatpush1.bf16.msra.mxu0 %v4348
  %4896 = vmatprep.subr.bf16.mxu0 0
  %4897 = vmatpush1.bf16.msra.mxu0 %v4347
  %4898 = vmatprep.subr.bf16.mxu0 0
  %4899 = vmatpush1.bf16.msra.mxu0 %v4346
  %4900 = vmatprep.subr.bf16.mxu0 0
  %4901 = vmatpush1.bf16.msra.mxu0 %v4345
  %4902 = vmatprep.subr.bf16.mxu0 0
  %4903 = vmatpush1.bf16.msra.mxu0 %v4344
  %4904 = vmatprep.subr.bf16.mxu0 0
  %4905 = vmatpush1.bf16.msra.mxu0 %v4343
  %4906 = vmatprep.subr.bf16.mxu0 0
  %4907 = vmatpush1.bf16.msra.mxu0 %v4342
  %4908 = vmatprep.subr.bf16.mxu0 0
  %4909 = vmatpush2.bf16.msra.mxu0 %v4357
  %4910 = vmatprep.subr.bf16.mxu0 0
  %4911 = vmatpush2.bf16.msra.mxu0 %v4356
  %4912 = vmatprep.subr.bf16.mxu0 0
  %4913 = vmatpush2.bf16.msra.mxu0 %v4355
  %4914 = vmatprep.subr.bf16.mxu0 0
  %4915 = vmatpush2.bf16.msra.mxu0 %v4354
  %4916 = vmatprep.subr.bf16.mxu0 0
  %4917 = vmatpush2.bf16.msra.mxu0 %v4353
  %4918 = vmatprep.subr.bf16.mxu0 0
  %4919 = vmatpush2.bf16.msra.mxu0 %v4352
  %4920 = vmatprep.subr.bf16.mxu0 0
  %4921 = vmatpush2.bf16.msra.mxu0 %v4351
  %4922 = vmatprep.subr.bf16.mxu0 0
  %4923 = vmatpush2.bf16.msra.mxu0 %v4350
  %4924 = vmatprep.mubr.bf16.mxu0 %v3420
  %4925 = vmatmul.mubr.bf16.gmra.mxu0 %v3419
  %v4926 = vpop.f32.mrf.mxu0
  %v4927 = vadd.f32 %v4862, %v4926
  %v4928 = vpop.f32.mrf.mxu0
  %v4929 = vpop.f32.mrf.mxu0
  %v4930 = vadd.f32 %v4865, %v4929
  %v4931 = vpop.f32.mrf.mxu0
  %4932 = vmatprep.mubr.bf16.mxu0 %v3436
  %4933 = vmatmul.mubr.bf16.gmra.mxu0 %v3435
  %v4934 = vpop.f32.mrf.mxu0
  %v4935 = vadd.f32 %v4870, %v4934
  %v4936 = vpop.f32.mrf.mxu0
  %v4937 = vpop.f32.mrf.mxu0
  %v4938 = vadd.f32 %v4873, %v4937
  %v4939 = vpop.f32.mrf.mxu0
  %4940 = vmatprep.mubr.bf16.mxu0 %v3452
  %4941 = vmatmul.mubr.bf16.gmra.mxu0 %v3451
  %v4942 = vpop.f32.mrf.mxu0
  %v4943 = vadd.f32 %v4878, %v4942
  %v4944 = vpop.f32.mrf.mxu0
  %v4945 = vpop.f32.mrf.mxu0
  %v4946 = vadd.f32 %v4881, %v4945
  %v4947 = vpop.f32.mrf.mxu0
  %4948 = vmatprep.mubr.bf16.mxu0 %v3468
  %4949 = vmatmul.mubr.bf16.gmra.mxu0 %v3467
  %v4950 = vpop.f32.mrf.mxu0
  %v4951 = vadd.f32 %v4886, %v4950
  %v4952 = vpop.f32.mrf.mxu0
  %v4953 = vpop.f32.mrf.mxu0
  %v4954 = vadd.f32 %v4889, %v4953
  %v4955 = vpop.f32.mrf.mxu0
  %4956 = vdwg.mxu0
  %4957 = vmatprep.subr.bf16.mxu0 0
  %4958 = vmatpush1.bf16.msra.mxu0 %v4365
  %4959 = vmatprep.subr.bf16.mxu0 0
  %4960 = vmatpush1.bf16.msra.mxu0 %v4364
  %4961 = vmatprep.subr.bf16.mxu0 0
  %4962 = vmatpush1.bf16.msra.mxu0 %v4363
  %4963 = vmatprep.subr.bf16.mxu0 0
  %4964 = vmatpush1.bf16.msra.mxu0 %v4362
  %4965 = vmatprep.subr.bf16.mxu0 0
  %4966 = vmatpush1.bf16.msra.mxu0 %v4361
  %4967 = vmatprep.subr.bf16.mxu0 0
  %4968 = vmatpush1.bf16.msra.mxu0 %v4360
  %4969 = vmatprep.subr.bf16.mxu0 0
  %4970 = vmatpush1.bf16.msra.mxu0 %v4359
  %4971 = vmatprep.subr.bf16.mxu0 0
  %4972 = vmatpush1.bf16.msra.mxu0 %v4358
  %4973 = vmatprep.subr.bf16.mxu0 0
  %4974 = vmatpush2.bf16.msra.mxu0 %v4373
  %4975 = vmatprep.subr.bf16.mxu0 0
  %4976 = vmatpush2.bf16.msra.mxu0 %v4372
  %4977 = vmatprep.subr.bf16.mxu0 0
  %4978 = vmatpush2.bf16.msra.mxu0 %v4371
  %4979 = vmatprep.subr.bf16.mxu0 0
  %4980 = vmatpush2.bf16.msra.mxu0 %v4370
  %4981 = vmatprep.subr.bf16.mxu0 0
  %4982 = vmatpush2.bf16.msra.mxu0 %v4369
  %4983 = vmatprep.subr.bf16.mxu0 0
  %4984 = vmatpush2.bf16.msra.mxu0 %v4368
  %4985 = vmatprep.subr.bf16.mxu0 0
  %4986 = vmatpush2.bf16.msra.mxu0 %v4367
  %4987 = vmatprep.subr.bf16.mxu0 0
  %4988 = vmatpush2.bf16.msra.mxu0 %v4366
  %4989 = vmatprep.mubr.bf16.mxu0 %v3422
  %4990 = vmatmul.mubr.bf16.gmra.mxu0 %v3421
  %v4991 = vpop.f32.mrf.mxu0
  %v4992 = vadd.f32 %v4927, %v4991
  %v4993 = vpop.f32.mrf.mxu0
  %v4994 = vpop.f32.mrf.mxu0
  %v4995 = vadd.f32 %v4930, %v4994
  %v4996 = vpop.f32.mrf.mxu0
  %4997 = vmatprep.mubr.bf16.mxu0 %v3438
  %4998 = vmatmul.mubr.bf16.gmra.mxu0 %v3437
  %v4999 = vpop.f32.mrf.mxu0
  %v5000 = vadd.f32 %v4935, %v4999
  %v5001 = vpop.f32.mrf.mxu0
  %v5002 = vpop.f32.mrf.mxu0
  %v5003 = vadd.f32 %v4938, %v5002
  %v5004 = vpop.f32.mrf.mxu0
  %5005 = vmatprep.mubr.bf16.mxu0 %v3454
  %5006 = vmatmul.mubr.bf16.gmra.mxu0 %v3453
  %v5007 = vpop.f32.mrf.mxu0
  %v5008 = vadd.f32 %v4943, %v5007
  %v5009 = vpop.f32.mrf.mxu0
  %v5010 = vpop.f32.mrf.mxu0
  %v5011 = vadd.f32 %v4946, %v5010
  %v5012 = vpop.f32.mrf.mxu0
  %5013 = vmatprep.mubr.bf16.mxu0 %v3470
  %5014 = vmatmul.mubr.bf16.gmra.mxu0 %v3469
  %v5015 = vpop.f32.mrf.mxu0
  %v5016 = vadd.f32 %v4951, %v5015
  %v5017 = vpop.f32.mrf.mxu0
  %v5018 = vpop.f32.mrf.mxu0
  %v5019 = vadd.f32 %v4954, %v5018
  %v5020 = vpop.f32.mrf.mxu0
  %5021 = vdwg.mxu0
  %v5022 = vadd.f32 %v2395, %v4992
  %v5023 = vadd.f32 %v2396, %v4995
  %v5024 = vadd.f32 %v2397, %v5000
  %v5025 = vadd.f32 %v2398, %v5003
  %v5026 = vadd.f32 %v2399, %v5008
  %v5027 = vadd.f32 %v2400, %v5011
  %v5028 = vadd.f32 %v2401, %v5016
  %v5029 = vadd.f32 %v2402, %v5019
  %v5030 = vld [vmem:[%s7] sm:$0x1]
  %v5031 = vld [vmem:[%s8] sm:$0x1]
  %v5032 = vsel %vm80, %v5022, 0.0
  %5033 = vadd.xlane.f32.xlu0 %v5032
  %v5034 = vpop.xlane.xlu0 %5033
  %v5035 = vsel %vm80, %v5023, 0.0
  %5036 = vadd.xlane.f32.xlu0 %v5035
  %v5037 = vpop.xlane.xlu0 %5036
  %v5038 = vsel %vm80, %v5024, 0.0
  %5039 = vadd.xlane.f32.xlu0 %v5038
  %v5040 = vpop.xlane.xlu0 %5039
  %v5041 = vsel %vm80, %v5025, 0.0
  %5042 = vadd.xlane.f32.xlu0 %v5041
  %v5043 = vpop.xlane.xlu0 %5042
  %v5044 = vsel %vm80, %v5026, 0.0
  %5045 = vadd.xlane.f32.xlu0 %v5044
  %v5046 = vpop.xlane.xlu0 %5045
  %v5047 = vsel %vm80, %v5027, 0.0
  %5048 = vadd.xlane.f32.xlu0 %v5047
  %v5049 = vpop.xlane.xlu0 %5048
  %v5050 = vsel %vm80, %v5028, 0.0
  %5051 = vadd.xlane.f32.xlu0 %v5050
  %v5052 = vpop.xlane.xlu0 %5051
  %v5053 = vsel %vm2290, %v5029, 0.0
  %5054 = vadd.xlane.f32.xlu0 %v5053
  %v5055 = vpop.xlane.xlu0 %5054
  %v5056 = vmul.f32 %v5034, %v2294
  %v5057 = vmul.f32 %v5037, %v2294
  %v5058 = vmul.f32 %v5040, %v2294
  %v5059 = vmul.f32 %v5043, %v2294
  %v5060 = vmul.f32 %v5046, %v2294
  %v5061 = vmul.f32 %v5049, %v2294
  %v5062 = vmul.f32 %v5052, %v2294
  %v5063 = vmul.f32 %v5055, %v2294
  %v5064 = vsub.f32 %v5022, %v5056
  %v5065 = vsub.f32 %v5023, %v5057
  %v5066 = vsub.f32 %v5024, %v5058
  %v5067 = vsub.f32 %v5025, %v5059
  %v5068 = vsub.f32 %v5026, %v5060
  %v5069 = vsub.f32 %v5027, %v5061
  %v5070 = vsub.f32 %v5028, %v5062
  %v5071 = vsub.f32 %v5029, %v5063
  %v5072 = vmul.f32 %v5064, %v5064
  %v5073 = vmul.f32 %v5065, %v5065
  %v5074 = vmul.f32 %v5066, %v5066
  %v5075 = vmul.f32 %v5067, %v5067
  %v5076 = vmul.f32 %v5068, %v5068
  %v5077 = vmul.f32 %v5069, %v5069
  %v5078 = vmul.f32 %v5070, %v5070
  %v5079 = vmul.f32 %v5071, %v5071
  %v5080 = vsel %vm80, %v5072, 0.0
  %5081 = vadd.xlane.f32.xlu0 %v5080
  %v5082 = vpop.xlane.xlu0 %5081
  %v5083 = vsel %vm80, %v5073, 0.0
  %5084 = vadd.xlane.f32.xlu0 %v5083
  %v5085 = vpop.xlane.xlu0 %5084
  %v5086 = vsel %vm80, %v5074, 0.0
  %5087 = vadd.xlane.f32.xlu0 %v5086
  %v5088 = vpop.xlane.xlu0 %5087
  %v5089 = vsel %vm80, %v5075, 0.0
  %5090 = vadd.xlane.f32.xlu0 %v5089
  %v5091 = vpop.xlane.xlu0 %5090
  %v5092 = vsel %vm80, %v5076, 0.0
  %5093 = vadd.xlane.f32.xlu0 %v5092
  %v5094 = vpop.xlane.xlu0 %5093
  %v5095 = vsel %vm80, %v5077, 0.0
  %5096 = vadd.xlane.f32.xlu0 %v5095
  %v5097 = vpop.xlane.xlu0 %5096
  %v5098 = vsel %vm80, %v5078, 0.0
  %5099 = vadd.xlane.f32.xlu0 %v5098
  %v5100 = vpop.xlane.xlu0 %5099
  %v5101 = vsel %vm2290, %v5079, 0.0
  %5102 = vadd.xlane.f32.xlu0 %v5101
  %v5103 = vpop.xlane.xlu0 %5102
  %v5104 = vmul.f32 %v5082, %v2294
  %v5105 = vmul.f32 %v5085, %v2294
  %v5106 = vmul.f32 %v5088, %v2294
  %v5107 = vmul.f32 %v5091, %v2294
  %v5108 = vmul.f32 %v5094, %v2294
  %v5109 = vmul.f32 %v5097, %v2294
  %v5110 = vmul.f32 %v5100, %v2294
  %v5111 = vmul.f32 %v5103, %v2294
  %v5112 = vadd.f32 %v5104, 1e-05
  %v5113 = vadd.f32 %v5105, 1e-05
  %v5114 = vadd.f32 %v5106, 1e-05
  %v5115 = vadd.f32 %v5107, 1e-05
  %v5116 = vadd.f32 %v5108, 1e-05
  %v5117 = vadd.f32 %v5109, 1e-05
  %v5118 = vadd.f32 %v5110, 1e-05
  %v5119 = vadd.f32 %v5111, 1e-05
  %v5120 = vrsqrt.pop %v5112
  %v5121 = vrsqrt.pop %v5113
  %v5122 = vrsqrt.pop %v5114
  %v5123 = vrsqrt.pop %v5115
  %v5124 = vrsqrt.pop %v5116
  %v5125 = vrsqrt.pop %v5117
  %v5126 = vrsqrt.pop %v5118
  %v5127 = vrsqrt.pop %v5119
  %v5128 = vmul.f32 %v5064, %v5120
  %v5129 = vmul.f32 %v5065, %v5121
  %v5130 = vmul.f32 %v5066, %v5122
  %v5131 = vmul.f32 %v5067, %v5123
  %v5132 = vmul.f32 %v5068, %v5124
  %v5133 = vmul.f32 %v5069, %v5125
  %v5134 = vmul.f32 %v5070, %v5126
  %v5135 = vmul.f32 %v5071, %v5127
  %v5137 = vlaneseq
  %v5138 = vshrl.u32 %v5137, 7
  %v5139 = vsub.s32 0, %v5138
  %v5140 = vrot.slane %v5030, %v5139
  %v5142 = vmul.f32 %v5128, %v5140
  %v5143 = vmul.f32 %v5129, %v5140
  %v5144 = vmul.f32 %v5130, %v5140
  %v5145 = vmul.f32 %v5131, %v5140
  %v5146 = vmul.f32 %v5132, %v5140
  %v5147 = vmul.f32 %v5133, %v5140
  %v5148 = vmul.f32 %v5134, %v5140
  %v5149 = vmul.f32 %v5135, %v5140
  %v5151 = vlaneseq
  %v5152 = vshrl.u32 %v5151, 7
  %v5153 = vsub.s32 0, %v5152
  %v5154 = vrot.slane %v5031, %v5153
  %v5156 = vadd.f32 %v5142, %v5154
  %v5157 = vadd.f32 %v5143, %v5154
  %v5158 = vadd.f32 %v5144, %v5154
  %v5159 = vadd.f32 %v5145, %v5154
  %v5160 = vadd.f32 %v5146, %v5154
  %v5161 = vadd.f32 %v5147, %v5154
  %v5162 = vadd.f32 %v5148, %v5154
  %v5163 = vadd.f32 %v5149, %v5154
  %v5164 = vpack.c.bf16 %v5157, %v5156
  %v5165 = vpack.c.bf16 %v5159, %v5158
  %v5166 = vpack.c.bf16 %v5161, %v5160
  %v5167 = vpack.c.bf16 %v5163, %v5162
  %s5168 = scalar_lea.vmem %s1, 16
  %v5169 = vld [vmem:[%s5168] sm:$0xf]
  %v5170 = vld [vmem:[%s5168 + $0x4] sm:$0xf]
  %v5171 = vld [vmem:[%s5168 + $0x8] sm:$0xf]
  %v5172 = vld [vmem:[%s5168 + $0xc] sm:$0xf]
  %s5173 = scalar_lea.vmem %s2, 1
  %v5174 = vld [vmem:[%s5173] sm:$0x1]
  %v5176 = vlaneseq
  %v5177 = vshrl.u32 %v5176, 7
  %v5178 = vsub.s32 0, %v5177
  %v5179 = vrot.slane %v5174, %v5178
  %v5185 = vunpack.c.l.b16 %v5169
  %v5186 = vunpack.c.l.b16 %v5170
  %v5187 = vunpack.c.l.b16 %v5171
  %v5188 = vunpack.c.l.b16 %v5172
  %v5189 = vpack.c.b16 %v5186, %v5185
  %v5190 = vpack.c.b16 %v5188, %v5187
  %v5194 = vsel %vm80, %v5164, 0
  %v5197 = vsel %vm80, %v5165, 0
  %v5200 = vsel %vm80, %v5166, 0
  %v5203 = vsel %vm80, %v5167, 0
  %5205 = vmatprep.subr.bf16.mxu0 0
  %5206 = vmatpush1.bf16.msra.mxu0 0
  %5207 = vmatprep.subr.bf16.mxu0 0
  %5208 = vmatpush1.bf16.msra.mxu0 0
  %5209 = vmatprep.subr.bf16.mxu0 0
  %5210 = vmatpush1.bf16.msra.mxu0 0
  %5211 = vmatprep.subr.bf16.mxu0 0
  %5212 = vmatpush1.bf16.msra.mxu0 0
  %5213 = vmatprep.subr.bf16.mxu0 0
  %5214 = vmatpush1.bf16.msra.mxu0 0
  %5215 = vmatprep.subr.bf16.mxu0 0
  %5216 = vmatpush1.bf16.msra.mxu0 0
  %5217 = vmatprep.subr.bf16.mxu0 0
  %5218 = vmatpush1.bf16.msra.mxu0 %v5190
  %5219 = vmatprep.subr.bf16.mxu0 0
  %5220 = vmatpush1.bf16.msra.mxu0 %v5189
  %5221 = vmatprep.subr.bf16.mxu0 0
  %5222 = vmatpush2.bf16.msra.mxu0 0
  %5223 = vmatprep.subr.bf16.mxu0 0
  %5224 = vmatpush2.bf16.msra.mxu0 0
  %5225 = vmatprep.subr.bf16.mxu0 0
  %5226 = vmatpush2.bf16.msra.mxu0 0
  %5227 = vmatprep.subr.bf16.mxu0 0
  %5228 = vmatpush2.bf16.msra.mxu0 0
  %5229 = vmatprep.subr.bf16.mxu0 0
  %5230 = vmatpush2.bf16.msra.mxu0 0
  %5231 = vmatprep.subr.bf16.mxu0 0
  %5232 = vmatpush2.bf16.msra.mxu0 0
  %5233 = vmatprep.subr.bf16.mxu0 0
  %5234 = vmatpush2.bf16.msra.mxu0 0
  %5235 = vmatprep.subr.bf16.mxu0 0
  %5236 = vmatpush2.bf16.msra.mxu0 0
  %5237 = vmatprep.mubr.bf16.mxu0 0
  %5238 = vmatmul.mubr.bf16.gmra.mxu0 %v5194
  %v5239 = vpop.f32.mrf.mxu0
  %v5240 = vadd.f32 %v5179, %v5239
  %v5241 = vpop.f32.mrf.mxu0
  %v5242 = vpop.f32.mrf.mxu0
  %v5243 = vadd.f32 %v5179, %v5242
  %v5244 = vpop.f32.mrf.mxu0
  %5245 = vmatprep.mubr.bf16.mxu0 0
  %5246 = vmatmul.mubr.bf16.gmra.mxu0 %v5197
  %v5247 = vpop.f32.mrf.mxu0
  %v5248 = vadd.f32 %v5179, %v5247
  %v5249 = vpop.f32.mrf.mxu0
  %v5250 = vpop.f32.mrf.mxu0
  %v5251 = vadd.f32 %v5179, %v5250
  %v5252 = vpop.f32.mrf.mxu0
  %5253 = vmatprep.mubr.bf16.mxu0 0
  %5254 = vmatmul.mubr.bf16.gmra.mxu0 %v5200
  %v5255 = vpop.f32.mrf.mxu0
  %v5256 = vadd.f32 %v5179, %v5255
  %v5257 = vpop.f32.mrf.mxu0
  %v5258 = vpop.f32.mrf.mxu0
  %v5259 = vadd.f32 %v5179, %v5258
  %v5260 = vpop.f32.mrf.mxu0
  %5261 = vmatprep.mubr.bf16.mxu0 0
  %5262 = vmatmul.mubr.bf16.gmra.mxu0 %v5203
  %v5263 = vpop.f32.mrf.mxu0
  %v5264 = vadd.f32 %v5179, %v5263
  %v5265 = vpop.f32.mrf.mxu0
  %v5266 = vpop.f32.mrf.mxu0
  %v5267 = vadd.f32 %v5179, %v5266
  %v5268 = vpop.f32.mrf.mxu0
  %5269 = vdwg.mxu0
  %5274 = vrot.lane.b32.xlu0 %v5240, 120
  %v5275 = vpop.permute.xlu0 %5274
  %5276 = vrot.lane.b32.xlu0 %v5243, 120
  %v5277 = vpop.permute.xlu0 %5276
  %5278 = vrot.lane.b32.xlu0 %v5248, 120
  %v5279 = vpop.permute.xlu0 %5278
  %5280 = vrot.lane.b32.xlu0 %v5251, 120
  %v5281 = vpop.permute.xlu0 %5280
  %5286 = vrot.lane.b32.xlu0 %v5240, 112
  %v5287 = vpop.permute.xlu0 %5286
  %5288 = vrot.lane.b32.xlu0 %v5243, 112
  %v5289 = vpop.permute.xlu0 %5288
  %5290 = vrot.lane.b32.xlu0 %v5248, 112
  %v5291 = vpop.permute.xlu0 %5290
  %5292 = vrot.lane.b32.xlu0 %v5251, 112
  %v5293 = vpop.permute.xlu0 %5292
  %5298 = vrot.lane.b32.xlu0 %v5240, 104
  %v5299 = vpop.permute.xlu0 %5298
  %5300 = vrot.lane.b32.xlu0 %v5243, 104
  %v5301 = vpop.permute.xlu0 %5300
  %5302 = vrot.lane.b32.xlu0 %v5248, 104
  %v5303 = vpop.permute.xlu0 %5302
  %5304 = vrot.lane.b32.xlu0 %v5251, 104
  %v5305 = vpop.permute.xlu0 %5304
  %v5314 = vrot.slane %v5251, 6
  %v5315 = vrot.slane %v5256, 6
  %v5316 = vsel %vm202, %v5314, %v5315
  %v5317 = vrot.slane %v5259, 6
  %v5318 = vsel %vm202, %v5315, %v5317
  %v5319 = vrot.slane %v5264, 6
  %v5320 = vsel %vm202, %v5317, %v5319
  %v5321 = vrot.slane %v5267, 6
  %v5322 = vsel %vm202, %v5319, %v5321
  %5327 = vrot.lane.b32.xlu0 %v5316, 120
  %v5328 = vpop.permute.xlu0 %5327
  %5329 = vrot.lane.b32.xlu0 %v5318, 120
  %v5330 = vpop.permute.xlu0 %5329
  %5331 = vrot.lane.b32.xlu0 %v5320, 120
  %v5332 = vpop.permute.xlu0 %5331
  %5333 = vrot.lane.b32.xlu0 %v5322, 120
  %v5334 = vpop.permute.xlu0 %5333
  %5339 = vrot.lane.b32.xlu0 %v5316, 112
  %v5340 = vpop.permute.xlu0 %5339
  %5341 = vrot.lane.b32.xlu0 %v5318, 112
  %v5342 = vpop.permute.xlu0 %5341
  %5343 = vrot.lane.b32.xlu0 %v5320, 112
  %v5344 = vpop.permute.xlu0 %5343
  %5345 = vrot.lane.b32.xlu0 %v5322, 112
  %v5346 = vpop.permute.xlu0 %5345
  %5351 = vrot.lane.b32.xlu0 %v5316, 104
  %v5352 = vpop.permute.xlu0 %5351
  %5353 = vrot.lane.b32.xlu0 %v5318, 104
  %v5354 = vpop.permute.xlu0 %5353
  %5355 = vrot.lane.b32.xlu0 %v5320, 104
  %v5356 = vpop.permute.xlu0 %5355
  %5357 = vrot.lane.b32.xlu0 %v5322, 104
  %v5358 = vpop.permute.xlu0 %5357
  %v5363 = vpack.c.bf16 %v5243, %v5240
  %v5364 = vpack.c.bf16 %v5251, %v5248
  %v5365 = vpack.c.bf16 %v5277, %v5275
  %v5366 = vpack.c.bf16 %v5281, %v5279
  %v5367 = vpack.c.bf16 %v5289, %v5287
  %v5368 = vpack.c.bf16 %v5293, %v5291
  %v5369 = vpack.c.bf16 %v5301, %v5299
  %v5370 = vpack.c.bf16 %v5305, %v5303
  %v5371 = vpack.c.bf16 %v5318, %v5316
  %v5372 = vpack.c.bf16 %v5322, %v5320
  %v5373 = vpack.c.bf16 %v5330, %v5328
  %v5374 = vpack.c.bf16 %v5334, %v5332
  %v5375 = vpack.c.bf16 %v5342, %v5340
  %v5376 = vpack.c.bf16 %v5346, %v5344
  %v5377 = vpack.c.bf16 %v5354, %v5352
  %v5378 = vpack.c.bf16 %v5358, %v5356
  %5381 = vrot.lane.b32.xlu0 %v5363, 96
  %v5382 = vpop.permute.xlu0 %5381
  %5383 = vrot.lane.b32.xlu0 %v5364, 96
  %v5384 = vpop.permute.xlu0 %5383
  %v5386 = vsel %vm274, %v5363, 0
  %v5389 = vsel %vm274, %v5364, 0
  %v5392 = vsel %vm274, %v5382, 0
  %v5395 = vsel %vm274, %v5384, 0
  %5397 = vmatprep.subr.bf16.mxu0 0
  %5398 = vmatpush1.bf16.xpose.msra.mxu0 0
  %5399 = vmatprep.subr.bf16.mxu0 0
  %5400 = vmatpush1.bf16.xpose.msra.mxu0 0
  %5401 = vmatprep.subr.bf16.mxu0 0
  %5402 = vmatpush1.bf16.xpose.msra.mxu0 0
  %5403 = vmatprep.subr.bf16.mxu0 0
  %5404 = vmatpush1.bf16.xpose.msra.mxu0 0
  %5405 = vmatprep.subr.bf16.mxu0 0
  %5406 = vmatpush1.bf16.xpose.msra.mxu0 0
  %5407 = vmatprep.subr.bf16.mxu0 0
  %5408 = vmatpush1.bf16.xpose.msra.mxu0 0
  %5409 = vmatprep.subr.bf16.mxu0 0
  %5410 = vmatpush1.bf16.xpose.msra.mxu0 %v5395
  %5411 = vmatprep.subr.bf16.mxu0 0
  %5412 = vmatpush1.bf16.xpose.msra.mxu0 %v5392
  %5413 = vmatprep.subr.bf16.mxu0 0
  %5414 = vmatpush2.bf16.xpose.msra.mxu0 0
  %5415 = vmatprep.subr.bf16.mxu0 0
  %5416 = vmatpush2.bf16.xpose.msra.mxu0 0
  %5417 = vmatprep.subr.bf16.mxu0 0
  %5418 = vmatpush2.bf16.xpose.msra.mxu0 0
  %5419 = vmatprep.subr.bf16.mxu0 0
  %5420 = vmatpush2.bf16.xpose.msra.mxu0 0
  %5421 = vmatprep.subr.bf16.mxu0 0
  %5422 = vmatpush2.bf16.xpose.msra.mxu0 0
  %5423 = vmatprep.subr.bf16.mxu0 0
  %5424 = vmatpush2.bf16.xpose.msra.mxu0 0
  %5425 = vmatprep.subr.bf16.mxu0 0
  %5426 = vmatpush2.bf16.xpose.msra.mxu0 0
  %5427 = vmatprep.subr.bf16.mxu0 0
  %5428 = vmatpush2.bf16.xpose.msra.mxu0 0
  %5429 = vmatprep.mubr.bf16.mxu0 0
  %5430 = vmatmul.mubr.bf16.gmra.mxu0 %v5386
  %v5431 = vpop.f32.mrf.mxu0
  %v5432 = vadd.f32 0.0, %v5431
  %v5433 = vpop.f32.mrf.mxu0
  %v5434 = vpop.f32.mrf.mxu0
  %v5435 = vadd.f32 0.0, %v5434
  %v5436 = vpop.f32.mrf.mxu0
  %5437 = vmatprep.mubr.bf16.mxu0 0
  %5438 = vmatmul.mubr.bf16.gmra.mxu0 %v5389
  %v5439 = vpop.f32.mrf.mxu0
  %v5440 = vadd.f32 0.0, %v5439
  %v5441 = vpop.f32.mrf.mxu0
  %v5442 = vpop.f32.mrf.mxu0
  %v5443 = vadd.f32 0.0, %v5442
  %v5444 = vpop.f32.mrf.mxu0
  %5445 = vdwg.mxu0
  %5448 = vrot.lane.b32.xlu0 %v5365, 96
  %v5449 = vpop.permute.xlu0 %5448
  %5450 = vrot.lane.b32.xlu0 %v5366, 96
  %v5451 = vpop.permute.xlu0 %5450
  %v5453 = vsel %vm274, %v5365, 0
  %v5456 = vsel %vm274, %v5366, 0
  %v5459 = vsel %vm274, %v5449, 0
  %v5462 = vsel %vm274, %v5451, 0
  %5464 = vmatprep.subr.bf16.mxu0 0
  %5465 = vmatpush1.bf16.xpose.msra.mxu0 0
  %5466 = vmatprep.subr.bf16.mxu0 0
  %5467 = vmatpush1.bf16.xpose.msra.mxu0 0
  %5468 = vmatprep.subr.bf16.mxu0 0
  %5469 = vmatpush1.bf16.xpose.msra.mxu0 0
  %5470 = vmatprep.subr.bf16.mxu0 0
  %5471 = vmatpush1.bf16.xpose.msra.mxu0 0
  %5472 = vmatprep.subr.bf16.mxu0 0
  %5473 = vmatpush1.bf16.xpose.msra.mxu0 0
  %5474 = vmatprep.subr.bf16.mxu0 0
  %5475 = vmatpush1.bf16.xpose.msra.mxu0 0
  %5476 = vmatprep.subr.bf16.mxu0 0
  %5477 = vmatpush1.bf16.xpose.msra.mxu0 %v5462
  %5478 = vmatprep.subr.bf16.mxu0 0
  %5479 = vmatpush1.bf16.xpose.msra.mxu0 %v5459
  %5480 = vmatprep.subr.bf16.mxu0 0
  %5481 = vmatpush2.bf16.xpose.msra.mxu0 0
  %5482 = vmatprep.subr.bf16.mxu0 0
  %5483 = vmatpush2.bf16.xpose.msra.mxu0 0
  %5484 = vmatprep.subr.bf16.mxu0 0
  %5485 = vmatpush2.bf16.xpose.msra.mxu0 0
  %5486 = vmatprep.subr.bf16.mxu0 0
  %5487 = vmatpush2.bf16.xpose.msra.mxu0 0
  %5488 = vmatprep.subr.bf16.mxu0 0
  %5489 = vmatpush2.bf16.xpose.msra.mxu0 0
  %5490 = vmatprep.subr.bf16.mxu0 0
  %5491 = vmatpush2.bf16.xpose.msra.mxu0 0
  %5492 = vmatprep.subr.bf16.mxu0 0
  %5493 = vmatpush2.bf16.xpose.msra.mxu0 0
  %5494 = vmatprep.subr.bf16.mxu0 0
  %5495 = vmatpush2.bf16.xpose.msra.mxu0 0
  %5496 = vmatprep.mubr.bf16.mxu0 0
  %5497 = vmatmul.mubr.bf16.gmra.mxu0 %v5453
  %v5498 = vpop.f32.mrf.mxu0
  %v5499 = vadd.f32 0.0, %v5498
  %v5500 = vpop.f32.mrf.mxu0
  %v5501 = vpop.f32.mrf.mxu0
  %v5502 = vadd.f32 0.0, %v5501
  %v5503 = vpop.f32.mrf.mxu0
  %5504 = vmatprep.mubr.bf16.mxu0 0
  %5505 = vmatmul.mubr.bf16.gmra.mxu0 %v5456
  %v5506 = vpop.f32.mrf.mxu0
  %v5507 = vadd.f32 0.0, %v5506
  %v5508 = vpop.f32.mrf.mxu0
  %v5509 = vpop.f32.mrf.mxu0
  %v5510 = vadd.f32 0.0, %v5509
  %v5511 = vpop.f32.mrf.mxu0
  %5512 = vdwg.mxu0
  %5515 = vrot.lane.b32.xlu0 %v5367, 96
  %v5516 = vpop.permute.xlu0 %5515
  %5517 = vrot.lane.b32.xlu0 %v5368, 96
  %v5518 = vpop.permute.xlu0 %5517
  %v5520 = vsel %vm274, %v5367, 0
  %v5523 = vsel %vm274, %v5368, 0
  %v5526 = vsel %vm274, %v5516, 0
  %v5529 = vsel %vm274, %v5518, 0
  %5531 = vmatprep.subr.bf16.mxu0 0
  %5532 = vmatpush1.bf16.xpose.msra.mxu0 0
  %5533 = vmatprep.subr.bf16.mxu0 0
  %5534 = vmatpush1.bf16.xpose.msra.mxu0 0
  %5535 = vmatprep.subr.bf16.mxu0 0
  %5536 = vmatpush1.bf16.xpose.msra.mxu0 0
  %5537 = vmatprep.subr.bf16.mxu0 0
  %5538 = vmatpush1.bf16.xpose.msra.mxu0 0
  %5539 = vmatprep.subr.bf16.mxu0 0
  %5540 = vmatpush1.bf16.xpose.msra.mxu0 0
  %5541 = vmatprep.subr.bf16.mxu0 0
  %5542 = vmatpush1.bf16.xpose.msra.mxu0 0
  %5543 = vmatprep.subr.bf16.mxu0 0
  %5544 = vmatpush1.bf16.xpose.msra.mxu0 %v5529
  %5545 = vmatprep.subr.bf16.mxu0 0
  %5546 = vmatpush1.bf16.xpose.msra.mxu0 %v5526
  %5547 = vmatprep.subr.bf16.mxu0 0
  %5548 = vmatpush2.bf16.xpose.msra.mxu0 0
  %5549 = vmatprep.subr.bf16.mxu0 0
  %5550 = vmatpush2.bf16.xpose.msra.mxu0 0
  %5551 = vmatprep.subr.bf16.mxu0 0
  %5552 = vmatpush2.bf16.xpose.msra.mxu0 0
  %5553 = vmatprep.subr.bf16.mxu0 0
  %5554 = vmatpush2.bf16.xpose.msra.mxu0 0
  %5555 = vmatprep.subr.bf16.mxu0 0
  %5556 = vmatpush2.bf16.xpose.msra.mxu0 0
  %5557 = vmatprep.subr.bf16.mxu0 0
  %5558 = vmatpush2.bf16.xpose.msra.mxu0 0
  %5559 = vmatprep.subr.bf16.mxu0 0
  %5560 = vmatpush2.bf16.xpose.msra.mxu0 0
  %5561 = vmatprep.subr.bf16.mxu0 0
  %5562 = vmatpush2.bf16.xpose.msra.mxu0 0
  %5563 = vmatprep.mubr.bf16.mxu0 0
  %5564 = vmatmul.mubr.bf16.gmra.mxu0 %v5520
  %v5565 = vpop.f32.mrf.mxu0
  %v5566 = vadd.f32 0.0, %v5565
  %v5567 = vpop.f32.mrf.mxu0
  %v5568 = vpop.f32.mrf.mxu0
  %v5569 = vadd.f32 0.0, %v5568
  %v5570 = vpop.f32.mrf.mxu0
  %5571 = vmatprep.mubr.bf16.mxu0 0
  %5572 = vmatmul.mubr.bf16.gmra.mxu0 %v5523
  %v5573 = vpop.f32.mrf.mxu0
  %v5574 = vadd.f32 0.0, %v5573
  %v5575 = vpop.f32.mrf.mxu0
  %v5576 = vpop.f32.mrf.mxu0
  %v5577 = vadd.f32 0.0, %v5576
  %v5578 = vpop.f32.mrf.mxu0
  %5579 = vdwg.mxu0
  %5582 = vrot.lane.b32.xlu0 %v5369, 96
  %v5583 = vpop.permute.xlu0 %5582
  %5584 = vrot.lane.b32.xlu0 %v5370, 96
  %v5585 = vpop.permute.xlu0 %5584
  %v5587 = vsel %vm274, %v5369, 0
  %v5590 = vsel %vm274, %v5370, 0
  %v5593 = vsel %vm274, %v5583, 0
  %v5596 = vsel %vm274, %v5585, 0
  %5598 = vmatprep.subr.bf16.mxu0 0
  %5599 = vmatpush1.bf16.xpose.msra.mxu0 0
  %5600 = vmatprep.subr.bf16.mxu0 0
  %5601 = vmatpush1.bf16.xpose.msra.mxu0 0
  %5602 = vmatprep.subr.bf16.mxu0 0
  %5603 = vmatpush1.bf16.xpose.msra.mxu0 0
  %5604 = vmatprep.subr.bf16.mxu0 0
  %5605 = vmatpush1.bf16.xpose.msra.mxu0 0
  %5606 = vmatprep.subr.bf16.mxu0 0
  %5607 = vmatpush1.bf16.xpose.msra.mxu0 0
  %5608 = vmatprep.subr.bf16.mxu0 0
  %5609 = vmatpush1.bf16.xpose.msra.mxu0 0
  %5610 = vmatprep.subr.bf16.mxu0 0
  %5611 = vmatpush1.bf16.xpose.msra.mxu0 %v5596
  %5612 = vmatprep.subr.bf16.mxu0 0
  %5613 = vmatpush1.bf16.xpose.msra.mxu0 %v5593
  %5614 = vmatprep.subr.bf16.mxu0 0
  %5615 = vmatpush2.bf16.xpose.msra.mxu0 0
  %5616 = vmatprep.subr.bf16.mxu0 0
  %5617 = vmatpush2.bf16.xpose.msra.mxu0 0
  %5618 = vmatprep.subr.bf16.mxu0 0
  %5619 = vmatpush2.bf16.xpose.msra.mxu0 0
  %5620 = vmatprep.subr.bf16.mxu0 0
  %5621 = vmatpush2.bf16.xpose.msra.mxu0 0
  %5622 = vmatprep.subr.bf16.mxu0 0
  %5623 = vmatpush2.bf16.xpose.msra.mxu0 0
  %5624 = vmatprep.subr.bf16.mxu0 0
  %5625 = vmatpush2.bf16.xpose.msra.mxu0 0
  %5626 = vmatprep.subr.bf16.mxu0 0
  %5627 = vmatpush2.bf16.xpose.msra.mxu0 0
  %5628 = vmatprep.subr.bf16.mxu0 0
  %5629 = vmatpush2.bf16.xpose.msra.mxu0 0
  %5630 = vmatprep.mubr.bf16.mxu0 0
  %5631 = vmatmul.mubr.bf16.gmra.mxu0 %v5587
  %v5632 = vpop.f32.mrf.mxu0
  %v5633 = vadd.f32 0.0, %v5632
  %v5634 = vpop.f32.mrf.mxu0
  %v5635 = vpop.f32.mrf.mxu0
  %v5636 = vadd.f32 0.0, %v5635
  %v5637 = vpop.f32.mrf.mxu0
  %5638 = vmatprep.mubr.bf16.mxu0 0
  %5639 = vmatmul.mubr.bf16.gmra.mxu0 %v5590
  %v5640 = vpop.f32.mrf.mxu0
  %v5641 = vadd.f32 0.0, %v5640
  %v5642 = vpop.f32.mrf.mxu0
  %v5643 = vpop.f32.mrf.mxu0
  %v5644 = vadd.f32 0.0, %v5643
  %v5645 = vpop.f32.mrf.mxu0
  %5646 = vdwg.mxu0
  %5649 = vrot.lane.b32.xlu0 %v5371, 96
  %v5650 = vpop.permute.xlu0 %5649
  %5651 = vrot.lane.b32.xlu0 %v5372, 96
  %v5652 = vpop.permute.xlu0 %5651
  %v5654 = vsel %vm274, %v5371, 0
  %v5657 = vsel %vm274, %v5372, 0
  %v5660 = vsel %vm274, %v5650, 0
  %v5663 = vsel %vm274, %v5652, 0
  %5665 = vmatprep.subr.bf16.mxu0 0
  %5666 = vmatpush1.bf16.xpose.msra.mxu0 0
  %5667 = vmatprep.subr.bf16.mxu0 0
  %5668 = vmatpush1.bf16.xpose.msra.mxu0 0
  %5669 = vmatprep.subr.bf16.mxu0 0
  %5670 = vmatpush1.bf16.xpose.msra.mxu0 0
  %5671 = vmatprep.subr.bf16.mxu0 0
  %5672 = vmatpush1.bf16.xpose.msra.mxu0 0
  %5673 = vmatprep.subr.bf16.mxu0 0
  %5674 = vmatpush1.bf16.xpose.msra.mxu0 0
  %5675 = vmatprep.subr.bf16.mxu0 0
  %5676 = vmatpush1.bf16.xpose.msra.mxu0 0
  %5677 = vmatprep.subr.bf16.mxu0 0
  %5678 = vmatpush1.bf16.xpose.msra.mxu0 %v5663
  %5679 = vmatprep.subr.bf16.mxu0 0
  %5680 = vmatpush1.bf16.xpose.msra.mxu0 %v5660
  %5681 = vmatprep.subr.bf16.mxu0 0
  %5682 = vmatpush2.bf16.xpose.msra.mxu0 0
  %5683 = vmatprep.subr.bf16.mxu0 0
  %5684 = vmatpush2.bf16.xpose.msra.mxu0 0
  %5685 = vmatprep.subr.bf16.mxu0 0
  %5686 = vmatpush2.bf16.xpose.msra.mxu0 0
  %5687 = vmatprep.subr.bf16.mxu0 0
  %5688 = vmatpush2.bf16.xpose.msra.mxu0 0
  %5689 = vmatprep.subr.bf16.mxu0 0
  %5690 = vmatpush2.bf16.xpose.msra.mxu0 0
  %5691 = vmatprep.subr.bf16.mxu0 0
  %5692 = vmatpush2.bf16.xpose.msra.mxu0 0
  %5693 = vmatprep.subr.bf16.mxu0 0
  %5694 = vmatpush2.bf16.xpose.msra.mxu0 0
  %5695 = vmatprep.subr.bf16.mxu0 0
  %5696 = vmatpush2.bf16.xpose.msra.mxu0 0
  %5697 = vmatprep.mubr.bf16.mxu0 0
  %5698 = vmatmul.mubr.bf16.gmra.mxu0 %v5654
  %v5699 = vpop.f32.mrf.mxu0
  %v5700 = vadd.f32 0.0, %v5699
  %v5701 = vpop.f32.mrf.mxu0
  %v5702 = vpop.f32.mrf.mxu0
  %v5703 = vadd.f32 0.0, %v5702
  %v5704 = vpop.f32.mrf.mxu0
  %5705 = vmatprep.mubr.bf16.mxu0 0
  %5706 = vmatmul.mubr.bf16.gmra.mxu0 %v5657
  %v5707 = vpop.f32.mrf.mxu0
  %v5708 = vadd.f32 0.0, %v5707
  %v5709 = vpop.f32.mrf.mxu0
  %v5710 = vpop.f32.mrf.mxu0
  %v5711 = vadd.f32 0.0, %v5710
  %v5712 = vpop.f32.mrf.mxu0
  %5713 = vdwg.mxu0
  %5716 = vrot.lane.b32.xlu0 %v5373, 96
  %v5717 = vpop.permute.xlu0 %5716
  %5718 = vrot.lane.b32.xlu0 %v5374, 96
  %v5719 = vpop.permute.xlu0 %5718
  %v5721 = vsel %vm274, %v5373, 0
  %v5724 = vsel %vm274, %v5374, 0
  %v5727 = vsel %vm274, %v5717, 0
  %v5730 = vsel %vm274, %v5719, 0
  %5732 = vmatprep.subr.bf16.mxu0 0
  %5733 = vmatpush1.bf16.xpose.msra.mxu0 0
  %5734 = vmatprep.subr.bf16.mxu0 0
  %5735 = vmatpush1.bf16.xpose.msra.mxu0 0
  %5736 = vmatprep.subr.bf16.mxu0 0
  %5737 = vmatpush1.bf16.xpose.msra.mxu0 0
  %5738 = vmatprep.subr.bf16.mxu0 0
  %5739 = vmatpush1.bf16.xpose.msra.mxu0 0
  %5740 = vmatprep.subr.bf16.mxu0 0
  %5741 = vmatpush1.bf16.xpose.msra.mxu0 0
  %5742 = vmatprep.subr.bf16.mxu0 0
  %5743 = vmatpush1.bf16.xpose.msra.mxu0 0
  %5744 = vmatprep.subr.bf16.mxu0 0
  %5745 = vmatpush1.bf16.xpose.msra.mxu0 %v5730
  %5746 = vmatprep.subr.bf16.mxu0 0
  %5747 = vmatpush1.bf16.xpose.msra.mxu0 %v5727
  %5748 = vmatprep.subr.bf16.mxu0 0
  %5749 = vmatpush2.bf16.xpose.msra.mxu0 0
  %5750 = vmatprep.subr.bf16.mxu0 0
  %5751 = vmatpush2.bf16.xpose.msra.mxu0 0
  %5752 = vmatprep.subr.bf16.mxu0 0
  %5753 = vmatpush2.bf16.xpose.msra.mxu0 0
  %5754 = vmatprep.subr.bf16.mxu0 0
  %5755 = vmatpush2.bf16.xpose.msra.mxu0 0
  %5756 = vmatprep.subr.bf16.mxu0 0
  %5757 = vmatpush2.bf16.xpose.msra.mxu0 0
  %5758 = vmatprep.subr.bf16.mxu0 0
  %5759 = vmatpush2.bf16.xpose.msra.mxu0 0
  %5760 = vmatprep.subr.bf16.mxu0 0
  %5761 = vmatpush2.bf16.xpose.msra.mxu0 0
  %5762 = vmatprep.subr.bf16.mxu0 0
  %5763 = vmatpush2.bf16.xpose.msra.mxu0 0
  %5764 = vmatprep.mubr.bf16.mxu0 0
  %5765 = vmatmul.mubr.bf16.gmra.mxu0 %v5721
  %v5766 = vpop.f32.mrf.mxu0
  %v5767 = vadd.f32 0.0, %v5766
  %v5768 = vpop.f32.mrf.mxu0
  %v5769 = vpop.f32.mrf.mxu0
  %v5770 = vadd.f32 0.0, %v5769
  %v5771 = vpop.f32.mrf.mxu0
  %5772 = vmatprep.mubr.bf16.mxu0 0
  %5773 = vmatmul.mubr.bf16.gmra.mxu0 %v5724
  %v5774 = vpop.f32.mrf.mxu0
  %v5775 = vadd.f32 0.0, %v5774
  %v5776 = vpop.f32.mrf.mxu0
  %v5777 = vpop.f32.mrf.mxu0
  %v5778 = vadd.f32 0.0, %v5777
  %v5779 = vpop.f32.mrf.mxu0
  %5780 = vdwg.mxu0
  %5783 = vrot.lane.b32.xlu0 %v5375, 96
  %v5784 = vpop.permute.xlu0 %5783
  %5785 = vrot.lane.b32.xlu0 %v5376, 96
  %v5786 = vpop.permute.xlu0 %5785
  %v5788 = vsel %vm274, %v5375, 0
  %v5791 = vsel %vm274, %v5376, 0
  %v5794 = vsel %vm274, %v5784, 0
  %v5797 = vsel %vm274, %v5786, 0
  %5799 = vmatprep.subr.bf16.mxu0 0
  %5800 = vmatpush1.bf16.xpose.msra.mxu0 0
  %5801 = vmatprep.subr.bf16.mxu0 0
  %5802 = vmatpush1.bf16.xpose.msra.mxu0 0
  %5803 = vmatprep.subr.bf16.mxu0 0
  %5804 = vmatpush1.bf16.xpose.msra.mxu0 0
  %5805 = vmatprep.subr.bf16.mxu0 0
  %5806 = vmatpush1.bf16.xpose.msra.mxu0 0
  %5807 = vmatprep.subr.bf16.mxu0 0
  %5808 = vmatpush1.bf16.xpose.msra.mxu0 0
  %5809 = vmatprep.subr.bf16.mxu0 0
  %5810 = vmatpush1.bf16.xpose.msra.mxu0 0
  %5811 = vmatprep.subr.bf16.mxu0 0
  %5812 = vmatpush1.bf16.xpose.msra.mxu0 %v5797
  %5813 = vmatprep.subr.bf16.mxu0 0
  %5814 = vmatpush1.bf16.xpose.msra.mxu0 %v5794
  %5815 = vmatprep.subr.bf16.mxu0 0
  %5816 = vmatpush2.bf16.xpose.msra.mxu0 0
  %5817 = vmatprep.subr.bf16.mxu0 0
  %5818 = vmatpush2.bf16.xpose.msra.mxu0 0
  %5819 = vmatprep.subr.bf16.mxu0 0
  %5820 = vmatpush2.bf16.xpose.msra.mxu0 0
  %5821 = vmatprep.subr.bf16.mxu0 0
  %5822 = vmatpush2.bf16.xpose.msra.mxu0 0
  %5823 = vmatprep.subr.bf16.mxu0 0
  %5824 = vmatpush2.bf16.xpose.msra.mxu0 0
  %5825 = vmatprep.subr.bf16.mxu0 0
  %5826 = vmatpush2.bf16.xpose.msra.mxu0 0
  %5827 = vmatprep.subr.bf16.mxu0 0
  %5828 = vmatpush2.bf16.xpose.msra.mxu0 0
  %5829 = vmatprep.subr.bf16.mxu0 0
  %5830 = vmatpush2.bf16.xpose.msra.mxu0 0
  %5831 = vmatprep.mubr.bf16.mxu0 0
  %5832 = vmatmul.mubr.bf16.gmra.mxu0 %v5788
  %v5833 = vpop.f32.mrf.mxu0
  %v5834 = vadd.f32 0.0, %v5833
  %v5835 = vpop.f32.mrf.mxu0
  %v5836 = vpop.f32.mrf.mxu0
  %v5837 = vadd.f32 0.0, %v5836
  %v5838 = vpop.f32.mrf.mxu0
  %5839 = vmatprep.mubr.bf16.mxu0 0
  %5840 = vmatmul.mubr.bf16.gmra.mxu0 %v5791
  %v5841 = vpop.f32.mrf.mxu0
  %v5842 = vadd.f32 0.0, %v5841
  %v5843 = vpop.f32.mrf.mxu0
  %v5844 = vpop.f32.mrf.mxu0
  %v5845 = vadd.f32 0.0, %v5844
  %v5846 = vpop.f32.mrf.mxu0
  %5847 = vdwg.mxu0
  %5850 = vrot.lane.b32.xlu0 %v5377, 96
  %v5851 = vpop.permute.xlu0 %5850
  %5852 = vrot.lane.b32.xlu0 %v5378, 96
  %v5853 = vpop.permute.xlu0 %5852
  %v5855 = vsel %vm274, %v5377, 0
  %v5858 = vsel %vm274, %v5378, 0
  %v5861 = vsel %vm274, %v5851, 0
  %v5864 = vsel %vm274, %v5853, 0
  %5866 = vmatprep.subr.bf16.mxu0 0
  %5867 = vmatpush1.bf16.xpose.msra.mxu0 0
  %5868 = vmatprep.subr.bf16.mxu0 0
  %5869 = vmatpush1.bf16.xpose.msra.mxu0 0
  %5870 = vmatprep.subr.bf16.mxu0 0
  %5871 = vmatpush1.bf16.xpose.msra.mxu0 0
  %5872 = vmatprep.subr.bf16.mxu0 0
  %5873 = vmatpush1.bf16.xpose.msra.mxu0 0
  %5874 = vmatprep.subr.bf16.mxu0 0
  %5875 = vmatpush1.bf16.xpose.msra.mxu0 0
  %5876 = vmatprep.subr.bf16.mxu0 0
  %5877 = vmatpush1.bf16.xpose.msra.mxu0 0
  %5878 = vmatprep.subr.bf16.mxu0 0
  %5879 = vmatpush1.bf16.xpose.msra.mxu0 %v5864
  %5880 = vmatprep.subr.bf16.mxu0 0
  %5881 = vmatpush1.bf16.xpose.msra.mxu0 %v5861
  %5882 = vmatprep.subr.bf16.mxu0 0
  %5883 = vmatpush2.bf16.xpose.msra.mxu0 0
  %5884 = vmatprep.subr.bf16.mxu0 0
  %5885 = vmatpush2.bf16.xpose.msra.mxu0 0
  %5886 = vmatprep.subr.bf16.mxu0 0
  %5887 = vmatpush2.bf16.xpose.msra.mxu0 0
  %5888 = vmatprep.subr.bf16.mxu0 0
  %5889 = vmatpush2.bf16.xpose.msra.mxu0 0
  %5890 = vmatprep.subr.bf16.mxu0 0
  %5891 = vmatpush2.bf16.xpose.msra.mxu0 0
  %5892 = vmatprep.subr.bf16.mxu0 0
  %5893 = vmatpush2.bf16.xpose.msra.mxu0 0
  %5894 = vmatprep.subr.bf16.mxu0 0
  %5895 = vmatpush2.bf16.xpose.msra.mxu0 0
  %5896 = vmatprep.subr.bf16.mxu0 0
  %5897 = vmatpush2.bf16.xpose.msra.mxu0 0
  %5898 = vmatprep.mubr.bf16.mxu0 0
  %5899 = vmatmul.mubr.bf16.gmra.mxu0 %v5855
  %v5900 = vpop.f32.mrf.mxu0
  %v5901 = vadd.f32 0.0, %v5900
  %v5902 = vpop.f32.mrf.mxu0
  %v5903 = vpop.f32.mrf.mxu0
  %v5904 = vadd.f32 0.0, %v5903
  %v5905 = vpop.f32.mrf.mxu0
  %5906 = vmatprep.mubr.bf16.mxu0 0
  %5907 = vmatmul.mubr.bf16.gmra.mxu0 %v5858
  %v5908 = vpop.f32.mrf.mxu0
  %v5909 = vadd.f32 0.0, %v5908
  %v5910 = vpop.f32.mrf.mxu0
  %v5911 = vpop.f32.mrf.mxu0
  %v5912 = vadd.f32 0.0, %v5911
  %v5913 = vpop.f32.mrf.mxu0
  %5914 = vdwg.mxu0
  %v5915 = vsel %vm805, %v5432, -inf
  %5916 = vmax.xlane.f32.xlu0 %v5915
  %v5917 = vpop.xlane.xlu0 %5916
  %v5918 = vsel %vm805, %v5435, -inf
  %5919 = vmax.xlane.f32.xlu0 %v5918
  %v5920 = vpop.xlane.xlu0 %5919
  %v5921 = vsel %vm805, %v5440, -inf
  %5922 = vmax.xlane.f32.xlu0 %v5921
  %v5923 = vpop.xlane.xlu0 %5922
  %v5924 = vsel %vm815, %v5443, -inf
  %5925 = vmax.xlane.f32.xlu0 %v5924
  %v5926 = vpop.xlane.xlu0 %5925
  %v5927 = vsel %vm805, %v5499, -inf
  %5928 = vmax.xlane.f32.xlu0 %v5927
  %v5929 = vpop.xlane.xlu0 %5928
  %v5930 = vsel %vm805, %v5502, -inf
  %5931 = vmax.xlane.f32.xlu0 %v5930
  %v5932 = vpop.xlane.xlu0 %5931
  %v5933 = vsel %vm805, %v5507, -inf
  %5934 = vmax.xlane.f32.xlu0 %v5933
  %v5935 = vpop.xlane.xlu0 %5934
  %v5936 = vsel %vm815, %v5510, -inf
  %5937 = vmax.xlane.f32.xlu0 %v5936
  %v5938 = vpop.xlane.xlu0 %5937
  %v5939 = vsel %vm805, %v5566, -inf
  %5940 = vmax.xlane.f32.xlu0 %v5939
  %v5941 = vpop.xlane.xlu0 %5940
  %v5942 = vsel %vm805, %v5569, -inf
  %5943 = vmax.xlane.f32.xlu0 %v5942
  %v5944 = vpop.xlane.xlu0 %5943
  %v5945 = vsel %vm805, %v5574, -inf
  %5946 = vmax.xlane.f32.xlu0 %v5945
  %v5947 = vpop.xlane.xlu0 %5946
  %v5948 = vsel %vm815, %v5577, -inf
  %5949 = vmax.xlane.f32.xlu0 %v5948
  %v5950 = vpop.xlane.xlu0 %5949
  %v5951 = vsel %vm805, %v5633, -inf
  %5952 = vmax.xlane.f32.xlu0 %v5951
  %v5953 = vpop.xlane.xlu0 %5952
  %v5954 = vsel %vm805, %v5636, -inf
  %5955 = vmax.xlane.f32.xlu0 %v5954
  %v5956 = vpop.xlane.xlu0 %5955
  %v5957 = vsel %vm805, %v5641, -inf
  %5958 = vmax.xlane.f32.xlu0 %v5957
  %v5959 = vpop.xlane.xlu0 %5958
  %v5960 = vsel %vm815, %v5644, -inf
  %5961 = vmax.xlane.f32.xlu0 %v5960
  %v5962 = vpop.xlane.xlu0 %5961
  %v5963 = vsel %vm805, %v5700, -inf
  %5964 = vmax.xlane.f32.xlu0 %v5963
  %v5965 = vpop.xlane.xlu0 %5964
  %v5966 = vsel %vm805, %v5703, -inf
  %5967 = vmax.xlane.f32.xlu0 %v5966
  %v5968 = vpop.xlane.xlu0 %5967
  %v5969 = vsel %vm805, %v5708, -inf
  %5970 = vmax.xlane.f32.xlu0 %v5969
  %v5971 = vpop.xlane.xlu0 %5970
  %v5972 = vsel %vm815, %v5711, -inf
  %5973 = vmax.xlane.f32.xlu0 %v5972
  %v5974 = vpop.xlane.xlu0 %5973
  %v5975 = vsel %vm805, %v5767, -inf
  %5976 = vmax.xlane.f32.xlu0 %v5975
  %v5977 = vpop.xlane.xlu0 %5976
  %v5978 = vsel %vm805, %v5770, -inf
  %5979 = vmax.xlane.f32.xlu0 %v5978
  %v5980 = vpop.xlane.xlu0 %5979
  %v5981 = vsel %vm805, %v5775, -inf
  %5982 = vmax.xlane.f32.xlu0 %v5981
  %v5983 = vpop.xlane.xlu0 %5982
  %v5984 = vsel %vm815, %v5778, -inf
  %5985 = vmax.xlane.f32.xlu0 %v5984
  %v5986 = vpop.xlane.xlu0 %5985
  %v5987 = vsel %vm805, %v5834, -inf
  %5988 = vmax.xlane.f32.xlu0 %v5987
  %v5989 = vpop.xlane.xlu0 %5988
  %v5990 = vsel %vm805, %v5837, -inf
  %5991 = vmax.xlane.f32.xlu0 %v5990
  %v5992 = vpop.xlane.xlu0 %5991
  %v5993 = vsel %vm805, %v5842, -inf
  %5994 = vmax.xlane.f32.xlu0 %v5993
  %v5995 = vpop.xlane.xlu0 %5994
  %v5996 = vsel %vm815, %v5845, -inf
  %5997 = vmax.xlane.f32.xlu0 %v5996
  %v5998 = vpop.xlane.xlu0 %5997
  %v5999 = vsel %vm805, %v5901, -inf
  %6000 = vmax.xlane.f32.xlu0 %v5999
  %v6001 = vpop.xlane.xlu0 %6000
  %v6002 = vsel %vm805, %v5904, -inf
  %6003 = vmax.xlane.f32.xlu0 %v6002
  %v6004 = vpop.xlane.xlu0 %6003
  %v6005 = vsel %vm805, %v5909, -inf
  %6006 = vmax.xlane.f32.xlu0 %v6005
  %v6007 = vpop.xlane.xlu0 %6006
  %v6008 = vsel %vm815, %v5912, -inf
  %6009 = vmax.xlane.f32.xlu0 %v6008
  %v6010 = vpop.xlane.xlu0 %6009
  %v6011 = vsub.f32 %v5432, %v5917
  %v6012 = vsub.f32 %v5435, %v5920
  %v6013 = vsub.f32 %v5440, %v5923
  %v6014 = vsub.f32 %v5443, %v5926
  %v6015 = vsub.f32 %v5499, %v5929
  %v6016 = vsub.f32 %v5502, %v5932
  %v6017 = vsub.f32 %v5507, %v5935
  %v6018 = vsub.f32 %v5510, %v5938
  %v6019 = vsub.f32 %v5566, %v5941
  %v6020 = vsub.f32 %v5569, %v5944
  %v6021 = vsub.f32 %v5574, %v5947
  %v6022 = vsub.f32 %v5577, %v5950
  %v6023 = vsub.f32 %v5633, %v5953
  %v6024 = vsub.f32 %v5636, %v5956
  %v6025 = vsub.f32 %v5641, %v5959
  %v6026 = vsub.f32 %v5644, %v5962
  %v6027 = vsub.f32 %v5700, %v5965
  %v6028 = vsub.f32 %v5703, %v5968
  %v6029 = vsub.f32 %v5708, %v5971
  %v6030 = vsub.f32 %v5711, %v5974
  %v6031 = vsub.f32 %v5767, %v5977
  %v6032 = vsub.f32 %v5770, %v5980
  %v6033 = vsub.f32 %v5775, %v5983
  %v6034 = vsub.f32 %v5778, %v5986
  %v6035 = vsub.f32 %v5834, %v5989
  %v6036 = vsub.f32 %v5837, %v5992
  %v6037 = vsub.f32 %v5842, %v5995
  %v6038 = vsub.f32 %v5845, %v5998
  %v6039 = vsub.f32 %v5901, %v6001
  %v6040 = vsub.f32 %v5904, %v6004
  %v6041 = vsub.f32 %v5909, %v6007
  %v6042 = vsub.f32 %v5912, %v6010
  %v6043 = vmul.f32 %v6011, 1.442695
  %v6044 = vpow.pop %v6043
  %v6045 = vmul.f32 %v6012, 1.442695
  %v6046 = vpow.pop %v6045
  %v6047 = vmul.f32 %v6013, 1.442695
  %v6048 = vpow.pop %v6047
  %v6049 = vmul.f32 %v6014, 1.442695
  %v6050 = vpow.pop %v6049
  %v6051 = vmul.f32 %v6015, 1.442695
  %v6052 = vpow.pop %v6051
  %v6053 = vmul.f32 %v6016, 1.442695
  %v6054 = vpow.pop %v6053
  %v6055 = vmul.f32 %v6017, 1.442695
  %v6056 = vpow.pop %v6055
  %v6057 = vmul.f32 %v6018, 1.442695
  %v6058 = vpow.pop %v6057
  %v6059 = vmul.f32 %v6019, 1.442695
  %v6060 = vpow.pop %v6059
  %v6061 = vmul.f32 %v6020, 1.442695
  %v6062 = vpow.pop %v6061
  %v6063 = vmul.f32 %v6021, 1.442695
  %v6064 = vpow.pop %v6063
  %v6065 = vmul.f32 %v6022, 1.442695
  %v6066 = vpow.pop %v6065
  %v6067 = vmul.f32 %v6023, 1.442695
  %v6068 = vpow.pop %v6067
  %v6069 = vmul.f32 %v6024, 1.442695
  %v6070 = vpow.pop %v6069
  %v6071 = vmul.f32 %v6025, 1.442695
  %v6072 = vpow.pop %v6071
  %v6073 = vmul.f32 %v6026, 1.442695
  %v6074 = vpow.pop %v6073
  %v6075 = vmul.f32 %v6027, 1.442695
  %v6076 = vpow.pop %v6075
  %v6077 = vmul.f32 %v6028, 1.442695
  %v6078 = vpow.pop %v6077
  %v6079 = vmul.f32 %v6029, 1.442695
  %v6080 = vpow.pop %v6079
  %v6081 = vmul.f32 %v6030, 1.442695
  %v6082 = vpow.pop %v6081
  %v6083 = vmul.f32 %v6031, 1.442695
  %v6084 = vpow.pop %v6083
  %v6085 = vmul.f32 %v6032, 1.442695
  %v6086 = vpow.pop %v6085
  %v6087 = vmul.f32 %v6033, 1.442695
  %v6088 = vpow.pop %v6087
  %v6089 = vmul.f32 %v6034, 1.442695
  %v6090 = vpow.pop %v6089
  %v6091 = vmul.f32 %v6035, 1.442695
  %v6092 = vpow.pop %v6091
  %v6093 = vmul.f32 %v6036, 1.442695
  %v6094 = vpow.pop %v6093
  %v6095 = vmul.f32 %v6037, 1.442695
  %v6096 = vpow.pop %v6095
  %v6097 = vmul.f32 %v6038, 1.442695
  %v6098 = vpow.pop %v6097
  %v6099 = vmul.f32 %v6039, 1.442695
  %v6100 = vpow.pop %v6099
  %v6101 = vmul.f32 %v6040, 1.442695
  %v6102 = vpow.pop %v6101
  %v6103 = vmul.f32 %v6041, 1.442695
  %v6104 = vpow.pop %v6103
  %v6105 = vmul.f32 %v6042, 1.442695
  %v6106 = vpow.pop %v6105
  %v6107 = vsel %vm805, %v6044, 0.0
  %6108 = vadd.xlane.f32.xlu0 %v6107
  %v6109 = vpop.xlane.xlu0 %6108
  %v6110 = vsel %vm805, %v6046, 0.0
  %6111 = vadd.xlane.f32.xlu0 %v6110
  %v6112 = vpop.xlane.xlu0 %6111
  %v6113 = vsel %vm805, %v6048, 0.0
  %6114 = vadd.xlane.f32.xlu0 %v6113
  %v6115 = vpop.xlane.xlu0 %6114
  %v6116 = vsel %vm815, %v6050, 0.0
  %6117 = vadd.xlane.f32.xlu0 %v6116
  %v6118 = vpop.xlane.xlu0 %6117
  %v6119 = vsel %vm805, %v6052, 0.0
  %6120 = vadd.xlane.f32.xlu0 %v6119
  %v6121 = vpop.xlane.xlu0 %6120
  %v6122 = vsel %vm805, %v6054, 0.0
  %6123 = vadd.xlane.f32.xlu0 %v6122
  %v6124 = vpop.xlane.xlu0 %6123
  %v6125 = vsel %vm805, %v6056, 0.0
  %6126 = vadd.xlane.f32.xlu0 %v6125
  %v6127 = vpop.xlane.xlu0 %6126
  %v6128 = vsel %vm815, %v6058, 0.0
  %6129 = vadd.xlane.f32.xlu0 %v6128
  %v6130 = vpop.xlane.xlu0 %6129
  %v6131 = vsel %vm805, %v6060, 0.0
  %6132 = vadd.xlane.f32.xlu0 %v6131
  %v6133 = vpop.xlane.xlu0 %6132
  %v6134 = vsel %vm805, %v6062, 0.0
  %6135 = vadd.xlane.f32.xlu0 %v6134
  %v6136 = vpop.xlane.xlu0 %6135
  %v6137 = vsel %vm805, %v6064, 0.0
  %6138 = vadd.xlane.f32.xlu0 %v6137
  %v6139 = vpop.xlane.xlu0 %6138
  %v6140 = vsel %vm815, %v6066, 0.0
  %6141 = vadd.xlane.f32.xlu0 %v6140
  %v6142 = vpop.xlane.xlu0 %6141
  %v6143 = vsel %vm805, %v6068, 0.0
  %6144 = vadd.xlane.f32.xlu0 %v6143
  %v6145 = vpop.xlane.xlu0 %6144
  %v6146 = vsel %vm805, %v6070, 0.0
  %6147 = vadd.xlane.f32.xlu0 %v6146
  %v6148 = vpop.xlane.xlu0 %6147
  %v6149 = vsel %vm805, %v6072, 0.0
  %6150 = vadd.xlane.f32.xlu0 %v6149
  %v6151 = vpop.xlane.xlu0 %6150
  %v6152 = vsel %vm815, %v6074, 0.0
  %6153 = vadd.xlane.f32.xlu0 %v6152
  %v6154 = vpop.xlane.xlu0 %6153
  %v6155 = vsel %vm805, %v6076, 0.0
  %6156 = vadd.xlane.f32.xlu0 %v6155
  %v6157 = vpop.xlane.xlu0 %6156
  %v6158 = vsel %vm805, %v6078, 0.0
  %6159 = vadd.xlane.f32.xlu0 %v6158
  %v6160 = vpop.xlane.xlu0 %6159
  %v6161 = vsel %vm805, %v6080, 0.0
  %6162 = vadd.xlane.f32.xlu0 %v6161
  %v6163 = vpop.xlane.xlu0 %6162
  %v6164 = vsel %vm815, %v6082, 0.0
  %6165 = vadd.xlane.f32.xlu0 %v6164
  %v6166 = vpop.xlane.xlu0 %6165
  %v6167 = vsel %vm805, %v6084, 0.0
  %6168 = vadd.xlane.f32.xlu0 %v6167
  %v6169 = vpop.xlane.xlu0 %6168
  %v6170 = vsel %vm805, %v6086, 0.0
  %6171 = vadd.xlane.f32.xlu0 %v6170
  %v6172 = vpop.xlane.xlu0 %6171
  %v6173 = vsel %vm805, %v6088, 0.0
  %6174 = vadd.xlane.f32.xlu0 %v6173
  %v6175 = vpop.xlane.xlu0 %6174
  %v6176 = vsel %vm815, %v6090, 0.0
  %6177 = vadd.xlane.f32.xlu0 %v6176
  %v6178 = vpop.xlane.xlu0 %6177
  %v6179 = vsel %vm805, %v6092, 0.0
  %6180 = vadd.xlane.f32.xlu0 %v6179
  %v6181 = vpop.xlane.xlu0 %6180
  %v6182 = vsel %vm805, %v6094, 0.0
  %6183 = vadd.xlane.f32.xlu0 %v6182
  %v6184 = vpop.xlane.xlu0 %6183
  %v6185 = vsel %vm805, %v6096, 0.0
  %6186 = vadd.xlane.f32.xlu0 %v6185
  %v6187 = vpop.xlane.xlu0 %6186
  %v6188 = vsel %vm815, %v6098, 0.0
  %6189 = vadd.xlane.f32.xlu0 %v6188
  %v6190 = vpop.xlane.xlu0 %6189
  %v6191 = vsel %vm805, %v6100, 0.0
  %6192 = vadd.xlane.f32.xlu0 %v6191
  %v6193 = vpop.xlane.xlu0 %6192
  %v6194 = vsel %vm805, %v6102, 0.0
  %6195 = vadd.xlane.f32.xlu0 %v6194
  %v6196 = vpop.xlane.xlu0 %6195
  %v6197 = vsel %vm805, %v6104, 0.0
  %6198 = vadd.xlane.f32.xlu0 %v6197
  %v6199 = vpop.xlane.xlu0 %6198
  %v6200 = vsel %vm815, %v6106, 0.0
  %6201 = vadd.xlane.f32.xlu0 %v6200
  %v6202 = vpop.xlane.xlu0 %6201
  %v6203 = vrcp.pop %v6109
  %v6204 = vrcp.pop %v6112
  %v6205 = vrcp.pop %v6115
  %v6206 = vrcp.pop %v6118
  %v6207 = vrcp.pop %v6121
  %v6208 = vrcp.pop %v6124
  %v6209 = vrcp.pop %v6127
  %v6210 = vrcp.pop %v6130
  %v6211 = vrcp.pop %v6133
  %v6212 = vrcp.pop %v6136
  %v6213 = vrcp.pop %v6139
  %v6214 = vrcp.pop %v6142
  %v6215 = vrcp.pop %v6145
  %v6216 = vrcp.pop %v6148
  %v6217 = vrcp.pop %v6151
  %v6218 = vrcp.pop %v6154
  %v6219 = vrcp.pop %v6157
  %v6220 = vrcp.pop %v6160
  %v6221 = vrcp.pop %v6163
  %v6222 = vrcp.pop %v6166
  %v6223 = vrcp.pop %v6169
  %v6224 = vrcp.pop %v6172
  %v6225 = vrcp.pop %v6175
  %v6226 = vrcp.pop %v6178
  %v6227 = vrcp.pop %v6181
  %v6228 = vrcp.pop %v6184
  %v6229 = vrcp.pop %v6187
  %v6230 = vrcp.pop %v6190
  %v6231 = vrcp.pop %v6193
  %v6232 = vrcp.pop %v6196
  %v6233 = vrcp.pop %v6199
  %v6234 = vrcp.pop %v6202
  %v6235 = vmul.f32 %v6044, %v6203
  %v6236 = vmul.f32 %v6046, %v6204
  %v6237 = vmul.f32 %v6048, %v6205
  %v6238 = vmul.f32 %v6050, %v6206
  %v6239 = vmul.f32 %v6052, %v6207
  %v6240 = vmul.f32 %v6054, %v6208
  %v6241 = vmul.f32 %v6056, %v6209
  %v6242 = vmul.f32 %v6058, %v6210
  %v6243 = vmul.f32 %v6060, %v6211
  %v6244 = vmul.f32 %v6062, %v6212
  %v6245 = vmul.f32 %v6064, %v6213
  %v6246 = vmul.f32 %v6066, %v6214
  %v6247 = vmul.f32 %v6068, %v6215
  %v6248 = vmul.f32 %v6070, %v6216
  %v6249 = vmul.f32 %v6072, %v6217
  %v6250 = vmul.f32 %v6074, %v6218
  %v6251 = vmul.f32 %v6076, %v6219
  %v6252 = vmul.f32 %v6078, %v6220
  %v6253 = vmul.f32 %v6080, %v6221
  %v6254 = vmul.f32 %v6082, %v6222
  %v6255 = vmul.f32 %v6084, %v6223
  %v6256 = vmul.f32 %v6086, %v6224
  %v6257 = vmul.f32 %v6088, %v6225
  %v6258 = vmul.f32 %v6090, %v6226
  %v6259 = vmul.f32 %v6092, %v6227
  %v6260 = vmul.f32 %v6094, %v6228
  %v6261 = vmul.f32 %v6096, %v6229
  %v6262 = vmul.f32 %v6098, %v6230
  %v6263 = vmul.f32 %v6100, %v6231
  %v6264 = vmul.f32 %v6102, %v6232
  %v6265 = vmul.f32 %v6104, %v6233
  %v6266 = vmul.f32 %v6106, %v6234
  %v6267 = vpack.c.bf16 %v6236, %v6235
  %v6268 = vpack.c.bf16 %v6238, %v6237
  %v6269 = vpack.c.bf16 %v6240, %v6239
  %v6270 = vpack.c.bf16 %v6242, %v6241
  %v6271 = vpack.c.bf16 %v6244, %v6243
  %v6272 = vpack.c.bf16 %v6246, %v6245
  %v6273 = vpack.c.bf16 %v6248, %v6247
  %v6274 = vpack.c.bf16 %v6250, %v6249
  %v6275 = vpack.c.bf16 %v6252, %v6251
  %v6276 = vpack.c.bf16 %v6254, %v6253
  %v6277 = vpack.c.bf16 %v6256, %v6255
  %v6278 = vpack.c.bf16 %v6258, %v6257
  %v6279 = vpack.c.bf16 %v6260, %v6259
  %v6280 = vpack.c.bf16 %v6262, %v6261
  %v6281 = vpack.c.bf16 %v6264, %v6263
  %v6282 = vpack.c.bf16 %v6266, %v6265
  %6283 = vrot.lane.b32.xlu0 %v5363, 64
  %v6284 = vpop.permute.xlu0 %6283
  %6285 = vrot.lane.b32.xlu0 %v5364, 64
  %v6286 = vpop.permute.xlu0 %6285
  %v6289 = vsel %vm805, %v6267, 0
  %v6292 = vsel %vm805, %v6268, 0
  %v6295 = vsel %vm1186, %v6286, 0
  %6297 = vmatprep.subr.bf16.mxu0 0
  %6298 = vmatpush1.bf16.msra.mxu0 0
  %6299 = vmatprep.subr.bf16.mxu0 0
  %6300 = vmatpush1.bf16.msra.mxu0 0
  %6301 = vmatprep.subr.bf16.mxu0 0
  %6302 = vmatpush1.bf16.msra.mxu0 0
  %6303 = vmatprep.subr.bf16.mxu0 0
  %6304 = vmatpush1.bf16.msra.mxu0 0
  %6305 = vmatprep.subr.bf16.mxu0 0
  %6306 = vmatpush1.bf16.msra.mxu0 0
  %6307 = vmatprep.subr.bf16.mxu0 0
  %6308 = vmatpush1.bf16.msra.mxu0 0
  %6309 = vmatprep.subr.bf16.mxu0 0
  %6310 = vmatpush1.bf16.msra.mxu0 %v6295
  %6311 = vmatprep.subr.bf16.mxu0 0
  %6312 = vmatpush1.bf16.msra.mxu0 %v6284
  %6313 = vmatprep.subr.bf16.mxu0 0
  %6314 = vmatpush2.bf16.msra.mxu0 0
  %6315 = vmatprep.subr.bf16.mxu0 0
  %6316 = vmatpush2.bf16.msra.mxu0 0
  %6317 = vmatprep.subr.bf16.mxu0 0
  %6318 = vmatpush2.bf16.msra.mxu0 0
  %6319 = vmatprep.subr.bf16.mxu0 0
  %6320 = vmatpush2.bf16.msra.mxu0 0
  %6321 = vmatprep.subr.bf16.mxu0 0
  %6322 = vmatpush2.bf16.msra.mxu0 0
  %6323 = vmatprep.subr.bf16.mxu0 0
  %6324 = vmatpush2.bf16.msra.mxu0 0
  %6325 = vmatprep.subr.bf16.mxu0 0
  %6326 = vmatpush2.bf16.msra.mxu0 0
  %6327 = vmatprep.subr.bf16.mxu0 0
  %6328 = vmatpush2.bf16.msra.mxu0 0
  %6329 = vmatprep.mubr.bf16.mxu0 0
  %6330 = vmatmul.mubr.bf16.gmra.mxu0 %v6289
  %v6331 = vpop.f32.mrf.mxu0
  %v6332 = vadd.f32 0.0, %v6331
  %v6333 = vpop.f32.mrf.mxu0
  %v6334 = vpop.f32.mrf.mxu0
  %v6335 = vadd.f32 0.0, %v6334
  %v6336 = vpop.f32.mrf.mxu0
  %6337 = vmatprep.mubr.bf16.mxu0 0
  %6338 = vmatmul.mubr.bf16.gmra.mxu0 %v6292
  %v6339 = vpop.f32.mrf.mxu0
  %v6340 = vadd.f32 0.0, %v6339
  %v6341 = vpop.f32.mrf.mxu0
  %v6342 = vpop.f32.mrf.mxu0
  %v6343 = vadd.f32 0.0, %v6342
  %v6344 = vpop.f32.mrf.mxu0
  %6345 = vdwg.mxu0
  %6346 = vrot.lane.b32.xlu0 %v5365, 64
  %v6347 = vpop.permute.xlu0 %6346
  %6348 = vrot.lane.b32.xlu0 %v5366, 64
  %v6349 = vpop.permute.xlu0 %6348
  %v6352 = vsel %vm805, %v6269, 0
  %v6355 = vsel %vm805, %v6270, 0
  %v6358 = vsel %vm1186, %v6349, 0
  %6360 = vmatprep.subr.bf16.mxu0 0
  %6361 = vmatpush1.bf16.msra.mxu0 0
  %6362 = vmatprep.subr.bf16.mxu0 0
  %6363 = vmatpush1.bf16.msra.mxu0 0
  %6364 = vmatprep.subr.bf16.mxu0 0
  %6365 = vmatpush1.bf16.msra.mxu0 0
  %6366 = vmatprep.subr.bf16.mxu0 0
  %6367 = vmatpush1.bf16.msra.mxu0 0
  %6368 = vmatprep.subr.bf16.mxu0 0
  %6369 = vmatpush1.bf16.msra.mxu0 0
  %6370 = vmatprep.subr.bf16.mxu0 0
  %6371 = vmatpush1.bf16.msra.mxu0 0
  %6372 = vmatprep.subr.bf16.mxu0 0
  %6373 = vmatpush1.bf16.msra.mxu0 %v6358
  %6374 = vmatprep.subr.bf16.mxu0 0
  %6375 = vmatpush1.bf16.msra.mxu0 %v6347
  %6376 = vmatprep.subr.bf16.mxu0 0
  %6377 = vmatpush2.bf16.msra.mxu0 0
  %6378 = vmatprep.subr.bf16.mxu0 0
  %6379 = vmatpush2.bf16.msra.mxu0 0
  %6380 = vmatprep.subr.bf16.mxu0 0
  %6381 = vmatpush2.bf16.msra.mxu0 0
  %6382 = vmatprep.subr.bf16.mxu0 0
  %6383 = vmatpush2.bf16.msra.mxu0 0
  %6384 = vmatprep.subr.bf16.mxu0 0
  %6385 = vmatpush2.bf16.msra.mxu0 0
  %6386 = vmatprep.subr.bf16.mxu0 0
  %6387 = vmatpush2.bf16.msra.mxu0 0
  %6388 = vmatprep.subr.bf16.mxu0 0
  %6389 = vmatpush2.bf16.msra.mxu0 0
  %6390 = vmatprep.subr.bf16.mxu0 0
  %6391 = vmatpush2.bf16.msra.mxu0 0
  %6392 = vmatprep.mubr.bf16.mxu0 0
  %6393 = vmatmul.mubr.bf16.gmra.mxu0 %v6352
  %v6394 = vpop.f32.mrf.mxu0
  %v6395 = vadd.f32 0.0, %v6394
  %v6396 = vpop.f32.mrf.mxu0
  %v6397 = vpop.f32.mrf.mxu0
  %v6398 = vadd.f32 0.0, %v6397
  %v6399 = vpop.f32.mrf.mxu0
  %6400 = vmatprep.mubr.bf16.mxu0 0
  %6401 = vmatmul.mubr.bf16.gmra.mxu0 %v6355
  %v6402 = vpop.f32.mrf.mxu0
  %v6403 = vadd.f32 0.0, %v6402
  %v6404 = vpop.f32.mrf.mxu0
  %v6405 = vpop.f32.mrf.mxu0
  %v6406 = vadd.f32 0.0, %v6405
  %v6407 = vpop.f32.mrf.mxu0
  %6408 = vdwg.mxu0
  %6409 = vrot.lane.b32.xlu0 %v5367, 64
  %v6410 = vpop.permute.xlu0 %6409
  %6411 = vrot.lane.b32.xlu0 %v5368, 64
  %v6412 = vpop.permute.xlu0 %6411
  %v6415 = vsel %vm805, %v6271, 0
  %v6418 = vsel %vm805, %v6272, 0
  %v6421 = vsel %vm1186, %v6412, 0
  %6423 = vmatprep.subr.bf16.mxu0 0
  %6424 = vmatpush1.bf16.msra.mxu0 0
  %6425 = vmatprep.subr.bf16.mxu0 0
  %6426 = vmatpush1.bf16.msra.mxu0 0
  %6427 = vmatprep.subr.bf16.mxu0 0
  %6428 = vmatpush1.bf16.msra.mxu0 0
  %6429 = vmatprep.subr.bf16.mxu0 0
  %6430 = vmatpush1.bf16.msra.mxu0 0
  %6431 = vmatprep.subr.bf16.mxu0 0
  %6432 = vmatpush1.bf16.msra.mxu0 0
  %6433 = vmatprep.subr.bf16.mxu0 0
  %6434 = vmatpush1.bf16.msra.mxu0 0
  %6435 = vmatprep.subr.bf16.mxu0 0
  %6436 = vmatpush1.bf16.msra.mxu0 %v6421
  %6437 = vmatprep.subr.bf16.mxu0 0
  %6438 = vmatpush1.bf16.msra.mxu0 %v6410
  %6439 = vmatprep.subr.bf16.mxu0 0
  %6440 = vmatpush2.bf16.msra.mxu0 0
  %6441 = vmatprep.subr.bf16.mxu0 0
  %6442 = vmatpush2.bf16.msra.mxu0 0
  %6443 = vmatprep.subr.bf16.mxu0 0
  %6444 = vmatpush2.bf16.msra.mxu0 0
  %6445 = vmatprep.subr.bf16.mxu0 0
  %6446 = vmatpush2.bf16.msra.mxu0 0
  %6447 = vmatprep.subr.bf16.mxu0 0
  %6448 = vmatpush2.bf16.msra.mxu0 0
  %6449 = vmatprep.subr.bf16.mxu0 0
  %6450 = vmatpush2.bf16.msra.mxu0 0
  %6451 = vmatprep.subr.bf16.mxu0 0
  %6452 = vmatpush2.bf16.msra.mxu0 0
  %6453 = vmatprep.subr.bf16.mxu0 0
  %6454 = vmatpush2.bf16.msra.mxu0 0
  %6455 = vmatprep.mubr.bf16.mxu0 0
  %6456 = vmatmul.mubr.bf16.gmra.mxu0 %v6415
  %v6457 = vpop.f32.mrf.mxu0
  %v6458 = vadd.f32 0.0, %v6457
  %v6459 = vpop.f32.mrf.mxu0
  %v6460 = vpop.f32.mrf.mxu0
  %v6461 = vadd.f32 0.0, %v6460
  %v6462 = vpop.f32.mrf.mxu0
  %6463 = vmatprep.mubr.bf16.mxu0 0
  %6464 = vmatmul.mubr.bf16.gmra.mxu0 %v6418
  %v6465 = vpop.f32.mrf.mxu0
  %v6466 = vadd.f32 0.0, %v6465
  %v6467 = vpop.f32.mrf.mxu0
  %v6468 = vpop.f32.mrf.mxu0
  %v6469 = vadd.f32 0.0, %v6468
  %v6470 = vpop.f32.mrf.mxu0
  %6471 = vdwg.mxu0
  %6472 = vrot.lane.b32.xlu0 %v5369, 64
  %v6473 = vpop.permute.xlu0 %6472
  %6474 = vrot.lane.b32.xlu0 %v5370, 64
  %v6475 = vpop.permute.xlu0 %6474
  %v6478 = vsel %vm805, %v6273, 0
  %v6481 = vsel %vm805, %v6274, 0
  %v6484 = vsel %vm1186, %v6475, 0
  %6486 = vmatprep.subr.bf16.mxu0 0
  %6487 = vmatpush1.bf16.msra.mxu0 0
  %6488 = vmatprep.subr.bf16.mxu0 0
  %6489 = vmatpush1.bf16.msra.mxu0 0
  %6490 = vmatprep.subr.bf16.mxu0 0
  %6491 = vmatpush1.bf16.msra.mxu0 0
  %6492 = vmatprep.subr.bf16.mxu0 0
  %6493 = vmatpush1.bf16.msra.mxu0 0
  %6494 = vmatprep.subr.bf16.mxu0 0
  %6495 = vmatpush1.bf16.msra.mxu0 0
  %6496 = vmatprep.subr.bf16.mxu0 0
  %6497 = vmatpush1.bf16.msra.mxu0 0
  %6498 = vmatprep.subr.bf16.mxu0 0
  %6499 = vmatpush1.bf16.msra.mxu0 %v6484
  %6500 = vmatprep.subr.bf16.mxu0 0
  %6501 = vmatpush1.bf16.msra.mxu0 %v6473
  %6502 = vmatprep.subr.bf16.mxu0 0
  %6503 = vmatpush2.bf16.msra.mxu0 0
  %6504 = vmatprep.subr.bf16.mxu0 0
  %6505 = vmatpush2.bf16.msra.mxu0 0
  %6506 = vmatprep.subr.bf16.mxu0 0
  %6507 = vmatpush2.bf16.msra.mxu0 0
  %6508 = vmatprep.subr.bf16.mxu0 0
  %6509 = vmatpush2.bf16.msra.mxu0 0
  %6510 = vmatprep.subr.bf16.mxu0 0
  %6511 = vmatpush2.bf16.msra.mxu0 0
  %6512 = vmatprep.subr.bf16.mxu0 0
  %6513 = vmatpush2.bf16.msra.mxu0 0
  %6514 = vmatprep.subr.bf16.mxu0 0
  %6515 = vmatpush2.bf16.msra.mxu0 0
  %6516 = vmatprep.subr.bf16.mxu0 0
  %6517 = vmatpush2.bf16.msra.mxu0 0
  %6518 = vmatprep.mubr.bf16.mxu0 0
  %6519 = vmatmul.mubr.bf16.gmra.mxu0 %v6478
  %v6520 = vpop.f32.mrf.mxu0
  %v6521 = vadd.f32 0.0, %v6520
  %v6522 = vpop.f32.mrf.mxu0
  %v6523 = vpop.f32.mrf.mxu0
  %v6524 = vadd.f32 0.0, %v6523
  %v6525 = vpop.f32.mrf.mxu0
  %6526 = vmatprep.mubr.bf16.mxu0 0
  %6527 = vmatmul.mubr.bf16.gmra.mxu0 %v6481
  %v6528 = vpop.f32.mrf.mxu0
  %v6529 = vadd.f32 0.0, %v6528
  %v6530 = vpop.f32.mrf.mxu0
  %v6531 = vpop.f32.mrf.mxu0
  %v6532 = vadd.f32 0.0, %v6531
  %v6533 = vpop.f32.mrf.mxu0
  %6534 = vdwg.mxu0
  %6535 = vrot.lane.b32.xlu0 %v5371, 64
  %v6536 = vpop.permute.xlu0 %6535
  %6537 = vrot.lane.b32.xlu0 %v5372, 64
  %v6538 = vpop.permute.xlu0 %6537
  %v6541 = vsel %vm805, %v6275, 0
  %v6544 = vsel %vm805, %v6276, 0
  %v6547 = vsel %vm1186, %v6538, 0
  %6549 = vmatprep.subr.bf16.mxu0 0
  %6550 = vmatpush1.bf16.msra.mxu0 0
  %6551 = vmatprep.subr.bf16.mxu0 0
  %6552 = vmatpush1.bf16.msra.mxu0 0
  %6553 = vmatprep.subr.bf16.mxu0 0
  %6554 = vmatpush1.bf16.msra.mxu0 0
  %6555 = vmatprep.subr.bf16.mxu0 0
  %6556 = vmatpush1.bf16.msra.mxu0 0
  %6557 = vmatprep.subr.bf16.mxu0 0
  %6558 = vmatpush1.bf16.msra.mxu0 0
  %6559 = vmatprep.subr.bf16.mxu0 0
  %6560 = vmatpush1.bf16.msra.mxu0 0
  %6561 = vmatprep.subr.bf16.mxu0 0
  %6562 = vmatpush1.bf16.msra.mxu0 %v6547
  %6563 = vmatprep.subr.bf16.mxu0 0
  %6564 = vmatpush1.bf16.msra.mxu0 %v6536
  %6565 = vmatprep.subr.bf16.mxu0 0
  %6566 = vmatpush2.bf16.msra.mxu0 0
  %6567 = vmatprep.subr.bf16.mxu0 0
  %6568 = vmatpush2.bf16.msra.mxu0 0
  %6569 = vmatprep.subr.bf16.mxu0 0
  %6570 = vmatpush2.bf16.msra.mxu0 0
  %6571 = vmatprep.subr.bf16.mxu0 0
  %6572 = vmatpush2.bf16.msra.mxu0 0
  %6573 = vmatprep.subr.bf16.mxu0 0
  %6574 = vmatpush2.bf16.msra.mxu0 0
  %6575 = vmatprep.subr.bf16.mxu0 0
  %6576 = vmatpush2.bf16.msra.mxu0 0
  %6577 = vmatprep.subr.bf16.mxu0 0
  %6578 = vmatpush2.bf16.msra.mxu0 0
  %6579 = vmatprep.subr.bf16.mxu0 0
  %6580 = vmatpush2.bf16.msra.mxu0 0
  %6581 = vmatprep.mubr.bf16.mxu0 0
  %6582 = vmatmul.mubr.bf16.gmra.mxu0 %v6541
  %v6583 = vpop.f32.mrf.mxu0
  %v6584 = vadd.f32 0.0, %v6583
  %v6585 = vpop.f32.mrf.mxu0
  %v6586 = vpop.f32.mrf.mxu0
  %v6587 = vadd.f32 0.0, %v6586
  %v6588 = vpop.f32.mrf.mxu0
  %6589 = vmatprep.mubr.bf16.mxu0 0
  %6590 = vmatmul.mubr.bf16.gmra.mxu0 %v6544
  %v6591 = vpop.f32.mrf.mxu0
  %v6592 = vadd.f32 0.0, %v6591
  %v6593 = vpop.f32.mrf.mxu0
  %v6594 = vpop.f32.mrf.mxu0
  %v6595 = vadd.f32 0.0, %v6594
  %v6596 = vpop.f32.mrf.mxu0
  %6597 = vdwg.mxu0
  %6598 = vrot.lane.b32.xlu0 %v5373, 64
  %v6599 = vpop.permute.xlu0 %6598
  %6600 = vrot.lane.b32.xlu0 %v5374, 64
  %v6601 = vpop.permute.xlu0 %6600
  %v6604 = vsel %vm805, %v6277, 0
  %v6607 = vsel %vm805, %v6278, 0
  %v6610 = vsel %vm1186, %v6601, 0
  %6612 = vmatprep.subr.bf16.mxu0 0
  %6613 = vmatpush1.bf16.msra.mxu0 0
  %6614 = vmatprep.subr.bf16.mxu0 0
  %6615 = vmatpush1.bf16.msra.mxu0 0
  %6616 = vmatprep.subr.bf16.mxu0 0
  %6617 = vmatpush1.bf16.msra.mxu0 0
  %6618 = vmatprep.subr.bf16.mxu0 0
  %6619 = vmatpush1.bf16.msra.mxu0 0
  %6620 = vmatprep.subr.bf16.mxu0 0
  %6621 = vmatpush1.bf16.msra.mxu0 0
  %6622 = vmatprep.subr.bf16.mxu0 0
  %6623 = vmatpush1.bf16.msra.mxu0 0
  %6624 = vmatprep.subr.bf16.mxu0 0
  %6625 = vmatpush1.bf16.msra.mxu0 %v6610
  %6626 = vmatprep.subr.bf16.mxu0 0
  %6627 = vmatpush1.bf16.msra.mxu0 %v6599
  %6628 = vmatprep.subr.bf16.mxu0 0
  %6629 = vmatpush2.bf16.msra.mxu0 0
  %6630 = vmatprep.subr.bf16.mxu0 0
  %6631 = vmatpush2.bf16.msra.mxu0 0
  %6632 = vmatprep.subr.bf16.mxu0 0
  %6633 = vmatpush2.bf16.msra.mxu0 0
  %6634 = vmatprep.subr.bf16.mxu0 0
  %6635 = vmatpush2.bf16.msra.mxu0 0
  %6636 = vmatprep.subr.bf16.mxu0 0
  %6637 = vmatpush2.bf16.msra.mxu0 0
  %6638 = vmatprep.subr.bf16.mxu0 0
  %6639 = vmatpush2.bf16.msra.mxu0 0
  %6640 = vmatprep.subr.bf16.mxu0 0
  %6641 = vmatpush2.bf16.msra.mxu0 0
  %6642 = vmatprep.subr.bf16.mxu0 0
  %6643 = vmatpush2.bf16.msra.mxu0 0
  %6644 = vmatprep.mubr.bf16.mxu0 0
  %6645 = vmatmul.mubr.bf16.gmra.mxu0 %v6604
  %v6646 = vpop.f32.mrf.mxu0
  %v6647 = vadd.f32 0.0, %v6646
  %v6648 = vpop.f32.mrf.mxu0
  %v6649 = vpop.f32.mrf.mxu0
  %v6650 = vadd.f32 0.0, %v6649
  %v6651 = vpop.f32.mrf.mxu0
  %6652 = vmatprep.mubr.bf16.mxu0 0
  %6653 = vmatmul.mubr.bf16.gmra.mxu0 %v6607
  %v6654 = vpop.f32.mrf.mxu0
  %v6655 = vadd.f32 0.0, %v6654
  %v6656 = vpop.f32.mrf.mxu0
  %v6657 = vpop.f32.mrf.mxu0
  %v6658 = vadd.f32 0.0, %v6657
  %v6659 = vpop.f32.mrf.mxu0
  %6660 = vdwg.mxu0
  %6661 = vrot.lane.b32.xlu0 %v5375, 64
  %v6662 = vpop.permute.xlu0 %6661
  %6663 = vrot.lane.b32.xlu0 %v5376, 64
  %v6664 = vpop.permute.xlu0 %6663
  %v6667 = vsel %vm805, %v6279, 0
  %v6670 = vsel %vm805, %v6280, 0
  %v6673 = vsel %vm1186, %v6664, 0
  %6675 = vmatprep.subr.bf16.mxu0 0
  %6676 = vmatpush1.bf16.msra.mxu0 0
  %6677 = vmatprep.subr.bf16.mxu0 0
  %6678 = vmatpush1.bf16.msra.mxu0 0
  %6679 = vmatprep.subr.bf16.mxu0 0
  %6680 = vmatpush1.bf16.msra.mxu0 0
  %6681 = vmatprep.subr.bf16.mxu0 0
  %6682 = vmatpush1.bf16.msra.mxu0 0
  %6683 = vmatprep.subr.bf16.mxu0 0
  %6684 = vmatpush1.bf16.msra.mxu0 0
  %6685 = vmatprep.subr.bf16.mxu0 0
  %6686 = vmatpush1.bf16.msra.mxu0 0
  %6687 = vmatprep.subr.bf16.mxu0 0
  %6688 = vmatpush1.bf16.msra.mxu0 %v6673
  %6689 = vmatprep.subr.bf16.mxu0 0
  %6690 = vmatpush1.bf16.msra.mxu0 %v6662
  %6691 = vmatprep.subr.bf16.mxu0 0
  %6692 = vmatpush2.bf16.msra.mxu0 0
  %6693 = vmatprep.subr.bf16.mxu0 0
  %6694 = vmatpush2.bf16.msra.mxu0 0
  %6695 = vmatprep.subr.bf16.mxu0 0
  %6696 = vmatpush2.bf16.msra.mxu0 0
  %6697 = vmatprep.subr.bf16.mxu0 0
  %6698 = vmatpush2.bf16.msra.mxu0 0
  %6699 = vmatprep.subr.bf16.mxu0 0
  %6700 = vmatpush2.bf16.msra.mxu0 0
  %6701 = vmatprep.subr.bf16.mxu0 0
  %6702 = vmatpush2.bf16.msra.mxu0 0
  %6703 = vmatprep.subr.bf16.mxu0 0
  %6704 = vmatpush2.bf16.msra.mxu0 0
  %6705 = vmatprep.subr.bf16.mxu0 0
  %6706 = vmatpush2.bf16.msra.mxu0 0
  %6707 = vmatprep.mubr.bf16.mxu0 0
  %6708 = vmatmul.mubr.bf16.gmra.mxu0 %v6667
  %v6709 = vpop.f32.mrf.mxu0
  %v6710 = vadd.f32 0.0, %v6709
  %v6711 = vpop.f32.mrf.mxu0
  %v6712 = vpop.f32.mrf.mxu0
  %v6713 = vadd.f32 0.0, %v6712
  %v6714 = vpop.f32.mrf.mxu0
  %6715 = vmatprep.mubr.bf16.mxu0 0
  %6716 = vmatmul.mubr.bf16.gmra.mxu0 %v6670
  %v6717 = vpop.f32.mrf.mxu0
  %v6718 = vadd.f32 0.0, %v6717
  %v6719 = vpop.f32.mrf.mxu0
  %v6720 = vpop.f32.mrf.mxu0
  %v6721 = vadd.f32 0.0, %v6720
  %v6722 = vpop.f32.mrf.mxu0
  %6723 = vdwg.mxu0
  %6724 = vrot.lane.b32.xlu0 %v5377, 64
  %v6725 = vpop.permute.xlu0 %6724
  %6726 = vrot.lane.b32.xlu0 %v5378, 64
  %v6727 = vpop.permute.xlu0 %6726
  %v6730 = vsel %vm805, %v6281, 0
  %v6733 = vsel %vm805, %v6282, 0
  %v6736 = vsel %vm1186, %v6727, 0
  %6738 = vmatprep.subr.bf16.mxu0 0
  %6739 = vmatpush1.bf16.msra.mxu0 0
  %6740 = vmatprep.subr.bf16.mxu0 0
  %6741 = vmatpush1.bf16.msra.mxu0 0
  %6742 = vmatprep.subr.bf16.mxu0 0
  %6743 = vmatpush1.bf16.msra.mxu0 0
  %6744 = vmatprep.subr.bf16.mxu0 0
  %6745 = vmatpush1.bf16.msra.mxu0 0
  %6746 = vmatprep.subr.bf16.mxu0 0
  %6747 = vmatpush1.bf16.msra.mxu0 0
  %6748 = vmatprep.subr.bf16.mxu0 0
  %6749 = vmatpush1.bf16.msra.mxu0 0
  %6750 = vmatprep.subr.bf16.mxu0 0
  %6751 = vmatpush1.bf16.msra.mxu0 %v6736
  %6752 = vmatprep.subr.bf16.mxu0 0
  %6753 = vmatpush1.bf16.msra.mxu0 %v6725
  %6754 = vmatprep.subr.bf16.mxu0 0
  %6755 = vmatpush2.bf16.msra.mxu0 0
  %6756 = vmatprep.subr.bf16.mxu0 0
  %6757 = vmatpush2.bf16.msra.mxu0 0
  %6758 = vmatprep.subr.bf16.mxu0 0
  %6759 = vmatpush2.bf16.msra.mxu0 0
  %6760 = vmatprep.subr.bf16.mxu0 0
  %6761 = vmatpush2.bf16.msra.mxu0 0
  %6762 = vmatprep.subr.bf16.mxu0 0
  %6763 = vmatpush2.bf16.msra.mxu0 0
  %6764 = vmatprep.subr.bf16.mxu0 0
  %6765 = vmatpush2.bf16.msra.mxu0 0
  %6766 = vmatprep.subr.bf16.mxu0 0
  %6767 = vmatpush2.bf16.msra.mxu0 0
  %6768 = vmatprep.subr.bf16.mxu0 0
  %6769 = vmatpush2.bf16.msra.mxu0 0
  %6770 = vmatprep.mubr.bf16.mxu0 0
  %6771 = vmatmul.mubr.bf16.gmra.mxu0 %v6730
  %v6772 = vpop.f32.mrf.mxu0
  %v6773 = vadd.f32 0.0, %v6772
  %v6774 = vpop.f32.mrf.mxu0
  %v6775 = vpop.f32.mrf.mxu0
  %v6776 = vadd.f32 0.0, %v6775
  %v6777 = vpop.f32.mrf.mxu0
  %6778 = vmatprep.mubr.bf16.mxu0 0
  %6779 = vmatmul.mubr.bf16.gmra.mxu0 %v6733
  %v6780 = vpop.f32.mrf.mxu0
  %v6781 = vadd.f32 0.0, %v6780
  %v6782 = vpop.f32.mrf.mxu0
  %v6783 = vpop.f32.mrf.mxu0
  %v6784 = vadd.f32 0.0, %v6783
  %v6785 = vpop.f32.mrf.mxu0
  %6786 = vdwg.mxu0
  %v6787 = vpack.c.bf16 %v6335, %v6332
  %v6788 = vpack.c.bf16 %v6343, %v6340
  %v6789 = vpack.c.bf16 %v6398, %v6395
  %v6790 = vpack.c.bf16 %v6406, %v6403
  %v6791 = vpack.c.bf16 %v6461, %v6458
  %v6792 = vpack.c.bf16 %v6469, %v6466
  %v6793 = vpack.c.bf16 %v6524, %v6521
  %v6794 = vpack.c.bf16 %v6532, %v6529
  %v6795 = vpack.c.bf16 %v6587, %v6584
  %v6796 = vpack.c.bf16 %v6595, %v6592
  %v6797 = vpack.c.bf16 %v6650, %v6647
  %v6798 = vpack.c.bf16 %v6658, %v6655
  %v6799 = vpack.c.bf16 %v6713, %v6710
  %v6800 = vpack.c.bf16 %v6721, %v6718
  %v6801 = vpack.c.bf16 %v6776, %v6773
  %v6802 = vpack.c.bf16 %v6784, %v6781
  %s6803 = scalar_lea.vmem %s3, 32
  %v6804 = vld [vmem:[%s6803] sm:$0xf]
  %v6805 = vld [vmem:[%s6803 + $0x4] sm:$0xf]
  %v6806 = vld [vmem:[%s6803 + $0x8] sm:$0xf]
  %v6807 = vld [vmem:[%s6803 + $0xc] sm:$0xf]
  %v6808 = vld [vmem:[%s6803 + $0x10] sm:$0xf]
  %v6809 = vld [vmem:[%s6803 + $0x14] sm:$0xf]
  %v6810 = vld [vmem:[%s6803 + $0x18] sm:$0xf]
  %v6811 = vld [vmem:[%s6803 + $0x1c] sm:$0xf]
  %v6813 = vsel %vm274, %v6787, 0
  %v6816 = vsel %vm274, %v6788, 0
  %v6819 = vsel %vm1710, %v6804, 0
  %6821 = vmatprep.subr.bf16.mxu0 0
  %6822 = vmatpush1.bf16.msra.mxu0 0
  %6823 = vmatprep.subr.bf16.mxu0 0
  %6824 = vmatpush1.bf16.msra.mxu0 0
  %6825 = vmatprep.subr.bf16.mxu0 0
  %6826 = vmatpush1.bf16.msra.mxu0 0
  %6827 = vmatprep.subr.bf16.mxu0 0
  %6828 = vmatpush1.bf16.msra.mxu0 0
  %6829 = vmatprep.subr.bf16.mxu0 0
  %6830 = vmatpush1.bf16.msra.mxu0 0
  %6831 = vmatprep.subr.bf16.mxu0 0
  %6832 = vmatpush1.bf16.msra.mxu0 0
  %6833 = vmatprep.subr.bf16.mxu0 0
  %6834 = vmatpush1.bf16.msra.mxu0 0
  %6835 = vmatprep.subr.bf16.mxu0 0
  %6836 = vmatpush1.bf16.msra.mxu0 %v6819
  %6837 = vmatprep.subr.bf16.mxu0 0
  %6838 = vmatpush2.bf16.msra.mxu0 0
  %6839 = vmatprep.subr.bf16.mxu0 0
  %6840 = vmatpush2.bf16.msra.mxu0 0
  %6841 = vmatprep.subr.bf16.mxu0 0
  %6842 = vmatpush2.bf16.msra.mxu0 0
  %6843 = vmatprep.subr.bf16.mxu0 0
  %6844 = vmatpush2.bf16.msra.mxu0 0
  %6845 = vmatprep.subr.bf16.mxu0 0
  %6846 = vmatpush2.bf16.msra.mxu0 0
  %6847 = vmatprep.subr.bf16.mxu0 0
  %6848 = vmatpush2.bf16.msra.mxu0 0
  %6849 = vmatprep.subr.bf16.mxu0 0
  %6850 = vmatpush2.bf16.msra.mxu0 0
  %6851 = vmatprep.subr.bf16.mxu0 0
  %6852 = vmatpush2.bf16.msra.mxu0 0
  %6853 = vmatprep.mubr.bf16.mxu0 0
  %6854 = vmatmul.mubr.bf16.gmra.mxu0 %v6813
  %v6855 = vpop.f32.mrf.mxu0
  %v6856 = vadd.f32 0.0, %v6855
  %v6857 = vpop.f32.mrf.mxu0
  %v6858 = vpop.f32.mrf.mxu0
  %v6859 = vadd.f32 0.0, %v6858
  %v6860 = vpop.f32.mrf.mxu0
  %6861 = vmatprep.mubr.bf16.mxu0 0
  %6862 = vmatmul.mubr.bf16.gmra.mxu0 %v6816
  %v6863 = vpop.f32.mrf.mxu0
  %v6864 = vadd.f32 0.0, %v6863
  %v6865 = vpop.f32.mrf.mxu0
  %v6866 = vpop.f32.mrf.mxu0
  %v6867 = vadd.f32 0.0, %v6866
  %v6868 = vpop.f32.mrf.mxu0
  %6869 = vdwg.mxu0
  %v6871 = vsel %vm274, %v6789, 0
  %v6874 = vsel %vm274, %v6790, 0
  %v6877 = vsel %vm1710, %v6805, 0
  %6879 = vmatprep.subr.bf16.mxu0 0
  %6880 = vmatpush1.bf16.msra.mxu0 0
  %6881 = vmatprep.subr.bf16.mxu0 0
  %6882 = vmatpush1.bf16.msra.mxu0 0
  %6883 = vmatprep.subr.bf16.mxu0 0
  %6884 = vmatpush1.bf16.msra.mxu0 0
  %6885 = vmatprep.subr.bf16.mxu0 0
  %6886 = vmatpush1.bf16.msra.mxu0 0
  %6887 = vmatprep.subr.bf16.mxu0 0
  %6888 = vmatpush1.bf16.msra.mxu0 0
  %6889 = vmatprep.subr.bf16.mxu0 0
  %6890 = vmatpush1.bf16.msra.mxu0 0
  %6891 = vmatprep.subr.bf16.mxu0 0
  %6892 = vmatpush1.bf16.msra.mxu0 0
  %6893 = vmatprep.subr.bf16.mxu0 0
  %6894 = vmatpush1.bf16.msra.mxu0 %v6877
  %6895 = vmatprep.subr.bf16.mxu0 0
  %6896 = vmatpush2.bf16.msra.mxu0 0
  %6897 = vmatprep.subr.bf16.mxu0 0
  %6898 = vmatpush2.bf16.msra.mxu0 0
  %6899 = vmatprep.subr.bf16.mxu0 0
  %6900 = vmatpush2.bf16.msra.mxu0 0
  %6901 = vmatprep.subr.bf16.mxu0 0
  %6902 = vmatpush2.bf16.msra.mxu0 0
  %6903 = vmatprep.subr.bf16.mxu0 0
  %6904 = vmatpush2.bf16.msra.mxu0 0
  %6905 = vmatprep.subr.bf16.mxu0 0
  %6906 = vmatpush2.bf16.msra.mxu0 0
  %6907 = vmatprep.subr.bf16.mxu0 0
  %6908 = vmatpush2.bf16.msra.mxu0 0
  %6909 = vmatprep.subr.bf16.mxu0 0
  %6910 = vmatpush2.bf16.msra.mxu0 0
  %6911 = vmatprep.mubr.bf16.mxu0 0
  %6912 = vmatmul.mubr.bf16.gmra.mxu0 %v6871
  %v6913 = vpop.f32.mrf.mxu0
  %v6914 = vadd.f32 0.0, %v6913
  %v6915 = vpop.f32.mrf.mxu0
  %v6916 = vpop.f32.mrf.mxu0
  %v6917 = vadd.f32 0.0, %v6916
  %v6918 = vpop.f32.mrf.mxu0
  %6919 = vmatprep.mubr.bf16.mxu0 0
  %6920 = vmatmul.mubr.bf16.gmra.mxu0 %v6874
  %v6921 = vpop.f32.mrf.mxu0
  %v6922 = vadd.f32 0.0, %v6921
  %v6923 = vpop.f32.mrf.mxu0
  %v6924 = vpop.f32.mrf.mxu0
  %v6925 = vadd.f32 0.0, %v6924
  %v6926 = vpop.f32.mrf.mxu0
  %6927 = vdwg.mxu0
  %v6929 = vsel %vm274, %v6791, 0
  %v6932 = vsel %vm274, %v6792, 0
  %v6935 = vsel %vm1710, %v6806, 0
  %6937 = vmatprep.subr.bf16.mxu0 0
  %6938 = vmatpush1.bf16.msra.mxu0 0
  %6939 = vmatprep.subr.bf16.mxu0 0
  %6940 = vmatpush1.bf16.msra.mxu0 0
  %6941 = vmatprep.subr.bf16.mxu0 0
  %6942 = vmatpush1.bf16.msra.mxu0 0
  %6943 = vmatprep.subr.bf16.mxu0 0
  %6944 = vmatpush1.bf16.msra.mxu0 0
  %6945 = vmatprep.subr.bf16.mxu0 0
  %6946 = vmatpush1.bf16.msra.mxu0 0
  %6947 = vmatprep.subr.bf16.mxu0 0
  %6948 = vmatpush1.bf16.msra.mxu0 0
  %6949 = vmatprep.subr.bf16.mxu0 0
  %6950 = vmatpush1.bf16.msra.mxu0 0
  %6951 = vmatprep.subr.bf16.mxu0 0
  %6952 = vmatpush1.bf16.msra.mxu0 %v6935
  %6953 = vmatprep.subr.bf16.mxu0 0
  %6954 = vmatpush2.bf16.msra.mxu0 0
  %6955 = vmatprep.subr.bf16.mxu0 0
  %6956 = vmatpush2.bf16.msra.mxu0 0
  %6957 = vmatprep.subr.bf16.mxu0 0
  %6958 = vmatpush2.bf16.msra.mxu0 0
  %6959 = vmatprep.subr.bf16.mxu0 0
  %6960 = vmatpush2.bf16.msra.mxu0 0
  %6961 = vmatprep.subr.bf16.mxu0 0
  %6962 = vmatpush2.bf16.msra.mxu0 0
  %6963 = vmatprep.subr.bf16.mxu0 0
  %6964 = vmatpush2.bf16.msra.mxu0 0
  %6965 = vmatprep.subr.bf16.mxu0 0
  %6966 = vmatpush2.bf16.msra.mxu0 0
  %6967 = vmatprep.subr.bf16.mxu0 0
  %6968 = vmatpush2.bf16.msra.mxu0 0
  %6969 = vmatprep.mubr.bf16.mxu0 0
  %6970 = vmatmul.mubr.bf16.gmra.mxu0 %v6929
  %v6971 = vpop.f32.mrf.mxu0
  %v6972 = vadd.f32 0.0, %v6971
  %v6973 = vpop.f32.mrf.mxu0
  %v6974 = vpop.f32.mrf.mxu0
  %v6975 = vadd.f32 0.0, %v6974
  %v6976 = vpop.f32.mrf.mxu0
  %6977 = vmatprep.mubr.bf16.mxu0 0
  %6978 = vmatmul.mubr.bf16.gmra.mxu0 %v6932
  %v6979 = vpop.f32.mrf.mxu0
  %v6980 = vadd.f32 0.0, %v6979
  %v6981 = vpop.f32.mrf.mxu0
  %v6982 = vpop.f32.mrf.mxu0
  %v6983 = vadd.f32 0.0, %v6982
  %v6984 = vpop.f32.mrf.mxu0
  %6985 = vdwg.mxu0
  %v6987 = vsel %vm274, %v6793, 0
  %v6990 = vsel %vm274, %v6794, 0
  %v6993 = vsel %vm1710, %v6807, 0
  %6995 = vmatprep.subr.bf16.mxu0 0
  %6996 = vmatpush1.bf16.msra.mxu0 0
  %6997 = vmatprep.subr.bf16.mxu0 0
  %6998 = vmatpush1.bf16.msra.mxu0 0
  %6999 = vmatprep.subr.bf16.mxu0 0
  %7000 = vmatpush1.bf16.msra.mxu0 0
  %7001 = vmatprep.subr.bf16.mxu0 0
  %7002 = vmatpush1.bf16.msra.mxu0 0
  %7003 = vmatprep.subr.bf16.mxu0 0
  %7004 = vmatpush1.bf16.msra.mxu0 0
  %7005 = vmatprep.subr.bf16.mxu0 0
  %7006 = vmatpush1.bf16.msra.mxu0 0
  %7007 = vmatprep.subr.bf16.mxu0 0
  %7008 = vmatpush1.bf16.msra.mxu0 0
  %7009 = vmatprep.subr.bf16.mxu0 0
  %7010 = vmatpush1.bf16.msra.mxu0 %v6993
  %7011 = vmatprep.subr.bf16.mxu0 0
  %7012 = vmatpush2.bf16.msra.mxu0 0
  %7013 = vmatprep.subr.bf16.mxu0 0
  %7014 = vmatpush2.bf16.msra.mxu0 0
  %7015 = vmatprep.subr.bf16.mxu0 0
  %7016 = vmatpush2.bf16.msra.mxu0 0
  %7017 = vmatprep.subr.bf16.mxu0 0
  %7018 = vmatpush2.bf16.msra.mxu0 0
  %7019 = vmatprep.subr.bf16.mxu0 0
  %7020 = vmatpush2.bf16.msra.mxu0 0
  %7021 = vmatprep.subr.bf16.mxu0 0
  %7022 = vmatpush2.bf16.msra.mxu0 0
  %7023 = vmatprep.subr.bf16.mxu0 0
  %7024 = vmatpush2.bf16.msra.mxu0 0
  %7025 = vmatprep.subr.bf16.mxu0 0
  %7026 = vmatpush2.bf16.msra.mxu0 0
  %7027 = vmatprep.mubr.bf16.mxu0 0
  %7028 = vmatmul.mubr.bf16.gmra.mxu0 %v6987
  %v7029 = vpop.f32.mrf.mxu0
  %v7030 = vadd.f32 0.0, %v7029
  %v7031 = vpop.f32.mrf.mxu0
  %v7032 = vpop.f32.mrf.mxu0
  %v7033 = vadd.f32 0.0, %v7032
  %v7034 = vpop.f32.mrf.mxu0
  %7035 = vmatprep.mubr.bf16.mxu0 0
  %7036 = vmatmul.mubr.bf16.gmra.mxu0 %v6990
  %v7037 = vpop.f32.mrf.mxu0
  %v7038 = vadd.f32 0.0, %v7037
  %v7039 = vpop.f32.mrf.mxu0
  %v7040 = vpop.f32.mrf.mxu0
  %v7041 = vadd.f32 0.0, %v7040
  %v7042 = vpop.f32.mrf.mxu0
  %7043 = vdwg.mxu0
  %v7045 = vsel %vm274, %v6795, 0
  %v7048 = vsel %vm274, %v6796, 0
  %v7051 = vsel %vm1710, %v6808, 0
  %7053 = vmatprep.subr.bf16.mxu0 0
  %7054 = vmatpush1.bf16.msra.mxu0 0
  %7055 = vmatprep.subr.bf16.mxu0 0
  %7056 = vmatpush1.bf16.msra.mxu0 0
  %7057 = vmatprep.subr.bf16.mxu0 0
  %7058 = vmatpush1.bf16.msra.mxu0 0
  %7059 = vmatprep.subr.bf16.mxu0 0
  %7060 = vmatpush1.bf16.msra.mxu0 0
  %7061 = vmatprep.subr.bf16.mxu0 0
  %7062 = vmatpush1.bf16.msra.mxu0 0
  %7063 = vmatprep.subr.bf16.mxu0 0
  %7064 = vmatpush1.bf16.msra.mxu0 0
  %7065 = vmatprep.subr.bf16.mxu0 0
  %7066 = vmatpush1.bf16.msra.mxu0 0
  %7067 = vmatprep.subr.bf16.mxu0 0
  %7068 = vmatpush1.bf16.msra.mxu0 %v7051
  %7069 = vmatprep.subr.bf16.mxu0 0
  %7070 = vmatpush2.bf16.msra.mxu0 0
  %7071 = vmatprep.subr.bf16.mxu0 0
  %7072 = vmatpush2.bf16.msra.mxu0 0
  %7073 = vmatprep.subr.bf16.mxu0 0
  %7074 = vmatpush2.bf16.msra.mxu0 0
  %7075 = vmatprep.subr.bf16.mxu0 0
  %7076 = vmatpush2.bf16.msra.mxu0 0
  %7077 = vmatprep.subr.bf16.mxu0 0
  %7078 = vmatpush2.bf16.msra.mxu0 0
  %7079 = vmatprep.subr.bf16.mxu0 0
  %7080 = vmatpush2.bf16.msra.mxu0 0
  %7081 = vmatprep.subr.bf16.mxu0 0
  %7082 = vmatpush2.bf16.msra.mxu0 0
  %7083 = vmatprep.subr.bf16.mxu0 0
  %7084 = vmatpush2.bf16.msra.mxu0 0
  %7085 = vmatprep.mubr.bf16.mxu0 0
  %7086 = vmatmul.mubr.bf16.gmra.mxu0 %v7045
  %v7087 = vpop.f32.mrf.mxu0
  %v7088 = vadd.f32 0.0, %v7087
  %v7089 = vpop.f32.mrf.mxu0
  %v7090 = vpop.f32.mrf.mxu0
  %v7091 = vadd.f32 0.0, %v7090
  %v7092 = vpop.f32.mrf.mxu0
  %7093 = vmatprep.mubr.bf16.mxu0 0
  %7094 = vmatmul.mubr.bf16.gmra.mxu0 %v7048
  %v7095 = vpop.f32.mrf.mxu0
  %v7096 = vadd.f32 0.0, %v7095
  %v7097 = vpop.f32.mrf.mxu0
  %v7098 = vpop.f32.mrf.mxu0
  %v7099 = vadd.f32 0.0, %v7098
  %v7100 = vpop.f32.mrf.mxu0
  %7101 = vdwg.mxu0
  %v7103 = vsel %vm274, %v6797, 0
  %v7106 = vsel %vm274, %v6798, 0
  %v7109 = vsel %vm1710, %v6809, 0
  %7111 = vmatprep.subr.bf16.mxu0 0
  %7112 = vmatpush1.bf16.msra.mxu0 0
  %7113 = vmatprep.subr.bf16.mxu0 0
  %7114 = vmatpush1.bf16.msra.mxu0 0
  %7115 = vmatprep.subr.bf16.mxu0 0
  %7116 = vmatpush1.bf16.msra.mxu0 0
  %7117 = vmatprep.subr.bf16.mxu0 0
  %7118 = vmatpush1.bf16.msra.mxu0 0
  %7119 = vmatprep.subr.bf16.mxu0 0
  %7120 = vmatpush1.bf16.msra.mxu0 0
  %7121 = vmatprep.subr.bf16.mxu0 0
  %7122 = vmatpush1.bf16.msra.mxu0 0
  %7123 = vmatprep.subr.bf16.mxu0 0
  %7124 = vmatpush1.bf16.msra.mxu0 0
  %7125 = vmatprep.subr.bf16.mxu0 0
  %7126 = vmatpush1.bf16.msra.mxu0 %v7109
  %7127 = vmatprep.subr.bf16.mxu0 0
  %7128 = vmatpush2.bf16.msra.mxu0 0
  %7129 = vmatprep.subr.bf16.mxu0 0
  %7130 = vmatpush2.bf16.msra.mxu0 0
  %7131 = vmatprep.subr.bf16.mxu0 0
  %7132 = vmatpush2.bf16.msra.mxu0 0
  %7133 = vmatprep.subr.bf16.mxu0 0
  %7134 = vmatpush2.bf16.msra.mxu0 0
  %7135 = vmatprep.subr.bf16.mxu0 0
  %7136 = vmatpush2.bf16.msra.mxu0 0
  %7137 = vmatprep.subr.bf16.mxu0 0
  %7138 = vmatpush2.bf16.msra.mxu0 0
  %7139 = vmatprep.subr.bf16.mxu0 0
  %7140 = vmatpush2.bf16.msra.mxu0 0
  %7141 = vmatprep.subr.bf16.mxu0 0
  %7142 = vmatpush2.bf16.msra.mxu0 0
  %7143 = vmatprep.mubr.bf16.mxu0 0
  %7144 = vmatmul.mubr.bf16.gmra.mxu0 %v7103
  %v7145 = vpop.f32.mrf.mxu0
  %v7146 = vadd.f32 0.0, %v7145
  %v7147 = vpop.f32.mrf.mxu0
  %v7148 = vpop.f32.mrf.mxu0
  %v7149 = vadd.f32 0.0, %v7148
  %v7150 = vpop.f32.mrf.mxu0
  %7151 = vmatprep.mubr.bf16.mxu0 0
  %7152 = vmatmul.mubr.bf16.gmra.mxu0 %v7106
  %v7153 = vpop.f32.mrf.mxu0
  %v7154 = vadd.f32 0.0, %v7153
  %v7155 = vpop.f32.mrf.mxu0
  %v7156 = vpop.f32.mrf.mxu0
  %v7157 = vadd.f32 0.0, %v7156
  %v7158 = vpop.f32.mrf.mxu0
  %7159 = vdwg.mxu0
  %v7161 = vsel %vm274, %v6799, 0
  %v7164 = vsel %vm274, %v6800, 0
  %v7167 = vsel %vm1710, %v6810, 0
  %7169 = vmatprep.subr.bf16.mxu0 0
  %7170 = vmatpush1.bf16.msra.mxu0 0
  %7171 = vmatprep.subr.bf16.mxu0 0
  %7172 = vmatpush1.bf16.msra.mxu0 0
  %7173 = vmatprep.subr.bf16.mxu0 0
  %7174 = vmatpush1.bf16.msra.mxu0 0
  %7175 = vmatprep.subr.bf16.mxu0 0
  %7176 = vmatpush1.bf16.msra.mxu0 0
  %7177 = vmatprep.subr.bf16.mxu0 0
  %7178 = vmatpush1.bf16.msra.mxu0 0
  %7179 = vmatprep.subr.bf16.mxu0 0
  %7180 = vmatpush1.bf16.msra.mxu0 0
  %7181 = vmatprep.subr.bf16.mxu0 0
  %7182 = vmatpush1.bf16.msra.mxu0 0
  %7183 = vmatprep.subr.bf16.mxu0 0
  %7184 = vmatpush1.bf16.msra.mxu0 %v7167
  %7185 = vmatprep.subr.bf16.mxu0 0
  %7186 = vmatpush2.bf16.msra.mxu0 0
  %7187 = vmatprep.subr.bf16.mxu0 0
  %7188 = vmatpush2.bf16.msra.mxu0 0
  %7189 = vmatprep.subr.bf16.mxu0 0
  %7190 = vmatpush2.bf16.msra.mxu0 0
  %7191 = vmatprep.subr.bf16.mxu0 0
  %7192 = vmatpush2.bf16.msra.mxu0 0
  %7193 = vmatprep.subr.bf16.mxu0 0
  %7194 = vmatpush2.bf16.msra.mxu0 0
  %7195 = vmatprep.subr.bf16.mxu0 0
  %7196 = vmatpush2.bf16.msra.mxu0 0
  %7197 = vmatprep.subr.bf16.mxu0 0
  %7198 = vmatpush2.bf16.msra.mxu0 0
  %7199 = vmatprep.subr.bf16.mxu0 0
  %7200 = vmatpush2.bf16.msra.mxu0 0
  %7201 = vmatprep.mubr.bf16.mxu0 0
  %7202 = vmatmul.mubr.bf16.gmra.mxu0 %v7161
  %v7203 = vpop.f32.mrf.mxu0
  %v7204 = vadd.f32 0.0, %v7203
  %v7205 = vpop.f32.mrf.mxu0
  %v7206 = vpop.f32.mrf.mxu0
  %v7207 = vadd.f32 0.0, %v7206
  %v7208 = vpop.f32.mrf.mxu0
  %7209 = vmatprep.mubr.bf16.mxu0 0
  %7210 = vmatmul.mubr.bf16.gmra.mxu0 %v7164
  %v7211 = vpop.f32.mrf.mxu0
  %v7212 = vadd.f32 0.0, %v7211
  %v7213 = vpop.f32.mrf.mxu0
  %v7214 = vpop.f32.mrf.mxu0
  %v7215 = vadd.f32 0.0, %v7214
  %v7216 = vpop.f32.mrf.mxu0
  %7217 = vdwg.mxu0
  %v7219 = vsel %vm274, %v6801, 0
  %v7222 = vsel %vm274, %v6802, 0
  %v7225 = vsel %vm1710, %v6811, 0
  %7227 = vmatprep.subr.bf16.mxu0 0
  %7228 = vmatpush1.bf16.msra.mxu0 0
  %7229 = vmatprep.subr.bf16.mxu0 0
  %7230 = vmatpush1.bf16.msra.mxu0 0
  %7231 = vmatprep.subr.bf16.mxu0 0
  %7232 = vmatpush1.bf16.msra.mxu0 0
  %7233 = vmatprep.subr.bf16.mxu0 0
  %7234 = vmatpush1.bf16.msra.mxu0 0
  %7235 = vmatprep.subr.bf16.mxu0 0
  %7236 = vmatpush1.bf16.msra.mxu0 0
  %7237 = vmatprep.subr.bf16.mxu0 0
  %7238 = vmatpush1.bf16.msra.mxu0 0
  %7239 = vmatprep.subr.bf16.mxu0 0
  %7240 = vmatpush1.bf16.msra.mxu0 0
  %7241 = vmatprep.subr.bf16.mxu0 0
  %7242 = vmatpush1.bf16.msra.mxu0 %v7225
  %7243 = vmatprep.subr.bf16.mxu0 0
  %7244 = vmatpush2.bf16.msra.mxu0 0
  %7245 = vmatprep.subr.bf16.mxu0 0
  %7246 = vmatpush2.bf16.msra.mxu0 0
  %7247 = vmatprep.subr.bf16.mxu0 0
  %7248 = vmatpush2.bf16.msra.mxu0 0
  %7249 = vmatprep.subr.bf16.mxu0 0
  %7250 = vmatpush2.bf16.msra.mxu0 0
  %7251 = vmatprep.subr.bf16.mxu0 0
  %7252 = vmatpush2.bf16.msra.mxu0 0
  %7253 = vmatprep.subr.bf16.mxu0 0
  %7254 = vmatpush2.bf16.msra.mxu0 0
  %7255 = vmatprep.subr.bf16.mxu0 0
  %7256 = vmatpush2.bf16.msra.mxu0 0
  %7257 = vmatprep.subr.bf16.mxu0 0
  %7258 = vmatpush2.bf16.msra.mxu0 0
  %7259 = vmatprep.mubr.bf16.mxu0 0
  %7260 = vmatmul.mubr.bf16.gmra.mxu0 %v7219
  %v7261 = vpop.f32.mrf.mxu0
  %v7262 = vadd.f32 0.0, %v7261
  %v7263 = vpop.f32.mrf.mxu0
  %v7264 = vpop.f32.mrf.mxu0
  %v7265 = vadd.f32 0.0, %v7264
  %v7266 = vpop.f32.mrf.mxu0
  %7267 = vmatprep.mubr.bf16.mxu0 0
  %7268 = vmatmul.mubr.bf16.gmra.mxu0 %v7222
  %v7269 = vpop.f32.mrf.mxu0
  %v7270 = vadd.f32 0.0, %v7269
  %v7271 = vpop.f32.mrf.mxu0
  %v7272 = vpop.f32.mrf.mxu0
  %v7273 = vadd.f32 0.0, %v7272
  %v7274 = vpop.f32.mrf.mxu0
  %7275 = vdwg.mxu0
  %v7276 = vsel %vm80, %v6856, 0.0
  %v7277 = vsel %vm80, %v6914, 0.0
  %v7278 = vadd.f32 %v7276, %v7277
  %v7279 = vsel %vm80, %v6972, 0.0
  %v7280 = vadd.f32 %v7278, %v7279
  %v7281 = vsel %vm80, %v7030, 0.0
  %v7282 = vadd.f32 %v7280, %v7281
  %v7283 = vsel %vm80, %v6859, 0.0
  %v7284 = vsel %vm80, %v6917, 0.0
  %v7285 = vadd.f32 %v7283, %v7284
  %v7286 = vsel %vm80, %v6975, 0.0
  %v7287 = vadd.f32 %v7285, %v7286
  %v7288 = vsel %vm80, %v7033, 0.0
  %v7289 = vadd.f32 %v7287, %v7288
  %v7290 = vsel %vm80, %v6864, 0.0
  %v7291 = vsel %vm80, %v6922, 0.0
  %v7292 = vadd.f32 %v7290, %v7291
  %v7293 = vsel %vm80, %v6980, 0.0
  %v7294 = vadd.f32 %v7292, %v7293
  %v7295 = vsel %vm80, %v7038, 0.0
  %v7296 = vadd.f32 %v7294, %v7295
  %v7297 = vsel %vm2190, %v6867, 0.0
  %v7298 = vsel %vm2190, %v6925, 0.0
  %v7299 = vadd.f32 %v7297, %v7298
  %v7300 = vsel %vm2190, %v6983, 0.0
  %v7301 = vadd.f32 %v7299, %v7300
  %v7302 = vsel %vm2190, %v7041, 0.0
  %v7303 = vadd.f32 %v7301, %v7302
  %v7304 = vsel %vm80, %v7088, 0.0
  %v7305 = vsel %vm80, %v7146, 0.0
  %v7306 = vadd.f32 %v7304, %v7305
  %v7307 = vsel %vm80, %v7204, 0.0
  %v7308 = vadd.f32 %v7306, %v7307
  %v7309 = vsel %vm80, %v7262, 0.0
  %v7310 = vadd.f32 %v7308, %v7309
  %v7311 = vsel %vm80, %v7091, 0.0
  %v7312 = vsel %vm80, %v7149, 0.0
  %v7313 = vadd.f32 %v7311, %v7312
  %v7314 = vsel %vm80, %v7207, 0.0
  %v7315 = vadd.f32 %v7313, %v7314
  %v7316 = vsel %vm80, %v7265, 0.0
  %v7317 = vadd.f32 %v7315, %v7316
  %v7318 = vsel %vm80, %v7096, 0.0
  %v7319 = vsel %vm80, %v7154, 0.0
  %v7320 = vadd.f32 %v7318, %v7319
  %v7321 = vsel %vm80, %v7212, 0.0
  %v7322 = vadd.f32 %v7320, %v7321
  %v7323 = vsel %vm80, %v7270, 0.0
  %v7324 = vadd.f32 %v7322, %v7323
  %v7325 = vsel %vm2190, %v7099, 0.0
  %v7326 = vsel %vm2190, %v7157, 0.0
  %v7327 = vadd.f32 %v7325, %v7326
  %v7328 = vsel %vm2190, %v7215, 0.0
  %v7329 = vadd.f32 %v7327, %v7328
  %v7330 = vsel %vm2190, %v7273, 0.0
  %v7331 = vadd.f32 %v7329, %v7330
  %v7336 = vrot.slane %v7310, 2
  %v7337 = vrot.slane %v7317, 2
  %v7338 = vsel %vm2230, %v7336, %v7337
  %v7339 = vrot.slane %v7324, 2
  %v7340 = vsel %vm2230, %v7337, %v7339
  %v7341 = vrot.slane %v7331, 2
  %v7342 = vsel %vm2230, %v7339, %v7341
  %v7348 = vsel %vm2230, %v7303, %v7336
  %s7349 = scalar_lea.vmem %s4, 1
  %v7350 = vld [vmem:[%s7349] sm:$0x1]
  %v7352 = vlaneseq
  %v7353 = vshrl.u32 %v7352, 7
  %v7354 = vsub.s32 0, %v7353
  %v7355 = vrot.slane %v7350, %v7354
  %v7357 = vadd.f32 %v7282, %v7355
  %v7358 = vadd.f32 %v7289, %v7355
  %v7359 = vadd.f32 %v7296, %v7355
  %v7360 = vadd.f32 %v7348, %v7355
  %v7361 = vadd.f32 %v7338, %v7355
  %v7362 = vadd.f32 %v7340, %v7355
  %v7363 = vadd.f32 %v7342, %v7355
  %v7364 = vadd.f32 %v7341, %v7355
  %v7365 = vadd.f32 %v5156, %v7357
  %v7366 = vadd.f32 %v5157, %v7358
  %v7367 = vadd.f32 %v5158, %v7359
  %v7368 = vadd.f32 %v5159, %v7360
  %v7369 = vadd.f32 %v5160, %v7361
  %v7370 = vadd.f32 %v5161, %v7362
  %v7371 = vadd.f32 %v5162, %v7363
  %v7372 = vadd.f32 %v5163, %v7364
  %s7373 = scalar_lea.vmem %s5, 1
  %v7374 = vld [vmem:[%s7373] sm:$0x1]
  %s7375 = scalar_lea.vmem %s6, 1
  %v7376 = vld [vmem:[%s7375] sm:$0x1]
  %v7377 = vsel %vm80, %v7365, 0.0
  %7378 = vadd.xlane.f32.xlu0 %v7377
  %v7379 = vpop.xlane.xlu0 %7378
  %v7380 = vsel %vm80, %v7366, 0.0
  %7381 = vadd.xlane.f32.xlu0 %v7380
  %v7382 = vpop.xlane.xlu0 %7381
  %v7383 = vsel %vm80, %v7367, 0.0
  %7384 = vadd.xlane.f32.xlu0 %v7383
  %v7385 = vpop.xlane.xlu0 %7384
  %v7386 = vsel %vm80, %v7368, 0.0
  %7387 = vadd.xlane.f32.xlu0 %v7386
  %v7388 = vpop.xlane.xlu0 %7387
  %v7389 = vsel %vm80, %v7369, 0.0
  %7390 = vadd.xlane.f32.xlu0 %v7389
  %v7391 = vpop.xlane.xlu0 %7390
  %v7392 = vsel %vm80, %v7370, 0.0
  %7393 = vadd.xlane.f32.xlu0 %v7392
  %v7394 = vpop.xlane.xlu0 %7393
  %v7395 = vsel %vm80, %v7371, 0.0
  %7396 = vadd.xlane.f32.xlu0 %v7395
  %v7397 = vpop.xlane.xlu0 %7396
  %v7398 = vsel %vm2290, %v7372, 0.0
  %7399 = vadd.xlane.f32.xlu0 %v7398
  %v7400 = vpop.xlane.xlu0 %7399
  %v7401 = vmul.f32 %v7379, %v2294
  %v7402 = vmul.f32 %v7382, %v2294
  %v7403 = vmul.f32 %v7385, %v2294
  %v7404 = vmul.f32 %v7388, %v2294
  %v7405 = vmul.f32 %v7391, %v2294
  %v7406 = vmul.f32 %v7394, %v2294
  %v7407 = vmul.f32 %v7397, %v2294
  %v7408 = vmul.f32 %v7400, %v2294
  %v7409 = vsub.f32 %v7365, %v7401
  %v7410 = vsub.f32 %v7366, %v7402
  %v7411 = vsub.f32 %v7367, %v7403
  %v7412 = vsub.f32 %v7368, %v7404
  %v7413 = vsub.f32 %v7369, %v7405
  %v7414 = vsub.f32 %v7370, %v7406
  %v7415 = vsub.f32 %v7371, %v7407
  %v7416 = vsub.f32 %v7372, %v7408
  %v7417 = vmul.f32 %v7409, %v7409
  %v7418 = vmul.f32 %v7410, %v7410
  %v7419 = vmul.f32 %v7411, %v7411
  %v7420 = vmul.f32 %v7412, %v7412
  %v7421 = vmul.f32 %v7413, %v7413
  %v7422 = vmul.f32 %v7414, %v7414
  %v7423 = vmul.f32 %v7415, %v7415
  %v7424 = vmul.f32 %v7416, %v7416
  %v7425 = vsel %vm80, %v7417, 0.0
  %7426 = vadd.xlane.f32.xlu0 %v7425
  %v7427 = vpop.xlane.xlu0 %7426
  %v7428 = vsel %vm80, %v7418, 0.0
  %7429 = vadd.xlane.f32.xlu0 %v7428
  %v7430 = vpop.xlane.xlu0 %7429
  %v7431 = vsel %vm80, %v7419, 0.0
  %7432 = vadd.xlane.f32.xlu0 %v7431
  %v7433 = vpop.xlane.xlu0 %7432
  %v7434 = vsel %vm80, %v7420, 0.0
  %7435 = vadd.xlane.f32.xlu0 %v7434
  %v7436 = vpop.xlane.xlu0 %7435
  %v7437 = vsel %vm80, %v7421, 0.0
  %7438 = vadd.xlane.f32.xlu0 %v7437
  %v7439 = vpop.xlane.xlu0 %7438
  %v7440 = vsel %vm80, %v7422, 0.0
  %7441 = vadd.xlane.f32.xlu0 %v7440
  %v7442 = vpop.xlane.xlu0 %7441
  %v7443 = vsel %vm80, %v7423, 0.0
  %7444 = vadd.xlane.f32.xlu0 %v7443
  %v7445 = vpop.xlane.xlu0 %7444
  %v7446 = vsel %vm2290, %v7424, 0.0
  %7447 = vadd.xlane.f32.xlu0 %v7446
  %v7448 = vpop.xlane.xlu0 %7447
  %v7449 = vmul.f32 %v7427, %v2294
  %v7450 = vmul.f32 %v7430, %v2294
  %v7451 = vmul.f32 %v7433, %v2294
  %v7452 = vmul.f32 %v7436, %v2294
  %v7453 = vmul.f32 %v7439, %v2294
  %v7454 = vmul.f32 %v7442, %v2294
  %v7455 = vmul.f32 %v7445, %v2294
  %v7456 = vmul.f32 %v7448, %v2294
  %v7457 = vadd.f32 %v7449, 1e-05
  %v7458 = vadd.f32 %v7450, 1e-05
  %v7459 = vadd.f32 %v7451, 1e-05
  %v7460 = vadd.f32 %v7452, 1e-05
  %v7461 = vadd.f32 %v7453, 1e-05
  %v7462 = vadd.f32 %v7454, 1e-05
  %v7463 = vadd.f32 %v7455, 1e-05
  %v7464 = vadd.f32 %v7456, 1e-05
  %v7465 = vrsqrt.pop %v7457
  %v7466 = vrsqrt.pop %v7458
  %v7467 = vrsqrt.pop %v7459
  %v7468 = vrsqrt.pop %v7460
  %v7469 = vrsqrt.pop %v7461
  %v7470 = vrsqrt.pop %v7462
  %v7471 = vrsqrt.pop %v7463
  %v7472 = vrsqrt.pop %v7464
  %v7473 = vmul.f32 %v7409, %v7465
  %v7474 = vmul.f32 %v7410, %v7466
  %v7475 = vmul.f32 %v7411, %v7467
  %v7476 = vmul.f32 %v7412, %v7468
  %v7477 = vmul.f32 %v7413, %v7469
  %v7478 = vmul.f32 %v7414, %v7470
  %v7479 = vmul.f32 %v7415, %v7471
  %v7480 = vmul.f32 %v7416, %v7472
  %v7482 = vlaneseq
  %v7483 = vshrl.u32 %v7482, 7
  %v7484 = vsub.s32 0, %v7483
  %v7485 = vrot.slane %v7374, %v7484
  %v7487 = vmul.f32 %v7473, %v7485
  %v7488 = vmul.f32 %v7474, %v7485
  %v7489 = vmul.f32 %v7475, %v7485
  %v7490 = vmul.f32 %v7476, %v7485
  %v7491 = vmul.f32 %v7477, %v7485
  %v7492 = vmul.f32 %v7478, %v7485
  %v7493 = vmul.f32 %v7479, %v7485
  %v7494 = vmul.f32 %v7480, %v7485
  %v7496 = vlaneseq
  %v7497 = vshrl.u32 %v7496, 7
  %v7498 = vsub.s32 0, %v7497
  %v7499 = vrot.slane %v7376, %v7498
  %v7501 = vadd.f32 %v7487, %v7499
  %v7502 = vadd.f32 %v7488, %v7499
  %v7503 = vadd.f32 %v7489, %v7499
  %v7504 = vadd.f32 %v7490, %v7499
  %v7505 = vadd.f32 %v7491, %v7499
  %v7506 = vadd.f32 %v7492, %v7499
  %v7507 = vadd.f32 %v7493, %v7499
  %v7508 = vadd.f32 %v7494, %v7499
  %v7509 = vpack.c.bf16 %v7502, %v7501
  %v7510 = vpack.c.bf16 %v7504, %v7503
  %v7511 = vpack.c.bf16 %v7506, %v7505
  %v7512 = vpack.c.bf16 %v7508, %v7507
  %s7513 = scalar_lea.vmem %s9, 256
  %v7514 = vld [vmem:[%s7513] sm:$0xff]
  %v7515 = vld [vmem:[%s7513 + $0x8] sm:$0xff]
  %v7516 = vld [vmem:[%s7513 + $0x10] sm:$0xff]
  %v7517 = vld [vmem:[%s7513 + $0x18] sm:$0xff]
  %v7518 = vld [vmem:[%s7513 + $0x20] sm:$0xff]
  %v7519 = vld [vmem:[%s7513 + $0x28] sm:$0xff]
  %v7520 = vld [vmem:[%s7513 + $0x30] sm:$0xff]
  %v7521 = vld [vmem:[%s7513 + $0x38] sm:$0xff]
  %v7522 = vld [vmem:[%s7513 + $0x40] sm:$0xff]
  %v7523 = vld [vmem:[%s7513 + $0x48] sm:$0xff]
  %v7524 = vld [vmem:[%s7513 + $0x50] sm:$0xff]
  %v7525 = vld [vmem:[%s7513 + $0x58] sm:$0xff]
  %v7526 = vld [vmem:[%s7513 + $0x60] sm:$0xff]
  %v7527 = vld [vmem:[%s7513 + $0x68] sm:$0xff]
  %v7528 = vld [vmem:[%s7513 + $0x70] sm:$0xff]
  %v7529 = vld [vmem:[%s7513 + $0x78] sm:$0xff]
  %v7530 = vld [vmem:[%s7513 + $0x80] sm:$0xff]
  %v7531 = vld [vmem:[%s7513 + $0x88] sm:$0xff]
  %v7532 = vld [vmem:[%s7513 + $0x90] sm:$0xff]
  %v7533 = vld [vmem:[%s7513 + $0x98] sm:$0xff]
  %v7534 = vld [vmem:[%s7513 + $0xa0] sm:$0xff]
  %v7535 = vld [vmem:[%s7513 + $0xa8] sm:$0xff]
  %v7536 = vld [vmem:[%s7513 + $0xb0] sm:$0xff]
  %v7537 = vld [vmem:[%s7513 + $0xb8] sm:$0xff]
  %v7538 = vld [vmem:[%s7513 + $0xc0] sm:$0xff]
  %v7539 = vld [vmem:[%s7513 + $0xc8] sm:$0xff]
  %v7540 = vld [vmem:[%s7513 + $0xd0] sm:$0xff]
  %v7541 = vld [vmem:[%s7513 + $0xd8] sm:$0xff]
  %v7542 = vld [vmem:[%s7513 + $0xe0] sm:$0xff]
  %v7543 = vld [vmem:[%s7513 + $0xe8] sm:$0xff]
  %v7544 = vld [vmem:[%s7513 + $0xf0] sm:$0xff]
  %v7545 = vld [vmem:[%s7513 + $0xf8] sm:$0xff]
  %s7546 = scalar_lea.vmem %s10, 16
  %v7547 = vld [vmem:[%s7546] sm:$0xff]
  %v7548 = vld [vmem:[%s7546 + $0x8] sm:$0xff]
  %v7551 = vlaneseq
  %v7552 = vshrl.u32 %v7551, 7
  %v7553 = vsub.s32 0, %v7552
  %v7554 = vrot.slane %v7547, %v7553
  %v7555 = vlaneseq
  %v7556 = vshrl.u32 %v7555, 7
  %v7557 = vsub.s32 1, %v7556
  %v7558 = vrot.slane %v7547, %v7557
  %v7559 = vlaneseq
  %v7560 = vshrl.u32 %v7559, 7
  %v7561 = vsub.s32 2, %v7560
  %v7562 = vrot.slane %v7547, %v7561
  %v7563 = vlaneseq
  %v7564 = vshrl.u32 %v7563, 7
  %v7565 = vsub.s32 3, %v7564
  %v7566 = vrot.slane %v7547, %v7565
  %v7567 = vlaneseq
  %v7568 = vshrl.u32 %v7567, 7
  %v7569 = vsub.s32 4, %v7568
  %v7570 = vrot.slane %v7547, %v7569
  %v7571 = vlaneseq
  %v7572 = vshrl.u32 %v7571, 7
  %v7573 = vsub.s32 5, %v7572
  %v7574 = vrot.slane %v7547, %v7573
  %v7575 = vlaneseq
  %v7576 = vshrl.u32 %v7575, 7
  %v7577 = vsub.s32 6, %v7576
  %v7578 = vrot.slane %v7547, %v7577
  %v7579 = vlaneseq
  %v7580 = vshrl.u32 %v7579, 7
  %v7581 = vsub.s32 7, %v7580
  %v7582 = vrot.slane %v7547, %v7581
  %v7583 = vlaneseq
  %v7584 = vshrl.u32 %v7583, 7
  %v7585 = vsub.s32 0, %v7584
  %v7586 = vrot.slane %v7548, %v7585
  %v7587 = vlaneseq
  %v7588 = vshrl.u32 %v7587, 7
  %v7589 = vsub.s32 1, %v7588
  %v7590 = vrot.slane %v7548, %v7589
  %v7591 = vlaneseq
  %v7592 = vshrl.u32 %v7591, 7
  %v7593 = vsub.s32 2, %v7592
  %v7594 = vrot.slane %v7548, %v7593
  %v7595 = vlaneseq
  %v7596 = vshrl.u32 %v7595, 7
  %v7597 = vsub.s32 3, %v7596
  %v7598 = vrot.slane %v7548, %v7597
  %v7599 = vlaneseq
  %v7600 = vshrl.u32 %v7599, 7
  %v7601 = vsub.s32 4, %v7600
  %v7602 = vrot.slane %v7548, %v7601
  %v7603 = vlaneseq
  %v7604 = vshrl.u32 %v7603, 7
  %v7605 = vsub.s32 5, %v7604
  %v7606 = vrot.slane %v7548, %v7605
  %v7607 = vlaneseq
  %v7608 = vshrl.u32 %v7607, 7
  %v7609 = vsub.s32 6, %v7608
  %v7610 = vrot.slane %v7548, %v7609
  %v7611 = vlaneseq
  %v7612 = vshrl.u32 %v7611, 7
  %v7613 = vsub.s32 7, %v7612
  %v7614 = vrot.slane %v7548, %v7613
  %v7663 = vunpack.c.l.b16 %v7514
  %v7664 = vunpack.c.h.b16 %v7514
  %v7665 = vunpack.c.l.b16 %v7515
  %v7666 = vunpack.c.h.b16 %v7515
  %v7667 = vunpack.c.l.b16 %v7516
  %v7668 = vunpack.c.h.b16 %v7516
  %v7669 = vunpack.c.l.b16 %v7517
  %v7670 = vunpack.c.h.b16 %v7517
  %v7671 = vunpack.c.l.b16 %v7518
  %v7672 = vunpack.c.h.b16 %v7518
  %v7673 = vunpack.c.l.b16 %v7519
  %v7674 = vunpack.c.h.b16 %v7519
  %v7675 = vunpack.c.l.b16 %v7520
  %v7676 = vunpack.c.h.b16 %v7520
  %v7677 = vunpack.c.l.b16 %v7521
  %v7678 = vunpack.c.h.b16 %v7521
  %v7679 = vunpack.c.l.b16 %v7522
  %v7680 = vunpack.c.h.b16 %v7522
  %v7681 = vunpack.c.l.b16 %v7523
  %v7682 = vunpack.c.h.b16 %v7523
  %v7683 = vunpack.c.l.b16 %v7524
  %v7684 = vunpack.c.h.b16 %v7524
  %v7685 = vunpack.c.l.b16 %v7525
  %v7686 = vunpack.c.h.b16 %v7525
  %v7687 = vunpack.c.l.b16 %v7526
  %v7688 = vunpack.c.h.b16 %v7526
  %v7689 = vunpack.c.l.b16 %v7527
  %v7690 = vunpack.c.h.b16 %v7527
  %v7691 = vunpack.c.l.b16 %v7528
  %v7692 = vunpack.c.h.b16 %v7528
  %v7693 = vunpack.c.l.b16 %v7529
  %v7694 = vunpack.c.h.b16 %v7529
  %v7695 = vunpack.c.l.b16 %v7530
  %v7696 = vunpack.c.h.b16 %v7530
  %v7697 = vunpack.c.l.b16 %v7531
  %v7698 = vunpack.c.h.b16 %v7531
  %v7699 = vunpack.c.l.b16 %v7532
  %v7700 = vunpack.c.h.b16 %v7532
  %v7701 = vunpack.c.l.b16 %v7533
  %v7702 = vunpack.c.h.b16 %v7533
  %v7703 = vunpack.c.l.b16 %v7534
  %v7704 = vunpack.c.h.b16 %v7534
  %v7705 = vunpack.c.l.b16 %v7535
  %v7706 = vunpack.c.h.b16 %v7535
  %v7707 = vunpack.c.l.b16 %v7536
  %v7708 = vunpack.c.h.b16 %v7536
  %v7709 = vunpack.c.l.b16 %v7537
  %v7710 = vunpack.c.h.b16 %v7537
  %v7711 = vunpack.c.l.b16 %v7538
  %v7712 = vunpack.c.h.b16 %v7538
  %v7713 = vunpack.c.l.b16 %v7539
  %v7714 = vunpack.c.h.b16 %v7539
  %v7715 = vunpack.c.l.b16 %v7540
  %v7716 = vunpack.c.h.b16 %v7540
  %v7717 = vunpack.c.l.b16 %v7541
  %v7718 = vunpack.c.h.b16 %v7541
  %v7719 = vunpack.c.l.b16 %v7542
  %v7720 = vunpack.c.h.b16 %v7542
  %v7721 = vunpack.c.l.b16 %v7543
  %v7722 = vunpack.c.h.b16 %v7543
  %v7723 = vunpack.c.l.b16 %v7544
  %v7724 = vunpack.c.h.b16 %v7544
  %v7725 = vunpack.c.l.b16 %v7545
  %v7726 = vunpack.c.h.b16 %v7545
  %v7727 = vpack.c.b16 %v7679, %v7663
  %v7728 = vpack.c.b16 %v7680, %v7664
  %v7729 = vpack.c.b16 %v7681, %v7665
  %v7730 = vpack.c.b16 %v7682, %v7666
  %v7731 = vpack.c.b16 %v7683, %v7667
  %v7732 = vpack.c.b16 %v7684, %v7668
  %v7733 = vpack.c.b16 %v7685, %v7669
  %v7734 = vpack.c.b16 %v7686, %v7670
  %v7735 = vpack.c.b16 %v7687, %v7671
  %v7736 = vpack.c.b16 %v7688, %v7672
  %v7737 = vpack.c.b16 %v7689, %v7673
  %v7738 = vpack.c.b16 %v7690, %v7674
  %v7739 = vpack.c.b16 %v7691, %v7675
  %v7740 = vpack.c.b16 %v7692, %v7676
  %v7741 = vpack.c.b16 %v7693, %v7677
  %v7742 = vpack.c.b16 %v7694, %v7678
  %v7743 = vpack.c.b16 %v7711, %v7695
  %v7744 = vpack.c.b16 %v7712, %v7696
  %v7745 = vpack.c.b16 %v7713, %v7697
  %v7746 = vpack.c.b16 %v7714, %v7698
  %v7747 = vpack.c.b16 %v7715, %v7699
  %v7748 = vpack.c.b16 %v7716, %v7700
  %v7749 = vpack.c.b16 %v7717, %v7701
  %v7750 = vpack.c.b16 %v7718, %v7702
  %v7751 = vpack.c.b16 %v7719, %v7703
  %v7752 = vpack.c.b16 %v7720, %v7704
  %v7753 = vpack.c.b16 %v7721, %v7705
  %v7754 = vpack.c.b16 %v7722, %v7706
  %v7755 = vpack.c.b16 %v7723, %v7707
  %v7756 = vpack.c.b16 %v7724, %v7708
  %v7757 = vpack.c.b16 %v7725, %v7709
  %v7758 = vpack.c.b16 %v7726, %v7710
  %v7792 = vsel %vm80, %v7509, 0
  %v7795 = vsel %vm80, %v7510, 0
  %v7798 = vsel %vm80, %v7511, 0
  %v7801 = vsel %vm80, %v7512, 0
  %7803 = vmatprep.subr.bf16.mxu0 0
  %7804 = vmatpush1.bf16.msra.mxu0 0
  %7805 = vmatprep.subr.bf16.mxu0 0
  %7806 = vmatpush1.bf16.msra.mxu0 0
  %7807 = vmatprep.subr.bf16.mxu0 0
  %7808 = vmatpush1.bf16.msra.mxu0 0
  %7809 = vmatprep.subr.bf16.mxu0 0
  %7810 = vmatpush1.bf16.msra.mxu0 0
  %7811 = vmatprep.subr.bf16.mxu0 0
  %7812 = vmatpush1.bf16.msra.mxu0 0
  %7813 = vmatprep.subr.bf16.mxu0 0
  %7814 = vmatpush1.bf16.msra.mxu0 0
  %7815 = vmatprep.subr.bf16.mxu0 %v7744
  %7816 = vmatpush1.bf16.msra.mxu0 %v7743
  %7817 = vmatprep.subr.bf16.mxu0 %v7728
  %7818 = vmatpush1.bf16.msra.mxu0 %v7727
  %7819 = vmatprep.subr.bf16.mxu0 0
  %7820 = vmatpush2.bf16.msra.mxu0 0
  %7821 = vmatprep.subr.bf16.mxu0 0
  %7822 = vmatpush2.bf16.msra.mxu0 0
  %7823 = vmatprep.subr.bf16.mxu0 0
  %7824 = vmatpush2.bf16.msra.mxu0 0
  %7825 = vmatprep.subr.bf16.mxu0 0
  %7826 = vmatpush2.bf16.msra.mxu0 0
  %7827 = vmatprep.subr.bf16.mxu0 0
  %7828 = vmatpush2.bf16.msra.mxu0 0
  %7829 = vmatprep.subr.bf16.mxu0 0
  %7830 = vmatpush2.bf16.msra.mxu0 0
  %7831 = vmatprep.subr.bf16.mxu0 0
  %7832 = vmatpush2.bf16.msra.mxu0 0
  %7833 = vmatprep.subr.bf16.mxu0 0
  %7834 = vmatpush2.bf16.msra.mxu0 0
  %7835 = vmatprep.mubr.bf16.mxu0 0
  %7836 = vmatmul.mubr.bf16.gmra.mxu0 %v7792
  %v7837 = vpop.f32.mrf.mxu0
  %v7838 = vadd.f32 %v7554, %v7837
  %v7839 = vpop.f32.mrf.mxu0
  %v7840 = vadd.f32 %v7558, %v7839
  %v7841 = vpop.f32.mrf.mxu0
  %v7842 = vadd.f32 %v7554, %v7841
  %v7843 = vpop.f32.mrf.mxu0
  %v7844 = vadd.f32 %v7558, %v7843
  %7845 = vmatprep.mubr.bf16.mxu0 0
  %7846 = vmatmul.mubr.bf16.gmra.mxu0 %v7795
  %v7847 = vpop.f32.mrf.mxu0
  %v7848 = vadd.f32 %v7554, %v7847
  %v7849 = vpop.f32.mrf.mxu0
  %v7850 = vadd.f32 %v7558, %v7849
  %v7851 = vpop.f32.mrf.mxu0
  %v7852 = vadd.f32 %v7554, %v7851
  %v7853 = vpop.f32.mrf.mxu0
  %v7854 = vadd.f32 %v7558, %v7853
  %7855 = vmatprep.mubr.bf16.mxu0 0
  %7856 = vmatmul.mubr.bf16.gmra.mxu0 %v7798
  %v7857 = vpop.f32.mrf.mxu0
  %v7858 = vadd.f32 %v7554, %v7857
  %v7859 = vpop.f32.mrf.mxu0
  %v7860 = vadd.f32 %v7558, %v7859
  %v7861 = vpop.f32.mrf.mxu0
  %v7862 = vadd.f32 %v7554, %v7861
  %v7863 = vpop.f32.mrf.mxu0
  %v7864 = vadd.f32 %v7558, %v7863
  %7865 = vmatprep.mubr.bf16.mxu0 0
  %7866 = vmatmul.mubr.bf16.gmra.mxu0 %v7801
  %v7867 = vpop.f32.mrf.mxu0
  %v7868 = vadd.f32 %v7554, %v7867
  %v7869 = vpop.f32.mrf.mxu0
  %v7870 = vadd.f32 %v7558, %v7869
  %v7871 = vpop.f32.mrf.mxu0
  %v7872 = vadd.f32 %v7554, %v7871
  %v7873 = vpop.f32.mrf.mxu0
  %v7874 = vadd.f32 %v7558, %v7873
  %7875 = vdwg.mxu0
  %7876 = vmatprep.subr.bf16.mxu0 0
  %7877 = vmatpush1.bf16.msra.mxu0 0
  %7878 = vmatprep.subr.bf16.mxu0 0
  %7879 = vmatpush1.bf16.msra.mxu0 0
  %7880 = vmatprep.subr.bf16.mxu0 0
  %7881 = vmatpush1.bf16.msra.mxu0 0
  %7882 = vmatprep.subr.bf16.mxu0 0
  %7883 = vmatpush1.bf16.msra.mxu0 0
  %7884 = vmatprep.subr.bf16.mxu0 0
  %7885 = vmatpush1.bf16.msra.mxu0 0
  %7886 = vmatprep.subr.bf16.mxu0 0
  %7887 = vmatpush1.bf16.msra.mxu0 0
  %7888 = vmatprep.subr.bf16.mxu0 %v7746
  %7889 = vmatpush1.bf16.msra.mxu0 %v7745
  %7890 = vmatprep.subr.bf16.mxu0 %v7730
  %7891 = vmatpush1.bf16.msra.mxu0 %v7729
  %7892 = vmatprep.subr.bf16.mxu0 0
  %7893 = vmatpush2.bf16.msra.mxu0 0
  %7894 = vmatprep.subr.bf16.mxu0 0
  %7895 = vmatpush2.bf16.msra.mxu0 0
  %7896 = vmatprep.subr.bf16.mxu0 0
  %7897 = vmatpush2.bf16.msra.mxu0 0
  %7898 = vmatprep.subr.bf16.mxu0 0
  %7899 = vmatpush2.bf16.msra.mxu0 0
  %7900 = vmatprep.subr.bf16.mxu0 0
  %7901 = vmatpush2.bf16.msra.mxu0 0
  %7902 = vmatprep.subr.bf16.mxu0 0
  %7903 = vmatpush2.bf16.msra.mxu0 0
  %7904 = vmatprep.subr.bf16.mxu0 0
  %7905 = vmatpush2.bf16.msra.mxu0 0
  %7906 = vmatprep.subr.bf16.mxu0 0
  %7907 = vmatpush2.bf16.msra.mxu0 0
  %7908 = vmatprep.mubr.bf16.mxu0 0
  %7909 = vmatmul.mubr.bf16.gmra.mxu0 %v7792
  %v7910 = vpop.f32.mrf.mxu0
  %v7911 = vadd.f32 %v7562, %v7910
  %v7912 = vpop.f32.mrf.mxu0
  %v7913 = vadd.f32 %v7566, %v7912
  %v7914 = vpop.f32.mrf.mxu0
  %v7915 = vadd.f32 %v7562, %v7914
  %v7916 = vpop.f32.mrf.mxu0
  %v7917 = vadd.f32 %v7566, %v7916
  %7918 = vmatprep.mubr.bf16.mxu0 0
  %7919 = vmatmul.mubr.bf16.gmra.mxu0 %v7795
  %v7920 = vpop.f32.mrf.mxu0
  %v7921 = vadd.f32 %v7562, %v7920
  %v7922 = vpop.f32.mrf.mxu0
  %v7923 = vadd.f32 %v7566, %v7922
  %v7924 = vpop.f32.mrf.mxu0
  %v7925 = vadd.f32 %v7562, %v7924
  %v7926 = vpop.f32.mrf.mxu0
  %v7927 = vadd.f32 %v7566, %v7926
  %7928 = vmatprep.mubr.bf16.mxu0 0
  %7929 = vmatmul.mubr.bf16.gmra.mxu0 %v7798
  %v7930 = vpop.f32.mrf.mxu0
  %v7931 = vadd.f32 %v7562, %v7930
  %v7932 = vpop.f32.mrf.mxu0
  %v7933 = vadd.f32 %v7566, %v7932
  %v7934 = vpop.f32.mrf.mxu0
  %v7935 = vadd.f32 %v7562, %v7934
  %v7936 = vpop.f32.mrf.mxu0
  %v7937 = vadd.f32 %v7566, %v7936
  %7938 = vmatprep.mubr.bf16.mxu0 0
  %7939 = vmatmul.mubr.bf16.gmra.mxu0 %v7801
  %v7940 = vpop.f32.mrf.mxu0
  %v7941 = vadd.f32 %v7562, %v7940
  %v7942 = vpop.f32.mrf.mxu0
  %v7943 = vadd.f32 %v7566, %v7942
  %v7944 = vpop.f32.mrf.mxu0
  %v7945 = vadd.f32 %v7562, %v7944
  %v7946 = vpop.f32.mrf.mxu0
  %v7947 = vadd.f32 %v7566, %v7946
  %7948 = vdwg.mxu0
  %7949 = vmatprep.subr.bf16.mxu0 0
  %7950 = vmatpush1.bf16.msra.mxu0 0
  %7951 = vmatprep.subr.bf16.mxu0 0
  %7952 = vmatpush1.bf16.msra.mxu0 0
  %7953 = vmatprep.subr.bf16.mxu0 0
  %7954 = vmatpush1.bf16.msra.mxu0 0
  %7955 = vmatprep.subr.bf16.mxu0 0
  %7956 = vmatpush1.bf16.msra.mxu0 0
  %7957 = vmatprep.subr.bf16.mxu0 0
  %7958 = vmatpush1.bf16.msra.mxu0 0
  %7959 = vmatprep.subr.bf16.mxu0 0
  %7960 = vmatpush1.bf16.msra.mxu0 0
  %7961 = vmatprep.subr.bf16.mxu0 %v7748
  %7962 = vmatpush1.bf16.msra.mxu0 %v7747
  %7963 = vmatprep.subr.bf16.mxu0 %v7732
  %7964 = vmatpush1.bf16.msra.mxu0 %v7731
  %7965 = vmatprep.subr.bf16.mxu0 0
  %7966 = vmatpush2.bf16.msra.mxu0 0
  %7967 = vmatprep.subr.bf16.mxu0 0
  %7968 = vmatpush2.bf16.msra.mxu0 0
  %7969 = vmatprep.subr.bf16.mxu0 0
  %7970 = vmatpush2.bf16.msra.mxu0 0
  %7971 = vmatprep.subr.bf16.mxu0 0
  %7972 = vmatpush2.bf16.msra.mxu0 0
  %7973 = vmatprep.subr.bf16.mxu0 0
  %7974 = vmatpush2.bf16.msra.mxu0 0
  %7975 = vmatprep.subr.bf16.mxu0 0
  %7976 = vmatpush2.bf16.msra.mxu0 0
  %7977 = vmatprep.subr.bf16.mxu0 0
  %7978 = vmatpush2.bf16.msra.mxu0 0
  %7979 = vmatprep.subr.bf16.mxu0 0
  %7980 = vmatpush2.bf16.msra.mxu0 0
  %7981 = vmatprep.mubr.bf16.mxu0 0
  %7982 = vmatmul.mubr.bf16.gmra.mxu0 %v7792
  %v7983 = vpop.f32.mrf.mxu0
  %v7984 = vadd.f32 %v7570, %v7983
  %v7985 = vpop.f32.mrf.mxu0
  %v7986 = vadd.f32 %v7574, %v7985
  %v7987 = vpop.f32.mrf.mxu0
  %v7988 = vadd.f32 %v7570, %v7987
  %v7989 = vpop.f32.mrf.mxu0
  %v7990 = vadd.f32 %v7574, %v7989
  %7991 = vmatprep.mubr.bf16.mxu0 0
  %7992 = vmatmul.mubr.bf16.gmra.mxu0 %v7795
  %v7993 = vpop.f32.mrf.mxu0
  %v7994 = vadd.f32 %v7570, %v7993
  %v7995 = vpop.f32.mrf.mxu0
  %v7996 = vadd.f32 %v7574, %v7995
  %v7997 = vpop.f32.mrf.mxu0
  %v7998 = vadd.f32 %v7570, %v7997
  %v7999 = vpop.f32.mrf.mxu0
  %v8000 = vadd.f32 %v7574, %v7999
  %8001 = vmatprep.mubr.bf16.mxu0 0
  %8002 = vmatmul.mubr.bf16.gmra.mxu0 %v7798
  %v8003 = vpop.f32.mrf.mxu0
  %v8004 = vadd.f32 %v7570, %v8003
  %v8005 = vpop.f32.mrf.mxu0
  %v8006 = vadd.f32 %v7574, %v8005
  %v8007 = vpop.f32.mrf.mxu0
  %v8008 = vadd.f32 %v7570, %v8007
  %v8009 = vpop.f32.mrf.mxu0
  %v8010 = vadd.f32 %v7574, %v8009
  %8011 = vmatprep.mubr.bf16.mxu0 0
  %8012 = vmatmul.mubr.bf16.gmra.mxu0 %v7801
  %v8013 = vpop.f32.mrf.mxu0
  %v8014 = vadd.f32 %v7570, %v8013
  %v8015 = vpop.f32.mrf.mxu0
  %v8016 = vadd.f32 %v7574, %v8015
  %v8017 = vpop.f32.mrf.mxu0
  %v8018 = vadd.f32 %v7570, %v8017
  %v8019 = vpop.f32.mrf.mxu0
  %v8020 = vadd.f32 %v7574, %v8019
  %8021 = vdwg.mxu0
  %8022 = vmatprep.subr.bf16.mxu0 0
  %8023 = vmatpush1.bf16.msra.mxu0 0
  %8024 = vmatprep.subr.bf16.mxu0 0
  %8025 = vmatpush1.bf16.msra.mxu0 0
  %8026 = vmatprep.subr.bf16.mxu0 0
  %8027 = vmatpush1.bf16.msra.mxu0 0
  %8028 = vmatprep.subr.bf16.mxu0 0
  %8029 = vmatpush1.bf16.msra.mxu0 0
  %8030 = vmatprep.subr.bf16.mxu0 0
  %8031 = vmatpush1.bf16.msra.mxu0 0
  %8032 = vmatprep.subr.bf16.mxu0 0
  %8033 = vmatpush1.bf16.msra.mxu0 0
  %8034 = vmatprep.subr.bf16.mxu0 %v7750
  %8035 = vmatpush1.bf16.msra.mxu0 %v7749
  %8036 = vmatprep.subr.bf16.mxu0 %v7734
  %8037 = vmatpush1.bf16.msra.mxu0 %v7733
  %8038 = vmatprep.subr.bf16.mxu0 0
  %8039 = vmatpush2.bf16.msra.mxu0 0
  %8040 = vmatprep.subr.bf16.mxu0 0
  %8041 = vmatpush2.bf16.msra.mxu0 0
  %8042 = vmatprep.subr.bf16.mxu0 0
  %8043 = vmatpush2.bf16.msra.mxu0 0
  %8044 = vmatprep.subr.bf16.mxu0 0
  %8045 = vmatpush2.bf16.msra.mxu0 0
  %8046 = vmatprep.subr.bf16.mxu0 0
  %8047 = vmatpush2.bf16.msra.mxu0 0
  %8048 = vmatprep.subr.bf16.mxu0 0
  %8049 = vmatpush2.bf16.msra.mxu0 0
  %8050 = vmatprep.subr.bf16.mxu0 0
  %8051 = vmatpush2.bf16.msra.mxu0 0
  %8052 = vmatprep.subr.bf16.mxu0 0
  %8053 = vmatpush2.bf16.msra.mxu0 0
  %8054 = vmatprep.mubr.bf16.mxu0 0
  %8055 = vmatmul.mubr.bf16.gmra.mxu0 %v7792
  %v8056 = vpop.f32.mrf.mxu0
  %v8057 = vadd.f32 %v7578, %v8056
  %v8058 = vpop.f32.mrf.mxu0
  %v8059 = vadd.f32 %v7582, %v8058
  %v8060 = vpop.f32.mrf.mxu0
  %v8061 = vadd.f32 %v7578, %v8060
  %v8062 = vpop.f32.mrf.mxu0
  %v8063 = vadd.f32 %v7582, %v8062
  %8064 = vmatprep.mubr.bf16.mxu0 0
  %8065 = vmatmul.mubr.bf16.gmra.mxu0 %v7795
  %v8066 = vpop.f32.mrf.mxu0
  %v8067 = vadd.f32 %v7578, %v8066
  %v8068 = vpop.f32.mrf.mxu0
  %v8069 = vadd.f32 %v7582, %v8068
  %v8070 = vpop.f32.mrf.mxu0
  %v8071 = vadd.f32 %v7578, %v8070
  %v8072 = vpop.f32.mrf.mxu0
  %v8073 = vadd.f32 %v7582, %v8072
  %8074 = vmatprep.mubr.bf16.mxu0 0
  %8075 = vmatmul.mubr.bf16.gmra.mxu0 %v7798
  %v8076 = vpop.f32.mrf.mxu0
  %v8077 = vadd.f32 %v7578, %v8076
  %v8078 = vpop.f32.mrf.mxu0
  %v8079 = vadd.f32 %v7582, %v8078
  %v8080 = vpop.f32.mrf.mxu0
  %v8081 = vadd.f32 %v7578, %v8080
  %v8082 = vpop.f32.mrf.mxu0
  %v8083 = vadd.f32 %v7582, %v8082
  %8084 = vmatprep.mubr.bf16.mxu0 0
  %8085 = vmatmul.mubr.bf16.gmra.mxu0 %v7801
  %v8086 = vpop.f32.mrf.mxu0
  %v8087 = vadd.f32 %v7578, %v8086
  %v8088 = vpop.f32.mrf.mxu0
  %v8089 = vadd.f32 %v7582, %v8088
  %v8090 = vpop.f32.mrf.mxu0
  %v8091 = vadd.f32 %v7578, %v8090
  %v8092 = vpop.f32.mrf.mxu0
  %v8093 = vadd.f32 %v7582, %v8092
  %8094 = vdwg.mxu0
  %8095 = vmatprep.subr.bf16.mxu0 0
  %8096 = vmatpush1.bf16.msra.mxu0 0
  %8097 = vmatprep.subr.bf16.mxu0 0
  %8098 = vmatpush1.bf16.msra.mxu0 0
  %8099 = vmatprep.subr.bf16.mxu0 0
  %8100 = vmatpush1.bf16.msra.mxu0 0
  %8101 = vmatprep.subr.bf16.mxu0 0
  %8102 = vmatpush1.bf16.msra.mxu0 0
  %8103 = vmatprep.subr.bf16.mxu0 0
  %8104 = vmatpush1.bf16.msra.mxu0 0
  %8105 = vmatprep.subr.bf16.mxu0 0
  %8106 = vmatpush1.bf16.msra.mxu0 0
  %8107 = vmatprep.subr.bf16.mxu0 %v7752
  %8108 = vmatpush1.bf16.msra.mxu0 %v7751
  %8109 = vmatprep.subr.bf16.mxu0 %v7736
  %8110 = vmatpush1.bf16.msra.mxu0 %v7735
  %8111 = vmatprep.subr.bf16.mxu0 0
  %8112 = vmatpush2.bf16.msra.mxu0 0
  %8113 = vmatprep.subr.bf16.mxu0 0
  %8114 = vmatpush2.bf16.msra.mxu0 0
  %8115 = vmatprep.subr.bf16.mxu0 0
  %8116 = vmatpush2.bf16.msra.mxu0 0
  %8117 = vmatprep.subr.bf16.mxu0 0
  %8118 = vmatpush2.bf16.msra.mxu0 0
  %8119 = vmatprep.subr.bf16.mxu0 0
  %8120 = vmatpush2.bf16.msra.mxu0 0
  %8121 = vmatprep.subr.bf16.mxu0 0
  %8122 = vmatpush2.bf16.msra.mxu0 0
  %8123 = vmatprep.subr.bf16.mxu0 0
  %8124 = vmatpush2.bf16.msra.mxu0 0
  %8125 = vmatprep.subr.bf16.mxu0 0
  %8126 = vmatpush2.bf16.msra.mxu0 0
  %8127 = vmatprep.mubr.bf16.mxu0 0
  %8128 = vmatmul.mubr.bf16.gmra.mxu0 %v7792
  %v8129 = vpop.f32.mrf.mxu0
  %v8130 = vadd.f32 %v7586, %v8129
  %v8131 = vpop.f32.mrf.mxu0
  %v8132 = vadd.f32 %v7590, %v8131
  %v8133 = vpop.f32.mrf.mxu0
  %v8134 = vadd.f32 %v7586, %v8133
  %v8135 = vpop.f32.mrf.mxu0
  %v8136 = vadd.f32 %v7590, %v8135
  %8137 = vmatprep.mubr.bf16.mxu0 0
  %8138 = vmatmul.mubr.bf16.gmra.mxu0 %v7795
  %v8139 = vpop.f32.mrf.mxu0
  %v8140 = vadd.f32 %v7586, %v8139
  %v8141 = vpop.f32.mrf.mxu0
  %v8142 = vadd.f32 %v7590, %v8141
  %v8143 = vpop.f32.mrf.mxu0
  %v8144 = vadd.f32 %v7586, %v8143
  %v8145 = vpop.f32.mrf.mxu0
  %v8146 = vadd.f32 %v7590, %v8145
  %8147 = vmatprep.mubr.bf16.mxu0 0
  %8148 = vmatmul.mubr.bf16.gmra.mxu0 %v7798
  %v8149 = vpop.f32.mrf.mxu0
  %v8150 = vadd.f32 %v7586, %v8149
  %v8151 = vpop.f32.mrf.mxu0
  %v8152 = vadd.f32 %v7590, %v8151
  %v8153 = vpop.f32.mrf.mxu0
  %v8154 = vadd.f32 %v7586, %v8153
  %v8155 = vpop.f32.mrf.mxu0
  %v8156 = vadd.f32 %v7590, %v8155
  %8157 = vmatprep.mubr.bf16.mxu0 0
  %8158 = vmatmul.mubr.bf16.gmra.mxu0 %v7801
  %v8159 = vpop.f32.mrf.mxu0
  %v8160 = vadd.f32 %v7586, %v8159
  %v8161 = vpop.f32.mrf.mxu0
  %v8162 = vadd.f32 %v7590, %v8161
  %v8163 = vpop.f32.mrf.mxu0
  %v8164 = vadd.f32 %v7586, %v8163
  %v8165 = vpop.f32.mrf.mxu0
  %v8166 = vadd.f32 %v7590, %v8165
  %8167 = vdwg.mxu0
  %8168 = vmatprep.subr.bf16.mxu0 0
  %8169 = vmatpush1.bf16.msra.mxu0 0
  %8170 = vmatprep.subr.bf16.mxu0 0
  %8171 = vmatpush1.bf16.msra.mxu0 0
  %8172 = vmatprep.subr.bf16.mxu0 0
  %8173 = vmatpush1.bf16.msra.mxu0 0
  %8174 = vmatprep.subr.bf16.mxu0 0
  %8175 = vmatpush1.bf16.msra.mxu0 0
  %8176 = vmatprep.subr.bf16.mxu0 0
  %8177 = vmatpush1.bf16.msra.mxu0 0
  %8178 = vmatprep.subr.bf16.mxu0 0
  %8179 = vmatpush1.bf16.msra.mxu0 0
  %8180 = vmatprep.subr.bf16.mxu0 %v7754
  %8181 = vmatpush1.bf16.msra.mxu0 %v7753
  %8182 = vmatprep.subr.bf16.mxu0 %v7738
  %8183 = vmatpush1.bf16.msra.mxu0 %v7737
  %8184 = vmatprep.subr.bf16.mxu0 0
  %8185 = vmatpush2.bf16.msra.mxu0 0
  %8186 = vmatprep.subr.bf16.mxu0 0
  %8187 = vmatpush2.bf16.msra.mxu0 0
  %8188 = vmatprep.subr.bf16.mxu0 0
  %8189 = vmatpush2.bf16.msra.mxu0 0
  %8190 = vmatprep.subr.bf16.mxu0 0
  %8191 = vmatpush2.bf16.msra.mxu0 0
  %8192 = vmatprep.subr.bf16.mxu0 0
  %8193 = vmatpush2.bf16.msra.mxu0 0
  %8194 = vmatprep.subr.bf16.mxu0 0
  %8195 = vmatpush2.bf16.msra.mxu0 0
  %8196 = vmatprep.subr.bf16.mxu0 0
  %8197 = vmatpush2.bf16.msra.mxu0 0
  %8198 = vmatprep.subr.bf16.mxu0 0
  %8199 = vmatpush2.bf16.msra.mxu0 0
  %8200 = vmatprep.mubr.bf16.mxu0 0
  %8201 = vmatmul.mubr.bf16.gmra.mxu0 %v7792
  %v8202 = vpop.f32.mrf.mxu0
  %v8203 = vadd.f32 %v7594, %v8202
  %v8204 = vpop.f32.mrf.mxu0
  %v8205 = vadd.f32 %v7598, %v8204
  %v8206 = vpop.f32.mrf.mxu0
  %v8207 = vadd.f32 %v7594, %v8206
  %v8208 = vpop.f32.mrf.mxu0
  %v8209 = vadd.f32 %v7598, %v8208
  %8210 = vmatprep.mubr.bf16.mxu0 0
  %8211 = vmatmul.mubr.bf16.gmra.mxu0 %v7795
  %v8212 = vpop.f32.mrf.mxu0
  %v8213 = vadd.f32 %v7594, %v8212
  %v8214 = vpop.f32.mrf.mxu0
  %v8215 = vadd.f32 %v7598, %v8214
  %v8216 = vpop.f32.mrf.mxu0
  %v8217 = vadd.f32 %v7594, %v8216
  %v8218 = vpop.f32.mrf.mxu0
  %v8219 = vadd.f32 %v7598, %v8218
  %8220 = vmatprep.mubr.bf16.mxu0 0
  %8221 = vmatmul.mubr.bf16.gmra.mxu0 %v7798
  %v8222 = vpop.f32.mrf.mxu0
  %v8223 = vadd.f32 %v7594, %v8222
  %v8224 = vpop.f32.mrf.mxu0
  %v8225 = vadd.f32 %v7598, %v8224
  %v8226 = vpop.f32.mrf.mxu0
  %v8227 = vadd.f32 %v7594, %v8226
  %v8228 = vpop.f32.mrf.mxu0
  %v8229 = vadd.f32 %v7598, %v8228
  %8230 = vmatprep.mubr.bf16.mxu0 0
  %8231 = vmatmul.mubr.bf16.gmra.mxu0 %v7801
  %v8232 = vpop.f32.mrf.mxu0
  %v8233 = vadd.f32 %v7594, %v8232
  %v8234 = vpop.f32.mrf.mxu0
  %v8235 = vadd.f32 %v7598, %v8234
  %v8236 = vpop.f32.mrf.mxu0
  %v8237 = vadd.f32 %v7594, %v8236
  %v8238 = vpop.f32.mrf.mxu0
  %v8239 = vadd.f32 %v7598, %v8238
  %8240 = vdwg.mxu0
  %8241 = vmatprep.subr.bf16.mxu0 0
  %8242 = vmatpush1.bf16.msra.mxu0 0
  %8243 = vmatprep.subr.bf16.mxu0 0
  %8244 = vmatpush1.bf16.msra.mxu0 0
  %8245 = vmatprep.subr.bf16.mxu0 0
  %8246 = vmatpush1.bf16.msra.mxu0 0
  %8247 = vmatprep.subr.bf16.mxu0 0
  %8248 = vmatpush1.bf16.msra.mxu0 0
  %8249 = vmatprep.subr.bf16.mxu0 0
  %8250 = vmatpush1.bf16.msra.mxu0 0
  %8251 = vmatprep.subr.bf16.mxu0 0
  %8252 = vmatpush1.bf16.msra.mxu0 0
  %8253 = vmatprep.subr.bf16.mxu0 %v7756
  %8254 = vmatpush1.bf16.msra.mxu0 %v7755
  %8255 = vmatprep.subr.bf16.mxu0 %v7740
  %8256 = vmatpush1.bf16.msra.mxu0 %v7739
  %8257 = vmatprep.subr.bf16.mxu0 0
  %8258 = vmatpush2.bf16.msra.mxu0 0
  %8259 = vmatprep.subr.bf16.mxu0 0
  %8260 = vmatpush2.bf16.msra.mxu0 0
  %8261 = vmatprep.subr.bf16.mxu0 0
  %8262 = vmatpush2.bf16.msra.mxu0 0
  %8263 = vmatprep.subr.bf16.mxu0 0
  %8264 = vmatpush2.bf16.msra.mxu0 0
  %8265 = vmatprep.subr.bf16.mxu0 0
  %8266 = vmatpush2.bf16.msra.mxu0 0
  %8267 = vmatprep.subr.bf16.mxu0 0
  %8268 = vmatpush2.bf16.msra.mxu0 0
  %8269 = vmatprep.subr.bf16.mxu0 0
  %8270 = vmatpush2.bf16.msra.mxu0 0
  %8271 = vmatprep.subr.bf16.mxu0 0
  %8272 = vmatpush2.bf16.msra.mxu0 0
  %8273 = vmatprep.mubr.bf16.mxu0 0
  %8274 = vmatmul.mubr.bf16.gmra.mxu0 %v7792
  %v8275 = vpop.f32.mrf.mxu0
  %v8276 = vadd.f32 %v7602, %v8275
  %v8277 = vpop.f32.mrf.mxu0
  %v8278 = vadd.f32 %v7606, %v8277
  %v8279 = vpop.f32.mrf.mxu0
  %v8280 = vadd.f32 %v7602, %v8279
  %v8281 = vpop.f32.mrf.mxu0
  %v8282 = vadd.f32 %v7606, %v8281
  %8283 = vmatprep.mubr.bf16.mxu0 0
  %8284 = vmatmul.mubr.bf16.gmra.mxu0 %v7795
  %v8285 = vpop.f32.mrf.mxu0
  %v8286 = vadd.f32 %v7602, %v8285
  %v8287 = vpop.f32.mrf.mxu0
  %v8288 = vadd.f32 %v7606, %v8287
  %v8289 = vpop.f32.mrf.mxu0
  %v8290 = vadd.f32 %v7602, %v8289
  %v8291 = vpop.f32.mrf.mxu0
  %v8292 = vadd.f32 %v7606, %v8291
  %8293 = vmatprep.mubr.bf16.mxu0 0
  %8294 = vmatmul.mubr.bf16.gmra.mxu0 %v7798
  %v8295 = vpop.f32.mrf.mxu0
  %v8296 = vadd.f32 %v7602, %v8295
  %v8297 = vpop.f32.mrf.mxu0
  %v8298 = vadd.f32 %v7606, %v8297
  %v8299 = vpop.f32.mrf.mxu0
  %v8300 = vadd.f32 %v7602, %v8299
  %v8301 = vpop.f32.mrf.mxu0
  %v8302 = vadd.f32 %v7606, %v8301
  %8303 = vmatprep.mubr.bf16.mxu0 0
  %8304 = vmatmul.mubr.bf16.gmra.mxu0 %v7801
  %v8305 = vpop.f32.mrf.mxu0
  %v8306 = vadd.f32 %v7602, %v8305
  %v8307 = vpop.f32.mrf.mxu0
  %v8308 = vadd.f32 %v7606, %v8307
  %v8309 = vpop.f32.mrf.mxu0
  %v8310 = vadd.f32 %v7602, %v8309
  %v8311 = vpop.f32.mrf.mxu0
  %v8312 = vadd.f32 %v7606, %v8311
  %8313 = vdwg.mxu0
  %8314 = vmatprep.subr.bf16.mxu0 0
  %8315 = vmatpush1.bf16.msra.mxu0 0
  %8316 = vmatprep.subr.bf16.mxu0 0
  %8317 = vmatpush1.bf16.msra.mxu0 0
  %8318 = vmatprep.subr.bf16.mxu0 0
  %8319 = vmatpush1.bf16.msra.mxu0 0
  %8320 = vmatprep.subr.bf16.mxu0 0
  %8321 = vmatpush1.bf16.msra.mxu0 0
  %8322 = vmatprep.subr.bf16.mxu0 0
  %8323 = vmatpush1.bf16.msra.mxu0 0
  %8324 = vmatprep.subr.bf16.mxu0 0
  %8325 = vmatpush1.bf16.msra.mxu0 0
  %8326 = vmatprep.subr.bf16.mxu0 %v7758
  %8327 = vmatpush1.bf16.msra.mxu0 %v7757
  %8328 = vmatprep.subr.bf16.mxu0 %v7742
  %8329 = vmatpush1.bf16.msra.mxu0 %v7741
  %8330 = vmatprep.subr.bf16.mxu0 0
  %8331 = vmatpush2.bf16.msra.mxu0 0
  %8332 = vmatprep.subr.bf16.mxu0 0
  %8333 = vmatpush2.bf16.msra.mxu0 0
  %8334 = vmatprep.subr.bf16.mxu0 0
  %8335 = vmatpush2.bf16.msra.mxu0 0
  %8336 = vmatprep.subr.bf16.mxu0 0
  %8337 = vmatpush2.bf16.msra.mxu0 0
  %8338 = vmatprep.subr.bf16.mxu0 0
  %8339 = vmatpush2.bf16.msra.mxu0 0
  %8340 = vmatprep.subr.bf16.mxu0 0
  %8341 = vmatpush2.bf16.msra.mxu0 0
  %8342 = vmatprep.subr.bf16.mxu0 0
  %8343 = vmatpush2.bf16.msra.mxu0 0
  %8344 = vmatprep.subr.bf16.mxu0 0
  %8345 = vmatpush2.bf16.msra.mxu0 0
  %8346 = vmatprep.mubr.bf16.mxu0 0
  %8347 = vmatmul.mubr.bf16.gmra.mxu0 %v7792
  %v8348 = vpop.f32.mrf.mxu0
  %v8349 = vadd.f32 %v7610, %v8348
  %v8350 = vpop.f32.mrf.mxu0
  %v8351 = vadd.f32 %v7614, %v8350
  %v8352 = vpop.f32.mrf.mxu0
  %v8353 = vadd.f32 %v7610, %v8352
  %v8354 = vpop.f32.mrf.mxu0
  %v8355 = vadd.f32 %v7614, %v8354
  %8356 = vmatprep.mubr.bf16.mxu0 0
  %8357 = vmatmul.mubr.bf16.gmra.mxu0 %v7795
  %v8358 = vpop.f32.mrf.mxu0
  %v8359 = vadd.f32 %v7610, %v8358
  %v8360 = vpop.f32.mrf.mxu0
  %v8361 = vadd.f32 %v7614, %v8360
  %v8362 = vpop.f32.mrf.mxu0
  %v8363 = vadd.f32 %v7610, %v8362
  %v8364 = vpop.f32.mrf.mxu0
  %v8365 = vadd.f32 %v7614, %v8364
  %8366 = vmatprep.mubr.bf16.mxu0 0
  %8367 = vmatmul.mubr.bf16.gmra.mxu0 %v7798
  %v8368 = vpop.f32.mrf.mxu0
  %v8369 = vadd.f32 %v7610, %v8368
  %v8370 = vpop.f32.mrf.mxu0
  %v8371 = vadd.f32 %v7614, %v8370
  %v8372 = vpop.f32.mrf.mxu0
  %v8373 = vadd.f32 %v7610, %v8372
  %v8374 = vpop.f32.mrf.mxu0
  %v8375 = vadd.f32 %v7614, %v8374
  %8376 = vmatprep.mubr.bf16.mxu0 0
  %8377 = vmatmul.mubr.bf16.gmra.mxu0 %v7801
  %v8378 = vpop.f32.mrf.mxu0
  %v8379 = vadd.f32 %v7610, %v8378
  %v8380 = vpop.f32.mrf.mxu0
  %v8381 = vadd.f32 %v7614, %v8380
  %v8382 = vpop.f32.mrf.mxu0
  %v8383 = vadd.f32 %v7610, %v8382
  %v8384 = vpop.f32.mrf.mxu0
  %v8385 = vadd.f32 %v7614, %v8384
  %8386 = vdwg.mxu0
  %v8387 = vmax.f32 %v7838, 0.0
  %v8388 = vmax.f32 %v7840, 0.0
  %v8389 = vmax.f32 %v7911, 0.0
  %v8390 = vmax.f32 %v7913, 0.0
  %v8391 = vmax.f32 %v7984, 0.0
  %v8392 = vmax.f32 %v7986, 0.0
  %v8393 = vmax.f32 %v8057, 0.0
  %v8394 = vmax.f32 %v8059, 0.0
  %v8395 = vmax.f32 %v8130, 0.0
  %v8396 = vmax.f32 %v8132, 0.0
  %v8397 = vmax.f32 %v8203, 0.0
  %v8398 = vmax.f32 %v8205, 0.0
  %v8399 = vmax.f32 %v8276, 0.0
  %v8400 = vmax.f32 %v8278, 0.0
  %v8401 = vmax.f32 %v8349, 0.0
  %v8402 = vmax.f32 %v8351, 0.0
  %v8403 = vmax.f32 %v7842, 0.0
  %v8404 = vmax.f32 %v7844, 0.0
  %v8405 = vmax.f32 %v7915, 0.0
  %v8406 = vmax.f32 %v7917, 0.0
  %v8407 = vmax.f32 %v7988, 0.0
  %v8408 = vmax.f32 %v7990, 0.0
  %v8409 = vmax.f32 %v8061, 0.0
  %v8410 = vmax.f32 %v8063, 0.0
  %v8411 = vmax.f32 %v8134, 0.0
  %v8412 = vmax.f32 %v8136, 0.0
  %v8413 = vmax.f32 %v8207, 0.0
  %v8414 = vmax.f32 %v8209, 0.0
  %v8415 = vmax.f32 %v8280, 0.0
  %v8416 = vmax.f32 %v8282, 0.0
  %v8417 = vmax.f32 %v8353, 0.0
  %v8418 = vmax.f32 %v8355, 0.0
  %v8419 = vmax.f32 %v7848, 0.0
  %v8420 = vmax.f32 %v7850, 0.0
  %v8421 = vmax.f32 %v7921, 0.0
  %v8422 = vmax.f32 %v7923, 0.0
  %v8423 = vmax.f32 %v7994, 0.0
  %v8424 = vmax.f32 %v7996, 0.0
  %v8425 = vmax.f32 %v8067, 0.0
  %v8426 = vmax.f32 %v8069, 0.0
  %v8427 = vmax.f32 %v8140, 0.0
  %v8428 = vmax.f32 %v8142, 0.0
  %v8429 = vmax.f32 %v8213, 0.0
  %v8430 = vmax.f32 %v8215, 0.0
  %v8431 = vmax.f32 %v8286, 0.0
  %v8432 = vmax.f32 %v8288, 0.0
  %v8433 = vmax.f32 %v8359, 0.0
  %v8434 = vmax.f32 %v8361, 0.0
  %v8435 = vmax.f32 %v7852, 0.0
  %v8436 = vmax.f32 %v7854, 0.0
  %v8437 = vmax.f32 %v7925, 0.0
  %v8438 = vmax.f32 %v7927, 0.0
  %v8439 = vmax.f32 %v7998, 0.0
  %v8440 = vmax.f32 %v8000, 0.0
  %v8441 = vmax.f32 %v8071, 0.0
  %v8442 = vmax.f32 %v8073, 0.0
  %v8443 = vmax.f32 %v8144, 0.0
  %v8444 = vmax.f32 %v8146, 0.0
  %v8445 = vmax.f32 %v8217, 0.0
  %v8446 = vmax.f32 %v8219, 0.0
  %v8447 = vmax.f32 %v8290, 0.0
  %v8448 = vmax.f32 %v8292, 0.0
  %v8449 = vmax.f32 %v8363, 0.0
  %v8450 = vmax.f32 %v8365, 0.0
  %v8451 = vmax.f32 %v7858, 0.0
  %v8452 = vmax.f32 %v7860, 0.0
  %v8453 = vmax.f32 %v7931, 0.0
  %v8454 = vmax.f32 %v7933, 0.0
  %v8455 = vmax.f32 %v8004, 0.0
  %v8456 = vmax.f32 %v8006, 0.0
  %v8457 = vmax.f32 %v8077, 0.0
  %v8458 = vmax.f32 %v8079, 0.0
  %v8459 = vmax.f32 %v8150, 0.0
  %v8460 = vmax.f32 %v8152, 0.0
  %v8461 = vmax.f32 %v8223, 0.0
  %v8462 = vmax.f32 %v8225, 0.0
  %v8463 = vmax.f32 %v8296, 0.0
  %v8464 = vmax.f32 %v8298, 0.0
  %v8465 = vmax.f32 %v8369, 0.0
  %v8466 = vmax.f32 %v8371, 0.0
  %v8467 = vmax.f32 %v7862, 0.0
  %v8468 = vmax.f32 %v7864, 0.0
  %v8469 = vmax.f32 %v7935, 0.0
  %v8470 = vmax.f32 %v7937, 0.0
  %v8471 = vmax.f32 %v8008, 0.0
  %v8472 = vmax.f32 %v8010, 0.0
  %v8473 = vmax.f32 %v8081, 0.0
  %v8474 = vmax.f32 %v8083, 0.0
  %v8475 = vmax.f32 %v8154, 0.0
  %v8476 = vmax.f32 %v8156, 0.0
  %v8477 = vmax.f32 %v8227, 0.0
  %v8478 = vmax.f32 %v8229, 0.0
  %v8479 = vmax.f32 %v8300, 0.0
  %v8480 = vmax.f32 %v8302, 0.0
  %v8481 = vmax.f32 %v8373, 0.0
  %v8482 = vmax.f32 %v8375, 0.0
  %v8483 = vmax.f32 %v7868, 0.0
  %v8484 = vmax.f32 %v7870, 0.0
  %v8485 = vmax.f32 %v7941, 0.0
  %v8486 = vmax.f32 %v7943, 0.0
  %v8487 = vmax.f32 %v8014, 0.0
  %v8488 = vmax.f32 %v8016, 0.0
  %v8489 = vmax.f32 %v8087, 0.0
  %v8490 = vmax.f32 %v8089, 0.0
  %v8491 = vmax.f32 %v8160, 0.0
  %v8492 = vmax.f32 %v8162, 0.0
  %v8493 = vmax.f32 %v8233, 0.0
  %v8494 = vmax.f32 %v8235, 0.0
  %v8495 = vmax.f32 %v8306, 0.0
  %v8496 = vmax.f32 %v8308, 0.0
  %v8497 = vmax.f32 %v8379, 0.0
  %v8498 = vmax.f32 %v8381, 0.0
  %v8499 = vmax.f32 %v7872, 0.0
  %v8500 = vmax.f32 %v7874, 0.0
  %v8501 = vmax.f32 %v7945, 0.0
  %v8502 = vmax.f32 %v7947, 0.0
  %v8503 = vmax.f32 %v8018, 0.0
  %v8504 = vmax.f32 %v8020, 0.0
  %v8505 = vmax.f32 %v8091, 0.0
  %v8506 = vmax.f32 %v8093, 0.0
  %v8507 = vmax.f32 %v8164, 0.0
  %v8508 = vmax.f32 %v8166, 0.0
  %v8509 = vmax.f32 %v8237, 0.0
  %v8510 = vmax.f32 %v8239, 0.0
  %v8511 = vmax.f32 %v8310, 0.0
  %v8512 = vmax.f32 %v8312, 0.0
  %v8513 = vmax.f32 %v8383, 0.0
  %v8514 = vmax.f32 %v8385, 0.0
  %v8515 = vpack.c.bf16 %v8403, %v8387
  %v8516 = vpack.c.bf16 %v8404, %v8388
  %v8517 = vpack.c.bf16 %v8405, %v8389
  %v8518 = vpack.c.bf16 %v8406, %v8390
  %v8519 = vpack.c.bf16 %v8407, %v8391
  %v8520 = vpack.c.bf16 %v8408, %v8392
  %v8521 = vpack.c.bf16 %v8409, %v8393
  %v8522 = vpack.c.bf16 %v8410, %v8394
  %v8523 = vpack.c.bf16 %v8411, %v8395
  %v8524 = vpack.c.bf16 %v8412, %v8396
  %v8525 = vpack.c.bf16 %v8413, %v8397
  %v8526 = vpack.c.bf16 %v8414, %v8398
  %v8527 = vpack.c.bf16 %v8415, %v8399
  %v8528 = vpack.c.bf16 %v8416, %v8400
  %v8529 = vpack.c.bf16 %v8417, %v8401
  %v8530 = vpack.c.bf16 %v8418, %v8402
  %v8531 = vpack.c.bf16 %v8435, %v8419
  %v8532 = vpack.c.bf16 %v8436, %v8420
  %v8533 = vpack.c.bf16 %v8437, %v8421
  %v8534 = vpack.c.bf16 %v8438, %v8422
  %v8535 = vpack.c.bf16 %v8439, %v8423
  %v8536 = vpack.c.bf16 %v8440, %v8424
  %v8537 = vpack.c.bf16 %v8441, %v8425
  %v8538 = vpack.c.bf16 %v8442, %v8426
  %v8539 = vpack.c.bf16 %v8443, %v8427
  %v8540 = vpack.c.bf16 %v8444, %v8428
  %v8541 = vpack.c.bf16 %v8445, %v8429
  %v8542 = vpack.c.bf16 %v8446, %v8430
  %v8543 = vpack.c.bf16 %v8447, %v8431
  %v8544 = vpack.c.bf16 %v8448, %v8432
  %v8545 = vpack.c.bf16 %v8449, %v8433
  %v8546 = vpack.c.bf16 %v8450, %v8434
  %v8547 = vpack.c.bf16 %v8467, %v8451
  %v8548 = vpack.c.bf16 %v8468, %v8452
  %v8549 = vpack.c.bf16 %v8469, %v8453
  %v8550 = vpack.c.bf16 %v8470, %v8454
  %v8551 = vpack.c.bf16 %v8471, %v8455
  %v8552 = vpack.c.bf16 %v8472, %v8456
  %v8553 = vpack.c.bf16 %v8473, %v8457
  %v8554 = vpack.c.bf16 %v8474, %v8458
  %v8555 = vpack.c.bf16 %v8475, %v8459
  %v8556 = vpack.c.bf16 %v8476, %v8460
  %v8557 = vpack.c.bf16 %v8477, %v8461
  %v8558 = vpack.c.bf16 %v8478, %v8462
  %v8559 = vpack.c.bf16 %v8479, %v8463
  %v8560 = vpack.c.bf16 %v8480, %v8464
  %v8561 = vpack.c.bf16 %v8481, %v8465
  %v8562 = vpack.c.bf16 %v8482, %v8466
  %v8563 = vpack.c.bf16 %v8499, %v8483
  %v8564 = vpack.c.bf16 %v8500, %v8484
  %v8565 = vpack.c.bf16 %v8501, %v8485
  %v8566 = vpack.c.bf16 %v8502, %v8486
  %v8567 = vpack.c.bf16 %v8503, %v8487
  %v8568 = vpack.c.bf16 %v8504, %v8488
  %v8569 = vpack.c.bf16 %v8505, %v8489
  %v8570 = vpack.c.bf16 %v8506, %v8490
  %v8571 = vpack.c.bf16 %v8507, %v8491
  %v8572 = vpack.c.bf16 %v8508, %v8492
  %v8573 = vpack.c.bf16 %v8509, %v8493
  %v8574 = vpack.c.bf16 %v8510, %v8494
  %v8575 = vpack.c.bf16 %v8511, %v8495
  %v8576 = vpack.c.bf16 %v8512, %v8496
  %v8577 = vpack.c.bf16 %v8513, %v8497
  %v8578 = vpack.c.bf16 %v8514, %v8498
  %s8579 = scalar_lea.vmem %s11, 1024
  %v8580 = vld [vmem:[%s8579] sm:$0xf]
  %v8581 = vld [vmem:[%s8579 + $0x4] sm:$0xf]
  %v8582 = vld [vmem:[%s8579 + $0x8] sm:$0xf]
  %v8583 = vld [vmem:[%s8579 + $0xc] sm:$0xf]
  %v8584 = vld [vmem:[%s8579 + $0x10] sm:$0xf]
  %v8585 = vld [vmem:[%s8579 + $0x14] sm:$0xf]
  %v8586 = vld [vmem:[%s8579 + $0x18] sm:$0xf]
  %v8587 = vld [vmem:[%s8579 + $0x1c] sm:$0xf]
  %v8588 = vld [vmem:[%s8579 + $0x20] sm:$0xf]
  %v8589 = vld [vmem:[%s8579 + $0x24] sm:$0xf]
  %v8590 = vld [vmem:[%s8579 + $0x28] sm:$0xf]
  %v8591 = vld [vmem:[%s8579 + $0x2c] sm:$0xf]
  %v8592 = vld [vmem:[%s8579 + $0x30] sm:$0xf]
  %v8593 = vld [vmem:[%s8579 + $0x34] sm:$0xf]
  %v8594 = vld [vmem:[%s8579 + $0x38] sm:$0xf]
  %v8595 = vld [vmem:[%s8579 + $0x3c] sm:$0xf]
  %v8596 = vld [vmem:[%s8579 + $0x40] sm:$0xf]
  %v8597 = vld [vmem:[%s8579 + $0x44] sm:$0xf]
  %v8598 = vld [vmem:[%s8579 + $0x48] sm:$0xf]
  %v8599 = vld [vmem:[%s8579 + $0x4c] sm:$0xf]
  %v8600 = vld [vmem:[%s8579 + $0x50] sm:$0xf]
  %v8601 = vld [vmem:[%s8579 + $0x54] sm:$0xf]
  %v8602 = vld [vmem:[%s8579 + $0x58] sm:$0xf]
  %v8603 = vld [vmem:[%s8579 + $0x5c] sm:$0xf]
  %v8604 = vld [vmem:[%s8579 + $0x60] sm:$0xf]
  %v8605 = vld [vmem:[%s8579 + $0x64] sm:$0xf]
  %v8606 = vld [vmem:[%s8579 + $0x68] sm:$0xf]
  %v8607 = vld [vmem:[%s8579 + $0x6c] sm:$0xf]
  %v8608 = vld [vmem:[%s8579 + $0x70] sm:$0xf]
  %v8609 = vld [vmem:[%s8579 + $0x74] sm:$0xf]
  %v8610 = vld [vmem:[%s8579 + $0x78] sm:$0xf]
  %v8611 = vld [vmem:[%s8579 + $0x7c] sm:$0xf]
  %v8612 = vld [vmem:[%s8579 + $0x80] sm:$0xf]
  %v8613 = vld [vmem:[%s8579 + $0x84] sm:$0xf]
  %v8614 = vld [vmem:[%s8579 + $0x88] sm:$0xf]
  %v8615 = vld [vmem:[%s8579 + $0x8c] sm:$0xf]
  %v8616 = vld [vmem:[%s8579 + $0x90] sm:$0xf]
  %v8617 = vld [vmem:[%s8579 + $0x94] sm:$0xf]
  %v8618 = vld [vmem:[%s8579 + $0x98] sm:$0xf]
  %v8619 = vld [vmem:[%s8579 + $0x9c] sm:$0xf]
  %v8620 = vld [vmem:[%s8579 + $0xa0] sm:$0xf]
  %v8621 = vld [vmem:[%s8579 + $0xa4] sm:$0xf]
  %v8622 = vld [vmem:[%s8579 + $0xa8] sm:$0xf]
  %v8623 = vld [vmem:[%s8579 + $0xac] sm:$0xf]
  %v8624 = vld [vmem:[%s8579 + $0xb0] sm:$0xf]
  %v8625 = vld [vmem:[%s8579 + $0xb4] sm:$0xf]
  %v8626 = vld [vmem:[%s8579 + $0xb8] sm:$0xf]
  %v8627 = vld [vmem:[%s8579 + $0xbc] sm:$0xf]
  %v8628 = vld [vmem:[%s8579 + $0xc0] sm:$0xf]
  %v8629 = vld [vmem:[%s8579 + $0xc4] sm:$0xf]
  %v8630 = vld [vmem:[%s8579 + $0xc8] sm:$0xf]
  %v8631 = vld [vmem:[%s8579 + $0xcc] sm:$0xf]
  %v8632 = vld [vmem:[%s8579 + $0xd0] sm:$0xf]
  %v8633 = vld [vmem:[%s8579 + $0xd4] sm:$0xf]
  %v8634 = vld [vmem:[%s8579 + $0xd8] sm:$0xf]
  %v8635 = vld [vmem:[%s8579 + $0xdc] sm:$0xf]
  %v8636 = vld [vmem:[%s8579 + $0xe0] sm:$0xf]
  %v8637 = vld [vmem:[%s8579 + $0xe4] sm:$0xf]
  %v8638 = vld [vmem:[%s8579 + $0xe8] sm:$0xf]
  %v8639 = vld [vmem:[%s8579 + $0xec] sm:$0xf]
  %v8640 = vld [vmem:[%s8579 + $0xf0] sm:$0xf]
  %v8641 = vld [vmem:[%s8579 + $0xf4] sm:$0xf]
  %v8642 = vld [vmem:[%s8579 + $0xf8] sm:$0xf]
  %v8643 = vld [vmem:[%s8579 + $0xfc] sm:$0xf]
  %v8644 = vld [vmem:[%s8579 + $0x100] sm:$0xf]
  %v8645 = vld [vmem:[%s8579 + $0x104] sm:$0xf]
  %v8646 = vld [vmem:[%s8579 + $0x108] sm:$0xf]
  %v8647 = vld [vmem:[%s8579 + $0x10c] sm:$0xf]
  %v8648 = vld [vmem:[%s8579 + $0x110] sm:$0xf]
  %v8649 = vld [vmem:[%s8579 + $0x114] sm:$0xf]
  %v8650 = vld [vmem:[%s8579 + $0x118] sm:$0xf]
  %v8651 = vld [vmem:[%s8579 + $0x11c] sm:$0xf]
  %v8652 = vld [vmem:[%s8579 + $0x120] sm:$0xf]
  %v8653 = vld [vmem:[%s8579 + $0x124] sm:$0xf]
  %v8654 = vld [vmem:[%s8579 + $0x128] sm:$0xf]
  %v8655 = vld [vmem:[%s8579 + $0x12c] sm:$0xf]
  %v8656 = vld [vmem:[%s8579 + $0x130] sm:$0xf]
  %v8657 = vld [vmem:[%s8579 + $0x134] sm:$0xf]
  %v8658 = vld [vmem:[%s8579 + $0x138] sm:$0xf]
  %v8659 = vld [vmem:[%s8579 + $0x13c] sm:$0xf]
  %v8660 = vld [vmem:[%s8579 + $0x140] sm:$0xf]
  %v8661 = vld [vmem:[%s8579 + $0x144] sm:$0xf]
  %v8662 = vld [vmem:[%s8579 + $0x148] sm:$0xf]
  %v8663 = vld [vmem:[%s8579 + $0x14c] sm:$0xf]
  %v8664 = vld [vmem:[%s8579 + $0x150] sm:$0xf]
  %v8665 = vld [vmem:[%s8579 + $0x154] sm:$0xf]
  %v8666 = vld [vmem:[%s8579 + $0x158] sm:$0xf]
  %v8667 = vld [vmem:[%s8579 + $0x15c] sm:$0xf]
  %v8668 = vld [vmem:[%s8579 + $0x160] sm:$0xf]
  %v8669 = vld [vmem:[%s8579 + $0x164] sm:$0xf]
  %v8670 = vld [vmem:[%s8579 + $0x168] sm:$0xf]
  %v8671 = vld [vmem:[%s8579 + $0x16c] sm:$0xf]
  %v8672 = vld [vmem:[%s8579 + $0x170] sm:$0xf]
  %v8673 = vld [vmem:[%s8579 + $0x174] sm:$0xf]
  %v8674 = vld [vmem:[%s8579 + $0x178] sm:$0xf]
  %v8675 = vld [vmem:[%s8579 + $0x17c] sm:$0xf]
  %v8676 = vld [vmem:[%s8579 + $0x180] sm:$0xf]
  %v8677 = vld [vmem:[%s8579 + $0x184] sm:$0xf]
  %v8678 = vld [vmem:[%s8579 + $0x188] sm:$0xf]
  %v8679 = vld [vmem:[%s8579 + $0x18c] sm:$0xf]
  %v8680 = vld [vmem:[%s8579 + $0x190] sm:$0xf]
  %v8681 = vld [vmem:[%s8579 + $0x194] sm:$0xf]
  %v8682 = vld [vmem:[%s8579 + $0x198] sm:$0xf]
  %v8683 = vld [vmem:[%s8579 + $0x19c] sm:$0xf]
  %v8684 = vld [vmem:[%s8579 + $0x1a0] sm:$0xf]
  %v8685 = vld [vmem:[%s8579 + $0x1a4] sm:$0xf]
  %v8686 = vld [vmem:[%s8579 + $0x1a8] sm:$0xf]
  %v8687 = vld [vmem:[%s8579 + $0x1ac] sm:$0xf]
  %v8688 = vld [vmem:[%s8579 + $0x1b0] sm:$0xf]
  %v8689 = vld [vmem:[%s8579 + $0x1b4] sm:$0xf]
  %v8690 = vld [vmem:[%s8579 + $0x1b8] sm:$0xf]
  %v8691 = vld [vmem:[%s8579 + $0x1bc] sm:$0xf]
  %v8692 = vld [vmem:[%s8579 + $0x1c0] sm:$0xf]
  %v8693 = vld [vmem:[%s8579 + $0x1c4] sm:$0xf]
  %v8694 = vld [vmem:[%s8579 + $0x1c8] sm:$0xf]
  %v8695 = vld [vmem:[%s8579 + $0x1cc] sm:$0xf]
  %v8696 = vld [vmem:[%s8579 + $0x1d0] sm:$0xf]
  %v8697 = vld [vmem:[%s8579 + $0x1d4] sm:$0xf]
  %v8698 = vld [vmem:[%s8579 + $0x1d8] sm:$0xf]
  %v8699 = vld [vmem:[%s8579 + $0x1dc] sm:$0xf]
  %v8700 = vld [vmem:[%s8579 + $0x1e0] sm:$0xf]
  %v8701 = vld [vmem:[%s8579 + $0x1e4] sm:$0xf]
  %v8702 = vld [vmem:[%s8579 + $0x1e8] sm:$0xf]
  %v8703 = vld [vmem:[%s8579 + $0x1ec] sm:$0xf]
  %v8704 = vld [vmem:[%s8579 + $0x1f0] sm:$0xf]
  %v8705 = vld [vmem:[%s8579 + $0x1f4] sm:$0xf]
  %v8706 = vld [vmem:[%s8579 + $0x1f8] sm:$0xf]
  %v8707 = vld [vmem:[%s8579 + $0x1fc] sm:$0xf]
  %v8708 = vld [vmem:[%s8579 + $0x200] sm:$0xf]
  %v8709 = vld [vmem:[%s8579 + $0x204] sm:$0xf]
  %v8710 = vld [vmem:[%s8579 + $0x208] sm:$0xf]
  %v8711 = vld [vmem:[%s8579 + $0x20c] sm:$0xf]
  %v8712 = vld [vmem:[%s8579 + $0x210] sm:$0xf]
  %v8713 = vld [vmem:[%s8579 + $0x214] sm:$0xf]
  %v8714 = vld [vmem:[%s8579 + $0x218] sm:$0xf]
  %v8715 = vld [vmem:[%s8579 + $0x21c] sm:$0xf]
  %v8716 = vld [vmem:[%s8579 + $0x220] sm:$0xf]
  %v8717 = vld [vmem:[%s8579 + $0x224] sm:$0xf]
  %v8718 = vld [vmem:[%s8579 + $0x228] sm:$0xf]
  %v8719 = vld [vmem:[%s8579 + $0x22c] sm:$0xf]
  %v8720 = vld [vmem:[%s8579 + $0x230] sm:$0xf]
  %v8721 = vld [vmem:[%s8579 + $0x234] sm:$0xf]
  %v8722 = vld [vmem:[%s8579 + $0x238] sm:$0xf]
  %v8723 = vld [vmem:[%s8579 + $0x23c] sm:$0xf]
  %v8724 = vld [vmem:[%s8579 + $0x240] sm:$0xf]
  %v8725 = vld [vmem:[%s8579 + $0x244] sm:$0xf]
  %v8726 = vld [vmem:[%s8579 + $0x248] sm:$0xf]
  %v8727 = vld [vmem:[%s8579 + $0x24c] sm:$0xf]
  %v8728 = vld [vmem:[%s8579 + $0x250] sm:$0xf]
  %v8729 = vld [vmem:[%s8579 + $0x254] sm:$0xf]
  %v8730 = vld [vmem:[%s8579 + $0x258] sm:$0xf]
  %v8731 = vld [vmem:[%s8579 + $0x25c] sm:$0xf]
  %v8732 = vld [vmem:[%s8579 + $0x260] sm:$0xf]
  %v8733 = vld [vmem:[%s8579 + $0x264] sm:$0xf]
  %v8734 = vld [vmem:[%s8579 + $0x268] sm:$0xf]
  %v8735 = vld [vmem:[%s8579 + $0x26c] sm:$0xf]
  %v8736 = vld [vmem:[%s8579 + $0x270] sm:$0xf]
  %v8737 = vld [vmem:[%s8579 + $0x274] sm:$0xf]
  %v8738 = vld [vmem:[%s8579 + $0x278] sm:$0xf]
  %v8739 = vld [vmem:[%s8579 + $0x27c] sm:$0xf]
  %v8740 = vld [vmem:[%s8579 + $0x280] sm:$0xf]
  %v8741 = vld [vmem:[%s8579 + $0x284] sm:$0xf]
  %v8742 = vld [vmem:[%s8579 + $0x288] sm:$0xf]
  %v8743 = vld [vmem:[%s8579 + $0x28c] sm:$0xf]
  %v8744 = vld [vmem:[%s8579 + $0x290] sm:$0xf]
  %v8745 = vld [vmem:[%s8579 + $0x294] sm:$0xf]
  %v8746 = vld [vmem:[%s8579 + $0x298] sm:$0xf]
  %v8747 = vld [vmem:[%s8579 + $0x29c] sm:$0xf]
  %v8748 = vld [vmem:[%s8579 + $0x2a0] sm:$0xf]
  %v8749 = vld [vmem:[%s8579 + $0x2a4] sm:$0xf]
  %v8750 = vld [vmem:[%s8579 + $0x2a8] sm:$0xf]
  %v8751 = vld [vmem:[%s8579 + $0x2ac] sm:$0xf]
  %v8752 = vld [vmem:[%s8579 + $0x2b0] sm:$0xf]
  %v8753 = vld [vmem:[%s8579 + $0x2b4] sm:$0xf]
  %v8754 = vld [vmem:[%s8579 + $0x2b8] sm:$0xf]
  %v8755 = vld [vmem:[%s8579 + $0x2bc] sm:$0xf]
  %v8756 = vld [vmem:[%s8579 + $0x2c0] sm:$0xf]
  %v8757 = vld [vmem:[%s8579 + $0x2c4] sm:$0xf]
  %v8758 = vld [vmem:[%s8579 + $0x2c8] sm:$0xf]
  %v8759 = vld [vmem:[%s8579 + $0x2cc] sm:$0xf]
  %v8760 = vld [vmem:[%s8579 + $0x2d0] sm:$0xf]
  %v8761 = vld [vmem:[%s8579 + $0x2d4] sm:$0xf]
  %v8762 = vld [vmem:[%s8579 + $0x2d8] sm:$0xf]
  %v8763 = vld [vmem:[%s8579 + $0x2dc] sm:$0xf]
  %v8764 = vld [vmem:[%s8579 + $0x2e0] sm:$0xf]
  %v8765 = vld [vmem:[%s8579 + $0x2e4] sm:$0xf]
  %v8766 = vld [vmem:[%s8579 + $0x2e8] sm:$0xf]
  %v8767 = vld [vmem:[%s8579 + $0x2ec] sm:$0xf]
  %v8768 = vld [vmem:[%s8579 + $0x2f0] sm:$0xf]
  %v8769 = vld [vmem:[%s8579 + $0x2f4] sm:$0xf]
  %v8770 = vld [vmem:[%s8579 + $0x2f8] sm:$0xf]
  %v8771 = vld [vmem:[%s8579 + $0x2fc] sm:$0xf]
  %v8772 = vld [vmem:[%s8579 + $0x300] sm:$0xf]
  %v8773 = vld [vmem:[%s8579 + $0x304] sm:$0xf]
  %v8774 = vld [vmem:[%s8579 + $0x308] sm:$0xf]
  %v8775 = vld [vmem:[%s8579 + $0x30c] sm:$0xf]
  %v8776 = vld [vmem:[%s8579 + $0x310] sm:$0xf]
  %v8777 = vld [vmem:[%s8579 + $0x314] sm:$0xf]
  %v8778 = vld [vmem:[%s8579 + $0x318] sm:$0xf]
  %v8779 = vld [vmem:[%s8579 + $0x31c] sm:$0xf]
  %v8780 = vld [vmem:[%s8579 + $0x320] sm:$0xf]
  %v8781 = vld [vmem:[%s8579 + $0x324] sm:$0xf]
  %v8782 = vld [vmem:[%s8579 + $0x328] sm:$0xf]
  %v8783 = vld [vmem:[%s8579 + $0x32c] sm:$0xf]
  %v8784 = vld [vmem:[%s8579 + $0x330] sm:$0xf]
  %v8785 = vld [vmem:[%s8579 + $0x334] sm:$0xf]
  %v8786 = vld [vmem:[%s8579 + $0x338] sm:$0xf]
  %v8787 = vld [vmem:[%s8579 + $0x33c] sm:$0xf]
  %v8788 = vld [vmem:[%s8579 + $0x340] sm:$0xf]
  %v8789 = vld [vmem:[%s8579 + $0x344] sm:$0xf]
  %v8790 = vld [vmem:[%s8579 + $0x348] sm:$0xf]
  %v8791 = vld [vmem:[%s8579 + $0x34c] sm:$0xf]
  %v8792 = vld [vmem:[%s8579 + $0x350] sm:$0xf]
  %v8793 = vld [vmem:[%s8579 + $0x354] sm:$0xf]
  %v8794 = vld [vmem:[%s8579 + $0x358] sm:$0xf]
  %v8795 = vld [vmem:[%s8579 + $0x35c] sm:$0xf]
  %v8796 = vld [vmem:[%s8579 + $0x360] sm:$0xf]
  %v8797 = vld [vmem:[%s8579 + $0x364] sm:$0xf]
  %v8798 = vld [vmem:[%s8579 + $0x368] sm:$0xf]
  %v8799 = vld [vmem:[%s8579 + $0x36c] sm:$0xf]
  %v8800 = vld [vmem:[%s8579 + $0x370] sm:$0xf]
  %v8801 = vld [vmem:[%s8579 + $0x374] sm:$0xf]
  %v8802 = vld [vmem:[%s8579 + $0x378] sm:$0xf]
  %v8803 = vld [vmem:[%s8579 + $0x37c] sm:$0xf]
  %v8804 = vld [vmem:[%s8579 + $0x380] sm:$0xf]
  %v8805 = vld [vmem:[%s8579 + $0x384] sm:$0xf]
  %v8806 = vld [vmem:[%s8579 + $0x388] sm:$0xf]
  %v8807 = vld [vmem:[%s8579 + $0x38c] sm:$0xf]
  %v8808 = vld [vmem:[%s8579 + $0x390] sm:$0xf]
  %v8809 = vld [vmem:[%s8579 + $0x394] sm:$0xf]
  %v8810 = vld [vmem:[%s8579 + $0x398] sm:$0xf]
  %v8811 = vld [vmem:[%s8579 + $0x39c] sm:$0xf]
  %v8812 = vld [vmem:[%s8579 + $0x3a0] sm:$0xf]
  %v8813 = vld [vmem:[%s8579 + $0x3a4] sm:$0xf]
  %v8814 = vld [vmem:[%s8579 + $0x3a8] sm:$0xf]
  %v8815 = vld [vmem:[%s8579 + $0x3ac] sm:$0xf]
  %v8816 = vld [vmem:[%s8579 + $0x3b0] sm:$0xf]
  %v8817 = vld [vmem:[%s8579 + $0x3b4] sm:$0xf]
  %v8818 = vld [vmem:[%s8579 + $0x3b8] sm:$0xf]
  %v8819 = vld [vmem:[%s8579 + $0x3bc] sm:$0xf]
  %v8820 = vld [vmem:[%s8579 + $0x3c0] sm:$0xf]
  %v8821 = vld [vmem:[%s8579 + $0x3c4] sm:$0xf]
  %v8822 = vld [vmem:[%s8579 + $0x3c8] sm:$0xf]
  %v8823 = vld [vmem:[%s8579 + $0x3cc] sm:$0xf]
  %v8824 = vld [vmem:[%s8579 + $0x3d0] sm:$0xf]
  %v8825 = vld [vmem:[%s8579 + $0x3d4] sm:$0xf]
  %v8826 = vld [vmem:[%s8579 + $0x3d8] sm:$0xf]
  %v8827 = vld [vmem:[%s8579 + $0x3dc] sm:$0xf]
  %v8828 = vld [vmem:[%s8579 + $0x3e0] sm:$0xf]
  %v8829 = vld [vmem:[%s8579 + $0x3e4] sm:$0xf]
  %v8830 = vld [vmem:[%s8579 + $0x3e8] sm:$0xf]
  %v8831 = vld [vmem:[%s8579 + $0x3ec] sm:$0xf]
  %v8832 = vld [vmem:[%s8579 + $0x3f0] sm:$0xf]
  %v8833 = vld [vmem:[%s8579 + $0x3f4] sm:$0xf]
  %v8834 = vld [vmem:[%s8579 + $0x3f8] sm:$0xf]
  %v8835 = vld [vmem:[%s8579 + $0x3fc] sm:$0xf]
  %s8836 = scalar_lea.vmem %s12, 1
  %v8837 = vld [vmem:[%s8836] sm:$0x1]
  %v8839 = vlaneseq
  %v8840 = vshrl.u32 %v8839, 7
  %v8841 = vsub.s32 0, %v8840
  %v8842 = vrot.slane %v8837, %v8841
  %v9100 = vunpack.c.l.b16 %v8580
  %v9101 = vunpack.c.l.b16 %v8581
  %v9102 = vunpack.c.l.b16 %v8582
  %v9103 = vunpack.c.l.b16 %v8583
  %v9104 = vunpack.c.l.b16 %v8584
  %v9105 = vunpack.c.l.b16 %v8585
  %v9106 = vunpack.c.l.b16 %v8586
  %v9107 = vunpack.c.l.b16 %v8587
  %v9108 = vunpack.c.l.b16 %v8588
  %v9109 = vunpack.c.l.b16 %v8589
  %v9110 = vunpack.c.l.b16 %v8590
  %v9111 = vunpack.c.l.b16 %v8591
  %v9112 = vunpack.c.l.b16 %v8592
  %v9113 = vunpack.c.l.b16 %v8593
  %v9114 = vunpack.c.l.b16 %v8594
  %v9115 = vunpack.c.l.b16 %v8595
  %v9116 = vunpack.c.l.b16 %v8596
  %v9117 = vunpack.c.l.b16 %v8597
  %v9118 = vunpack.c.l.b16 %v8598
  %v9119 = vunpack.c.l.b16 %v8599
  %v9120 = vunpack.c.l.b16 %v8600
  %v9121 = vunpack.c.l.b16 %v8601
  %v9122 = vunpack.c.l.b16 %v8602
  %v9123 = vunpack.c.l.b16 %v8603
  %v9124 = vunpack.c.l.b16 %v8604
  %v9125 = vunpack.c.l.b16 %v8605
  %v9126 = vunpack.c.l.b16 %v8606
  %v9127 = vunpack.c.l.b16 %v8607
  %v9128 = vunpack.c.l.b16 %v8608
  %v9129 = vunpack.c.l.b16 %v8609
  %v9130 = vunpack.c.l.b16 %v8610
  %v9131 = vunpack.c.l.b16 %v8611
  %v9132 = vunpack.c.l.b16 %v8612
  %v9133 = vunpack.c.l.b16 %v8613
  %v9134 = vunpack.c.l.b16 %v8614
  %v9135 = vunpack.c.l.b16 %v8615
  %v9136 = vunpack.c.l.b16 %v8616
  %v9137 = vunpack.c.l.b16 %v8617
  %v9138 = vunpack.c.l.b16 %v8618
  %v9139 = vunpack.c.l.b16 %v8619
  %v9140 = vunpack.c.l.b16 %v8620
  %v9141 = vunpack.c.l.b16 %v8621
  %v9142 = vunpack.c.l.b16 %v8622
  %v9143 = vunpack.c.l.b16 %v8623
  %v9144 = vunpack.c.l.b16 %v8624
  %v9145 = vunpack.c.l.b16 %v8625
  %v9146 = vunpack.c.l.b16 %v8626
  %v9147 = vunpack.c.l.b16 %v8627
  %v9148 = vunpack.c.l.b16 %v8628
  %v9149 = vunpack.c.l.b16 %v8629
  %v9150 = vunpack.c.l.b16 %v8630
  %v9151 = vunpack.c.l.b16 %v8631
  %v9152 = vunpack.c.l.b16 %v8632
  %v9153 = vunpack.c.l.b16 %v8633
  %v9154 = vunpack.c.l.b16 %v8634
  %v9155 = vunpack.c.l.b16 %v8635
  %v9156 = vunpack.c.l.b16 %v8636
  %v9157 = vunpack.c.l.b16 %v8637
  %v9158 = vunpack.c.l.b16 %v8638
  %v9159 = vunpack.c.l.b16 %v8639
  %v9160 = vunpack.c.l.b16 %v8640
  %v9161 = vunpack.c.l.b16 %v8641
  %v9162 = vunpack.c.l.b16 %v8642
  %v9163 = vunpack.c.l.b16 %v8643
  %v9164 = vunpack.c.l.b16 %v8644
  %v9165 = vunpack.c.l.b16 %v8645
  %v9166 = vunpack.c.l.b16 %v8646
  %v9167 = vunpack.c.l.b16 %v8647
  %v9168 = vunpack.c.l.b16 %v8648
  %v9169 = vunpack.c.l.b16 %v8649
  %v9170 = vunpack.c.l.b16 %v8650
  %v9171 = vunpack.c.l.b16 %v8651
  %v9172 = vunpack.c.l.b16 %v8652
  %v9173 = vunpack.c.l.b16 %v8653
  %v9174 = vunpack.c.l.b16 %v8654
  %v9175 = vunpack.c.l.b16 %v8655
  %v9176 = vunpack.c.l.b16 %v8656
  %v9177 = vunpack.c.l.b16 %v8657
  %v9178 = vunpack.c.l.b16 %v8658
  %v9179 = vunpack.c.l.b16 %v8659
  %v9180 = vunpack.c.l.b16 %v8660
  %v9181 = vunpack.c.l.b16 %v8661
  %v9182 = vunpack.c.l.b16 %v8662
  %v9183 = vunpack.c.l.b16 %v8663
  %v9184 = vunpack.c.l.b16 %v8664
  %v9185 = vunpack.c.l.b16 %v8665
  %v9186 = vunpack.c.l.b16 %v8666
  %v9187 = vunpack.c.l.b16 %v8667
  %v9188 = vunpack.c.l.b16 %v8668
  %v9189 = vunpack.c.l.b16 %v8669
  %v9190 = vunpack.c.l.b16 %v8670
  %v9191 = vunpack.c.l.b16 %v8671
  %v9192 = vunpack.c.l.b16 %v8672
  %v9193 = vunpack.c.l.b16 %v8673
  %v9194 = vunpack.c.l.b16 %v8674
  %v9195 = vunpack.c.l.b16 %v8675
  %v9196 = vunpack.c.l.b16 %v8676
  %v9197 = vunpack.c.l.b16 %v8677
  %v9198 = vunpack.c.l.b16 %v8678
  %v9199 = vunpack.c.l.b16 %v8679
  %v9200 = vunpack.c.l.b16 %v8680
  %v9201 = vunpack.c.l.b16 %v8681
  %v9202 = vunpack.c.l.b16 %v8682
  %v9203 = vunpack.c.l.b16 %v8683
  %v9204 = vunpack.c.l.b16 %v8684
  %v9205 = vunpack.c.l.b16 %v8685
  %v9206 = vunpack.c.l.b16 %v8686
  %v9207 = vunpack.c.l.b16 %v8687
  %v9208 = vunpack.c.l.b16 %v8688
  %v9209 = vunpack.c.l.b16 %v8689
  %v9210 = vunpack.c.l.b16 %v8690
  %v9211 = vunpack.c.l.b16 %v8691
  %v9212 = vunpack.c.l.b16 %v8692
  %v9213 = vunpack.c.l.b16 %v8693
  %v9214 = vunpack.c.l.b16 %v8694
  %v9215 = vunpack.c.l.b16 %v8695
  %v9216 = vunpack.c.l.b16 %v8696
  %v9217 = vunpack.c.l.b16 %v8697
  %v9218 = vunpack.c.l.b16 %v8698
  %v9219 = vunpack.c.l.b16 %v8699
  %v9220 = vunpack.c.l.b16 %v8700
  %v9221 = vunpack.c.l.b16 %v8701
  %v9222 = vunpack.c.l.b16 %v8702
  %v9223 = vunpack.c.l.b16 %v8703
  %v9224 = vunpack.c.l.b16 %v8704
  %v9225 = vunpack.c.l.b16 %v8705
  %v9226 = vunpack.c.l.b16 %v8706
  %v9227 = vunpack.c.l.b16 %v8707
  %v9228 = vunpack.c.l.b16 %v8708
  %v9229 = vunpack.c.l.b16 %v8709
  %v9230 = vunpack.c.l.b16 %v8710
  %v9231 = vunpack.c.l.b16 %v8711
  %v9232 = vunpack.c.l.b16 %v8712
  %v9233 = vunpack.c.l.b16 %v8713
  %v9234 = vunpack.c.l.b16 %v8714
  %v9235 = vunpack.c.l.b16 %v8715
  %v9236 = vunpack.c.l.b16 %v8716
  %v9237 = vunpack.c.l.b16 %v8717
  %v9238 = vunpack.c.l.b16 %v8718
  %v9239 = vunpack.c.l.b16 %v8719
  %v9240 = vunpack.c.l.b16 %v8720
  %v9241 = vunpack.c.l.b16 %v8721
  %v9242 = vunpack.c.l.b16 %v8722
  %v9243 = vunpack.c.l.b16 %v8723
  %v9244 = vunpack.c.l.b16 %v8724
  %v9245 = vunpack.c.l.b16 %v8725
  %v9246 = vunpack.c.l.b16 %v8726
  %v9247 = vunpack.c.l.b16 %v8727
  %v9248 = vunpack.c.l.b16 %v8728
  %v9249 = vunpack.c.l.b16 %v8729
  %v9250 = vunpack.c.l.b16 %v8730
  %v9251 = vunpack.c.l.b16 %v8731
  %v9252 = vunpack.c.l.b16 %v8732
  %v9253 = vunpack.c.l.b16 %v8733
  %v9254 = vunpack.c.l.b16 %v8734
  %v9255 = vunpack.c.l.b16 %v8735
  %v9256 = vunpack.c.l.b16 %v8736
  %v9257 = vunpack.c.l.b16 %v8737
  %v9258 = vunpack.c.l.b16 %v8738
  %v9259 = vunpack.c.l.b16 %v8739
  %v9260 = vunpack.c.l.b16 %v8740
  %v9261 = vunpack.c.l.b16 %v8741
  %v9262 = vunpack.c.l.b16 %v8742
  %v9263 = vunpack.c.l.b16 %v8743
  %v9264 = vunpack.c.l.b16 %v8744
  %v9265 = vunpack.c.l.b16 %v8745
  %v9266 = vunpack.c.l.b16 %v8746
  %v9267 = vunpack.c.l.b16 %v8747
  %v9268 = vunpack.c.l.b16 %v8748
  %v9269 = vunpack.c.l.b16 %v8749
  %v9270 = vunpack.c.l.b16 %v8750
  %v9271 = vunpack.c.l.b16 %v8751
  %v9272 = vunpack.c.l.b16 %v8752
  %v9273 = vunpack.c.l.b16 %v8753
  %v9274 = vunpack.c.l.b16 %v8754
  %v9275 = vunpack.c.l.b16 %v8755
  %v9276 = vunpack.c.l.b16 %v8756
  %v9277 = vunpack.c.l.b16 %v8757
  %v9278 = vunpack.c.l.b16 %v8758
  %v9279 = vunpack.c.l.b16 %v8759
  %v9280 = vunpack.c.l.b16 %v8760
  %v9281 = vunpack.c.l.b16 %v8761
  %v9282 = vunpack.c.l.b16 %v8762
  %v9283 = vunpack.c.l.b16 %v8763
  %v9284 = vunpack.c.l.b16 %v8764
  %v9285 = vunpack.c.l.b16 %v8765
  %v9286 = vunpack.c.l.b16 %v8766
  %v9287 = vunpack.c.l.b16 %v8767
  %v9288 = vunpack.c.l.b16 %v8768
  %v9289 = vunpack.c.l.b16 %v8769
  %v9290 = vunpack.c.l.b16 %v8770
  %v9291 = vunpack.c.l.b16 %v8771
  %v9292 = vunpack.c.l.b16 %v8772
  %v9293 = vunpack.c.l.b16 %v8773
  %v9294 = vunpack.c.l.b16 %v8774
  %v9295 = vunpack.c.l.b16 %v8775
  %v9296 = vunpack.c.l.b16 %v8776
  %v9297 = vunpack.c.l.b16 %v8777
  %v9298 = vunpack.c.l.b16 %v8778
  %v9299 = vunpack.c.l.b16 %v8779
  %v9300 = vunpack.c.l.b16 %v8780
  %v9301 = vunpack.c.l.b16 %v8781
  %v9302 = vunpack.c.l.b16 %v8782
  %v9303 = vunpack.c.l.b16 %v8783
  %v9304 = vunpack.c.l.b16 %v8784
  %v9305 = vunpack.c.l.b16 %v8785
  %v9306 = vunpack.c.l.b16 %v8786
  %v9307 = vunpack.c.l.b16 %v8787
  %v9308 = vunpack.c.l.b16 %v8788
  %v9309 = vunpack.c.l.b16 %v8789
  %v9310 = vunpack.c.l.b16 %v8790
  %v9311 = vunpack.c.l.b16 %v8791
  %v9312 = vunpack.c.l.b16 %v8792
  %v9313 = vunpack.c.l.b16 %v8793
  %v9314 = vunpack.c.l.b16 %v8794
  %v9315 = vunpack.c.l.b16 %v8795
  %v9316 = vunpack.c.l.b16 %v8796
  %v9317 = vunpack.c.l.b16 %v8797
  %v9318 = vunpack.c.l.b16 %v8798
  %v9319 = vunpack.c.l.b16 %v8799
  %v9320 = vunpack.c.l.b16 %v8800
  %v9321 = vunpack.c.l.b16 %v8801
  %v9322 = vunpack.c.l.b16 %v8802
  %v9323 = vunpack.c.l.b16 %v8803
  %v9324 = vunpack.c.l.b16 %v8804
  %v9325 = vunpack.c.l.b16 %v8805
  %v9326 = vunpack.c.l.b16 %v8806
  %v9327 = vunpack.c.l.b16 %v8807
  %v9328 = vunpack.c.l.b16 %v8808
  %v9329 = vunpack.c.l.b16 %v8809
  %v9330 = vunpack.c.l.b16 %v8810
  %v9331 = vunpack.c.l.b16 %v8811
  %v9332 = vunpack.c.l.b16 %v8812
  %v9333 = vunpack.c.l.b16 %v8813
  %v9334 = vunpack.c.l.b16 %v8814
  %v9335 = vunpack.c.l.b16 %v8815
  %v9336 = vunpack.c.l.b16 %v8816
  %v9337 = vunpack.c.l.b16 %v8817
  %v9338 = vunpack.c.l.b16 %v8818
  %v9339 = vunpack.c.l.b16 %v8819
  %v9340 = vunpack.c.l.b16 %v8820
  %v9341 = vunpack.c.l.b16 %v8821
  %v9342 = vunpack.c.l.b16 %v8822
  %v9343 = vunpack.c.l.b16 %v8823
  %v9344 = vunpack.c.l.b16 %v8824
  %v9345 = vunpack.c.l.b16 %v8825
  %v9346 = vunpack.c.l.b16 %v8826
  %v9347 = vunpack.c.l.b16 %v8827
  %v9348 = vunpack.c.l.b16 %v8828
  %v9349 = vunpack.c.l.b16 %v8829
  %v9350 = vunpack.c.l.b16 %v8830
  %v9351 = vunpack.c.l.b16 %v8831
  %v9352 = vunpack.c.l.b16 %v8832
  %v9353 = vunpack.c.l.b16 %v8833
  %v9354 = vunpack.c.l.b16 %v8834
  %v9355 = vunpack.c.l.b16 %v8835
  %v9356 = vpack.c.b16 %v9101, %v9100
  %v9357 = vpack.c.b16 %v9103, %v9102
  %v9358 = vpack.c.b16 %v9105, %v9104
  %v9359 = vpack.c.b16 %v9107, %v9106
  %v9360 = vpack.c.b16 %v9109, %v9108
  %v9361 = vpack.c.b16 %v9111, %v9110
  %v9362 = vpack.c.b16 %v9113, %v9112
  %v9363 = vpack.c.b16 %v9115, %v9114
  %v9364 = vpack.c.b16 %v9117, %v9116
  %v9365 = vpack.c.b16 %v9119, %v9118
  %v9366 = vpack.c.b16 %v9121, %v9120
  %v9367 = vpack.c.b16 %v9123, %v9122
  %v9368 = vpack.c.b16 %v9125, %v9124
  %v9369 = vpack.c.b16 %v9127, %v9126
  %v9370 = vpack.c.b16 %v9129, %v9128
  %v9371 = vpack.c.b16 %v9131, %v9130
  %v9372 = vpack.c.b16 %v9133, %v9132
  %v9373 = vpack.c.b16 %v9135, %v9134
  %v9374 = vpack.c.b16 %v9137, %v9136
  %v9375 = vpack.c.b16 %v9139, %v9138
  %v9376 = vpack.c.b16 %v9141, %v9140
  %v9377 = vpack.c.b16 %v9143, %v9142
  %v9378 = vpack.c.b16 %v9145, %v9144
  %v9379 = vpack.c.b16 %v9147, %v9146
  %v9380 = vpack.c.b16 %v9149, %v9148
  %v9381 = vpack.c.b16 %v9151, %v9150
  %v9382 = vpack.c.b16 %v9153, %v9152
  %v9383 = vpack.c.b16 %v9155, %v9154
  %v9384 = vpack.c.b16 %v9157, %v9156
  %v9385 = vpack.c.b16 %v9159, %v9158
  %v9386 = vpack.c.b16 %v9161, %v9160
  %v9387 = vpack.c.b16 %v9163, %v9162
  %v9388 = vpack.c.b16 %v9165, %v9164
  %v9389 = vpack.c.b16 %v9167, %v9166
  %v9390 = vpack.c.b16 %v9169, %v9168
  %v9391 = vpack.c.b16 %v9171, %v9170
  %v9392 = vpack.c.b16 %v9173, %v9172
  %v9393 = vpack.c.b16 %v9175, %v9174
  %v9394 = vpack.c.b16 %v9177, %v9176
  %v9395 = vpack.c.b16 %v9179, %v9178
  %v9396 = vpack.c.b16 %v9181, %v9180
  %v9397 = vpack.c.b16 %v9183, %v9182
  %v9398 = vpack.c.b16 %v9185, %v9184
  %v9399 = vpack.c.b16 %v9187, %v9186
  %v9400 = vpack.c.b16 %v9189, %v9188
  %v9401 = vpack.c.b16 %v9191, %v9190
  %v9402 = vpack.c.b16 %v9193, %v9192
  %v9403 = vpack.c.b16 %v9195, %v9194
  %v9404 = vpack.c.b16 %v9197, %v9196
  %v9405 = vpack.c.b16 %v9199, %v9198
  %v9406 = vpack.c.b16 %v9201, %v9200
  %v9407 = vpack.c.b16 %v9203, %v9202
  %v9408 = vpack.c.b16 %v9205, %v9204
  %v9409 = vpack.c.b16 %v9207, %v9206
  %v9410 = vpack.c.b16 %v9209, %v9208
  %v9411 = vpack.c.b16 %v9211, %v9210
  %v9412 = vpack.c.b16 %v9213, %v9212
  %v9413 = vpack.c.b16 %v9215, %v9214
  %v9414 = vpack.c.b16 %v9217, %v9216
  %v9415 = vpack.c.b16 %v9219, %v9218
  %v9416 = vpack.c.b16 %v9221, %v9220
  %v9417 = vpack.c.b16 %v9223, %v9222
  %v9418 = vpack.c.b16 %v9225, %v9224
  %v9419 = vpack.c.b16 %v9227, %v9226
  %v9420 = vpack.c.b16 %v9229, %v9228
  %v9421 = vpack.c.b16 %v9231, %v9230
  %v9422 = vpack.c.b16 %v9233, %v9232
  %v9423 = vpack.c.b16 %v9235, %v9234
  %v9424 = vpack.c.b16 %v9237, %v9236
  %v9425 = vpack.c.b16 %v9239, %v9238
  %v9426 = vpack.c.b16 %v9241, %v9240
  %v9427 = vpack.c.b16 %v9243, %v9242
  %v9428 = vpack.c.b16 %v9245, %v9244
  %v9429 = vpack.c.b16 %v9247, %v9246
  %v9430 = vpack.c.b16 %v9249, %v9248
  %v9431 = vpack.c.b16 %v9251, %v9250
  %v9432 = vpack.c.b16 %v9253, %v9252
  %v9433 = vpack.c.b16 %v9255, %v9254
  %v9434 = vpack.c.b16 %v9257, %v9256
  %v9435 = vpack.c.b16 %v9259, %v9258
  %v9436 = vpack.c.b16 %v9261, %v9260
  %v9437 = vpack.c.b16 %v9263, %v9262
  %v9438 = vpack.c.b16 %v9265, %v9264
  %v9439 = vpack.c.b16 %v9267, %v9266
  %v9440 = vpack.c.b16 %v9269, %v9268
  %v9441 = vpack.c.b16 %v9271, %v9270
  %v9442 = vpack.c.b16 %v9273, %v9272
  %v9443 = vpack.c.b16 %v9275, %v9274
  %v9444 = vpack.c.b16 %v9277, %v9276
  %v9445 = vpack.c.b16 %v9279, %v9278
  %v9446 = vpack.c.b16 %v9281, %v9280
  %v9447 = vpack.c.b16 %v9283, %v9282
  %v9448 = vpack.c.b16 %v9285, %v9284
  %v9449 = vpack.c.b16 %v9287, %v9286
  %v9450 = vpack.c.b16 %v9289, %v9288
  %v9451 = vpack.c.b16 %v9291, %v9290
  %v9452 = vpack.c.b16 %v9293, %v9292
  %v9453 = vpack.c.b16 %v9295, %v9294
  %v9454 = vpack.c.b16 %v9297, %v9296
  %v9455 = vpack.c.b16 %v9299, %v9298
  %v9456 = vpack.c.b16 %v9301, %v9300
  %v9457 = vpack.c.b16 %v9303, %v9302
  %v9458 = vpack.c.b16 %v9305, %v9304
  %v9459 = vpack.c.b16 %v9307, %v9306
  %v9460 = vpack.c.b16 %v9309, %v9308
  %v9461 = vpack.c.b16 %v9311, %v9310
  %v9462 = vpack.c.b16 %v9313, %v9312
  %v9463 = vpack.c.b16 %v9315, %v9314
  %v9464 = vpack.c.b16 %v9317, %v9316
  %v9465 = vpack.c.b16 %v9319, %v9318
  %v9466 = vpack.c.b16 %v9321, %v9320
  %v9467 = vpack.c.b16 %v9323, %v9322
  %v9468 = vpack.c.b16 %v9325, %v9324
  %v9469 = vpack.c.b16 %v9327, %v9326
  %v9470 = vpack.c.b16 %v9329, %v9328
  %v9471 = vpack.c.b16 %v9331, %v9330
  %v9472 = vpack.c.b16 %v9333, %v9332
  %v9473 = vpack.c.b16 %v9335, %v9334
  %v9474 = vpack.c.b16 %v9337, %v9336
  %v9475 = vpack.c.b16 %v9339, %v9338
  %v9476 = vpack.c.b16 %v9341, %v9340
  %v9477 = vpack.c.b16 %v9343, %v9342
  %v9478 = vpack.c.b16 %v9345, %v9344
  %v9479 = vpack.c.b16 %v9347, %v9346
  %v9480 = vpack.c.b16 %v9349, %v9348
  %v9481 = vpack.c.b16 %v9351, %v9350
  %v9482 = vpack.c.b16 %v9353, %v9352
  %v9483 = vpack.c.b16 %v9355, %v9354
  %9612 = vmatprep.subr.bf16.mxu0 0
  %9613 = vmatpush1.bf16.msra.mxu0 %v9363
  %9614 = vmatprep.subr.bf16.mxu0 0
  %9615 = vmatpush1.bf16.msra.mxu0 %v9362
  %9616 = vmatprep.subr.bf16.mxu0 0
  %9617 = vmatpush1.bf16.msra.mxu0 %v9361
  %9618 = vmatprep.subr.bf16.mxu0 0
  %9619 = vmatpush1.bf16.msra.mxu0 %v9360
  %9620 = vmatprep.subr.bf16.mxu0 0
  %9621 = vmatpush1.bf16.msra.mxu0 %v9359
  %9622 = vmatprep.subr.bf16.mxu0 0
  %9623 = vmatpush1.bf16.msra.mxu0 %v9358
  %9624 = vmatprep.subr.bf16.mxu0 0
  %9625 = vmatpush1.bf16.msra.mxu0 %v9357
  %9626 = vmatprep.subr.bf16.mxu0 0
  %9627 = vmatpush1.bf16.msra.mxu0 %v9356
  %9628 = vmatprep.subr.bf16.mxu0 0
  %9629 = vmatpush2.bf16.msra.mxu0 %v9371
  %9630 = vmatprep.subr.bf16.mxu0 0
  %9631 = vmatpush2.bf16.msra.mxu0 %v9370
  %9632 = vmatprep.subr.bf16.mxu0 0
  %9633 = vmatpush2.bf16.msra.mxu0 %v9369
  %9634 = vmatprep.subr.bf16.mxu0 0
  %9635 = vmatpush2.bf16.msra.mxu0 %v9368
  %9636 = vmatprep.subr.bf16.mxu0 0
  %9637 = vmatpush2.bf16.msra.mxu0 %v9367
  %9638 = vmatprep.subr.bf16.mxu0 0
  %9639 = vmatpush2.bf16.msra.mxu0 %v9366
  %9640 = vmatprep.subr.bf16.mxu0 0
  %9641 = vmatpush2.bf16.msra.mxu0 %v9365
  %9642 = vmatprep.subr.bf16.mxu0 0
  %9643 = vmatpush2.bf16.msra.mxu0 %v9364
  %9644 = vmatprep.mubr.bf16.mxu0 %v8516
  %9645 = vmatmul.mubr.bf16.gmra.mxu0 %v8515
  %v9646 = vpop.f32.mrf.mxu0
  %v9647 = vadd.f32 %v8842, %v9646
  %v9648 = vpop.f32.mrf.mxu0
  %v9649 = vpop.f32.mrf.mxu0
  %v9650 = vadd.f32 %v8842, %v9649
  %v9651 = vpop.f32.mrf.mxu0
  %9652 = vmatprep.mubr.bf16.mxu0 %v8532
  %9653 = vmatmul.mubr.bf16.gmra.mxu0 %v8531
  %v9654 = vpop.f32.mrf.mxu0
  %v9655 = vadd.f32 %v8842, %v9654
  %v9656 = vpop.f32.mrf.mxu0
  %v9657 = vpop.f32.mrf.mxu0
  %v9658 = vadd.f32 %v8842, %v9657
  %v9659 = vpop.f32.mrf.mxu0
  %9660 = vmatprep.mubr.bf16.mxu0 %v8548
  %9661 = vmatmul.mubr.bf16.gmra.mxu0 %v8547
  %v9662 = vpop.f32.mrf.mxu0
  %v9663 = vadd.f32 %v8842, %v9662
  %v9664 = vpop.f32.mrf.mxu0
  %v9665 = vpop.f32.mrf.mxu0
  %v9666 = vadd.f32 %v8842, %v9665
  %v9667 = vpop.f32.mrf.mxu0
  %9668 = vmatprep.mubr.bf16.mxu0 %v8564
  %9669 = vmatmul.mubr.bf16.gmra.mxu0 %v8563
  %v9670 = vpop.f32.mrf.mxu0
  %v9671 = vadd.f32 %v8842, %v9670
  %v9672 = vpop.f32.mrf.mxu0
  %v9673 = vpop.f32.mrf.mxu0
  %v9674 = vadd.f32 %v8842, %v9673
  %v9675 = vpop.f32.mrf.mxu0
  %9676 = vdwg.mxu0
  %9677 = vmatprep.subr.bf16.mxu0 0
  %9678 = vmatpush1.bf16.msra.mxu0 %v9379
  %9679 = vmatprep.subr.bf16.mxu0 0
  %9680 = vmatpush1.bf16.msra.mxu0 %v9378
  %9681 = vmatprep.subr.bf16.mxu0 0
  %9682 = vmatpush1.bf16.msra.mxu0 %v9377
  %9683 = vmatprep.subr.bf16.mxu0 0
  %9684 = vmatpush1.bf16.msra.mxu0 %v9376
  %9685 = vmatprep.subr.bf16.mxu0 0
  %9686 = vmatpush1.bf16.msra.mxu0 %v9375
  %9687 = vmatprep.subr.bf16.mxu0 0
  %9688 = vmatpush1.bf16.msra.mxu0 %v9374
  %9689 = vmatprep.subr.bf16.mxu0 0
  %9690 = vmatpush1.bf16.msra.mxu0 %v9373
  %9691 = vmatprep.subr.bf16.mxu0 0
  %9692 = vmatpush1.bf16.msra.mxu0 %v9372
  %9693 = vmatprep.subr.bf16.mxu0 0
  %9694 = vmatpush2.bf16.msra.mxu0 %v9387
  %9695 = vmatprep.subr.bf16.mxu0 0
  %9696 = vmatpush2.bf16.msra.mxu0 %v9386
  %9697 = vmatprep.subr.bf16.mxu0 0
  %9698 = vmatpush2.bf16.msra.mxu0 %v9385
  %9699 = vmatprep.subr.bf16.mxu0 0
  %9700 = vmatpush2.bf16.msra.mxu0 %v9384
  %9701 = vmatprep.subr.bf16.mxu0 0
  %9702 = vmatpush2.bf16.msra.mxu0 %v9383
  %9703 = vmatprep.subr.bf16.mxu0 0
  %9704 = vmatpush2.bf16.msra.mxu0 %v9382
  %9705 = vmatprep.subr.bf16.mxu0 0
  %9706 = vmatpush2.bf16.msra.mxu0 %v9381
  %9707 = vmatprep.subr.bf16.mxu0 0
  %9708 = vmatpush2.bf16.msra.mxu0 %v9380
  %9709 = vmatprep.mubr.bf16.mxu0 %v8518
  %9710 = vmatmul.mubr.bf16.gmra.mxu0 %v8517
  %v9711 = vpop.f32.mrf.mxu0
  %v9712 = vadd.f32 %v9647, %v9711
  %v9713 = vpop.f32.mrf.mxu0
  %v9714 = vpop.f32.mrf.mxu0
  %v9715 = vadd.f32 %v9650, %v9714
  %v9716 = vpop.f32.mrf.mxu0
  %9717 = vmatprep.mubr.bf16.mxu0 %v8534
  %9718 = vmatmul.mubr.bf16.gmra.mxu0 %v8533
  %v9719 = vpop.f32.mrf.mxu0
  %v9720 = vadd.f32 %v9655, %v9719
  %v9721 = vpop.f32.mrf.mxu0
  %v9722 = vpop.f32.mrf.mxu0
  %v9723 = vadd.f32 %v9658, %v9722
  %v9724 = vpop.f32.mrf.mxu0
  %9725 = vmatprep.mubr.bf16.mxu0 %v8550
  %9726 = vmatmul.mubr.bf16.gmra.mxu0 %v8549
  %v9727 = vpop.f32.mrf.mxu0
  %v9728 = vadd.f32 %v9663, %v9727
  %v9729 = vpop.f32.mrf.mxu0
  %v9730 = vpop.f32.mrf.mxu0
  %v9731 = vadd.f32 %v9666, %v9730
  %v9732 = vpop.f32.mrf.mxu0
  %9733 = vmatprep.mubr.bf16.mxu0 %v8566
  %9734 = vmatmul.mubr.bf16.gmra.mxu0 %v8565
  %v9735 = vpop.f32.mrf.mxu0
  %v9736 = vadd.f32 %v9671, %v9735
  %v9737 = vpop.f32.mrf.mxu0
  %v9738 = vpop.f32.mrf.mxu0
  %v9739 = vadd.f32 %v9674, %v9738
  %v9740 = vpop.f32.mrf.mxu0
  %9741 = vdwg.mxu0
  %9742 = vmatprep.subr.bf16.mxu0 0
  %9743 = vmatpush1.bf16.msra.mxu0 %v9395
  %9744 = vmatprep.subr.bf16.mxu0 0
  %9745 = vmatpush1.bf16.msra.mxu0 %v9394
  %9746 = vmatprep.subr.bf16.mxu0 0
  %9747 = vmatpush1.bf16.msra.mxu0 %v9393
  %9748 = vmatprep.subr.bf16.mxu0 0
  %9749 = vmatpush1.bf16.msra.mxu0 %v9392
  %9750 = vmatprep.subr.bf16.mxu0 0
  %9751 = vmatpush1.bf16.msra.mxu0 %v9391
  %9752 = vmatprep.subr.bf16.mxu0 0
  %9753 = vmatpush1.bf16.msra.mxu0 %v9390
  %9754 = vmatprep.subr.bf16.mxu0 0
  %9755 = vmatpush1.bf16.msra.mxu0 %v9389
  %9756 = vmatprep.subr.bf16.mxu0 0
  %9757 = vmatpush1.bf16.msra.mxu0 %v9388
  %9758 = vmatprep.subr.bf16.mxu0 0
  %9759 = vmatpush2.bf16.msra.mxu0 %v9403
  %9760 = vmatprep.subr.bf16.mxu0 0
  %9761 = vmatpush2.bf16.msra.mxu0 %v9402
  %9762 = vmatprep.subr.bf16.mxu0 0
  %9763 = vmatpush2.bf16.msra.mxu0 %v9401
  %9764 = vmatprep.subr.bf16.mxu0 0
  %9765 = vmatpush2.bf16.msra.mxu0 %v9400
  %9766 = vmatprep.subr.bf16.mxu0 0
  %9767 = vmatpush2.bf16.msra.mxu0 %v9399
  %9768 = vmatprep.subr.bf16.mxu0 0
  %9769 = vmatpush2.bf16.msra.mxu0 %v9398
  %9770 = vmatprep.subr.bf16.mxu0 0
  %9771 = vmatpush2.bf16.msra.mxu0 %v9397
  %9772 = vmatprep.subr.bf16.mxu0 0
  %9773 = vmatpush2.bf16.msra.mxu0 %v9396
  %9774 = vmatprep.mubr.bf16.mxu0 %v8520
  %9775 = vmatmul.mubr.bf16.gmra.mxu0 %v8519
  %v9776 = vpop.f32.mrf.mxu0
  %v9777 = vadd.f32 %v9712, %v9776
  %v9778 = vpop.f32.mrf.mxu0
  %v9779 = vpop.f32.mrf.mxu0
  %v9780 = vadd.f32 %v9715, %v9779
  %v9781 = vpop.f32.mrf.mxu0
  %9782 = vmatprep.mubr.bf16.mxu0 %v8536
  %9783 = vmatmul.mubr.bf16.gmra.mxu0 %v8535
  %v9784 = vpop.f32.mrf.mxu0
  %v9785 = vadd.f32 %v9720, %v9784
  %v9786 = vpop.f32.mrf.mxu0
  %v9787 = vpop.f32.mrf.mxu0
  %v9788 = vadd.f32 %v9723, %v9787
  %v9789 = vpop.f32.mrf.mxu0
  %9790 = vmatprep.mubr.bf16.mxu0 %v8552
  %9791 = vmatmul.mubr.bf16.gmra.mxu0 %v8551
  %v9792 = vpop.f32.mrf.mxu0
  %v9793 = vadd.f32 %v9728, %v9792
  %v9794 = vpop.f32.mrf.mxu0
  %v9795 = vpop.f32.mrf.mxu0
  %v9796 = vadd.f32 %v9731, %v9795
  %v9797 = vpop.f32.mrf.mxu0
  %9798 = vmatprep.mubr.bf16.mxu0 %v8568
  %9799 = vmatmul.mubr.bf16.gmra.mxu0 %v8567
  %v9800 = vpop.f32.mrf.mxu0
  %v9801 = vadd.f32 %v9736, %v9800
  %v9802 = vpop.f32.mrf.mxu0
  %v9803 = vpop.f32.mrf.mxu0
  %v9804 = vadd.f32 %v9739, %v9803
  %v9805 = vpop.f32.mrf.mxu0
  %9806 = vdwg.mxu0
  %9807 = vmatprep.subr.bf16.mxu0 0
  %9808 = vmatpush1.bf16.msra.mxu0 %v9411
  %9809 = vmatprep.subr.bf16.mxu0 0
  %9810 = vmatpush1.bf16.msra.mxu0 %v9410
  %9811 = vmatprep.subr.bf16.mxu0 0
  %9812 = vmatpush1.bf16.msra.mxu0 %v9409
  %9813 = vmatprep.subr.bf16.mxu0 0
  %9814 = vmatpush1.bf16.msra.mxu0 %v9408
  %9815 = vmatprep.subr.bf16.mxu0 0
  %9816 = vmatpush1.bf16.msra.mxu0 %v9407
  %9817 = vmatprep.subr.bf16.mxu0 0
  %9818 = vmatpush1.bf16.msra.mxu0 %v9406
  %9819 = vmatprep.subr.bf16.mxu0 0
  %9820 = vmatpush1.bf16.msra.mxu0 %v9405
  %9821 = vmatprep.subr.bf16.mxu0 0
  %9822 = vmatpush1.bf16.msra.mxu0 %v9404
  %9823 = vmatprep.subr.bf16.mxu0 0
  %9824 = vmatpush2.bf16.msra.mxu0 %v9419
  %9825 = vmatprep.subr.bf16.mxu0 0
  %9826 = vmatpush2.bf16.msra.mxu0 %v9418
  %9827 = vmatprep.subr.bf16.mxu0 0
  %9828 = vmatpush2.bf16.msra.mxu0 %v9417
  %9829 = vmatprep.subr.bf16.mxu0 0
  %9830 = vmatpush2.bf16.msra.mxu0 %v9416
  %9831 = vmatprep.subr.bf16.mxu0 0
  %9832 = vmatpush2.bf16.msra.mxu0 %v9415
  %9833 = vmatprep.subr.bf16.mxu0 0
  %9834 = vmatpush2.bf16.msra.mxu0 %v9414
  %9835 = vmatprep.subr.bf16.mxu0 0
  %9836 = vmatpush2.bf16.msra.mxu0 %v9413
  %9837 = vmatprep.subr.bf16.mxu0 0
  %9838 = vmatpush2.bf16.msra.mxu0 %v9412
  %9839 = vmatprep.mubr.bf16.mxu0 %v8522
  %9840 = vmatmul.mubr.bf16.gmra.mxu0 %v8521
  %v9841 = vpop.f32.mrf.mxu0
  %v9842 = vadd.f32 %v9777, %v9841
  %v9843 = vpop.f32.mrf.mxu0
  %v9844 = vpop.f32.mrf.mxu0
  %v9845 = vadd.f32 %v9780, %v9844
  %v9846 = vpop.f32.mrf.mxu0
  %9847 = vmatprep.mubr.bf16.mxu0 %v8538
  %9848 = vmatmul.mubr.bf16.gmra.mxu0 %v8537
  %v9849 = vpop.f32.mrf.mxu0
  %v9850 = vadd.f32 %v9785, %v9849
  %v9851 = vpop.f32.mrf.mxu0
  %v9852 = vpop.f32.mrf.mxu0
  %v9853 = vadd.f32 %v9788, %v9852
  %v9854 = vpop.f32.mrf.mxu0
  %9855 = vmatprep.mubr.bf16.mxu0 %v8554
  %9856 = vmatmul.mubr.bf16.gmra.mxu0 %v8553
  %v9857 = vpop.f32.mrf.mxu0
  %v9858 = vadd.f32 %v9793, %v9857
  %v9859 = vpop.f32.mrf.mxu0
  %v9860 = vpop.f32.mrf.mxu0
  %v9861 = vadd.f32 %v9796, %v9860
  %v9862 = vpop.f32.mrf.mxu0
  %9863 = vmatprep.mubr.bf16.mxu0 %v8570
  %9864 = vmatmul.mubr.bf16.gmra.mxu0 %v8569
  %v9865 = vpop.f32.mrf.mxu0
  %v9866 = vadd.f32 %v9801, %v9865
  %v9867 = vpop.f32.mrf.mxu0
  %v9868 = vpop.f32.mrf.mxu0
  %v9869 = vadd.f32 %v9804, %v9868
  %v9870 = vpop.f32.mrf.mxu0
  %9871 = vdwg.mxu0
  %9872 = vmatprep.subr.bf16.mxu0 0
  %9873 = vmatpush1.bf16.msra.mxu0 %v9427
  %9874 = vmatprep.subr.bf16.mxu0 0
  %9875 = vmatpush1.bf16.msra.mxu0 %v9426
  %9876 = vmatprep.subr.bf16.mxu0 0
  %9877 = vmatpush1.bf16.msra.mxu0 %v9425
  %9878 = vmatprep.subr.bf16.mxu0 0
  %9879 = vmatpush1.bf16.msra.mxu0 %v9424
  %9880 = vmatprep.subr.bf16.mxu0 0
  %9881 = vmatpush1.bf16.msra.mxu0 %v9423
  %9882 = vmatprep.subr.bf16.mxu0 0
  %9883 = vmatpush1.bf16.msra.mxu0 %v9422
  %9884 = vmatprep.subr.bf16.mxu0 0
  %9885 = vmatpush1.bf16.msra.mxu0 %v9421
  %9886 = vmatprep.subr.bf16.mxu0 0
  %9887 = vmatpush1.bf16.msra.mxu0 %v9420
  %9888 = vmatprep.subr.bf16.mxu0 0
  %9889 = vmatpush2.bf16.msra.mxu0 %v9435
  %9890 = vmatprep.subr.bf16.mxu0 0
  %9891 = vmatpush2.bf16.msra.mxu0 %v9434
  %9892 = vmatprep.subr.bf16.mxu0 0
  %9893 = vmatpush2.bf16.msra.mxu0 %v9433
  %9894 = vmatprep.subr.bf16.mxu0 0
  %9895 = vmatpush2.bf16.msra.mxu0 %v9432
  %9896 = vmatprep.subr.bf16.mxu0 0
  %9897 = vmatpush2.bf16.msra.mxu0 %v9431
  %9898 = vmatprep.subr.bf16.mxu0 0
  %9899 = vmatpush2.bf16.msra.mxu0 %v9430
  %9900 = vmatprep.subr.bf16.mxu0 0
  %9901 = vmatpush2.bf16.msra.mxu0 %v9429
  %9902 = vmatprep.subr.bf16.mxu0 0
  %9903 = vmatpush2.bf16.msra.mxu0 %v9428
  %9904 = vmatprep.mubr.bf16.mxu0 %v8524
  %9905 = vmatmul.mubr.bf16.gmra.mxu0 %v8523
  %v9906 = vpop.f32.mrf.mxu0
  %v9907 = vadd.f32 %v9842, %v9906
  %v9908 = vpop.f32.mrf.mxu0
  %v9909 = vpop.f32.mrf.mxu0
  %v9910 = vadd.f32 %v9845, %v9909
  %v9911 = vpop.f32.mrf.mxu0
  %9912 = vmatprep.mubr.bf16.mxu0 %v8540
  %9913 = vmatmul.mubr.bf16.gmra.mxu0 %v8539
  %v9914 = vpop.f32.mrf.mxu0
  %v9915 = vadd.f32 %v9850, %v9914
  %v9916 = vpop.f32.mrf.mxu0
  %v9917 = vpop.f32.mrf.mxu0
  %v9918 = vadd.f32 %v9853, %v9917
  %v9919 = vpop.f32.mrf.mxu0
  %9920 = vmatprep.mubr.bf16.mxu0 %v8556
  %9921 = vmatmul.mubr.bf16.gmra.mxu0 %v8555
  %v9922 = vpop.f32.mrf.mxu0
  %v9923 = vadd.f32 %v9858, %v9922
  %v9924 = vpop.f32.mrf.mxu0
  %v9925 = vpop.f32.mrf.mxu0
  %v9926 = vadd.f32 %v9861, %v9925
  %v9927 = vpop.f32.mrf.mxu0
  %9928 = vmatprep.mubr.bf16.mxu0 %v8572
  %9929 = vmatmul.mubr.bf16.gmra.mxu0 %v8571
  %v9930 = vpop.f32.mrf.mxu0
  %v9931 = vadd.f32 %v9866, %v9930
  %v9932 = vpop.f32.mrf.mxu0
  %v9933 = vpop.f32.mrf.mxu0
  %v9934 = vadd.f32 %v9869, %v9933
  %v9935 = vpop.f32.mrf.mxu0
  %9936 = vdwg.mxu0
  %9937 = vmatprep.subr.bf16.mxu0 0
  %9938 = vmatpush1.bf16.msra.mxu0 %v9443
  %9939 = vmatprep.subr.bf16.mxu0 0
  %9940 = vmatpush1.bf16.msra.mxu0 %v9442
  %9941 = vmatprep.subr.bf16.mxu0 0
  %9942 = vmatpush1.bf16.msra.mxu0 %v9441
  %9943 = vmatprep.subr.bf16.mxu0 0
  %9944 = vmatpush1.bf16.msra.mxu0 %v9440
  %9945 = vmatprep.subr.bf16.mxu0 0
  %9946 = vmatpush1.bf16.msra.mxu0 %v9439
  %9947 = vmatprep.subr.bf16.mxu0 0
  %9948 = vmatpush1.bf16.msra.mxu0 %v9438
  %9949 = vmatprep.subr.bf16.mxu0 0
  %9950 = vmatpush1.bf16.msra.mxu0 %v9437
  %9951 = vmatprep.subr.bf16.mxu0 0
  %9952 = vmatpush1.bf16.msra.mxu0 %v9436
  %9953 = vmatprep.subr.bf16.mxu0 0
  %9954 = vmatpush2.bf16.msra.mxu0 %v9451
  %9955 = vmatprep.subr.bf16.mxu0 0
  %9956 = vmatpush2.bf16.msra.mxu0 %v9450
  %9957 = vmatprep.subr.bf16.mxu0 0
  %9958 = vmatpush2.bf16.msra.mxu0 %v9449
  %9959 = vmatprep.subr.bf16.mxu0 0
  %9960 = vmatpush2.bf16.msra.mxu0 %v9448
  %9961 = vmatprep.subr.bf16.mxu0 0
  %9962 = vmatpush2.bf16.msra.mxu0 %v9447
  %9963 = vmatprep.subr.bf16.mxu0 0
  %9964 = vmatpush2.bf16.msra.mxu0 %v9446
  %9965 = vmatprep.subr.bf16.mxu0 0
  %9966 = vmatpush2.bf16.msra.mxu0 %v9445
  %9967 = vmatprep.subr.bf16.mxu0 0
  %9968 = vmatpush2.bf16.msra.mxu0 %v9444
  %9969 = vmatprep.mubr.bf16.mxu0 %v8526
  %9970 = vmatmul.mubr.bf16.gmra.mxu0 %v8525
  %v9971 = vpop.f32.mrf.mxu0
  %v9972 = vadd.f32 %v9907, %v9971
  %v9973 = vpop.f32.mrf.mxu0
  %v9974 = vpop.f32.mrf.mxu0
  %v9975 = vadd.f32 %v9910, %v9974
  %v9976 = vpop.f32.mrf.mxu0
  %9977 = vmatprep.mubr.bf16.mxu0 %v8542
  %9978 = vmatmul.mubr.bf16.gmra.mxu0 %v8541
  %v9979 = vpop.f32.mrf.mxu0
  %v9980 = vadd.f32 %v9915, %v9979
  %v9981 = vpop.f32.mrf.mxu0
  %v9982 = vpop.f32.mrf.mxu0
  %v9983 = vadd.f32 %v9918, %v9982
  %v9984 = vpop.f32.mrf.mxu0
  %9985 = vmatprep.mubr.bf16.mxu0 %v8558
  %9986 = vmatmul.mubr.bf16.gmra.mxu0 %v8557
  %v9987 = vpop.f32.mrf.mxu0
  %v9988 = vadd.f32 %v9923, %v9987
  %v9989 = vpop.f32.mrf.mxu0
  %v9990 = vpop.f32.mrf.mxu0
  %v9991 = vadd.f32 %v9926, %v9990
  %v9992 = vpop.f32.mrf.mxu0
  %9993 = vmatprep.mubr.bf16.mxu0 %v8574
  %9994 = vmatmul.mubr.bf16.gmra.mxu0 %v8573
  %v9995 = vpop.f32.mrf.mxu0
  %v9996 = vadd.f32 %v9931, %v9995
  %v9997 = vpop.f32.mrf.mxu0
  %v9998 = vpop.f32.mrf.mxu0
  %v9999 = vadd.f32 %v9934, %v9998
  %v10000 = vpop.f32.mrf.mxu0
  %10001 = vdwg.mxu0
  %10002 = vmatprep.subr.bf16.mxu0 0
  %10003 = vmatpush1.bf16.msra.mxu0 %v9459
  %10004 = vmatprep.subr.bf16.mxu0 0
  %10005 = vmatpush1.bf16.msra.mxu0 %v9458
  %10006 = vmatprep.subr.bf16.mxu0 0
  %10007 = vmatpush1.bf16.msra.mxu0 %v9457
  %10008 = vmatprep.subr.bf16.mxu0 0
  %10009 = vmatpush1.bf16.msra.mxu0 %v9456
  %10010 = vmatprep.subr.bf16.mxu0 0
  %10011 = vmatpush1.bf16.msra.mxu0 %v9455
  %10012 = vmatprep.subr.bf16.mxu0 0
  %10013 = vmatpush1.bf16.msra.mxu0 %v9454
  %10014 = vmatprep.subr.bf16.mxu0 0
  %10015 = vmatpush1.bf16.msra.mxu0 %v9453
  %10016 = vmatprep.subr.bf16.mxu0 0
  %10017 = vmatpush1.bf16.msra.mxu0 %v9452
  %10018 = vmatprep.subr.bf16.mxu0 0
  %10019 = vmatpush2.bf16.msra.mxu0 %v9467
  %10020 = vmatprep.subr.bf16.mxu0 0
  %10021 = vmatpush2.bf16.msra.mxu0 %v9466
  %10022 = vmatprep.subr.bf16.mxu0 0
  %10023 = vmatpush2.bf16.msra.mxu0 %v9465
  %10024 = vmatprep.subr.bf16.mxu0 0
  %10025 = vmatpush2.bf16.msra.mxu0 %v9464
  %10026 = vmatprep.subr.bf16.mxu0 0
  %10027 = vmatpush2.bf16.msra.mxu0 %v9463
  %10028 = vmatprep.subr.bf16.mxu0 0
  %10029 = vmatpush2.bf16.msra.mxu0 %v9462
  %10030 = vmatprep.subr.bf16.mxu0 0
  %10031 = vmatpush2.bf16.msra.mxu0 %v9461
  %10032 = vmatprep.subr.bf16.mxu0 0
  %10033 = vmatpush2.bf16.msra.mxu0 %v9460
  %10034 = vmatprep.mubr.bf16.mxu0 %v8528
  %10035 = vmatmul.mubr.bf16.gmra.mxu0 %v8527
  %v10036 = vpop.f32.mrf.mxu0
  %v10037 = vadd.f32 %v9972, %v10036
  %v10038 = vpop.f32.mrf.mxu0
  %v10039 = vpop.f32.mrf.mxu0
  %v10040 = vadd.f32 %v9975, %v10039
  %v10041 = vpop.f32.mrf.mxu0
  %10042 = vmatprep.mubr.bf16.mxu0 %v8544
  %10043 = vmatmul.mubr.bf16.gmra.mxu0 %v8543
  %v10044 = vpop.f32.mrf.mxu0
  %v10045 = vadd.f32 %v9980, %v10044
  %v10046 = vpop.f32.mrf.mxu0
  %v10047 = vpop.f32.mrf.mxu0
  %v10048 = vadd.f32 %v9983, %v10047
  %v10049 = vpop.f32.mrf.mxu0
  %10050 = vmatprep.mubr.bf16.mxu0 %v8560
  %10051 = vmatmul.mubr.bf16.gmra.mxu0 %v8559
  %v10052 = vpop.f32.mrf.mxu0
  %v10053 = vadd.f32 %v9988, %v10052
  %v10054 = vpop.f32.mrf.mxu0
  %v10055 = vpop.f32.mrf.mxu0
  %v10056 = vadd.f32 %v9991, %v10055
  %v10057 = vpop.f32.mrf.mxu0
  %10058 = vmatprep.mubr.bf16.mxu0 %v8576
  %10059 = vmatmul.mubr.bf16.gmra.mxu0 %v8575
  %v10060 = vpop.f32.mrf.mxu0
  %v10061 = vadd.f32 %v9996, %v10060
  %v10062 = vpop.f32.mrf.mxu0
  %v10063 = vpop.f32.mrf.mxu0
  %v10064 = vadd.f32 %v9999, %v10063
  %v10065 = vpop.f32.mrf.mxu0
  %10066 = vdwg.mxu0
  %10067 = vmatprep.subr.bf16.mxu0 0
  %10068 = vmatpush1.bf16.msra.mxu0 %v9475
  %10069 = vmatprep.subr.bf16.mxu0 0
  %10070 = vmatpush1.bf16.msra.mxu0 %v9474
  %10071 = vmatprep.subr.bf16.mxu0 0
  %10072 = vmatpush1.bf16.msra.mxu0 %v9473
  %10073 = vmatprep.subr.bf16.mxu0 0
  %10074 = vmatpush1.bf16.msra.mxu0 %v9472
  %10075 = vmatprep.subr.bf16.mxu0 0
  %10076 = vmatpush1.bf16.msra.mxu0 %v9471
  %10077 = vmatprep.subr.bf16.mxu0 0
  %10078 = vmatpush1.bf16.msra.mxu0 %v9470
  %10079 = vmatprep.subr.bf16.mxu0 0
  %10080 = vmatpush1.bf16.msra.mxu0 %v9469
  %10081 = vmatprep.subr.bf16.mxu0 0
  %10082 = vmatpush1.bf16.msra.mxu0 %v9468
  %10083 = vmatprep.subr.bf16.mxu0 0
  %10084 = vmatpush2.bf16.msra.mxu0 %v9483
  %10085 = vmatprep.subr.bf16.mxu0 0
  %10086 = vmatpush2.bf16.msra.mxu0 %v9482
  %10087 = vmatprep.subr.bf16.mxu0 0
  %10088 = vmatpush2.bf16.msra.mxu0 %v9481
  %10089 = vmatprep.subr.bf16.mxu0 0
  %10090 = vmatpush2.bf16.msra.mxu0 %v9480
  %10091 = vmatprep.subr.bf16.mxu0 0
  %10092 = vmatpush2.bf16.msra.mxu0 %v9479
  %10093 = vmatprep.subr.bf16.mxu0 0
  %10094 = vmatpush2.bf16.msra.mxu0 %v9478
  %10095 = vmatprep.subr.bf16.mxu0 0
  %10096 = vmatpush2.bf16.msra.mxu0 %v9477
  %10097 = vmatprep.subr.bf16.mxu0 0
  %10098 = vmatpush2.bf16.msra.mxu0 %v9476
  %10099 = vmatprep.mubr.bf16.mxu0 %v8530
  %10100 = vmatmul.mubr.bf16.gmra.mxu0 %v8529
  %v10101 = vpop.f32.mrf.mxu0
  %v10102 = vadd.f32 %v10037, %v10101
  %v10103 = vpop.f32.mrf.mxu0
  %v10104 = vpop.f32.mrf.mxu0
  %v10105 = vadd.f32 %v10040, %v10104
  %v10106 = vpop.f32.mrf.mxu0
  %10107 = vmatprep.mubr.bf16.mxu0 %v8546
  %10108 = vmatmul.mubr.bf16.gmra.mxu0 %v8545
  %v10109 = vpop.f32.mrf.mxu0
  %v10110 = vadd.f32 %v10045, %v10109
  %v10111 = vpop.f32.mrf.mxu0
  %v10112 = vpop.f32.mrf.mxu0
  %v10113 = vadd.f32 %v10048, %v10112
  %v10114 = vpop.f32.mrf.mxu0
  %10115 = vmatprep.mubr.bf16.mxu0 %v8562
  %10116 = vmatmul.mubr.bf16.gmra.mxu0 %v8561
  %v10117 = vpop.f32.mrf.mxu0
  %v10118 = vadd.f32 %v10053, %v10117
  %v10119 = vpop.f32.mrf.mxu0
  %v10120 = vpop.f32.mrf.mxu0
  %v10121 = vadd.f32 %v10056, %v10120
  %v10122 = vpop.f32.mrf.mxu0
  %10123 = vmatprep.mubr.bf16.mxu0 %v8578
  %10124 = vmatmul.mubr.bf16.gmra.mxu0 %v8577
  %v10125 = vpop.f32.mrf.mxu0
  %v10126 = vadd.f32 %v10061, %v10125
  %v10127 = vpop.f32.mrf.mxu0
  %v10128 = vpop.f32.mrf.mxu0
  %v10129 = vadd.f32 %v10064, %v10128
  %v10130 = vpop.f32.mrf.mxu0
  %10131 = vdwg.mxu0
  %v10132 = vadd.f32 %v7501, %v10102
  %v10133 = vadd.f32 %v7502, %v10105
  %v10134 = vadd.f32 %v7503, %v10110
  %v10135 = vadd.f32 %v7504, %v10113
  %v10136 = vadd.f32 %v7505, %v10118
  %v10137 = vadd.f32 %v7506, %v10121
  %v10138 = vadd.f32 %v7507, %v10126
  %v10139 = vadd.f32 %v7508, %v10129
  %s10140 = scalar_lea.vmem %s7, 1
  %v10141 = vld [vmem:[%s10140] sm:$0x1]
  %s10142 = scalar_lea.vmem %s8, 1
  %v10143 = vld [vmem:[%s10142] sm:$0x1]
  %v10144 = vsel %vm80, %v10132, 0.0
  %10145 = vadd.xlane.f32.xlu0 %v10144
  %v10146 = vpop.xlane.xlu0 %10145
  %v10147 = vsel %vm80, %v10133, 0.0
  %10148 = vadd.xlane.f32.xlu0 %v10147
  %v10149 = vpop.xlane.xlu0 %10148
  %v10150 = vsel %vm80, %v10134, 0.0
  %10151 = vadd.xlane.f32.xlu0 %v10150
  %v10152 = vpop.xlane.xlu0 %10151
  %v10153 = vsel %vm80, %v10135, 0.0
  %10154 = vadd.xlane.f32.xlu0 %v10153
  %v10155 = vpop.xlane.xlu0 %10154
  %v10156 = vsel %vm80, %v10136, 0.0
  %10157 = vadd.xlane.f32.xlu0 %v10156
  %v10158 = vpop.xlane.xlu0 %10157
  %v10159 = vsel %vm80, %v10137, 0.0
  %10160 = vadd.xlane.f32.xlu0 %v10159
  %v10161 = vpop.xlane.xlu0 %10160
  %v10162 = vsel %vm80, %v10138, 0.0
  %10163 = vadd.xlane.f32.xlu0 %v10162
  %v10164 = vpop.xlane.xlu0 %10163
  %v10165 = vsel %vm2290, %v10139, 0.0
  %10166 = vadd.xlane.f32.xlu0 %v10165
  %v10167 = vpop.xlane.xlu0 %10166
  %v10168 = vmul.f32 %v10146, %v2294
  %v10169 = vmul.f32 %v10149, %v2294
  %v10170 = vmul.f32 %v10152, %v2294
  %v10171 = vmul.f32 %v10155, %v2294
  %v10172 = vmul.f32 %v10158, %v2294
  %v10173 = vmul.f32 %v10161, %v2294
  %v10174 = vmul.f32 %v10164, %v2294
  %v10175 = vmul.f32 %v10167, %v2294
  %v10176 = vsub.f32 %v10132, %v10168
  %v10177 = vsub.f32 %v10133, %v10169
  %v10178 = vsub.f32 %v10134, %v10170
  %v10179 = vsub.f32 %v10135, %v10171
  %v10180 = vsub.f32 %v10136, %v10172
  %v10181 = vsub.f32 %v10137, %v10173
  %v10182 = vsub.f32 %v10138, %v10174
  %v10183 = vsub.f32 %v10139, %v10175
  %v10184 = vmul.f32 %v10176, %v10176
  %v10185 = vmul.f32 %v10177, %v10177
  %v10186 = vmul.f32 %v10178, %v10178
  %v10187 = vmul.f32 %v10179, %v10179
  %v10188 = vmul.f32 %v10180, %v10180
  %v10189 = vmul.f32 %v10181, %v10181
  %v10190 = vmul.f32 %v10182, %v10182
  %v10191 = vmul.f32 %v10183, %v10183
  %v10192 = vsel %vm80, %v10184, 0.0
  %10193 = vadd.xlane.f32.xlu0 %v10192
  %v10194 = vpop.xlane.xlu0 %10193
  %v10195 = vsel %vm80, %v10185, 0.0
  %10196 = vadd.xlane.f32.xlu0 %v10195
  %v10197 = vpop.xlane.xlu0 %10196
  %v10198 = vsel %vm80, %v10186, 0.0
  %10199 = vadd.xlane.f32.xlu0 %v10198
  %v10200 = vpop.xlane.xlu0 %10199
  %v10201 = vsel %vm80, %v10187, 0.0
  %10202 = vadd.xlane.f32.xlu0 %v10201
  %v10203 = vpop.xlane.xlu0 %10202
  %v10204 = vsel %vm80, %v10188, 0.0
  %10205 = vadd.xlane.f32.xlu0 %v10204
  %v10206 = vpop.xlane.xlu0 %10205
  %v10207 = vsel %vm80, %v10189, 0.0
  %10208 = vadd.xlane.f32.xlu0 %v10207
  %v10209 = vpop.xlane.xlu0 %10208
  %v10210 = vsel %vm80, %v10190, 0.0
  %10211 = vadd.xlane.f32.xlu0 %v10210
  %v10212 = vpop.xlane.xlu0 %10211
  %v10213 = vsel %vm2290, %v10191, 0.0
  %10214 = vadd.xlane.f32.xlu0 %v10213
  %v10215 = vpop.xlane.xlu0 %10214
  %v10216 = vmul.f32 %v10194, %v2294
  %v10217 = vmul.f32 %v10197, %v2294
  %v10218 = vmul.f32 %v10200, %v2294
  %v10219 = vmul.f32 %v10203, %v2294
  %v10220 = vmul.f32 %v10206, %v2294
  %v10221 = vmul.f32 %v10209, %v2294
  %v10222 = vmul.f32 %v10212, %v2294
  %v10223 = vmul.f32 %v10215, %v2294
  %v10224 = vadd.f32 %v10216, 1e-05
  %v10225 = vadd.f32 %v10217, 1e-05
  %v10226 = vadd.f32 %v10218, 1e-05
  %v10227 = vadd.f32 %v10219, 1e-05
  %v10228 = vadd.f32 %v10220, 1e-05
  %v10229 = vadd.f32 %v10221, 1e-05
  %v10230 = vadd.f32 %v10222, 1e-05
  %v10231 = vadd.f32 %v10223, 1e-05
  %v10232 = vrsqrt.pop %v10224
  %v10233 = vrsqrt.pop %v10225
  %v10234 = vrsqrt.pop %v10226
  %v10235 = vrsqrt.pop %v10227
  %v10236 = vrsqrt.pop %v10228
  %v10237 = vrsqrt.pop %v10229
  %v10238 = vrsqrt.pop %v10230
  %v10239 = vrsqrt.pop %v10231
  %v10240 = vmul.f32 %v10176, %v10232
  %v10241 = vmul.f32 %v10177, %v10233
  %v10242 = vmul.f32 %v10178, %v10234
  %v10243 = vmul.f32 %v10179, %v10235
  %v10244 = vmul.f32 %v10180, %v10236
  %v10245 = vmul.f32 %v10181, %v10237
  %v10246 = vmul.f32 %v10182, %v10238
  %v10247 = vmul.f32 %v10183, %v10239
  %v10249 = vlaneseq
  %v10250 = vshrl.u32 %v10249, 7
  %v10251 = vsub.s32 0, %v10250
  %v10252 = vrot.slane %v10141, %v10251
  %v10254 = vmul.f32 %v10240, %v10252
  %v10255 = vmul.f32 %v10241, %v10252
  %v10256 = vmul.f32 %v10242, %v10252
  %v10257 = vmul.f32 %v10243, %v10252
  %v10258 = vmul.f32 %v10244, %v10252
  %v10259 = vmul.f32 %v10245, %v10252
  %v10260 = vmul.f32 %v10246, %v10252
  %v10261 = vmul.f32 %v10247, %v10252
  %v10263 = vlaneseq
  %v10264 = vshrl.u32 %v10263, 7
  %v10265 = vsub.s32 0, %v10264
  %v10266 = vrot.slane %v10143, %v10265
  %v10268 = vadd.f32 %v10254, %v10266
  %v10269 = vadd.f32 %v10255, %v10266
  %v10270 = vadd.f32 %v10256, %v10266
  %v10271 = vadd.f32 %v10257, %v10266
  %v10272 = vadd.f32 %v10258, %v10266
  %v10273 = vadd.f32 %v10259, %v10266
  %v10274 = vadd.f32 %v10260, %v10266
  %v10275 = vadd.f32 %v10261, %v10266
  %10276 = vst.msk [vmem:[%s13] sm:$0xff] %vm80, %v10268
  %10277 = vst.msk [vmem:[%s13 + $0x8] sm:$0xff] %vm80, %v10269
  %10278 = vst.msk [vmem:[%s13 + $0x10] sm:$0xff] %vm80, %v10270
  %10279 = vst.msk [vmem:[%s13 + $0x18] sm:$0xff] %vm80, %v10271
  %10280 = vst.msk [vmem:[%s13 + $0x20] sm:$0xff] %vm80, %v10272
  %10281 = vst.msk [vmem:[%s13 + $0x28] sm:$0xff] %vm80, %v10273
  %10282 = vst.msk [vmem:[%s13 + $0x30] sm:$0xff] %vm80, %v10274
  %10283 = vst.msk [vmem:[%s13 + $0x38] sm:$0xf] %vm2290, %v10275
  // Predicated region
  $region54: #{transformer_classifier_forward.2} parent=0 // pred_check
    _
  $region55: #{transformer_classifier_forward.2} parent=0 // pred_check_branch
    %10285 = sbr.rel (0) target = $region57
  $region56: #{transformer_classifier_forward.2} parent=0 // pred_region
    _
  $region57: #{transformer_classifier_forward.2} parent=0 // pred_fallthru
    _
  // Predicated region
  $region58: #{transformer_classifier_forward.2} parent=0 // pred_check
    _
  $region59: #{transformer_classifier_forward.2} parent=0 // pred_check_branch
    %10287 = sbr.rel (0) target = $region61
  $region60: #{transformer_classifier_forward.2} parent=0 // pred_region
    _
  $region61: #{transformer_classifier_forward.2} parent=0 // pred_fallthru
    _

</llo_original>
